<compile_context>
chip_gen: v7x
topology: tpu7x:2x2x1
jax: 0.10.0
libtpu: 0.0.40
codegen_flags: <defaults>
</compile_context>

<pallas_src>
import functools

import jax
import jax.numpy as jnp
from jax import lax
from jax.experimental import pallas as pl
from jax.experimental.pallas import tpu as pltpu


LANE = 128  # conv output channels are zero-padded to this for lane-dense stores


# ----------------------------------------------------------------------------
# Fused Conv3x3 (stride 1, pad 1) + bias + ReLU + MaxPool2x2, one image per
# grid step.  The input arrives as a 2x2 space-to-depth of the zero-padded
# NHWC activation: xstd[n, p*2+q, i, j, c] == xpad[n, 2i+p, 2j+q, c].
# ----------------------------------------------------------------------------
def _conv_relu_pool_kernel(x_ref, w_ref, b_ref, o_ref):
    # x_ref: (1, 4, Hh, Wh, Cin) bf16   (Hh = (H+2)//2, Wh = (W+2)//2)
    # w_ref: (9*Cin, 128) bf16, output channels zero-padded to 128.
    # b_ref: (1, 128) f32.
    # o_ref: (1, Ho, Wo, 128) bf16      (Ho = H//2, Wo = W//2)
    _, Ho, Wo, Cp = o_ref.shape
    Cin = x_ref.shape[4]
    P = Ho * Wo

    # In-kernel im2col grouped by pool quadrant (r, s): for tap (dy, dx) the
    # needed pixels are a contiguous (Ho, Wo, Cin) slice of parity plane
    # (p, q) = ((r+dy)%2, (s+dx)%2) at offset (a, b) = ((r+dy)//2, (s+dx)//2).
    quads = []
    for r in range(2):
        for s in range(2):
            taps = []
            for dy in range(3):
                for dx in range(3):
                    p, a = (r + dy) % 2, (r + dy) // 2
                    q, b = (s + dx) % 2, (s + dx) // 2
                    taps.append(x_ref[0, p * 2 + q, a:a + Ho, b:b + Wo, :])
            quads.append(jnp.concatenate(taps, axis=-1))       # (Ho, Wo, 9*Cin)

    cols = jnp.stack(quads, axis=0).reshape(4 * P, 9 * Cin)    # (4P, 9*Cin)

    # One full-depth MXU contraction for all four pool offsets at once.
    y = jnp.dot(cols, w_ref[...], preferred_element_type=jnp.float32)  # (4P,128)

    # 2x2 max-pool == max over the four quadrant row-blocks; bias + ReLU once.
    pooled = jnp.maximum(jnp.maximum(y[0:P], y[P:2 * P]),
                         jnp.maximum(y[2 * P:3 * P], y[3 * P:4 * P]))
    pooled = jnp.maximum(pooled + b_ref[...], 0.0)
    o_ref[0] = pooled.reshape(Ho, Wo, Cp).astype(o_ref.dtype)


def _pad_space_to_depth(x_nhwc):
    """SAME-pad for the 3x3 conv, then split into 2x2 parity planes.
    Cheap XLA relayout of the raw activation (no im2col expansion)."""
    N, H, W, C = x_nhwc.shape
    xp = jnp.pad(x_nhwc, ((0, 0), (1, 1), (1, 1), (0, 0)))
    Hh, Wh = (H + 2) // 2, (W + 2) // 2
    xstd = xp.reshape(N, Hh, 2, Wh, 2, C)
    xstd = jnp.transpose(xstd, (0, 2, 4, 1, 3, 5))
    return xstd.reshape(N, 4, Hh, Wh, C)


def conv3x3_relu_pool(x_nhwc, w_k, b2d):
    """x_nhwc: (N,H,W,Cin); w_k: (9*Cin, 128) bf16, rows ordered (ky,kx,cin)
    and columns zero-padded past Cout; b2d: (1,128) f32 zero-padded.
    Returns (N, H//2, W//2, 128) bf16 with valid channels in the low lanes."""
    N, H, W, Cin = x_nhwc.shape
    Ho, Wo = H // 2, W // 2
    K = 9 * Cin
    xstd = _pad_space_to_depth(x_nhwc.astype(jnp.bfloat16))
    _, _, Hh, Wh, _ = xstd.shape

    cost = pl.CostEstimate(
        flops=2 * N * 4 * Ho * Wo * K * LANE,
        transcendentals=0,
        bytes_accessed=(xstd.size * 2 + w_k.size * 2 + b2d.size * 4
                        + N * Ho * Wo * LANE * 2),
    )
    return pl.pallas_call(
        _conv_relu_pool_kernel,
        out_shape=jax.ShapeDtypeStruct((N, Ho, Wo, LANE), jnp.bfloat16),
        grid_spec=pltpu.PrefetchScalarGridSpec(
            num_scalar_prefetch=0,
            grid=(N,),
            in_specs=[
                pl.BlockSpec((1, 4, Hh, Wh, Cin), lambda n: (n, 0, 0, 0, 0)),
                pl.BlockSpec((K, LANE), lambda n: (0, 0)),
                pl.BlockSpec((1, LANE), lambda n: (0, 0)),
            ],
            out_specs=pl.BlockSpec((1, Ho, Wo, LANE), lambda n: (n, 0, 0, 0)),
        ),
        compiler_params=pltpu.CompilerParams(
            dimension_semantics=("parallel",),
        ),
        cost_estimate=cost,
    )(xstd, w_k, b2d)


# ----------------------------------------------------------------------------
# Fused Linear(feat->256) + ReLU + Linear(256->num_classes), with the FC1 K
# dimension grid-tiled so the big weight streams (f32 VMEM accumulator).
# ----------------------------------------------------------------------------
def _mlp_kernel(x_ref, w1_ref, b1_ref, w2_ref, b2_ref, o_ref, acc_ref):
    k = pl.program_id(0)

    @pl.when(k == 0)
    def _():
        acc_ref[...] = jnp.zeros_like(acc_ref)

    acc_ref[...] += jnp.dot(x_ref[...], w1_ref[...],
                            preferred_element_type=jnp.float32)

    @pl.when(k == pl.num_programs(0) - 1)
    def _():
        h = jnp.maximum(acc_ref[...] + b1_ref[...], 0.0).astype(jnp.bfloat16)
        y = jnp.dot(h, w2_ref[...], preferred_element_type=jnp.float32)
        o_ref[...] = (y + b2_ref[...]).astype(o_ref.dtype)


def mlp_fused(x, w1_t, b1_2d, w2_t, b2_2d, *, block_k=1024):
    """x: (N, feat) bf16; w1_t: (feat, 256) bf16; w2_t: (256, C) bf16."""
    N, K = x.shape
    H1 = w1_t.shape[1]
    C = w2_t.shape[1]
    tk = min(block_k, K)
    while K % tk:
        tk //= 2
    nk = K // tk

    cost = pl.CostEstimate(
        flops=2 * N * K * H1 + 2 * N * H1 * C,
        transcendentals=0,
        bytes_accessed=(x.size * 2 + w1_t.size * 2 + w2_t.size * 2
                        + b1_2d.size * 4 + b2_2d.size * 4 + N * C * 4),
    )
    return pl.pallas_call(
        _mlp_kernel,
        out_shape=jax.ShapeDtypeStruct((N, C), jnp.float32),
        grid_spec=pltpu.PrefetchScalarGridSpec(
            num_scalar_prefetch=0,
            grid=(nk,),
            in_specs=[
                pl.BlockSpec((N, tk), lambda k: (0, k)),
                pl.BlockSpec((tk, H1), lambda k: (k, 0)),
                pl.BlockSpec((1, H1), lambda k: (0, 0)),
                pl.BlockSpec((H1, C), lambda k: (0, 0)),
                pl.BlockSpec((1, C), lambda k: (0, 0)),
            ],
            out_specs=pl.BlockSpec((N, C), lambda k: (0, 0)),
            scratch_shapes=[pltpu.VMEM((N, H1), jnp.float32)],
        ),
        compiler_params=pltpu.CompilerParams(
            dimension_semantics=("arbitrary",),
        ),
        cost_estimate=cost,
    )(x, w1_t, b1_2d, w2_t, b2_2d)


# ----------------------------------------------------------------------------
# Full forward pass (matches nn.Sequential in RoadSignCNN).
# ----------------------------------------------------------------------------
@jax.jit
def road_sign_cnn_forward(x_nchw, p):
    N = x_nchw.shape[0]
    x = jnp.transpose(x_nchw, (0, 2, 3, 1)).astype(jnp.bfloat16)  # NCHW -> NHWC
    y = conv3x3_relu_pool(x, p["w1k"], p["b1_2d"])                # Conv(3->32)+ReLU+Pool
    y = conv3x3_relu_pool(y[..., :32], p["w2k"], p["b2_2d"])      # Conv(32->64)+ReLU+Pool
    flat = y[..., :64].reshape(N, -1)                             # NHWC flatten
    return mlp_fused(flat, p["wfc1_t"], p["bfc1_2d"], p["wfc2_t"], p["bfc2_2d"])


# ----------------------------------------------------------------------------
# Pure-JAX f32 reference (mirrors the PyTorch forward) for validation.
# ----------------------------------------------------------------------------
def reference_forward(x_nchw, p):
    dn = ("NCHW", "OIHW", "NCHW")
    y = lax.conv_general_dilated(x_nchw, p["w1"], (1, 1), "SAME", dimension_numbers=dn)
    y = jnp.maximum(y + p["b1"][None, :, None, None], 0.0)
    y = lax.reduce_window(y, -jnp.inf, lax.max, (1, 1, 2, 2), (1, 1, 2, 2), "VALID")
    y = lax.conv_general_dilated(y, p["w2"], (1, 1), "SAME", dimension_numbers=dn)
    y = jnp.maximum(y + p["b2"][None, :, None, None], 0.0)
    y = lax.reduce_window(y, -jnp.inf, lax.max, (1, 1, 2, 2), (1, 1, 2, 2), "VALID")
    flat = y.reshape(y.shape[0], -1)
    h = jnp.maximum(flat @ p["wfc1"].T + p["bfc1"], 0.0)
    return h @ p["wfc2"].T + p["bfc2"]


def init_params(key, H, W, num_classes):
    ks = jax.random.split(key, 8)
    Ho, Wo = H // 4, W // 4
    feat = 64 * Ho * Wo
    p = {}
    # PyTorch-layout f32 parameters (deterministic synthetic init).
    p["w1"] = jax.random.normal(ks[0], (32, 3, 3, 3), jnp.float32) * 0.05
    p["b1"] = jax.random.normal(ks[1], (32,), jnp.float32) * 0.05
    p["w2"] = jax.random.normal(ks[2], (64, 32, 3, 3), jnp.float32) * 0.05
    p["b2"] = jax.random.normal(ks[3], (64,), jnp.float32) * 0.05
    p["wfc1"] = jax.random.normal(ks[4], (256, feat), jnp.float32) * 0.02
    p["bfc1"] = jax.random.normal(ks[5], (256,), jnp.float32) * 0.02
    p["wfc2"] = jax.random.normal(ks[6], (num_classes, 256), jnp.float32) * 0.02
    p["bfc2"] = jax.random.normal(ks[7], (num_classes,), jnp.float32) * 0.02

    # Conv weights: (Cout,Cin,ky,kx) -> (ky,kx,cin,cout) -> (9*Cin, Cout),
    # matching the in-kernel tap ordering ((dy,dx) major, cin minor); output
    # channels zero-padded to 128 so conv stores are lane-dense.
    def conv_w(w):
        cout = w.shape[0]
        wk = jnp.transpose(w, (2, 3, 1, 0)).reshape(-1, cout)
        return jnp.pad(wk, ((0, 0), (0, LANE - cout))).astype(jnp.bfloat16)

    p["w1k"] = conv_w(p["w1"])
    p["w2k"] = conv_w(p["w2"])
    p["b1_2d"] = jnp.pad(p["b1"], (0, LANE - 32)).reshape(1, LANE)
    p["b2_2d"] = jnp.pad(p["b2"], (0, LANE - 64)).reshape(1, LANE)

    # FC1 weight rows permuted once to NHWC flatten order so the conv output
    # can be flattened directly (no runtime NHWC->NCHW transpose).
    wfc1_nhwc = jnp.transpose(
        p["wfc1"].reshape(256, 64, Ho, Wo), (0, 2, 3, 1)
    ).reshape(256, feat)
    p["wfc1_t"] = wfc1_nhwc.T.astype(jnp.bfloat16)
    p["wfc2_t"] = p["wfc2"].T.astype(jnp.bfloat16)
    p["bfc1_2d"] = p["bfc1"].reshape(1, 256)
    p["bfc2_2d"] = p["bfc2"].reshape(1, num_classes)
    return p


if __name__ == "__main__":
    key = jax.random.PRNGKey(0)
    k_x, k_p = jax.random.split(key)

    N, H, W = 2, 32, 32          # small spatial size (original module implies 224x224)
    num_classes = 10

    x = jax.random.normal(k_x, (N, 3, H, W), jnp.float32)
    params = init_params(k_p, H, W, num_classes)

    out = jax.block_until_ready(road_sign_cnn_forward(x, params))
    ref = jax.block_until_ready(reference_forward(x, params))

    assert out.shape == (N, num_classes)
    # bf16 matmul operands with f32 accumulation vs. a pure-f32 reference.
    assert jnp.allclose(out, ref, atol=2e-2, rtol=2e-2), (
        "mismatch vs reference: max abs diff = %e" % float(jnp.max(jnp.abs(out - ref)))
    )

    print("KERNEL_OK")
</pallas_src>

<mosaic_0001>
module attributes {stable_mosaic.version = 11 : i64} {
  func.func @_conv_relu_pool_kernel(%arg0: i32, %arg1: memref<1x4x17x17x3xbf16, #tpu.memory_space<vmem>>, %arg2: memref<27x128xbf16, #tpu.memory_space<vmem>>, %arg3: memref<1x128xf32, #tpu.memory_space<vmem>>, %arg4: memref<1x16x16x128xbf16, #tpu.memory_space<vmem>>) attributes {dimension_semantics = [#tpu.dimension_semantics<parallel>], iteration_bounds = array<i64: 2>, scalar_prefetch = 0 : i64, scratch_operands = 0 : i64, tpu.core_type = #tpu.core_type<tc>, window_params = [{transform_indices = @transform_0, window_bounds = array<i64: 1, 4, 17, 17, 3>}, {pipeline_mode = #tpu.pipeline_mode<synchronous>, transform_indices = @transform_1, window_bounds = array<i64: 27, 128>}, {pipeline_mode = #tpu.pipeline_mode<synchronous>, transform_indices = @transform_2, window_bounds = array<i64: 1, 128>}, {transform_indices = @transform_3, window_bounds = array<i64: 1, 16, 16, 128>}]} {
    %c0 = arith.constant 0 : index
    %c0_0 = arith.constant 0 : index
    %c0_1 = arith.constant 0 : index
    %c0_2 = arith.constant 0 : index
    %c0_3 = arith.constant 0 : index
    %0 = vector.load %arg1[%c0, %c0_0, %c0_1, %c0_2, %c0_3] : memref<1x4x17x17x3xbf16, #tpu.memory_space<vmem>>, vector<1x1x16x16x3xbf16>
    %1 = vector.shape_cast %0 : vector<1x1x16x16x3xbf16> to vector<16x16x3xbf16>
    %c0_4 = arith.constant 0 : index
    %c1 = arith.constant 1 : index
    %c0_5 = arith.constant 0 : index
    %c0_6 = arith.constant 0 : index
    %c0_7 = arith.constant 0 : index
    %2 = vector.load %arg1[%c0_4, %c1, %c0_5, %c0_6, %c0_7] : memref<1x4x17x17x3xbf16, #tpu.memory_space<vmem>>, vector<1x1x16x16x3xbf16>
    %3 = vector.shape_cast %2 : vector<1x1x16x16x3xbf16> to vector<16x16x3xbf16>
    %c0_8 = arith.constant 0 : index
    %c0_9 = arith.constant 0 : index
    %c0_10 = arith.constant 0 : index
    %c1_11 = arith.constant 1 : index
    %c0_12 = arith.constant 0 : index
    %4 = vector.load %arg1[%c0_8, %c0_9, %c0_10, %c1_11, %c0_12] : memref<1x4x17x17x3xbf16, #tpu.memory_space<vmem>>, vector<1x1x16x16x3xbf16>
    %5 = vector.shape_cast %4 : vector<1x1x16x16x3xbf16> to vector<16x16x3xbf16>
    %c0_13 = arith.constant 0 : index
    %c2 = arith.constant 2 : index
    %c0_14 = arith.constant 0 : index
    %c0_15 = arith.constant 0 : index
    %c0_16 = arith.constant 0 : index
    %6 = vector.load %arg1[%c0_13, %c2, %c0_14, %c0_15, %c0_16] : memref<1x4x17x17x3xbf16, #tpu.memory_space<vmem>>, vector<1x1x16x16x3xbf16>
    %7 = vector.shape_cast %6 : vector<1x1x16x16x3xbf16> to vector<16x16x3xbf16>
    %c0_17 = arith.constant 0 : index
    %c3 = arith.constant 3 : index
    %c0_18 = arith.constant 0 : index
    %c0_19 = arith.constant 0 : index
    %c0_20 = arith.constant 0 : index
    %8 = vector.load %arg1[%c0_17, %c3, %c0_18, %c0_19, %c0_20] : memref<1x4x17x17x3xbf16, #tpu.memory_space<vmem>>, vector<1x1x16x16x3xbf16>
    %9 = vector.shape_cast %8 : vector<1x1x16x16x3xbf16> to vector<16x16x3xbf16>
    %c0_21 = arith.constant 0 : index
    %c2_22 = arith.constant 2 : index
    %c0_23 = arith.constant 0 : index
    %c1_24 = arith.constant 1 : index
    %c0_25 = arith.constant 0 : index
    %10 = vector.load %arg1[%c0_21, %c2_22, %c0_23, %c1_24, %c0_25] : memref<1x4x17x17x3xbf16, #tpu.memory_space<vmem>>, vector<1x1x16x16x3xbf16>
    %11 = vector.shape_cast %10 : vector<1x1x16x16x3xbf16> to vector<16x16x3xbf16>
    %c0_26 = arith.constant 0 : index
    %c0_27 = arith.constant 0 : index
    %c1_28 = arith.constant 1 : index
    %c0_29 = arith.constant 0 : index
    %c0_30 = arith.constant 0 : index
    %12 = vector.load %arg1[%c0_26, %c0_27, %c1_28, %c0_29, %c0_30] : memref<1x4x17x17x3xbf16, #tpu.memory_space<vmem>>, vector<1x1x16x16x3xbf16>
    %13 = vector.shape_cast %12 : vector<1x1x16x16x3xbf16> to vector<16x16x3xbf16>
    %c0_31 = arith.constant 0 : index
    %c1_32 = arith.constant 1 : index
    %c1_33 = arith.constant 1 : index
    %c0_34 = arith.constant 0 : index
    %c0_35 = arith.constant 0 : index
    %14 = vector.load %arg1[%c0_31, %c1_32, %c1_33, %c0_34, %c0_35] : memref<1x4x17x17x3xbf16, #tpu.memory_space<vmem>>, vector<1x1x16x16x3xbf16>
    %15 = vector.shape_cast %14 : vector<1x1x16x16x3xbf16> to vector<16x16x3xbf16>
    %c0_36 = arith.constant 0 : index
    %c0_37 = arith.constant 0 : index
    %c1_38 = arith.constant 1 : index
    %c1_39 = arith.constant 1 : index
    %c0_40 = arith.constant 0 : index
    %16 = vector.load %arg1[%c0_36, %c0_37, %c1_38, %c1_39, %c0_40] : memref<1x4x17x17x3xbf16, #tpu.memory_space<vmem>>, vector<1x1x16x16x3xbf16>
    %17 = vector.shape_cast %16 : vector<1x1x16x16x3xbf16> to vector<16x16x3xbf16>
    %18 = tpu.concatenate %1, %3, %5, %7, %9, %11, %13, %15, %17 in 2 : vector<16x16x3xbf16>, vector<16x16x3xbf16>, vector<16x16x3xbf16>, vector<16x16x3xbf16>, vector<16x16x3xbf16>, vector<16x16x3xbf16>, vector<16x16x3xbf16>, vector<16x16x3xbf16>, vector<16x16x3xbf16> -> vector<16x16x27xbf16>
    %c0_41 = arith.constant 0 : index
    %c1_42 = arith.constant 1 : index
    %c0_43 = arith.constant 0 : index
    %c0_44 = arith.constant 0 : index
    %c0_45 = arith.constant 0 : index
    %19 = vector.load %arg1[%c0_41, %c1_42, %c0_43, %c0_44, %c0_45] : memref<1x4x17x17x3xbf16, #tpu.memory_space<vmem>>, vector<1x1x16x16x3xbf16>
    %20 = vector.shape_cast %19 : vector<1x1x16x16x3xbf16> to vector<16x16x3xbf16>
    %c0_46 = arith.constant 0 : index
    %c0_47 = arith.constant 0 : index
    %c0_48 = arith.constant 0 : index
    %c1_49 = arith.constant 1 : index
    %c0_50 = arith.constant 0 : index
    %21 = vector.load %arg1[%c0_46, %c0_47, %c0_48, %c1_49, %c0_50] : memref<1x4x17x17x3xbf16, #tpu.memory_space<vmem>>, vector<1x1x16x16x3xbf16>
    %22 = vector.shape_cast %21 : vector<1x1x16x16x3xbf16> to vector<16x16x3xbf16>
    %c0_51 = arith.constant 0 : index
    %c1_52 = arith.constant 1 : index
    %c0_53 = arith.constant 0 : index
    %c1_54 = arith.constant 1 : index
    %c0_55 = arith.constant 0 : index
    %23 = vector.load %arg1[%c0_51, %c1_52, %c0_53, %c1_54, %c0_55] : memref<1x4x17x17x3xbf16, #tpu.memory_space<vmem>>, vector<1x1x16x16x3xbf16>
    %24 = vector.shape_cast %23 : vector<1x1x16x16x3xbf16> to vector<16x16x3xbf16>
    %c0_56 = arith.constant 0 : index
    %c3_57 = arith.constant 3 : index
    %c0_58 = arith.constant 0 : index
    %c0_59 = arith.constant 0 : index
    %c0_60 = arith.constant 0 : index
    %25 = vector.load %arg1[%c0_56, %c3_57, %c0_58, %c0_59, %c0_60] : memref<1x4x17x17x3xbf16, #tpu.memory_space<vmem>>, vector<1x1x16x16x3xbf16>
    %26 = vector.shape_cast %25 : vector<1x1x16x16x3xbf16> to vector<16x16x3xbf16>
    %c0_61 = arith.constant 0 : index
    %c2_62 = arith.constant 2 : index
    %c0_63 = arith.constant 0 : index
    %c1_64 = arith.constant 1 : index
    %c0_65 = arith.constant 0 : index
    %27 = vector.load %arg1[%c0_61, %c2_62, %c0_63, %c1_64, %c0_65] : memref<1x4x17x17x3xbf16, #tpu.memory_space<vmem>>, vector<1x1x16x16x3xbf16>
    %28 = vector.shape_cast %27 : vector<1x1x16x16x3xbf16> to vector<16x16x3xbf16>
    %c0_66 = arith.constant 0 : index
    %c3_67 = arith.constant 3 : index
    %c0_68 = arith.constant 0 : index
    %c1_69 = arith.constant 1 : index
    %c0_70 = arith.constant 0 : index
    %29 = vector.load %arg1[%c0_66, %c3_67, %c0_68, %c1_69, %c0_70] : memref<1x4x17x17x3xbf16, #tpu.memory_space<vmem>>, vector<1x1x16x16x3xbf16>
    %30 = vector.shape_cast %29 : vector<1x1x16x16x3xbf16> to vector<16x16x3xbf16>
    %c0_71 = arith.constant 0 : index
    %c1_72 = arith.constant 1 : index
    %c1_73 = arith.constant 1 : index
    %c0_74 = arith.constant 0 : index
    %c0_75 = arith.constant 0 : index
    %31 = vector.load %arg1[%c0_71, %c1_72, %c1_73, %c0_74, %c0_75] : memref<1x4x17x17x3xbf16, #tpu.memory_space<vmem>>, vector<1x1x16x16x3xbf16>
    %32 = vector.shape_cast %31 : vector<1x1x16x16x3xbf16> to vector<16x16x3xbf16>
    %c0_76 = arith.constant 0 : index
    %c0_77 = arith.constant 0 : index
    %c1_78 = arith.constant 1 : index
    %c1_79 = arith.constant 1 : index
    %c0_80 = arith.constant 0 : index
    %33 = vector.load %arg1[%c0_76, %c0_77, %c1_78, %c1_79, %c0_80] : memref<1x4x17x17x3xbf16, #tpu.memory_space<vmem>>, vector<1x1x16x16x3xbf16>
    %34 = vector.shape_cast %33 : vector<1x1x16x16x3xbf16> to vector<16x16x3xbf16>
    %c0_81 = arith.constant 0 : index
    %c1_82 = arith.constant 1 : index
    %c1_83 = arith.constant 1 : index
    %c1_84 = arith.constant 1 : index
    %c0_85 = arith.constant 0 : index
    %35 = vector.load %arg1[%c0_81, %c1_82, %c1_83, %c1_84, %c0_85] : memref<1x4x17x17x3xbf16, #tpu.memory_space<vmem>>, vector<1x1x16x16x3xbf16>
    %36 = vector.shape_cast %35 : vector<1x1x16x16x3xbf16> to vector<16x16x3xbf16>
    %37 = tpu.concatenate %20, %22, %24, %26, %28, %30, %32, %34, %36 in 2 : vector<16x16x3xbf16>, vector<16x16x3xbf16>, vector<16x16x3xbf16>, vector<16x16x3xbf16>, vector<16x16x3xbf16>, vector<16x16x3xbf16>, vector<16x16x3xbf16>, vector<16x16x3xbf16>, vector<16x16x3xbf16> -> vector<16x16x27xbf16>
    %c0_86 = arith.constant 0 : index
    %c2_87 = arith.constant 2 : index
    %c0_88 = arith.constant 0 : index
    %c0_89 = arith.constant 0 : index
    %c0_90 = arith.constant 0 : index
    %38 = vector.load %arg1[%c0_86, %c2_87, %c0_88, %c0_89, %c0_90] : memref<1x4x17x17x3xbf16, #tpu.memory_space<vmem>>, vector<1x1x16x16x3xbf16>
    %39 = vector.shape_cast %38 : vector<1x1x16x16x3xbf16> to vector<16x16x3xbf16>
    %c0_91 = arith.constant 0 : index
    %c3_92 = arith.constant 3 : index
    %c0_93 = arith.constant 0 : index
    %c0_94 = arith.constant 0 : index
    %c0_95 = arith.constant 0 : index
    %40 = vector.load %arg1[%c0_91, %c3_92, %c0_93, %c0_94, %c0_95] : memref<1x4x17x17x3xbf16, #tpu.memory_space<vmem>>, vector<1x1x16x16x3xbf16>
    %41 = vector.shape_cast %40 : vector<1x1x16x16x3xbf16> to vector<16x16x3xbf16>
    %c0_96 = arith.constant 0 : index
    %c2_97 = arith.constant 2 : index
    %c0_98 = arith.constant 0 : index
    %c1_99 = arith.constant 1 : index
    %c0_100 = arith.constant 0 : index
    %42 = vector.load %arg1[%c0_96, %c2_97, %c0_98, %c1_99, %c0_100] : memref<1x4x17x17x3xbf16, #tpu.memory_space<vmem>>, vector<1x1x16x16x3xbf16>
    %43 = vector.shape_cast %42 : vector<1x1x16x16x3xbf16> to vector<16x16x3xbf16>
    %c0_101 = arith.constant 0 : index
    %c0_102 = arith.constant 0 : index
    %c1_103 = arith.constant 1 : index
    %c0_104 = arith.constant 0 : index
    %c0_105 = arith.constant 0 : index
    %44 = vector.load %arg1[%c0_101, %c0_102, %c1_103, %c0_104, %c0_105] : memref<1x4x17x17x3xbf16, #tpu.memory_space<vmem>>, vector<1x1x16x16x3xbf16>
    %45 = vector.shape_cast %44 : vector<1x1x16x16x3xbf16> to vector<16x16x3xbf16>
    %c0_106 = arith.constant 0 : index
    %c1_107 = arith.constant 1 : index
    %c1_108 = arith.constant 1 : index
    %c0_109 = arith.constant 0 : index
    %c0_110 = arith.constant 0 : index
    %46 = vector.load %arg1[%c0_106, %c1_107, %c1_108, %c0_109, %c0_110] : memref<1x4x17x17x3xbf16, #tpu.memory_space<vmem>>, vector<1x1x16x16x3xbf16>
    %47 = vector.shape_cast %46 : vector<1x1x16x16x3xbf16> to vector<16x16x3xbf16>
    %c0_111 = arith.constant 0 : index
    %c0_112 = arith.constant 0 : index
    %c1_113 = arith.constant 1 : index
    %c1_114 = arith.constant 1 : index
    %c0_115 = arith.constant 0 : index
    %48 = vector.load %arg1[%c0_111, %c0_112, %c1_113, %c1_114, %c0_115] : memref<1x4x17x17x3xbf16, #tpu.memory_space<vmem>>, vector<1x1x16x16x3xbf16>
    %49 = vector.shape_cast %48 : vector<1x1x16x16x3xbf16> to vector<16x16x3xbf16>
    %c0_116 = arith.constant 0 : index
    %c2_117 = arith.constant 2 : index
    %c1_118 = arith.constant 1 : index
    %c0_119 = arith.constant 0 : index
    %c0_120 = arith.constant 0 : index
    %50 = vector.load %arg1[%c0_116, %c2_117, %c1_118, %c0_119, %c0_120] : memref<1x4x17x17x3xbf16, #tpu.memory_space<vmem>>, vector<1x1x16x16x3xbf16>
    %51 = vector.shape_cast %50 : vector<1x1x16x16x3xbf16> to vector<16x16x3xbf16>
    %c0_121 = arith.constant 0 : index
    %c3_122 = arith.constant 3 : index
    %c1_123 = arith.constant 1 : index
    %c0_124 = arith.constant 0 : index
    %c0_125 = arith.constant 0 : index
    %52 = vector.load %arg1[%c0_121, %c3_122, %c1_123, %c0_124, %c0_125] : memref<1x4x17x17x3xbf16, #tpu.memory_space<vmem>>, vector<1x1x16x16x3xbf16>
    %53 = vector.shape_cast %52 : vector<1x1x16x16x3xbf16> to vector<16x16x3xbf16>
    %c0_126 = arith.constant 0 : index
    %c2_127 = arith.constant 2 : index
    %c1_128 = arith.constant 1 : index
    %c1_129 = arith.constant 1 : index
    %c0_130 = arith.constant 0 : index
    %54 = vector.load %arg1[%c0_126, %c2_127, %c1_128, %c1_129, %c0_130] : memref<1x4x17x17x3xbf16, #tpu.memory_space<vmem>>, vector<1x1x16x16x3xbf16>
    %55 = vector.shape_cast %54 : vector<1x1x16x16x3xbf16> to vector<16x16x3xbf16>
    %56 = tpu.concatenate %39, %41, %43, %45, %47, %49, %51, %53, %55 in 2 : vector<16x16x3xbf16>, vector<16x16x3xbf16>, vector<16x16x3xbf16>, vector<16x16x3xbf16>, vector<16x16x3xbf16>, vector<16x16x3xbf16>, vector<16x16x3xbf16>, vector<16x16x3xbf16>, vector<16x16x3xbf16> -> vector<16x16x27xbf16>
    %c0_131 = arith.constant 0 : index
    %c3_132 = arith.constant 3 : index
    %c0_133 = arith.constant 0 : index
    %c0_134 = arith.constant 0 : index
    %c0_135 = arith.constant 0 : index
    %57 = vector.load %arg1[%c0_131, %c3_132, %c0_133, %c0_134, %c0_135] : memref<1x4x17x17x3xbf16, #tpu.memory_space<vmem>>, vector<1x1x16x16x3xbf16>
    %58 = vector.shape_cast %57 : vector<1x1x16x16x3xbf16> to vector<16x16x3xbf16>
    %c0_136 = arith.constant 0 : index
    %c2_137 = arith.constant 2 : index
    %c0_138 = arith.constant 0 : index
    %c1_139 = arith.constant 1 : index
    %c0_140 = arith.constant 0 : index
    %59 = vector.load %arg1[%c0_136, %c2_137, %c0_138, %c1_139, %c0_140] : memref<1x4x17x17x3xbf16, #tpu.memory_space<vmem>>, vector<1x1x16x16x3xbf16>
    %60 = vector.shape_cast %59 : vector<1x1x16x16x3xbf16> to vector<16x16x3xbf16>
    %c0_141 = arith.constant 0 : index
    %c3_142 = arith.constant 3 : index
    %c0_143 = arith.constant 0 : index
    %c1_144 = arith.constant 1 : index
    %c0_145 = arith.constant 0 : index
    %61 = vector.load %arg1[%c0_141, %c3_142, %c0_143, %c1_144, %c0_145] : memref<1x4x17x17x3xbf16, #tpu.memory_space<vmem>>, vector<1x1x16x16x3xbf16>
    %62 = vector.shape_cast %61 : vector<1x1x16x16x3xbf16> to vector<16x16x3xbf16>
    %c0_146 = arith.constant 0 : index
    %c1_147 = arith.constant 1 : index
    %c1_148 = arith.constant 1 : index
    %c0_149 = arith.constant 0 : index
    %c0_150 = arith.constant 0 : index
    %63 = vector.load %arg1[%c0_146, %c1_147, %c1_148, %c0_149, %c0_150] : memref<1x4x17x17x3xbf16, #tpu.memory_space<vmem>>, vector<1x1x16x16x3xbf16>
    %64 = vector.shape_cast %63 : vector<1x1x16x16x3xbf16> to vector<16x16x3xbf16>
    %c0_151 = arith.constant 0 : index
    %c0_152 = arith.constant 0 : index
    %c1_153 = arith.constant 1 : index
    %c1_154 = arith.constant 1 : index
    %c0_155 = arith.constant 0 : index
    %65 = vector.load %arg1[%c0_151, %c0_152, %c1_153, %c1_154, %c0_155] : memref<1x4x17x17x3xbf16, #tpu.memory_space<vmem>>, vector<1x1x16x16x3xbf16>
    %66 = vector.shape_cast %65 : vector<1x1x16x16x3xbf16> to vector<16x16x3xbf16>
    %c0_156 = arith.constant 0 : index
    %c1_157 = arith.constant 1 : index
    %c1_158 = arith.constant 1 : index
    %c1_159 = arith.constant 1 : index
    %c0_160 = arith.constant 0 : index
    %67 = vector.load %arg1[%c0_156, %c1_157, %c1_158, %c1_159, %c0_160] : memref<1x4x17x17x3xbf16, #tpu.memory_space<vmem>>, vector<1x1x16x16x3xbf16>
    %68 = vector.shape_cast %67 : vector<1x1x16x16x3xbf16> to vector<16x16x3xbf16>
    %c0_161 = arith.constant 0 : index
    %c3_162 = arith.constant 3 : index
    %c1_163 = arith.constant 1 : index
    %c0_164 = arith.constant 0 : index
    %c0_165 = arith.constant 0 : index
    %69 = vector.load %arg1[%c0_161, %c3_162, %c1_163, %c0_164, %c0_165] : memref<1x4x17x17x3xbf16, #tpu.memory_space<vmem>>, vector<1x1x16x16x3xbf16>
    %70 = vector.shape_cast %69 : vector<1x1x16x16x3xbf16> to vector<16x16x3xbf16>
    %c0_166 = arith.constant 0 : index
    %c2_167 = arith.constant 2 : index
    %c1_168 = arith.constant 1 : index
    %c1_169 = arith.constant 1 : index
    %c0_170 = arith.constant 0 : index
    %71 = vector.load %arg1[%c0_166, %c2_167, %c1_168, %c1_169, %c0_170] : memref<1x4x17x17x3xbf16, #tpu.memory_space<vmem>>, vector<1x1x16x16x3xbf16>
    %72 = vector.shape_cast %71 : vector<1x1x16x16x3xbf16> to vector<16x16x3xbf16>
    %c0_171 = arith.constant 0 : index
    %c3_172 = arith.constant 3 : index
    %c1_173 = arith.constant 1 : index
    %c1_174 = arith.constant 1 : index
    %c0_175 = arith.constant 0 : index
    %73 = vector.load %arg1[%c0_171, %c3_172, %c1_173, %c1_174, %c0_175] : memref<1x4x17x17x3xbf16, #tpu.memory_space<vmem>>, vector<1x1x16x16x3xbf16>
    %74 = vector.shape_cast %73 : vector<1x1x16x16x3xbf16> to vector<16x16x3xbf16>
    %75 = tpu.concatenate %58, %60, %62, %64, %66, %68, %70, %72, %74 in 2 : vector<16x16x3xbf16>, vector<16x16x3xbf16>, vector<16x16x3xbf16>, vector<16x16x3xbf16>, vector<16x16x3xbf16>, vector<16x16x3xbf16>, vector<16x16x3xbf16>, vector<16x16x3xbf16>, vector<16x16x3xbf16> -> vector<16x16x27xbf16>
    %76 = vector.shape_cast %18 : vector<16x16x27xbf16> to vector<1x16x16x27xbf16>
    %77 = vector.shape_cast %37 : vector<16x16x27xbf16> to vector<1x16x16x27xbf16>
    %78 = vector.shape_cast %56 : vector<16x16x27xbf16> to vector<1x16x16x27xbf16>
    %79 = vector.shape_cast %75 : vector<16x16x27xbf16> to vector<1x16x16x27xbf16>
    %80 = tpu.concatenate %76, %77, %78, %79 in 0 : vector<1x16x16x27xbf16>, vector<1x16x16x27xbf16>, vector<1x16x16x27xbf16>, vector<1x16x16x27xbf16> -> vector<4x16x16x27xbf16>
    %81 = vector.shape_cast %80 : vector<4x16x16x27xbf16> to vector<1024x27xbf16>
    %c0_176 = arith.constant 0 : index
    %c0_177 = arith.constant 0 : index
    %82 = vector.load %arg2[%c0_176, %c0_177] : memref<27x128xbf16, #tpu.memory_space<vmem>>, vector<27x128xbf16>
    %cst = arith.constant dense<0.000000e+00> : vector<1024x128xf32>
    %83 = tpu.matmul %81, %82, %cst {dimension_numbers = #tpu.dot_dimension_numbers<[1], [0], [0], [1], [0, 0, 1, 1], [], []>} : vector<1024x27xbf16>, vector<27x128xbf16>, vector<1024x128xf32> -> vector<1024x128xf32>
    %84 = vector.extract_strided_slice %83 {offsets = [0, 0], sizes = [256, 128], strides = [1, 1]} : vector<1024x128xf32> to vector<256x128xf32>
    %85 = vector.extract_strided_slice %83 {offsets = [256, 0], sizes = [256, 128], strides = [1, 1]} : vector<1024x128xf32> to vector<256x128xf32>
    %86 = arith.maximumf %84, %85 : vector<256x128xf32>
    %87 = vector.extract_strided_slice %83 {offsets = [512, 0], sizes = [256, 128], strides = [1, 1]} : vector<1024x128xf32> to vector<256x128xf32>
    %88 = vector.extract_strided_slice %83 {offsets = [768, 0], sizes = [256, 128], strides = [1, 1]} : vector<1024x128xf32> to vector<256x128xf32>
    %89 = arith.maximumf %87, %88 : vector<256x128xf32>
    %90 = arith.maximumf %86, %89 : vector<256x128xf32>
    %c0_178 = arith.constant 0 : index
    %c0_179 = arith.constant 0 : index
    %91 = vector.load %arg3[%c0_178, %c0_179] : memref<1x128xf32, #tpu.memory_space<vmem>>, vector<1x128xf32>
    %92 = vector.broadcast %91 : vector<1x128xf32> to vector<256x128xf32>
    %93 = arith.addf %90, %92 : vector<256x128xf32>
    %cst_180 = arith.constant 0.000000e+00 : f32
    %94 = vector.broadcast %cst_180 : f32 to vector<256x128xf32>
    %95 = arith.maximumf %93, %94 : vector<256x128xf32>
    %96 = vector.shape_cast %95 : vector<256x128xf32> to vector<16x16x128xf32>
    %97 = arith.truncf %96 : vector<16x16x128xf32> to vector<16x16x128xbf16>
    %c0_181 = arith.constant 0 : index
    %c0_182 = arith.constant 0 : index
    %c0_183 = arith.constant 0 : index
    %c0_184 = arith.constant 0 : index
    %98 = vector.load %arg4[%c0_181, %c0_182, %c0_183, %c0_184] : memref<1x16x16x128xbf16, #tpu.memory_space<vmem>>, vector<1x16x16x128xbf16>
    %99 = vector.shape_cast %98 : vector<1x16x16x128xbf16> to vector<16x16x128xbf16>
    %100 = vector.shape_cast %97 : vector<16x16x128xbf16> to vector<1x16x16x128xbf16>
    tpu.vector_store %arg4[%c0_181, %c0_182, %c0_183, %c0_184], %100 {strides = array<i32>} : memref<1x16x16x128xbf16, #tpu.memory_space<vmem>>, vector<1x16x16x128xbf16>,
    return
  }
  func.func @transform_0(%arg0: i32) -> (i32, i32, i32, i32, i32) {
    %c0_i32 = arith.constant 0 : i32
    %c0_i32_0 = arith.constant 0 : i32
    %c0_i32_1 = arith.constant 0 : i32
    %c0_i32_2 = arith.constant 0 : i32
    %c0_i32_3 = arith.constant 0 : i32
    return %arg0, %c0_i32, %c0_i32_0, %c0_i32_1, %c0_i32_2 : i32, i32, i32, i32, i32
  }
  func.func @transform_1(%arg0: i32) -> (i32, i32) {
    %c0_i32 = arith.constant 0 : i32
    %c0_i32_0 = arith.constant 0 : i32
    %c0_i32_1 = arith.constant 0 : i32
    return %c0_i32, %c0_i32_0 : i32, i32
  }
  func.func @transform_2(%arg0: i32) -> (i32, i32) {
    %c0_i32 = arith.constant 0 : i32
    %c0_i32_0 = arith.constant 0 : i32
    %c0_i32_1 = arith.constant 0 : i32
    return %c0_i32, %c0_i32_0 : i32, i32
  }
  func.func @transform_3(%arg0: i32) -> (i32, i32, i32, i32) {
    %c0_i32 = arith.constant 0 : i32
    %c0_i32_0 = arith.constant 0 : i32
    %c0_i32_1 = arith.constant 0 : i32
    %c0_i32_2 = arith.constant 0 : i32
    return %arg0, %c0_i32, %c0_i32_0, %c0_i32_1 : i32, i32, i32, i32
  }
}

module attributes {stable_mosaic.version = 11 : i64} {
  func.func @_conv_relu_pool_kernel(%arg0: i32, %arg1: memref<1x4x9x9x32xbf16, #tpu.memory_space<vmem>>, %arg2: memref<288x128xbf16, #tpu.memory_space<vmem>>, %arg3: memref<1x128xf32, #tpu.memory_space<vmem>>, %arg4: memref<1x8x8x128xbf16, #tpu.memory_space<vmem>>) attributes {dimension_semantics = [#tpu.dimension_semantics<parallel>], iteration_bounds = array<i64: 2>, scalar_prefetch = 0 : i64, scratch_operands = 0 : i64, tpu.core_type = #tpu.core_type<tc>, window_params = [{transform_indices = @transform_0, window_bounds = array<i64: 1, 4, 9, 9, 32>}, {pipeline_mode = #tpu.pipeline_mode<synchronous>, transform_indices = @transform_1, window_bounds = array<i64: 288, 128>}, {pipeline_mode = #tpu.pipeline_mode<synchronous>, transform_indices = @transform_2, window_bounds = array<i64: 1, 128>}, {transform_indices = @transform_3, window_bounds = array<i64: 1, 8, 8, 128>}]} {
    %c0 = arith.constant 0 : index
    %c0_0 = arith.constant 0 : index
    %c0_1 = arith.constant 0 : index
    %c0_2 = arith.constant 0 : index
    %c0_3 = arith.constant 0 : index
    %0 = vector.load %arg1[%c0, %c0_0, %c0_1, %c0_2, %c0_3] : memref<1x4x9x9x32xbf16, #tpu.memory_space<vmem>>, vector<1x1x8x8x32xbf16>
    %1 = vector.shape_cast %0 : vector<1x1x8x8x32xbf16> to vector<8x8x32xbf16>
    %c0_4 = arith.constant 0 : index
    %c1 = arith.constant 1 : index
    %c0_5 = arith.constant 0 : index
    %c0_6 = arith.constant 0 : index
    %c0_7 = arith.constant 0 : index
    %2 = vector.load %arg1[%c0_4, %c1, %c0_5, %c0_6, %c0_7] : memref<1x4x9x9x32xbf16, #tpu.memory_space<vmem>>, vector<1x1x8x8x32xbf16>
    %3 = vector.shape_cast %2 : vector<1x1x8x8x32xbf16> to vector<8x8x32xbf16>
    %c0_8 = arith.constant 0 : index
    %c0_9 = arith.constant 0 : index
    %c0_10 = arith.constant 0 : index
    %c1_11 = arith.constant 1 : index
    %c0_12 = arith.constant 0 : index
    %4 = vector.load %arg1[%c0_8, %c0_9, %c0_10, %c1_11, %c0_12] : memref<1x4x9x9x32xbf16, #tpu.memory_space<vmem>>, vector<1x1x8x8x32xbf16>
    %5 = vector.shape_cast %4 : vector<1x1x8x8x32xbf16> to vector<8x8x32xbf16>
    %c0_13 = arith.constant 0 : index
    %c2 = arith.constant 2 : index
    %c0_14 = arith.constant 0 : index
    %c0_15 = arith.constant 0 : index
    %c0_16 = arith.constant 0 : index
    %6 = vector.load %arg1[%c0_13, %c2, %c0_14, %c0_15, %c0_16] : memref<1x4x9x9x32xbf16, #tpu.memory_space<vmem>>, vector<1x1x8x8x32xbf16>
    %7 = vector.shape_cast %6 : vector<1x1x8x8x32xbf16> to vector<8x8x32xbf16>
    %c0_17 = arith.constant 0 : index
    %c3 = arith.constant 3 : index
    %c0_18 = arith.constant 0 : index
    %c0_19 = arith.constant 0 : index
    %c0_20 = arith.constant 0 : index
    %8 = vector.load %arg1[%c0_17, %c3, %c0_18, %c0_19, %c0_20] : memref<1x4x9x9x32xbf16, #tpu.memory_space<vmem>>, vector<1x1x8x8x32xbf16>
    %9 = vector.shape_cast %8 : vector<1x1x8x8x32xbf16> to vector<8x8x32xbf16>
    %c0_21 = arith.constant 0 : index
    %c2_22 = arith.constant 2 : index
    %c0_23 = arith.constant 0 : index
    %c1_24 = arith.constant 1 : index
    %c0_25 = arith.constant 0 : index
    %10 = vector.load %arg1[%c0_21, %c2_22, %c0_23, %c1_24, %c0_25] : memref<1x4x9x9x32xbf16, #tpu.memory_space<vmem>>, vector<1x1x8x8x32xbf16>
    %11 = vector.shape_cast %10 : vector<1x1x8x8x32xbf16> to vector<8x8x32xbf16>
    %c0_26 = arith.constant 0 : index
    %c0_27 = arith.constant 0 : index
    %c1_28 = arith.constant 1 : index
    %c0_29 = arith.constant 0 : index
    %c0_30 = arith.constant 0 : index
    %12 = vector.load %arg1[%c0_26, %c0_27, %c1_28, %c0_29, %c0_30] : memref<1x4x9x9x32xbf16, #tpu.memory_space<vmem>>, vector<1x1x8x8x32xbf16>
    %13 = vector.shape_cast %12 : vector<1x1x8x8x32xbf16> to vector<8x8x32xbf16>
    %c0_31 = arith.constant 0 : index
    %c1_32 = arith.constant 1 : index
    %c1_33 = arith.constant 1 : index
    %c0_34 = arith.constant 0 : index
    %c0_35 = arith.constant 0 : index
    %14 = vector.load %arg1[%c0_31, %c1_32, %c1_33, %c0_34, %c0_35] : memref<1x4x9x9x32xbf16, #tpu.memory_space<vmem>>, vector<1x1x8x8x32xbf16>
    %15 = vector.shape_cast %14 : vector<1x1x8x8x32xbf16> to vector<8x8x32xbf16>
    %c0_36 = arith.constant 0 : index
    %c0_37 = arith.constant 0 : index
    %c1_38 = arith.constant 1 : index
    %c1_39 = arith.constant 1 : index
    %c0_40 = arith.constant 0 : index
    %16 = vector.load %arg1[%c0_36, %c0_37, %c1_38, %c1_39, %c0_40] : memref<1x4x9x9x32xbf16, #tpu.memory_space<vmem>>, vector<1x1x8x8x32xbf16>
    %17 = vector.shape_cast %16 : vector<1x1x8x8x32xbf16> to vector<8x8x32xbf16>
    %18 = tpu.concatenate %1, %3, %5, %7, %9, %11, %13, %15, %17 in 2 : vector<8x8x32xbf16>, vector<8x8x32xbf16>, vector<8x8x32xbf16>, vector<8x8x32xbf16>, vector<8x8x32xbf16>, vector<8x8x32xbf16>, vector<8x8x32xbf16>, vector<8x8x32xbf16>, vector<8x8x32xbf16> -> vector<8x8x288xbf16>
    %c0_41 = arith.constant 0 : index
    %c1_42 = arith.constant 1 : index
    %c0_43 = arith.constant 0 : index
    %c0_44 = arith.constant 0 : index
    %c0_45 = arith.constant 0 : index
    %19 = vector.load %arg1[%c0_41, %c1_42, %c0_43, %c0_44, %c0_45] : memref<1x4x9x9x32xbf16, #tpu.memory_space<vmem>>, vector<1x1x8x8x32xbf16>
    %20 = vector.shape_cast %19 : vector<1x1x8x8x32xbf16> to vector<8x8x32xbf16>
    %c0_46 = arith.constant 0 : index
    %c0_47 = arith.constant 0 : index
    %c0_48 = arith.constant 0 : index
    %c1_49 = arith.constant 1 : index
    %c0_50 = arith.constant 0 : index
    %21 = vector.load %arg1[%c0_46, %c0_47, %c0_48, %c1_49, %c0_50] : memref<1x4x9x9x32xbf16, #tpu.memory_space<vmem>>, vector<1x1x8x8x32xbf16>
    %22 = vector.shape_cast %21 : vector<1x1x8x8x32xbf16> to vector<8x8x32xbf16>
    %c0_51 = arith.constant 0 : index
    %c1_52 = arith.constant 1 : index
    %c0_53 = arith.constant 0 : index
    %c1_54 = arith.constant 1 : index
    %c0_55 = arith.constant 0 : index
    %23 = vector.load %arg1[%c0_51, %c1_52, %c0_53, %c1_54, %c0_55] : memref<1x4x9x9x32xbf16, #tpu.memory_space<vmem>>, vector<1x1x8x8x32xbf16>
    %24 = vector.shape_cast %23 : vector<1x1x8x8x32xbf16> to vector<8x8x32xbf16>
    %c0_56 = arith.constant 0 : index
    %c3_57 = arith.constant 3 : index
    %c0_58 = arith.constant 0 : index
    %c0_59 = arith.constant 0 : index
    %c0_60 = arith.constant 0 : index
    %25 = vector.load %arg1[%c0_56, %c3_57, %c0_58, %c0_59, %c0_60] : memref<1x4x9x9x32xbf16, #tpu.memory_space<vmem>>, vector<1x1x8x8x32xbf16>
    %26 = vector.shape_cast %25 : vector<1x1x8x8x32xbf16> to vector<8x8x32xbf16>
    %c0_61 = arith.constant 0 : index
    %c2_62 = arith.constant 2 : index
    %c0_63 = arith.constant 0 : index
    %c1_64 = arith.constant 1 : index
    %c0_65 = arith.constant 0 : index
    %27 = vector.load %arg1[%c0_61, %c2_62, %c0_63, %c1_64, %c0_65] : memref<1x4x9x9x32xbf16, #tpu.memory_space<vmem>>, vector<1x1x8x8x32xbf16>
    %28 = vector.shape_cast %27 : vector<1x1x8x8x32xbf16> to vector<8x8x32xbf16>
    %c0_66 = arith.constant 0 : index
    %c3_67 = arith.constant 3 : index
    %c0_68 = arith.constant 0 : index
    %c1_69 = arith.constant 1 : index
    %c0_70 = arith.constant 0 : index
    %29 = vector.load %arg1[%c0_66, %c3_67, %c0_68, %c1_69, %c0_70] : memref<1x4x9x9x32xbf16, #tpu.memory_space<vmem>>, vector<1x1x8x8x32xbf16>
    %30 = vector.shape_cast %29 : vector<1x1x8x8x32xbf16> to vector<8x8x32xbf16>
    %c0_71 = arith.constant 0 : index
    %c1_72 = arith.constant 1 : index
    %c1_73 = arith.constant 1 : index
    %c0_74 = arith.constant 0 : index
    %c0_75 = arith.constant 0 : index
    %31 = vector.load %arg1[%c0_71, %c1_72, %c1_73, %c0_74, %c0_75] : memref<1x4x9x9x32xbf16, #tpu.memory_space<vmem>>, vector<1x1x8x8x32xbf16>
    %32 = vector.shape_cast %31 : vector<1x1x8x8x32xbf16> to vector<8x8x32xbf16>
    %c0_76 = arith.constant 0 : index
    %c0_77 = arith.constant 0 : index
    %c1_78 = arith.constant 1 : index
    %c1_79 = arith.constant 1 : index
    %c0_80 = arith.constant 0 : index
    %33 = vector.load %arg1[%c0_76, %c0_77, %c1_78, %c1_79, %c0_80] : memref<1x4x9x9x32xbf16, #tpu.memory_space<vmem>>, vector<1x1x8x8x32xbf16>
    %34 = vector.shape_cast %33 : vector<1x1x8x8x32xbf16> to vector<8x8x32xbf16>
    %c0_81 = arith.constant 0 : index
    %c1_82 = arith.constant 1 : index
    %c1_83 = arith.constant 1 : index
    %c1_84 = arith.constant 1 : index
    %c0_85 = arith.constant 0 : index
    %35 = vector.load %arg1[%c0_81, %c1_82, %c1_83, %c1_84, %c0_85] : memref<1x4x9x9x32xbf16, #tpu.memory_space<vmem>>, vector<1x1x8x8x32xbf16>
    %36 = vector.shape_cast %35 : vector<1x1x8x8x32xbf16> to vector<8x8x32xbf16>
    %37 = tpu.concatenate %20, %22, %24, %26, %28, %30, %32, %34, %36 in 2 : vector<8x8x32xbf16>, vector<8x8x32xbf16>, vector<8x8x32xbf16>, vector<8x8x32xbf16>, vector<8x8x32xbf16>, vector<8x8x32xbf16>, vector<8x8x32xbf16>, vector<8x8x32xbf16>, vector<8x8x32xbf16> -> vector<8x8x288xbf16>
    %c0_86 = arith.constant 0 : index
    %c2_87 = arith.constant 2 : index
    %c0_88 = arith.constant 0 : index
    %c0_89 = arith.constant 0 : index
    %c0_90 = arith.constant 0 : index
    %38 = vector.load %arg1[%c0_86, %c2_87, %c0_88, %c0_89, %c0_90] : memref<1x4x9x9x32xbf16, #tpu.memory_space<vmem>>, vector<1x1x8x8x32xbf16>
    %39 = vector.shape_cast %38 : vector<1x1x8x8x32xbf16> to vector<8x8x32xbf16>
    %c0_91 = arith.constant 0 : index
    %c3_92 = arith.constant 3 : index
    %c0_93 = arith.constant 0 : index
    %c0_94 = arith.constant 0 : index
    %c0_95 = arith.constant 0 : index
    %40 = vector.load %arg1[%c0_91, %c3_92, %c0_93, %c0_94, %c0_95] : memref<1x4x9x9x32xbf16, #tpu.memory_space<vmem>>, vector<1x1x8x8x32xbf16>
    %41 = vector.shape_cast %40 : vector<1x1x8x8x32xbf16> to vector<8x8x32xbf16>
    %c0_96 = arith.constant 0 : index
    %c2_97 = arith.constant 2 : index
    %c0_98 = arith.constant 0 : index
    %c1_99 = arith.constant 1 : index
    %c0_100 = arith.constant 0 : index
    %42 = vector.load %arg1[%c0_96, %c2_97, %c0_98, %c1_99, %c0_100] : memref<1x4x9x9x32xbf16, #tpu.memory_space<vmem>>, vector<1x1x8x8x32xbf16>
    %43 = vector.shape_cast %42 : vector<1x1x8x8x32xbf16> to vector<8x8x32xbf16>
    %c0_101 = arith.constant 0 : index
    %c0_102 = arith.constant 0 : index
    %c1_103 = arith.constant 1 : index
    %c0_104 = arith.constant 0 : index
    %c0_105 = arith.constant 0 : index
    %44 = vector.load %arg1[%c0_101, %c0_102, %c1_103, %c0_104, %c0_105] : memref<1x4x9x9x32xbf16, #tpu.memory_space<vmem>>, vector<1x1x8x8x32xbf16>
    %45 = vector.shape_cast %44 : vector<1x1x8x8x32xbf16> to vector<8x8x32xbf16>
    %c0_106 = arith.constant 0 : index
    %c1_107 = arith.constant 1 : index
    %c1_108 = arith.constant 1 : index
    %c0_109 = arith.constant 0 : index
    %c0_110 = arith.constant 0 : index
    %46 = vector.load %arg1[%c0_106, %c1_107, %c1_108, %c0_109, %c0_110] : memref<1x4x9x9x32xbf16, #tpu.memory_space<vmem>>, vector<1x1x8x8x32xbf16>
    %47 = vector.shape_cast %46 : vector<1x1x8x8x32xbf16> to vector<8x8x32xbf16>
    %c0_111 = arith.constant 0 : index
    %c0_112 = arith.constant 0 : index
    %c1_113 = arith.constant 1 : index
    %c1_114 = arith.constant 1 : index
    %c0_115 = arith.constant 0 : index
    %48 = vector.load %arg1[%c0_111, %c0_112, %c1_113, %c1_114, %c0_115] : memref<1x4x9x9x32xbf16, #tpu.memory_space<vmem>>, vector<1x1x8x8x32xbf16>
    %49 = vector.shape_cast %48 : vector<1x1x8x8x32xbf16> to vector<8x8x32xbf16>
    %c0_116 = arith.constant 0 : index
    %c2_117 = arith.constant 2 : index
    %c1_118 = arith.constant 1 : index
    %c0_119 = arith.constant 0 : index
    %c0_120 = arith.constant 0 : index
    %50 = vector.load %arg1[%c0_116, %c2_117, %c1_118, %c0_119, %c0_120] : memref<1x4x9x9x32xbf16, #tpu.memory_space<vmem>>, vector<1x1x8x8x32xbf16>
    %51 = vector.shape_cast %50 : vector<1x1x8x8x32xbf16> to vector<8x8x32xbf16>
    %c0_121 = arith.constant 0 : index
    %c3_122 = arith.constant 3 : index
    %c1_123 = arith.constant 1 : index
    %c0_124 = arith.constant 0 : index
    %c0_125 = arith.constant 0 : index
    %52 = vector.load %arg1[%c0_121, %c3_122, %c1_123, %c0_124, %c0_125] : memref<1x4x9x9x32xbf16, #tpu.memory_space<vmem>>, vector<1x1x8x8x32xbf16>
    %53 = vector.shape_cast %52 : vector<1x1x8x8x32xbf16> to vector<8x8x32xbf16>
    %c0_126 = arith.constant 0 : index
    %c2_127 = arith.constant 2 : index
    %c1_128 = arith.constant 1 : index
    %c1_129 = arith.constant 1 : index
    %c0_130 = arith.constant 0 : index
    %54 = vector.load %arg1[%c0_126, %c2_127, %c1_128, %c1_129, %c0_130] : memref<1x4x9x9x32xbf16, #tpu.memory_space<vmem>>, vector<1x1x8x8x32xbf16>
    %55 = vector.shape_cast %54 : vector<1x1x8x8x32xbf16> to vector<8x8x32xbf16>
    %56 = tpu.concatenate %39, %41, %43, %45, %47, %49, %51, %53, %55 in 2 : vector<8x8x32xbf16>, vector<8x8x32xbf16>, vector<8x8x32xbf16>, vector<8x8x32xbf16>, vector<8x8x32xbf16>, vector<8x8x32xbf16>, vector<8x8x32xbf16>, vector<8x8x32xbf16>, vector<8x8x32xbf16> -> vector<8x8x288xbf16>
    %c0_131 = arith.constant 0 : index
    %c3_132 = arith.constant 3 : index
    %c0_133 = arith.constant 0 : index
    %c0_134 = arith.constant 0 : index
    %c0_135 = arith.constant 0 : index
    %57 = vector.load %arg1[%c0_131, %c3_132, %c0_133, %c0_134, %c0_135] : memref<1x4x9x9x32xbf16, #tpu.memory_space<vmem>>, vector<1x1x8x8x32xbf16>
    %58 = vector.shape_cast %57 : vector<1x1x8x8x32xbf16> to vector<8x8x32xbf16>
    %c0_136 = arith.constant 0 : index
    %c2_137 = arith.constant 2 : index
    %c0_138 = arith.constant 0 : index
    %c1_139 = arith.constant 1 : index
    %c0_140 = arith.constant 0 : index
    %59 = vector.load %arg1[%c0_136, %c2_137, %c0_138, %c1_139, %c0_140] : memref<1x4x9x9x32xbf16, #tpu.memory_space<vmem>>, vector<1x1x8x8x32xbf16>
    %60 = vector.shape_cast %59 : vector<1x1x8x8x32xbf16> to vector<8x8x32xbf16>
    %c0_141 = arith.constant 0 : index
    %c3_142 = arith.constant 3 : index
    %c0_143 = arith.constant 0 : index
    %c1_144 = arith.constant 1 : index
    %c0_145 = arith.constant 0 : index
    %61 = vector.load %arg1[%c0_141, %c3_142, %c0_143, %c1_144, %c0_145] : memref<1x4x9x9x32xbf16, #tpu.memory_space<vmem>>, vector<1x1x8x8x32xbf16>
    %62 = vector.shape_cast %61 : vector<1x1x8x8x32xbf16> to vector<8x8x32xbf16>
    %c0_146 = arith.constant 0 : index
    %c1_147 = arith.constant 1 : index
    %c1_148 = arith.constant 1 : index
    %c0_149 = arith.constant 0 : index
    %c0_150 = arith.constant 0 : index
    %63 = vector.load %arg1[%c0_146, %c1_147, %c1_148, %c0_149, %c0_150] : memref<1x4x9x9x32xbf16, #tpu.memory_space<vmem>>, vector<1x1x8x8x32xbf16>
    %64 = vector.shape_cast %63 : vector<1x1x8x8x32xbf16> to vector<8x8x32xbf16>
    %c0_151 = arith.constant 0 : index
    %c0_152 = arith.constant 0 : index
    %c1_153 = arith.constant 1 : index
    %c1_154 = arith.constant 1 : index
    %c0_155 = arith.constant 0 : index
    %65 = vector.load %arg1[%c0_151, %c0_152, %c1_153, %c1_154, %c0_155] : memref<1x4x9x9x32xbf16, #tpu.memory_space<vmem>>, vector<1x1x8x8x32xbf16>
    %66 = vector.shape_cast %65 : vector<1x1x8x8x32xbf16> to vector<8x8x32xbf16>
    %c0_156 = arith.constant 0 : index
    %c1_157 = arith.constant 1 : index
    %c1_158 = arith.constant 1 : index
    %c1_159 = arith.constant 1 : index
    %c0_160 = arith.constant 0 : index
    %67 = vector.load %arg1[%c0_156, %c1_157, %c1_158, %c1_159, %c0_160] : memref<1x4x9x9x32xbf16, #tpu.memory_space<vmem>>, vector<1x1x8x8x32xbf16>
    %68 = vector.shape_cast %67 : vector<1x1x8x8x32xbf16> to vector<8x8x32xbf16>
    %c0_161 = arith.constant 0 : index
    %c3_162 = arith.constant 3 : index
    %c1_163 = arith.constant 1 : index
    %c0_164 = arith.constant 0 : index
    %c0_165 = arith.constant 0 : index
    %69 = vector.load %arg1[%c0_161, %c3_162, %c1_163, %c0_164, %c0_165] : memref<1x4x9x9x32xbf16, #tpu.memory_space<vmem>>, vector<1x1x8x8x32xbf16>
    %70 = vector.shape_cast %69 : vector<1x1x8x8x32xbf16> to vector<8x8x32xbf16>
    %c0_166 = arith.constant 0 : index
    %c2_167 = arith.constant 2 : index
    %c1_168 = arith.constant 1 : index
    %c1_169 = arith.constant 1 : index
    %c0_170 = arith.constant 0 : index
    %71 = vector.load %arg1[%c0_166, %c2_167, %c1_168, %c1_169, %c0_170] : memref<1x4x9x9x32xbf16, #tpu.memory_space<vmem>>, vector<1x1x8x8x32xbf16>
    %72 = vector.shape_cast %71 : vector<1x1x8x8x32xbf16> to vector<8x8x32xbf16>
    %c0_171 = arith.constant 0 : index
    %c3_172 = arith.constant 3 : index
    %c1_173 = arith.constant 1 : index
    %c1_174 = arith.constant 1 : index
    %c0_175 = arith.constant 0 : index
    %73 = vector.load %arg1[%c0_171, %c3_172, %c1_173, %c1_174, %c0_175] : memref<1x4x9x9x32xbf16, #tpu.memory_space<vmem>>, vector<1x1x8x8x32xbf16>
    %74 = vector.shape_cast %73 : vector<1x1x8x8x32xbf16> to vector<8x8x32xbf16>
    %75 = tpu.concatenate %58, %60, %62, %64, %66, %68, %70, %72, %74 in 2 : vector<8x8x32xbf16>, vector<8x8x32xbf16>, vector<8x8x32xbf16>, vector<8x8x32xbf16>, vector<8x8x32xbf16>, vector<8x8x32xbf16>, vector<8x8x32xbf16>, vector<8x8x32xbf16>, vector<8x8x32xbf16> -> vector<8x8x288xbf16>
    %76 = vector.shape_cast %18 : vector<8x8x288xbf16> to vector<1x8x8x288xbf16>
    %77 = vector.shape_cast %37 : vector<8x8x288xbf16> to vector<1x8x8x288xbf16>
    %78 = vector.shape_cast %56 : vector<8x8x288xbf16> to vector<1x8x8x288xbf16>
    %79 = vector.shape_cast %75 : vector<8x8x288xbf16> to vector<1x8x8x288xbf16>
    %80 = tpu.concatenate %76, %77, %78, %79 in 0 : vector<1x8x8x288xbf16>, vector<1x8x8x288xbf16>, vector<1x8x8x288xbf16>, vector<1x8x8x288xbf16> -> vector<4x8x8x288xbf16>
    %81 = vector.shape_cast %80 : vector<4x8x8x288xbf16> to vector<256x288xbf16>
    %c0_176 = arith.constant 0 : index
    %c0_177 = arith.constant 0 : index
    %82 = vector.load %arg2[%c0_176, %c0_177] : memref<288x128xbf16, #tpu.memory_space<vmem>>, vector<288x128xbf16>
    %cst = arith.constant dense<0.000000e+00> : vector<256x128xf32>
    %83 = tpu.matmul %81, %82, %cst {dimension_numbers = #tpu.dot_dimension_numbers<[1], [0], [0], [1], [0, 0, 1, 1], [], []>} : vector<256x288xbf16>, vector<288x128xbf16>, vector<256x128xf32> -> vector<256x128xf32>
    %84 = vector.extract_strided_slice %83 {offsets = [0, 0], sizes = [64, 128], strides = [1, 1]} : vector<256x128xf32> to vector<64x128xf32>
    %85 = vector.extract_strided_slice %83 {offsets = [64, 0], sizes = [64, 128], strides = [1, 1]} : vector<256x128xf32> to vector<64x128xf32>
    %86 = arith.maximumf %84, %85 : vector<64x128xf32>
    %87 = vector.extract_strided_slice %83 {offsets = [128, 0], sizes = [64, 128], strides = [1, 1]} : vector<256x128xf32> to vector<64x128xf32>
    %88 = vector.extract_strided_slice %83 {offsets = [192, 0], sizes = [64, 128], strides = [1, 1]} : vector<256x128xf32> to vector<64x128xf32>
    %89 = arith.maximumf %87, %88 : vector<64x128xf32>
    %90 = arith.maximumf %86, %89 : vector<64x128xf32>
    %c0_178 = arith.constant 0 : index
    %c0_179 = arith.constant 0 : index
    %91 = vector.load %arg3[%c0_178, %c0_179] : memref<1x128xf32, #tpu.memory_space<vmem>>, vector<1x128xf32>
    %92 = vector.broadcast %91 : vector<1x128xf32> to vector<64x128xf32>
    %93 = arith.addf %90, %92 : vector<64x128xf32>
    %cst_180 = arith.constant 0.000000e+00 : f32
    %94 = vector.broadcast %cst_180 : f32 to vector<64x128xf32>
    %95 = arith.maximumf %93, %94 : vector<64x128xf32>
    %96 = vector.shape_cast %95 : vector<64x128xf32> to vector<8x8x128xf32>
    %97 = arith.truncf %96 : vector<8x8x128xf32> to vector<8x8x128xbf16>
    %c0_181 = arith.constant 0 : index
    %c0_182 = arith.constant 0 : index
    %c0_183 = arith.constant 0 : index
    %c0_184 = arith.constant 0 : index
    %98 = vector.load %arg4[%c0_181, %c0_182, %c0_183, %c0_184] : memref<1x8x8x128xbf16, #tpu.memory_space<vmem>>, vector<1x8x8x128xbf16>
    %99 = vector.shape_cast %98 : vector<1x8x8x128xbf16> to vector<8x8x128xbf16>
    %100 = vector.shape_cast %97 : vector<8x8x128xbf16> to vector<1x8x8x128xbf16>
    tpu.vector_store %arg4[%c0_181, %c0_182, %c0_183, %c0_184], %100 {strides = array<i32>} : memref<1x8x8x128xbf16, #tpu.memory_space<vmem>>, vector<1x8x8x128xbf16>,
    return
  }
  func.func @transform_0(%arg0: i32) -> (i32, i32, i32, i32, i32) {
    %c0_i32 = arith.constant 0 : i32
    %c0_i32_0 = arith.constant 0 : i32
    %c0_i32_1 = arith.constant 0 : i32
    %c0_i32_2 = arith.constant 0 : i32
    %c0_i32_3 = arith.constant 0 : i32
    return %arg0, %c0_i32, %c0_i32_0, %c0_i32_1, %c0_i32_2 : i32, i32, i32, i32, i32
  }
  func.func @transform_1(%arg0: i32) -> (i32, i32) {
    %c0_i32 = arith.constant 0 : i32
    %c0_i32_0 = arith.constant 0 : i32
    %c0_i32_1 = arith.constant 0 : i32
    return %c0_i32, %c0_i32_0 : i32, i32
  }
  func.func @transform_2(%arg0: i32) -> (i32, i32) {
    %c0_i32 = arith.constant 0 : i32
    %c0_i32_0 = arith.constant 0 : i32
    %c0_i32_1 = arith.constant 0 : i32
    return %c0_i32, %c0_i32_0 : i32, i32
  }
  func.func @transform_3(%arg0: i32) -> (i32, i32, i32, i32) {
    %c0_i32 = arith.constant 0 : i32
    %c0_i32_0 = arith.constant 0 : i32
    %c0_i32_1 = arith.constant 0 : i32
    %c0_i32_2 = arith.constant 0 : i32
    return %arg0, %c0_i32, %c0_i32_0, %c0_i32_1 : i32, i32, i32, i32
  }
}

module attributes {stable_mosaic.version = 11 : i64} {
  func.func @_mlp_kernel(%arg0: i32, %arg1: memref<2x1024xbf16, #tpu.memory_space<vmem>>, %arg2: memref<1024x256xbf16, #tpu.memory_space<vmem>>, %arg3: memref<1x256xf32, #tpu.memory_space<vmem>>, %arg4: memref<256x10xbf16, #tpu.memory_space<vmem>>, %arg5: memref<1x10xf32, #tpu.memory_space<vmem>>, %arg6: memref<2x10xf32, #tpu.memory_space<vmem>>, %arg7: memref<2x256xf32, #tpu.memory_space<vmem>>) attributes {dimension_semantics = [#tpu.dimension_semantics<arbitrary>], iteration_bounds = array<i64: 4>, scalar_prefetch = 0 : i64, scratch_operands = 1 : i64, tpu.core_type = #tpu.core_type<tc>, window_params = [{transform_indices = @transform_0, window_bounds = array<i64: 2, 1024>}, {transform_indices = @transform_1, window_bounds = array<i64: 1024, 256>}, {pipeline_mode = #tpu.pipeline_mode<synchronous>, transform_indices = @transform_2, window_bounds = array<i64: 1, 256>}, {pipeline_mode = #tpu.pipeline_mode<synchronous>, transform_indices = @transform_3, window_bounds = array<i64: 256, 10>}, {pipeline_mode = #tpu.pipeline_mode<synchronous>, transform_indices = @transform_4, window_bounds = array<i64: 1, 10>}, {pipeline_mode = #tpu.pipeline_mode<synchronous>, transform_indices = @transform_5, window_bounds = array<i64: 2, 10>}]} {
    %c0_i32 = arith.constant 0 : i32
    %0 = arith.cmpi eq, %arg0, %c0_i32 : i32
    %1 = arith.extui %0 : i1 to i32
    %c0_i32_0 = arith.constant 0 : i32
    %2 = arith.cmpi ne, %1, %c0_i32_0 : i32
    scf.if %2 {
      %cst_9 = arith.constant 0.000000e+00 : f32
      %12 = vector.broadcast %cst_9 : f32 to vector<2x256xf32>
      %c0_10 = arith.constant 0 : index
      %c0_11 = arith.constant 0 : index
      %13 = vector.load %arg7[%c0_10, %c0_11] : memref<2x256xf32, #tpu.memory_space<vmem>>, vector<2x256xf32>
      tpu.vector_store %arg7[%c0_10, %c0_11], %12 {strides = array<i32>} : memref<2x256xf32, #tpu.memory_space<vmem>>, vector<2x256xf32>,
    } else {
    }
    %c0 = arith.constant 0 : index
    %c0_1 = arith.constant 0 : index
    %3 = vector.load %arg7[%c0, %c0_1] : memref<2x256xf32, #tpu.memory_space<vmem>>, vector<2x256xf32>
    %c0_2 = arith.constant 0 : index
    %c0_3 = arith.constant 0 : index
    %4 = vector.load %arg1[%c0_2, %c0_3] : memref<2x1024xbf16, #tpu.memory_space<vmem>>, vector<2x1024xbf16>
    %c0_4 = arith.constant 0 : index
    %c0_5 = arith.constant 0 : index
    %5 = vector.load %arg2[%c0_4, %c0_5] : memref<1024x256xbf16, #tpu.memory_space<vmem>>, vector<1024x256xbf16>
    %cst = arith.constant dense<0.000000e+00> : vector<2x256xf32>
    %6 = tpu.matmul %4, %5, %cst {dimension_numbers = #tpu.dot_dimension_numbers<[1], [0], [0], [1], [0, 0, 1, 1], [], []>} : vector<2x1024xbf16>, vector<1024x256xbf16>, vector<2x256xf32> -> vector<2x256xf32>
    %7 = arith.addf %3, %6 : vector<2x256xf32>
    %c0_6 = arith.constant 0 : index
    %c0_7 = arith.constant 0 : index
    %8 = vector.load %arg7[%c0_6, %c0_7] : memref<2x256xf32, #tpu.memory_space<vmem>>, vector<2x256xf32>
    tpu.vector_store %arg7[%c0_6, %c0_7], %7 {strides = array<i32>} : memref<2x256xf32, #tpu.memory_space<vmem>>, vector<2x256xf32>,
    %c3_i32 = arith.constant 3 : i32
    %9 = arith.cmpi eq, %arg0, %c3_i32 : i32
    %10 = arith.extui %9 : i1 to i32
    %c0_i32_8 = arith.constant 0 : i32
    %11 = arith.cmpi ne, %10, %c0_i32_8 : i32
    scf.if %11 {
      %c0_9 = arith.constant 0 : index
      %c0_10 = arith.constant 0 : index
      %12 = vector.load %arg7[%c0_9, %c0_10] : memref<2x256xf32, #tpu.memory_space<vmem>>, vector<2x256xf32>
      %c0_11 = arith.constant 0 : index
      %c0_12 = arith.constant 0 : index
      %13 = vector.load %arg3[%c0_11, %c0_12] : memref<1x256xf32, #tpu.memory_space<vmem>>, vector<1x256xf32>
      %14 = vector.broadcast %13 : vector<1x256xf32> to vector<2x256xf32>
      %15 = arith.addf %12, %14 : vector<2x256xf32>
      %cst_13 = arith.constant 0.000000e+00 : f32
      %16 = vector.broadcast %cst_13 : f32 to vector<2x256xf32>
      %17 = arith.maximumf %15, %16 : vector<2x256xf32>
      %18 = arith.truncf %17 : vector<2x256xf32> to vector<2x256xbf16>
      %c0_14 = arith.constant 0 : index
      %c0_15 = arith.constant 0 : index
      %19 = vector.load %arg4[%c0_14, %c0_15] : memref<256x10xbf16, #tpu.memory_space<vmem>>, vector<256x10xbf16>
      %cst_16 = arith.constant dense<0.000000e+00> : vector<2x10xf32>
      %20 = tpu.matmul %18, %19, %cst_16 {dimension_numbers = #tpu.dot_dimension_numbers<[1], [0], [0], [1], [0, 0, 1, 1], [], []>} : vector<2x256xbf16>, vector<256x10xbf16>, vector<2x10xf32> -> vector<2x10xf32>
      %c0_17 = arith.constant 0 : index
      %c0_18 = arith.constant 0 : index
      %21 = vector.load %arg5[%c0_17, %c0_18] : memref<1x10xf32, #tpu.memory_space<vmem>>, vector<1x10xf32>
      %22 = vector.broadcast %21 : vector<1x10xf32> to vector<2x10xf32>
      %23 = arith.addf %20, %22 : vector<2x10xf32>
      %c0_19 = arith.constant 0 : index
      %c0_20 = arith.constant 0 : index
      %24 = vector.load %arg6[%c0_19, %c0_20] : memref<2x10xf32, #tpu.memory_space<vmem>>, vector<2x10xf32>
      tpu.vector_store %arg6[%c0_19, %c0_20], %23 {strides = array<i32>} : memref<2x10xf32, #tpu.memory_space<vmem>>, vector<2x10xf32>,
    } else {
    }
    return
  }
  func.func @transform_0(%arg0: i32) -> (i32, i32) {
    %c0_i32 = arith.constant 0 : i32
    %c0_i32_0 = arith.constant 0 : i32
    return %c0_i32, %arg0 : i32, i32
  }
  func.func @transform_1(%arg0: i32) -> (i32, i32) {
    %c0_i32 = arith.constant 0 : i32
    %c0_i32_0 = arith.constant 0 : i32
    return %arg0, %c0_i32 : i32, i32
  }
  func.func @transform_2(%arg0: i32) -> (i32, i32) {
    %c0_i32 = arith.constant 0 : i32
    %c0_i32_0 = arith.constant 0 : i32
    %c0_i32_1 = arith.constant 0 : i32
    return %c0_i32, %c0_i32_0 : i32, i32
  }
  func.func @transform_3(%arg0: i32) -> (i32, i32) {
    %c0_i32 = arith.constant 0 : i32
    %c0_i32_0 = arith.constant 0 : i32
    %c0_i32_1 = arith.constant 0 : i32
    return %c0_i32, %c0_i32_0 : i32, i32
  }
  func.func @transform_4(%arg0: i32) -> (i32, i32) {
    %c0_i32 = arith.constant 0 : i32
    %c0_i32_0 = arith.constant 0 : i32
    %c0_i32_1 = arith.constant 0 : i32
    return %c0_i32, %c0_i32_0 : i32, i32
  }
  func.func @transform_5(%arg0: i32) -> (i32, i32) {
    %c0_i32 = arith.constant 0 : i32
    %c0_i32_0 = arith.constant 0 : i32
    %c0_i32_1 = arith.constant 0 : i32
    return %c0_i32, %c0_i32_0 : i32, i32
  }
}

</mosaic_0001>

<llo_original>
// kernel: road_sign_cnn_forward.5
$region0: #{road_sign_cnn_forward.5}
  #allocation0 [shape = 'u32[]', space=smem, size = 0x4, offset = 0x4, fixed_abs, tag = 'smem constant byte address 0x4 - core index']
  #allocation1 [shape = 'u32[144,128]{1,0:T(1,128)}', space=vmem, size = 0x12000, scoped, tag = 'internal scratch']
  #allocation2 [shape = 'f32[2,256]{1,0:T(2,128)}', space=vmem, size = 0x800, scoped, tag = 'scratch operand']
  %s0 = inlined_call_operand.vmem [shape: bf16[2,4096], index: 0, kind: input, shape index: {}]
  %s1 = inlined_call_operand.vmem [shape: bf16[4096,256], index: 1, kind: input, shape index: {}]
  %s2 = inlined_call_operand.vmem [shape: f32[1,256], index: 2, kind: input, shape index: {}]
  %s3 = inlined_call_operand.vmem [shape: bf16[256,10], index: 3, kind: input, shape index: {}]
  %s4 = inlined_call_operand.vmem [shape: f32[1,10], index: 4, kind: input, shape index: {}]
  %s5 = inlined_call_operand.hbm [shape: f32[2,10], index: 5, kind: output, shape index: {}]
  %s6 = sld [smem:[#allocation0]]
  $region61: #{road_sign_cnn_forward.5} parent=0
    _
  %s8 = ssub.s32 1, %s6
  %s9 = scalar_select 0, %s8, %s6
  $region1: #{road_sign_cnn_forward.5} parent=0
    #allocation3 [shape = 'u8[1024]{0}', space=vmem, size = 0x400, scoped, tag = 'output window, operand 0, single buffered']
    #allocation4 [shape = 's32[2]{0}', space=sflag, size = 0x8, scoped, tag = 'scoped memory for road_sign_cnn_forward.5']
    %10 = vsyncpa [#allocation4], 0
    loop: start=0, step=1, limit=6
    $region2: #{road_sign_cnn_forward.5} parent=1 // loop_pre_header
      _
    $region3: #{road_sign_cnn_forward.5} parent=1 // loop_header
      %s12 = sphi 0, %s16
      %p13 = scmp.ge.s32.totalorder %s12, 6
      %s22 = sphi 0, %s24
      %s25 = sphi 0, %s22
      %s26 = sphi 0, %s25
      %s42 = sphi 0, %s26
      %s48 = sphi 0, %s50
      %s51 = sphi 0, %s48
      %s52 = sphi 0, %s51
      %s68 = sphi 0, %s52
      %s72 = sphi 0, %s72
      %s74 = sphi 0, %s72
      %s75 = sphi 0, %s74
      %s89 = sphi 0, %s75
      %s93 = sphi 0, %s93
      %s95 = sphi 0, %s93
      %s96 = sphi 0, %s95
      %s110 = sphi 0, %s96
      %s114 = sphi 0, %s114
      %s116 = sphi 0, %s114
      %s117 = sphi 0, %s116
      %s131 = sphi 0, %s117
      %s135 = sphi 0, %s135
      %s137 = sphi 0, %s135
      %s138 = sphi 0, %s137
      %s152 = sphi 0, %s138
    $region4: #{road_sign_cnn_forward.5} parent=1 // loop_header_branch
      %15 = sbr.rel (%p13) target = $region8
    $region5: #{road_sign_cnn_forward.5} parent=1 // loop_body
      %s17 = ssub.s32 %s12, 1
      %s18 = ssub.s32 %s12, 2
      %s19 = sadd.s32 %s12, 1
      %s20 = ssub.s32 %s12, %s19
      %p21 = scmp.eq.s32.totalorder %s20, 0
      %s23 = sadd.s32 %s22, 1
      %s24 = scalar_select %p21, %s22, %s23
      %p27 = pneg %p21
      %p28 = scmp.eq.s32.totalorder %s12, 3
      %p29 = por %p27, %p28
      %p30 = scmp.ne.s32.totalorder %s22, %s25
      %p31 = scmp.eq.s32.totalorder %s12, 0
      %p32 = por %p30, %p31
      %p33 = scmp.ne.s32.totalorder %s22, %s25
      %p34 = scmp.eq.s32.totalorder %s17, 3
      %p35 = por %p33, %p34
      %p36 = scmp.ne.s32.totalorder %s25, %s26
      %p37 = scmp.eq.s32.totalorder %s17, 0
      %p38 = por %p36, %p37
      %p39 = scmp.ne.s32.totalorder %s25, %s26
      %p40 = scmp.eq.s32.totalorder %s18, 3
      %p41 = por %p39, %p40
      %p43 = scmp.ne.s32.totalorder %s26, %s42
      %p44 = scmp.eq.s32.totalorder %s18, 0
      %p45 = por %p43, %p44
      %s46 = ssub.s32 %s12, %s19
      %p47 = scmp.eq.s32.totalorder %s46, 0
      %s49 = sadd.s32 %s48, 1
      %s50 = scalar_select %p47, %s48, %s49
      %p53 = pneg %p47
      %p54 = scmp.eq.s32.totalorder %s12, 3
      %p55 = por %p53, %p54
      %p56 = scmp.ne.s32.totalorder %s48, %s51
      %p57 = scmp.eq.s32.totalorder %s12, 0
      %p58 = por %p56, %p57
      %p59 = scmp.ne.s32.totalorder %s48, %s51
      %p60 = scmp.eq.s32.totalorder %s17, 3
      %p61 = por %p59, %p60
      %p62 = scmp.ne.s32.totalorder %s51, %s52
      %p63 = scmp.eq.s32.totalorder %s17, 0
      %p64 = por %p62, %p63
      %p65 = scmp.ne.s32.totalorder %s51, %s52
      %p66 = scmp.eq.s32.totalorder %s18, 3
      %p67 = por %p65, %p66
      %p69 = scmp.ne.s32.totalorder %s52, %s68
      %p70 = scmp.eq.s32.totalorder %s18, 0
      %p71 = por %p69, %p70
      %s73 = sadd.s32 %s72, 1
      %p76 = scmp.eq.s32.totalorder %s12, 3
      %p77 = scmp.ne.s32.totalorder %s72, %s74
      %p78 = scmp.eq.s32.totalorder %s12, 0
      %p79 = por %p77, %p78
      %p80 = scmp.ne.s32.totalorder %s72, %s74
      %p81 = scmp.eq.s32.totalorder %s17, 3
      %p82 = por %p80, %p81
      %p83 = scmp.ne.s32.totalorder %s74, %s75
      %p84 = scmp.eq.s32.totalorder %s17, 0
      %p85 = por %p83, %p84
      %p86 = scmp.ne.s32.totalorder %s74, %s75
      %p87 = scmp.eq.s32.totalorder %s18, 3
      %p88 = por %p86, %p87
      %p90 = scmp.ne.s32.totalorder %s75, %s89
      %p91 = scmp.eq.s32.totalorder %s18, 0
      %p92 = por %p90, %p91
      %s94 = sadd.s32 %s93, 1
      %p97 = scmp.eq.s32.totalorder %s12, 3
      %p98 = scmp.ne.s32.totalorder %s93, %s95
      %p99 = scmp.eq.s32.totalorder %s12, 0
      %p100 = por %p98, %p99
      %p101 = scmp.ne.s32.totalorder %s93, %s95
      %p102 = scmp.eq.s32.totalorder %s17, 3
      %p103 = por %p101, %p102
      %p104 = scmp.ne.s32.totalorder %s95, %s96
      %p105 = scmp.eq.s32.totalorder %s17, 0
      %p106 = por %p104, %p105
      %p107 = scmp.ne.s32.totalorder %s95, %s96
      %p108 = scmp.eq.s32.totalorder %s18, 3
      %p109 = por %p107, %p108
      %p111 = scmp.ne.s32.totalorder %s96, %s110
      %p112 = scmp.eq.s32.totalorder %s18, 0
      %p113 = por %p111, %p112
      %s115 = sadd.s32 %s114, 1
      %p118 = scmp.eq.s32.totalorder %s12, 3
      %p119 = scmp.ne.s32.totalorder %s114, %s116
      %p120 = scmp.eq.s32.totalorder %s12, 0
      %p121 = por %p119, %p120
      %p122 = scmp.ne.s32.totalorder %s114, %s116
      %p123 = scmp.eq.s32.totalorder %s17, 3
      %p124 = por %p122, %p123
      %p125 = scmp.ne.s32.totalorder %s116, %s117
      %p126 = scmp.eq.s32.totalorder %s17, 0
      %p127 = por %p125, %p126
      %p128 = scmp.ne.s32.totalorder %s116, %s117
      %p129 = scmp.eq.s32.totalorder %s18, 3
      %p130 = por %p128, %p129
      %p132 = scmp.ne.s32.totalorder %s117, %s131
      %p133 = scmp.eq.s32.totalorder %s18, 0
      %p134 = por %p132, %p133
      %s136 = sadd.s32 %s135, 1
      %p139 = scmp.eq.s32.totalorder %s12, 3
      %p140 = scmp.ne.s32.totalorder %s135, %s137
      %p141 = scmp.eq.s32.totalorder %s12, 0
      %p142 = por %p140, %p141
      %p143 = scmp.ne.s32.totalorder %s135, %s137
      %p144 = scmp.eq.s32.totalorder %s17, 3
      %p145 = por %p143, %p144
      %p146 = scmp.ne.s32.totalorder %s137, %s138
      %p147 = scmp.eq.s32.totalorder %s17, 0
      %p148 = por %p146, %p147
      %p149 = scmp.ne.s32.totalorder %s137, %s138
      %p150 = scmp.eq.s32.totalorder %s18, 3
      %p151 = por %p149, %p150
      %p153 = scmp.ne.s32.totalorder %s138, %s152
      %p154 = scmp.eq.s32.totalorder %s18, 0
      %p155 = por %p153, %p154
      %p156 = scmp.le.s32.totalorder 1, %s12
      %p157 = scmp.lt.s32.totalorder %s12, 5
      %p158 = pnand %p156, %p157
      %p159 = pneg %p158
      // Predicated region
      $region9: #{road_sign_cnn_forward.5} parent=5 // pred_check
        _
      $region10: #{road_sign_cnn_forward.5} parent=5 // pred_check_branch
        %161 = sbr.rel (%p158) target = $region12
      $region11: #{road_sign_cnn_forward.5} parent=5 // pred_region
        %s162 = ssub.s32 %s12, 1
        // Predicated region
        $region13: #{road_sign_cnn_forward.5} parent=11 // pred_check
          %p163 = pneg %p85
        $region14: #{road_sign_cnn_forward.5} parent=11 // pred_check_branch
          %165 = sbr.rel (%p163) target = $region16
        $region15: #{road_sign_cnn_forward.5} parent=11 // pred_region
          _
        $region16: #{road_sign_cnn_forward.5} parent=11 // pred_fallthru
          _
        // Predicated region
        $region17: #{road_sign_cnn_forward.5} parent=11 // pred_check
          %p166 = pneg %p106
        $region18: #{road_sign_cnn_forward.5} parent=11 // pred_check_branch
          %168 = sbr.rel (%p166) target = $region20
        $region19: #{road_sign_cnn_forward.5} parent=11 // pred_region
          _
        $region20: #{road_sign_cnn_forward.5} parent=11 // pred_fallthru
          _
        // Predicated region
        $region21: #{road_sign_cnn_forward.5} parent=11 // pred_check
          %p169 = pneg %p127
        $region22: #{road_sign_cnn_forward.5} parent=11 // pred_check_branch
          %171 = sbr.rel (%p169) target = $region24
        $region23: #{road_sign_cnn_forward.5} parent=11 // pred_region
          _
        $region24: #{road_sign_cnn_forward.5} parent=11 // pred_fallthru
          _
      $region12: #{road_sign_cnn_forward.5} parent=5 // pred_fallthru
        _
      %p172 = scmp.lt.s32.totalorder %s12, 4
      // Predicated region
      $region25: #{road_sign_cnn_forward.5} parent=5 // pred_check
        %p173 = pneg %p172
      $region26: #{road_sign_cnn_forward.5} parent=5 // pred_check_branch
        %175 = sbr.rel (%p173) target = $region28
      $region27: #{road_sign_cnn_forward.5} parent=5 // pred_region
        // Predicated region
        $region29: #{road_sign_cnn_forward.5} parent=27 // pred_check
          %p176 = pneg %p32
        $region30: #{road_sign_cnn_forward.5} parent=27 // pred_check_branch
          %178 = sbr.rel (%p176) target = $region32
        $region31: #{road_sign_cnn_forward.5} parent=27 // pred_region
          %s179 = smul.u32 8, %s12
          %p180 = scmp.lt.s32.totalorder %s179, 31
          %s181 = scalar_select %p180, %s179, 31
          %s182 = scalar_lea.vmem %s0, %s181
          %s183 = smul.u32 8, %s12
        $region32: #{road_sign_cnn_forward.5} parent=27 // pred_fallthru
          _
        // Predicated region
        $region33: #{road_sign_cnn_forward.5} parent=27 // pred_check
          %p184 = pneg %p58
        $region34: #{road_sign_cnn_forward.5} parent=27 // pred_check_branch
          %186 = sbr.rel (%p184) target = $region36
        $region35: #{road_sign_cnn_forward.5} parent=27 // pred_region
          %s187 = smul.u32 128, %s12
          %p188 = scmp.lt.s32.totalorder %s187, 511
          %s189 = scalar_select %p188, %s187, 511
          %s190 = smul.addr %s189, 2
          %s191 = smul.addr %s190, 4
          %s192 = scalar_lea.vmem %s1, %s191
          %s193 = smul.u32 128, %s12
        $region36: #{road_sign_cnn_forward.5} parent=27 // pred_fallthru
          _
      $region28: #{road_sign_cnn_forward.5} parent=5 // pred_fallthru
        _
      %p194 = scmp.le.s32.totalorder 1, %s12
      %p195 = scmp.lt.s32.totalorder %s12, 5
      %p196 = pnand %p194, %p195
      %p197 = pneg %p196
      // Predicated region
      $region37: #{road_sign_cnn_forward.5} parent=5 // pred_check
        _
      $region38: #{road_sign_cnn_forward.5} parent=5 // pred_check_branch
        %199 = sbr.rel (%p196) target = $region40
      $region39: #{road_sign_cnn_forward.5} parent=5 // pred_region
        %s200 = ssub.s32 %s12, 1
        %s201 = smul.u32 8, %s17
        %p202 = scmp.lt.s32.totalorder %s201, 31
        %s203 = scalar_select %p202, %s201, 31
        %s204 = scalar_lea.vmem %s0, %s203
        %p205 = pneg %p38
        %p206 = pneg %p35
        %s207 = smul.u32 128, %s17
        %p208 = scmp.lt.s32.totalorder %s207, 511
        %s209 = scalar_select %p208, %s207, 511
        %s210 = smul.addr %s209, 2
        %s211 = smul.addr %s210, 4
        %s212 = scalar_lea.vmem %s1, %s211
        %p213 = pneg %p64
        %p214 = pneg %p61
        %p215 = pneg %p85
        %p216 = pneg %p82
        %p217 = pneg %p106
        %p218 = pneg %p103
        %p219 = pneg %p127
        %p220 = pneg %p124
        %p221 = pneg %p148
        %p222 = pneg %p145
        %s223 = smul.u32 8, %s17
        %p224 = scmp.lt.s32.totalorder %s223, 31
        %s225 = scalar_select %p224, %s223, 31
        %s226 = scalar_lea.vmem %s0, %s225
        %s227 = smul.u32 8, %s17
        %s228 = smul.u32 128, %s17
        %p229 = scmp.lt.s32.totalorder %s228, 511
        %s230 = scalar_select %p229, %s228, 511
        %s231 = smul.addr %s230, 2
        %s232 = smul.addr %s231, 4
        %s233 = scalar_lea.vmem %s1, %s232
        %s234 = smul.u32 128, %s17
        %p236 = scmp.eq.s32.totalorder %s17, 0
        // Predicated region
        $region41: #{road_sign_cnn_forward.5} parent=39 // pred_check
          %p237 = pneg %p236
        $region42: #{road_sign_cnn_forward.5} parent=39 // pred_check_branch
          %239 = sbr.rel (%p237) target = $region44
        $region43: #{road_sign_cnn_forward.5} parent=39 // pred_region
          %240 = vst [vmem:[#allocation2] sm:$0xf] 0.0
        $region44: #{road_sign_cnn_forward.5} parent=39 // pred_fallthru
          _
        %v241 = vld [vmem:[#allocation2] sm:$0xf]
        %v242 = vld [vmem:[%s226] sm:$0xff]
        %v243 = vld [vmem:[%s233] sm:$0xff]
        %v244 = vld [vmem:[%s233 + $0x8] sm:$0xff]
        %v245 = vld [vmem:[%s233 + $0x10] sm:$0xff]
        %v246 = vld [vmem:[%s233 + $0x18] sm:$0xff]
        %v247 = vld [vmem:[%s233 + $0x20] sm:$0xff]
        %v248 = vld [vmem:[%s233 + $0x28] sm:$0xff]
        %v249 = vld [vmem:[%s233 + $0x30] sm:$0xff]
        %v250 = vld [vmem:[%s233 + $0x38] sm:$0xff]
        %v251 = vld [vmem:[%s233 + $0x40] sm:$0xff]
        %v252 = vld [vmem:[%s233 + $0x48] sm:$0xff]
        %v253 = vld [vmem:[%s233 + $0x50] sm:$0xff]
        %v254 = vld [vmem:[%s233 + $0x58] sm:$0xff]
        %v255 = vld [vmem:[%s233 + $0x60] sm:$0xff]
        %v256 = vld [vmem:[%s233 + $0x68] sm:$0xff]
        %v257 = vld [vmem:[%s233 + $0x70] sm:$0xff]
        %v258 = vld [vmem:[%s233 + $0x78] sm:$0xff]
        %v259 = vld [vmem:[%s233 + $0x80] sm:$0xff]
        %v260 = vld [vmem:[%s233 + $0x88] sm:$0xff]
        %v261 = vld [vmem:[%s233 + $0x90] sm:$0xff]
        %v262 = vld [vmem:[%s233 + $0x98] sm:$0xff]
        %v263 = vld [vmem:[%s233 + $0xa0] sm:$0xff]
        %v264 = vld [vmem:[%s233 + $0xa8] sm:$0xff]
        %v265 = vld [vmem:[%s233 + $0xb0] sm:$0xff]
        %v266 = vld [vmem:[%s233 + $0xb8] sm:$0xff]
        %v267 = vld [vmem:[%s233 + $0xc0] sm:$0xff]
        %v268 = vld [vmem:[%s233 + $0xc8] sm:$0xff]
        %v269 = vld [vmem:[%s233 + $0xd0] sm:$0xff]
        %v270 = vld [vmem:[%s233 + $0xd8] sm:$0xff]
        %v271 = vld [vmem:[%s233 + $0xe0] sm:$0xff]
        %v272 = vld [vmem:[%s233 + $0xe8] sm:$0xff]
        %v273 = vld [vmem:[%s233 + $0xf0] sm:$0xff]
        %v274 = vld [vmem:[%s233 + $0xf8] sm:$0xff]
        %v275 = vld [vmem:[%s233 + $0x100] sm:$0xff]
        %v276 = vld [vmem:[%s233 + $0x108] sm:$0xff]
        %v277 = vld [vmem:[%s233 + $0x110] sm:$0xff]
        %v278 = vld [vmem:[%s233 + $0x118] sm:$0xff]
        %v279 = vld [vmem:[%s233 + $0x120] sm:$0xff]
        %v280 = vld [vmem:[%s233 + $0x128] sm:$0xff]
        %v281 = vld [vmem:[%s233 + $0x130] sm:$0xff]
        %v282 = vld [vmem:[%s233 + $0x138] sm:$0xff]
        %v283 = vld [vmem:[%s233 + $0x140] sm:$0xff]
        %v284 = vld [vmem:[%s233 + $0x148] sm:$0xff]
        %v285 = vld [vmem:[%s233 + $0x150] sm:$0xff]
        %v286 = vld [vmem:[%s233 + $0x158] sm:$0xff]
        %v287 = vld [vmem:[%s233 + $0x160] sm:$0xff]
        %v288 = vld [vmem:[%s233 + $0x168] sm:$0xff]
        %v289 = vld [vmem:[%s233 + $0x170] sm:$0xff]
        %v290 = vld [vmem:[%s233 + $0x178] sm:$0xff]
        %v291 = vld [vmem:[%s233 + $0x180] sm:$0xff]
        %v292 = vld [vmem:[%s233 + $0x188] sm:$0xff]
        %v293 = vld [vmem:[%s233 + $0x190] sm:$0xff]
        %v294 = vld [vmem:[%s233 + $0x198] sm:$0xff]
        %v295 = vld [vmem:[%s233 + $0x1a0] sm:$0xff]
        %v296 = vld [vmem:[%s233 + $0x1a8] sm:$0xff]
        %v297 = vld [vmem:[%s233 + $0x1b0] sm:$0xff]
        %v298 = vld [vmem:[%s233 + $0x1b8] sm:$0xff]
        %v299 = vld [vmem:[%s233 + $0x1c0] sm:$0xff]
        %v300 = vld [vmem:[%s233 + $0x1c8] sm:$0xff]
        %v301 = vld [vmem:[%s233 + $0x1d0] sm:$0xff]
        %v302 = vld [vmem:[%s233 + $0x1d8] sm:$0xff]
        %v303 = vld [vmem:[%s233 + $0x1e0] sm:$0xff]
        %v304 = vld [vmem:[%s233 + $0x1e8] sm:$0xff]
        %v305 = vld [vmem:[%s233 + $0x1f0] sm:$0xff]
        %v306 = vld [vmem:[%s233 + $0x1f8] sm:$0xff]
        %v307 = vld [vmem:[%s233 + $0x200] sm:$0xff]
        %v308 = vld [vmem:[%s233 + $0x208] sm:$0xff]
        %v309 = vld [vmem:[%s233 + $0x210] sm:$0xff]
        %v310 = vld [vmem:[%s233 + $0x218] sm:$0xff]
        %v311 = vld [vmem:[%s233 + $0x220] sm:$0xff]
        %v312 = vld [vmem:[%s233 + $0x228] sm:$0xff]
        %v313 = vld [vmem:[%s233 + $0x230] sm:$0xff]
        %v314 = vld [vmem:[%s233 + $0x238] sm:$0xff]
        %v315 = vld [vmem:[%s233 + $0x240] sm:$0xff]
        %v316 = vld [vmem:[%s233 + $0x248] sm:$0xff]
        %v317 = vld [vmem:[%s233 + $0x250] sm:$0xff]
        %v318 = vld [vmem:[%s233 + $0x258] sm:$0xff]
        %v319 = vld [vmem:[%s233 + $0x260] sm:$0xff]
        %v320 = vld [vmem:[%s233 + $0x268] sm:$0xff]
        %v321 = vld [vmem:[%s233 + $0x270] sm:$0xff]
        %v322 = vld [vmem:[%s233 + $0x278] sm:$0xff]
        %v323 = vld [vmem:[%s233 + $0x280] sm:$0xff]
        %v324 = vld [vmem:[%s233 + $0x288] sm:$0xff]
        %v325 = vld [vmem:[%s233 + $0x290] sm:$0xff]
        %v326 = vld [vmem:[%s233 + $0x298] sm:$0xff]
        %v327 = vld [vmem:[%s233 + $0x2a0] sm:$0xff]
        %v328 = vld [vmem:[%s233 + $0x2a8] sm:$0xff]
        %v329 = vld [vmem:[%s233 + $0x2b0] sm:$0xff]
        %v330 = vld [vmem:[%s233 + $0x2b8] sm:$0xff]
        %v331 = vld [vmem:[%s233 + $0x2c0] sm:$0xff]
        %v332 = vld [vmem:[%s233 + $0x2c8] sm:$0xff]
        %v333 = vld [vmem:[%s233 + $0x2d0] sm:$0xff]
        %v334 = vld [vmem:[%s233 + $0x2d8] sm:$0xff]
        %v335 = vld [vmem:[%s233 + $0x2e0] sm:$0xff]
        %v336 = vld [vmem:[%s233 + $0x2e8] sm:$0xff]
        %v337 = vld [vmem:[%s233 + $0x2f0] sm:$0xff]
        %v338 = vld [vmem:[%s233 + $0x2f8] sm:$0xff]
        %v339 = vld [vmem:[%s233 + $0x300] sm:$0xff]
        %v340 = vld [vmem:[%s233 + $0x308] sm:$0xff]
        %v341 = vld [vmem:[%s233 + $0x310] sm:$0xff]
        %v342 = vld [vmem:[%s233 + $0x318] sm:$0xff]
        %v343 = vld [vmem:[%s233 + $0x320] sm:$0xff]
        %v344 = vld [vmem:[%s233 + $0x328] sm:$0xff]
        %v345 = vld [vmem:[%s233 + $0x330] sm:$0xff]
        %v346 = vld [vmem:[%s233 + $0x338] sm:$0xff]
        %v347 = vld [vmem:[%s233 + $0x340] sm:$0xff]
        %v348 = vld [vmem:[%s233 + $0x348] sm:$0xff]
        %v349 = vld [vmem:[%s233 + $0x350] sm:$0xff]
        %v350 = vld [vmem:[%s233 + $0x358] sm:$0xff]
        %v351 = vld [vmem:[%s233 + $0x360] sm:$0xff]
        %v352 = vld [vmem:[%s233 + $0x368] sm:$0xff]
        %v353 = vld [vmem:[%s233 + $0x370] sm:$0xff]
        %v354 = vld [vmem:[%s233 + $0x378] sm:$0xff]
        %v355 = vld [vmem:[%s233 + $0x380] sm:$0xff]
        %v356 = vld [vmem:[%s233 + $0x388] sm:$0xff]
        %v357 = vld [vmem:[%s233 + $0x390] sm:$0xff]
        %v358 = vld [vmem:[%s233 + $0x398] sm:$0xff]
        %v359 = vld [vmem:[%s233 + $0x3a0] sm:$0xff]
        %v360 = vld [vmem:[%s233 + $0x3a8] sm:$0xff]
        %v361 = vld [vmem:[%s233 + $0x3b0] sm:$0xff]
        %v362 = vld [vmem:[%s233 + $0x3b8] sm:$0xff]
        %v363 = vld [vmem:[%s233 + $0x3c0] sm:$0xff]
        %v364 = vld [vmem:[%s233 + $0x3c8] sm:$0xff]
        %v365 = vld [vmem:[%s233 + $0x3d0] sm:$0xff]
        %v366 = vld [vmem:[%s233 + $0x3d8] sm:$0xff]
        %v367 = vld [vmem:[%s233 + $0x3e0] sm:$0xff]
        %v368 = vld [vmem:[%s233 + $0x3e8] sm:$0xff]
        %v369 = vld [vmem:[%s233 + $0x3f0] sm:$0xff]
        %v370 = vld [vmem:[%s233 + $0x3f8] sm:$0xff]
        %v372 = vcombine.high %v242, %v242
        %v374 = vunpack.c.l.s4 1966171168
        %v375 = vunpack.c.0.s8 %v374
        %v376 = vlaneseq
        %v377 = vshrl.u32 %v376, 7
        %v378 = vsub.s32 %v375, %v377
        %v379 = vrot.slane %v242, %v378
        %v381 = vunpack.c.l.s4 1966171168
        %v382 = vunpack.c.0.s8 %v381
        %v383 = vlaneseq
        %v384 = vshrl.u32 %v383, 7
        %v385 = vsub.s32 %v382, %v384
        %v386 = vrot.slane %v372, %v385
        %v387 = vcombine.high %v379, %v379
        %v388 = vcombine.high %v386, %v386
        %v390 = vunpack.c.l.s4 1966171168
        %v391 = vunpack.c.0.s8 %v390
        %v392 = vlaneseq
        %v393 = vshrl.u32 %v392, 7
        %v394 = vsub.s32 %v391, %v393
        %v395 = vrot.slane %v379, %v394
        %v397 = vunpack.c.l.s4 1966171168
        %v398 = vunpack.c.0.s8 %v397
        %v399 = vlaneseq
        %v400 = vshrl.u32 %v399, 7
        %v401 = vsub.s32 %v398, %v400
        %v402 = vrot.slane %v386, %v401
        %v404 = vunpack.c.l.s4 1966171168
        %v405 = vunpack.c.0.s8 %v404
        %v406 = vlaneseq
        %v407 = vshrl.u32 %v406, 7
        %v408 = vsub.s32 %v405, %v407
        %v409 = vrot.slane %v387, %v408
        %v411 = vunpack.c.l.s4 1966171168
        %v412 = vunpack.c.0.s8 %v411
        %v413 = vlaneseq
        %v414 = vshrl.u32 %v413, 7
        %v415 = vsub.s32 %v412, %v414
        %v416 = vrot.slane %v388, %v415
        %v417 = vcombine.high %v395, %v395
        %v418 = vcombine.high %v402, %v402
        %v419 = vcombine.high %v409, %v409
        %v420 = vcombine.high %v416, %v416
        %v557 = vunpack.c.l.b16 %v243
        %v558 = vunpack.c.h.b16 %v243
        %v559 = vunpack.c.l.b16 %v244
        %v560 = vunpack.c.h.b16 %v244
        %v561 = vunpack.c.l.b16 %v245
        %v562 = vunpack.c.h.b16 %v245
        %v563 = vunpack.c.l.b16 %v246
        %v564 = vunpack.c.h.b16 %v246
        %v565 = vunpack.c.l.b16 %v247
        %v566 = vunpack.c.h.b16 %v247
        %v567 = vunpack.c.l.b16 %v248
        %v568 = vunpack.c.h.b16 %v248
        %v569 = vunpack.c.l.b16 %v249
        %v570 = vunpack.c.h.b16 %v249
        %v571 = vunpack.c.l.b16 %v250
        %v572 = vunpack.c.h.b16 %v250
        %v573 = vunpack.c.l.b16 %v251
        %v574 = vunpack.c.h.b16 %v251
        %v575 = vunpack.c.l.b16 %v252
        %v576 = vunpack.c.h.b16 %v252
        %v577 = vunpack.c.l.b16 %v253
        %v578 = vunpack.c.h.b16 %v253
        %v579 = vunpack.c.l.b16 %v254
        %v580 = vunpack.c.h.b16 %v254
        %v581 = vunpack.c.l.b16 %v255
        %v582 = vunpack.c.h.b16 %v255
        %v583 = vunpack.c.l.b16 %v256
        %v584 = vunpack.c.h.b16 %v256
        %v585 = vunpack.c.l.b16 %v257
        %v586 = vunpack.c.h.b16 %v257
        %v587 = vunpack.c.l.b16 %v258
        %v588 = vunpack.c.h.b16 %v258
        %v589 = vunpack.c.l.b16 %v259
        %v590 = vunpack.c.h.b16 %v259
        %v591 = vunpack.c.l.b16 %v260
        %v592 = vunpack.c.h.b16 %v260
        %v593 = vunpack.c.l.b16 %v261
        %v594 = vunpack.c.h.b16 %v261
        %v595 = vunpack.c.l.b16 %v262
        %v596 = vunpack.c.h.b16 %v262
        %v597 = vunpack.c.l.b16 %v263
        %v598 = vunpack.c.h.b16 %v263
        %v599 = vunpack.c.l.b16 %v264
        %v600 = vunpack.c.h.b16 %v264
        %v601 = vunpack.c.l.b16 %v265
        %v602 = vunpack.c.h.b16 %v265
        %v603 = vunpack.c.l.b16 %v266
        %v604 = vunpack.c.h.b16 %v266
        %v605 = vunpack.c.l.b16 %v267
        %v606 = vunpack.c.h.b16 %v267
        %v607 = vunpack.c.l.b16 %v268
        %v608 = vunpack.c.h.b16 %v268
        %v609 = vunpack.c.l.b16 %v269
        %v610 = vunpack.c.h.b16 %v269
        %v611 = vunpack.c.l.b16 %v270
        %v612 = vunpack.c.h.b16 %v270
        %v613 = vunpack.c.l.b16 %v271
        %v614 = vunpack.c.h.b16 %v271
        %v615 = vunpack.c.l.b16 %v272
        %v616 = vunpack.c.h.b16 %v272
        %v617 = vunpack.c.l.b16 %v273
        %v618 = vunpack.c.h.b16 %v273
        %v619 = vunpack.c.l.b16 %v274
        %v620 = vunpack.c.h.b16 %v274
        %v621 = vunpack.c.l.b16 %v275
        %v622 = vunpack.c.h.b16 %v275
        %v623 = vunpack.c.l.b16 %v276
        %v624 = vunpack.c.h.b16 %v276
        %v625 = vunpack.c.l.b16 %v277
        %v626 = vunpack.c.h.b16 %v277
        %v627 = vunpack.c.l.b16 %v278
        %v628 = vunpack.c.h.b16 %v278
        %v629 = vunpack.c.l.b16 %v279
        %v630 = vunpack.c.h.b16 %v279
        %v631 = vunpack.c.l.b16 %v280
        %v632 = vunpack.c.h.b16 %v280
        %v633 = vunpack.c.l.b16 %v281
        %v634 = vunpack.c.h.b16 %v281
        %v635 = vunpack.c.l.b16 %v282
        %v636 = vunpack.c.h.b16 %v282
        %v637 = vunpack.c.l.b16 %v283
        %v638 = vunpack.c.h.b16 %v283
        %v639 = vunpack.c.l.b16 %v284
        %v640 = vunpack.c.h.b16 %v284
        %v641 = vunpack.c.l.b16 %v285
        %v642 = vunpack.c.h.b16 %v285
        %v643 = vunpack.c.l.b16 %v286
        %v644 = vunpack.c.h.b16 %v286
        %v645 = vunpack.c.l.b16 %v287
        %v646 = vunpack.c.h.b16 %v287
        %v647 = vunpack.c.l.b16 %v288
        %v648 = vunpack.c.h.b16 %v288
        %v649 = vunpack.c.l.b16 %v289
        %v650 = vunpack.c.h.b16 %v289
        %v651 = vunpack.c.l.b16 %v290
        %v652 = vunpack.c.h.b16 %v290
        %v653 = vunpack.c.l.b16 %v291
        %v654 = vunpack.c.h.b16 %v291
        %v655 = vunpack.c.l.b16 %v292
        %v656 = vunpack.c.h.b16 %v292
        %v657 = vunpack.c.l.b16 %v293
        %v658 = vunpack.c.h.b16 %v293
        %v659 = vunpack.c.l.b16 %v294
        %v660 = vunpack.c.h.b16 %v294
        %v661 = vunpack.c.l.b16 %v295
        %v662 = vunpack.c.h.b16 %v295
        %v663 = vunpack.c.l.b16 %v296
        %v664 = vunpack.c.h.b16 %v296
        %v665 = vunpack.c.l.b16 %v297
        %v666 = vunpack.c.h.b16 %v297
        %v667 = vunpack.c.l.b16 %v298
        %v668 = vunpack.c.h.b16 %v298
        %v669 = vunpack.c.l.b16 %v299
        %v670 = vunpack.c.h.b16 %v299
        %v671 = vunpack.c.l.b16 %v300
        %v672 = vunpack.c.h.b16 %v300
        %v673 = vunpack.c.l.b16 %v301
        %v674 = vunpack.c.h.b16 %v301
        %v675 = vunpack.c.l.b16 %v302
        %v676 = vunpack.c.h.b16 %v302
        %v677 = vunpack.c.l.b16 %v303
        %v678 = vunpack.c.h.b16 %v303
        %v679 = vunpack.c.l.b16 %v304
        %v680 = vunpack.c.h.b16 %v304
        %v681 = vunpack.c.l.b16 %v305
        %v682 = vunpack.c.h.b16 %v305
        %v683 = vunpack.c.l.b16 %v306
        %v684 = vunpack.c.h.b16 %v306
        %v685 = vunpack.c.l.b16 %v307
        %v686 = vunpack.c.h.b16 %v307
        %v687 = vunpack.c.l.b16 %v308
        %v688 = vunpack.c.h.b16 %v308
        %v689 = vunpack.c.l.b16 %v309
        %v690 = vunpack.c.h.b16 %v309
        %v691 = vunpack.c.l.b16 %v310
        %v692 = vunpack.c.h.b16 %v310
        %v693 = vunpack.c.l.b16 %v311
        %v694 = vunpack.c.h.b16 %v311
        %v695 = vunpack.c.l.b16 %v312
        %v696 = vunpack.c.h.b16 %v312
        %v697 = vunpack.c.l.b16 %v313
        %v698 = vunpack.c.h.b16 %v313
        %v699 = vunpack.c.l.b16 %v314
        %v700 = vunpack.c.h.b16 %v314
        %v701 = vunpack.c.l.b16 %v315
        %v702 = vunpack.c.h.b16 %v315
        %v703 = vunpack.c.l.b16 %v316
        %v704 = vunpack.c.h.b16 %v316
        %v705 = vunpack.c.l.b16 %v317
        %v706 = vunpack.c.h.b16 %v317
        %v707 = vunpack.c.l.b16 %v318
        %v708 = vunpack.c.h.b16 %v318
        %v709 = vunpack.c.l.b16 %v319
        %v710 = vunpack.c.h.b16 %v319
        %v711 = vunpack.c.l.b16 %v320
        %v712 = vunpack.c.h.b16 %v320
        %v713 = vunpack.c.l.b16 %v321
        %v714 = vunpack.c.h.b16 %v321
        %v715 = vunpack.c.l.b16 %v322
        %v716 = vunpack.c.h.b16 %v322
        %v717 = vunpack.c.l.b16 %v323
        %v718 = vunpack.c.h.b16 %v323
        %v719 = vunpack.c.l.b16 %v324
        %v720 = vunpack.c.h.b16 %v324
        %v721 = vunpack.c.l.b16 %v325
        %v722 = vunpack.c.h.b16 %v325
        %v723 = vunpack.c.l.b16 %v326
        %v724 = vunpack.c.h.b16 %v326
        %v725 = vunpack.c.l.b16 %v327
        %v726 = vunpack.c.h.b16 %v327
        %v727 = vunpack.c.l.b16 %v328
        %v728 = vunpack.c.h.b16 %v328
        %v729 = vunpack.c.l.b16 %v329
        %v730 = vunpack.c.h.b16 %v329
        %v731 = vunpack.c.l.b16 %v330
        %v732 = vunpack.c.h.b16 %v330
        %v733 = vunpack.c.l.b16 %v331
        %v734 = vunpack.c.h.b16 %v331
        %v735 = vunpack.c.l.b16 %v332
        %v736 = vunpack.c.h.b16 %v332
        %v737 = vunpack.c.l.b16 %v333
        %v738 = vunpack.c.h.b16 %v333
        %v739 = vunpack.c.l.b16 %v334
        %v740 = vunpack.c.h.b16 %v334
        %v741 = vunpack.c.l.b16 %v335
        %v742 = vunpack.c.h.b16 %v335
        %v743 = vunpack.c.l.b16 %v336
        %v744 = vunpack.c.h.b16 %v336
        %v745 = vunpack.c.l.b16 %v337
        %v746 = vunpack.c.h.b16 %v337
        %v747 = vunpack.c.l.b16 %v338
        %v748 = vunpack.c.h.b16 %v338
        %v749 = vunpack.c.l.b16 %v339
        %v750 = vunpack.c.h.b16 %v339
        %v751 = vunpack.c.l.b16 %v340
        %v752 = vunpack.c.h.b16 %v340
        %v753 = vunpack.c.l.b16 %v341
        %v754 = vunpack.c.h.b16 %v341
        %v755 = vunpack.c.l.b16 %v342
        %v756 = vunpack.c.h.b16 %v342
        %v757 = vunpack.c.l.b16 %v343
        %v758 = vunpack.c.h.b16 %v343
        %v759 = vunpack.c.l.b16 %v344
        %v760 = vunpack.c.h.b16 %v344
        %v761 = vunpack.c.l.b16 %v345
        %v762 = vunpack.c.h.b16 %v345
        %v763 = vunpack.c.l.b16 %v346
        %v764 = vunpack.c.h.b16 %v346
        %v765 = vunpack.c.l.b16 %v347
        %v766 = vunpack.c.h.b16 %v347
        %v767 = vunpack.c.l.b16 %v348
        %v768 = vunpack.c.h.b16 %v348
        %v769 = vunpack.c.l.b16 %v349
        %v770 = vunpack.c.h.b16 %v349
        %v771 = vunpack.c.l.b16 %v350
        %v772 = vunpack.c.h.b16 %v350
        %v773 = vunpack.c.l.b16 %v351
        %v774 = vunpack.c.h.b16 %v351
        %v775 = vunpack.c.l.b16 %v352
        %v776 = vunpack.c.h.b16 %v352
        %v777 = vunpack.c.l.b16 %v353
        %v778 = vunpack.c.h.b16 %v353
        %v779 = vunpack.c.l.b16 %v354
        %v780 = vunpack.c.h.b16 %v354
        %v781 = vunpack.c.l.b16 %v355
        %v782 = vunpack.c.h.b16 %v355
        %v783 = vunpack.c.l.b16 %v356
        %v784 = vunpack.c.h.b16 %v356
        %v785 = vunpack.c.l.b16 %v357
        %v786 = vunpack.c.h.b16 %v357
        %v787 = vunpack.c.l.b16 %v358
        %v788 = vunpack.c.h.b16 %v358
        %v789 = vunpack.c.l.b16 %v359
        %v790 = vunpack.c.h.b16 %v359
        %v791 = vunpack.c.l.b16 %v360
        %v792 = vunpack.c.h.b16 %v360
        %v793 = vunpack.c.l.b16 %v361
        %v794 = vunpack.c.h.b16 %v361
        %v795 = vunpack.c.l.b16 %v362
        %v796 = vunpack.c.h.b16 %v362
        %v797 = vunpack.c.l.b16 %v363
        %v798 = vunpack.c.h.b16 %v363
        %v799 = vunpack.c.l.b16 %v364
        %v800 = vunpack.c.h.b16 %v364
        %v801 = vunpack.c.l.b16 %v365
        %v802 = vunpack.c.h.b16 %v365
        %v803 = vunpack.c.l.b16 %v366
        %v804 = vunpack.c.h.b16 %v366
        %v805 = vunpack.c.l.b16 %v367
        %v806 = vunpack.c.h.b16 %v367
        %v807 = vunpack.c.l.b16 %v368
        %v808 = vunpack.c.h.b16 %v368
        %v809 = vunpack.c.l.b16 %v369
        %v810 = vunpack.c.h.b16 %v369
        %v811 = vunpack.c.l.b16 %v370
        %v812 = vunpack.c.h.b16 %v370
        %v813 = vpack.c.b16 %v559, %v557
        %v814 = vpack.c.b16 %v560, %v558
        %v815 = vpack.c.b16 %v563, %v561
        %v816 = vpack.c.b16 %v564, %v562
        %v817 = vpack.c.b16 %v567, %v565
        %v818 = vpack.c.b16 %v568, %v566
        %v819 = vpack.c.b16 %v571, %v569
        %v820 = vpack.c.b16 %v572, %v570
        %v821 = vpack.c.b16 %v575, %v573
        %v822 = vpack.c.b16 %v576, %v574
        %v823 = vpack.c.b16 %v579, %v577
        %v824 = vpack.c.b16 %v580, %v578
        %v825 = vpack.c.b16 %v583, %v581
        %v826 = vpack.c.b16 %v584, %v582
        %v827 = vpack.c.b16 %v587, %v585
        %v828 = vpack.c.b16 %v588, %v586
        %v829 = vpack.c.b16 %v591, %v589
        %v830 = vpack.c.b16 %v592, %v590
        %v831 = vpack.c.b16 %v595, %v593
        %v832 = vpack.c.b16 %v596, %v594
        %v833 = vpack.c.b16 %v599, %v597
        %v834 = vpack.c.b16 %v600, %v598
        %v835 = vpack.c.b16 %v603, %v601
        %v836 = vpack.c.b16 %v604, %v602
        %v837 = vpack.c.b16 %v607, %v605
        %v838 = vpack.c.b16 %v608, %v606
        %v839 = vpack.c.b16 %v611, %v609
        %v840 = vpack.c.b16 %v612, %v610
        %v841 = vpack.c.b16 %v615, %v613
        %v842 = vpack.c.b16 %v616, %v614
        %v843 = vpack.c.b16 %v619, %v617
        %v844 = vpack.c.b16 %v620, %v618
        %v845 = vpack.c.b16 %v623, %v621
        %v846 = vpack.c.b16 %v624, %v622
        %v847 = vpack.c.b16 %v627, %v625
        %v848 = vpack.c.b16 %v628, %v626
        %v849 = vpack.c.b16 %v631, %v629
        %v850 = vpack.c.b16 %v632, %v630
        %v851 = vpack.c.b16 %v635, %v633
        %v852 = vpack.c.b16 %v636, %v634
        %v853 = vpack.c.b16 %v639, %v637
        %v854 = vpack.c.b16 %v640, %v638
        %v855 = vpack.c.b16 %v643, %v641
        %v856 = vpack.c.b16 %v644, %v642
        %v857 = vpack.c.b16 %v647, %v645
        %v858 = vpack.c.b16 %v648, %v646
        %v859 = vpack.c.b16 %v651, %v649
        %v860 = vpack.c.b16 %v652, %v650
        %v861 = vpack.c.b16 %v655, %v653
        %v862 = vpack.c.b16 %v656, %v654
        %v863 = vpack.c.b16 %v659, %v657
        %v864 = vpack.c.b16 %v660, %v658
        %v865 = vpack.c.b16 %v663, %v661
        %v866 = vpack.c.b16 %v664, %v662
        %v867 = vpack.c.b16 %v667, %v665
        %v868 = vpack.c.b16 %v668, %v666
        %v869 = vpack.c.b16 %v671, %v669
        %v870 = vpack.c.b16 %v672, %v670
        %v871 = vpack.c.b16 %v675, %v673
        %v872 = vpack.c.b16 %v676, %v674
        %v873 = vpack.c.b16 %v679, %v677
        %v874 = vpack.c.b16 %v680, %v678
        %v875 = vpack.c.b16 %v683, %v681
        %v876 = vpack.c.b16 %v684, %v682
        %v877 = vpack.c.b16 %v687, %v685
        %v878 = vpack.c.b16 %v688, %v686
        %v879 = vpack.c.b16 %v691, %v689
        %v880 = vpack.c.b16 %v692, %v690
        %v881 = vpack.c.b16 %v695, %v693
        %v882 = vpack.c.b16 %v696, %v694
        %v883 = vpack.c.b16 %v699, %v697
        %v884 = vpack.c.b16 %v700, %v698
        %v885 = vpack.c.b16 %v703, %v701
        %v886 = vpack.c.b16 %v704, %v702
        %v887 = vpack.c.b16 %v707, %v705
        %v888 = vpack.c.b16 %v708, %v706
        %v889 = vpack.c.b16 %v711, %v709
        %v890 = vpack.c.b16 %v712, %v710
        %v891 = vpack.c.b16 %v715, %v713
        %v892 = vpack.c.b16 %v716, %v714
        %v893 = vpack.c.b16 %v719, %v717
        %v894 = vpack.c.b16 %v720, %v718
        %v895 = vpack.c.b16 %v723, %v721
        %v896 = vpack.c.b16 %v724, %v722
        %v897 = vpack.c.b16 %v727, %v725
        %v898 = vpack.c.b16 %v728, %v726
        %v899 = vpack.c.b16 %v731, %v729
        %v900 = vpack.c.b16 %v732, %v730
        %v901 = vpack.c.b16 %v735, %v733
        %v902 = vpack.c.b16 %v736, %v734
        %v903 = vpack.c.b16 %v739, %v737
        %v904 = vpack.c.b16 %v740, %v738
        %v905 = vpack.c.b16 %v743, %v741
        %v906 = vpack.c.b16 %v744, %v742
        %v907 = vpack.c.b16 %v747, %v745
        %v908 = vpack.c.b16 %v748, %v746
        %v909 = vpack.c.b16 %v751, %v749
        %v910 = vpack.c.b16 %v752, %v750
        %v911 = vpack.c.b16 %v755, %v753
        %v912 = vpack.c.b16 %v756, %v754
        %v913 = vpack.c.b16 %v759, %v757
        %v914 = vpack.c.b16 %v760, %v758
        %v915 = vpack.c.b16 %v763, %v761
        %v916 = vpack.c.b16 %v764, %v762
        %v917 = vpack.c.b16 %v767, %v765
        %v918 = vpack.c.b16 %v768, %v766
        %v919 = vpack.c.b16 %v771, %v769
        %v920 = vpack.c.b16 %v772, %v770
        %v921 = vpack.c.b16 %v775, %v773
        %v922 = vpack.c.b16 %v776, %v774
        %v923 = vpack.c.b16 %v779, %v777
        %v924 = vpack.c.b16 %v780, %v778
        %v925 = vpack.c.b16 %v783, %v781
        %v926 = vpack.c.b16 %v784, %v782
        %v927 = vpack.c.b16 %v787, %v785
        %v928 = vpack.c.b16 %v788, %v786
        %v929 = vpack.c.b16 %v791, %v789
        %v930 = vpack.c.b16 %v792, %v790
        %v931 = vpack.c.b16 %v795, %v793
        %v932 = vpack.c.b16 %v796, %v794
        %v933 = vpack.c.b16 %v799, %v797
        %v934 = vpack.c.b16 %v800, %v798
        %v935 = vpack.c.b16 %v803, %v801
        %v936 = vpack.c.b16 %v804, %v802
        %v937 = vpack.c.b16 %v807, %v805
        %v938 = vpack.c.b16 %v808, %v806
        %v939 = vpack.c.b16 %v811, %v809
        %v940 = vpack.c.b16 %v812, %v810
        %1069 = vmatprep.subr.bf16.mxu0 %v814
        %1070 = vmatpush1.bf16.msra.mxu0 %v813
        %1071 = vmatprep.subr.bf16.mxu0 %v816
        %1072 = vmatpush1.bf16.msra.mxu0 %v815
        %1073 = vmatprep.subr.bf16.mxu0 %v818
        %1074 = vmatpush1.bf16.msra.mxu0 %v817
        %1075 = vmatprep.subr.bf16.mxu0 %v820
        %1076 = vmatpush1.bf16.msra.mxu0 %v819
        %1077 = vmatprep.subr.bf16.mxu0 %v822
        %1078 = vmatpush1.bf16.msra.mxu0 %v821
        %1079 = vmatprep.subr.bf16.mxu0 %v824
        %1080 = vmatpush1.bf16.msra.mxu0 %v823
        %1081 = vmatprep.subr.bf16.mxu0 %v826
        %1082 = vmatpush1.bf16.msra.mxu0 %v825
        %1083 = vmatprep.subr.bf16.mxu0 %v828
        %1084 = vmatpush1.bf16.msra.mxu0 %v827
        %1085 = vmatprep.subr.bf16.mxu0 %v830
        %1086 = vmatpush1.bf16.msra.mxu0 %v829
        %1087 = vmatprep.subr.bf16.mxu0 %v832
        %1088 = vmatpush1.bf16.msra.mxu0 %v831
        %1089 = vmatprep.subr.bf16.mxu0 %v834
        %1090 = vmatpush1.bf16.msra.mxu0 %v833
        %1091 = vmatprep.subr.bf16.mxu0 %v836
        %1092 = vmatpush1.bf16.msra.mxu0 %v835
        %1093 = vmatprep.subr.bf16.mxu0 %v838
        %1094 = vmatpush1.bf16.msra.mxu0 %v837
        %1095 = vmatprep.subr.bf16.mxu0 %v840
        %1096 = vmatpush1.bf16.msra.mxu0 %v839
        %1097 = vmatprep.subr.bf16.mxu0 %v842
        %1098 = vmatpush1.bf16.msra.mxu0 %v841
        %1099 = vmatprep.subr.bf16.mxu0 %v844
        %1100 = vmatpush1.bf16.msra.mxu0 %v843
        %1101 = vmatprep.mubr.bf16.mxu0 %v409
        %1102 = vmatmul.mubr.bf16.gmra.mrb[0].mxu0 %v395
        %v1103 = vpop.f32.mrb[0].mxu0
        %v1104 = vadd.f32 0.0, %v1103
        %v1105 = vpop.f32.mrb[0].mxu0
        %v1106 = vadd.f32 0.0, %v1105
        %v1107 = vpop.f32.mrb[0].mxu0
        %v1108 = vpop.f32.mrb[0].mxu0
        %1109 = vdwg.mxu0
        %1110 = vmatprep.subr.bf16.mxu0 %v846
        %1111 = vmatpush1.bf16.msra.mxu0 %v845
        %1112 = vmatprep.subr.bf16.mxu0 %v848
        %1113 = vmatpush1.bf16.msra.mxu0 %v847
        %1114 = vmatprep.subr.bf16.mxu0 %v850
        %1115 = vmatpush1.bf16.msra.mxu0 %v849
        %1116 = vmatprep.subr.bf16.mxu0 %v852
        %1117 = vmatpush1.bf16.msra.mxu0 %v851
        %1118 = vmatprep.subr.bf16.mxu0 %v854
        %1119 = vmatpush1.bf16.msra.mxu0 %v853
        %1120 = vmatprep.subr.bf16.mxu0 %v856
        %1121 = vmatpush1.bf16.msra.mxu0 %v855
        %1122 = vmatprep.subr.bf16.mxu0 %v858
        %1123 = vmatpush1.bf16.msra.mxu0 %v857
        %1124 = vmatprep.subr.bf16.mxu0 %v860
        %1125 = vmatpush1.bf16.msra.mxu0 %v859
        %1126 = vmatprep.subr.bf16.mxu0 %v862
        %1127 = vmatpush1.bf16.msra.mxu0 %v861
        %1128 = vmatprep.subr.bf16.mxu0 %v864
        %1129 = vmatpush1.bf16.msra.mxu0 %v863
        %1130 = vmatprep.subr.bf16.mxu0 %v866
        %1131 = vmatpush1.bf16.msra.mxu0 %v865
        %1132 = vmatprep.subr.bf16.mxu0 %v868
        %1133 = vmatpush1.bf16.msra.mxu0 %v867
        %1134 = vmatprep.subr.bf16.mxu0 %v870
        %1135 = vmatpush1.bf16.msra.mxu0 %v869
        %1136 = vmatprep.subr.bf16.mxu0 %v872
        %1137 = vmatpush1.bf16.msra.mxu0 %v871
        %1138 = vmatprep.subr.bf16.mxu0 %v874
        %1139 = vmatpush1.bf16.msra.mxu0 %v873
        %1140 = vmatprep.subr.bf16.mxu0 %v876
        %1141 = vmatpush1.bf16.msra.mxu0 %v875
        %1142 = vmatprep.mubr.bf16.mxu0 %v419
        %1143 = vmatmul.mubr.bf16.gmra.mrb[0].mxu0 %v417
        %v1144 = vpop.f32.mrb[0].mxu0
        %v1145 = vadd.f32 %v1104, %v1144
        %v1146 = vpop.f32.mrb[0].mxu0
        %v1147 = vadd.f32 %v1106, %v1146
        %v1148 = vpop.f32.mrb[0].mxu0
        %v1149 = vpop.f32.mrb[0].mxu0
        %1150 = vdwg.mxu0
        %1151 = vmatprep.subr.bf16.mxu0 %v878
        %1152 = vmatpush1.bf16.msra.mxu0 %v877
        %1153 = vmatprep.subr.bf16.mxu0 %v880
        %1154 = vmatpush1.bf16.msra.mxu0 %v879
        %1155 = vmatprep.subr.bf16.mxu0 %v882
        %1156 = vmatpush1.bf16.msra.mxu0 %v881
        %1157 = vmatprep.subr.bf16.mxu0 %v884
        %1158 = vmatpush1.bf16.msra.mxu0 %v883
        %1159 = vmatprep.subr.bf16.mxu0 %v886
        %1160 = vmatpush1.bf16.msra.mxu0 %v885
        %1161 = vmatprep.subr.bf16.mxu0 %v888
        %1162 = vmatpush1.bf16.msra.mxu0 %v887
        %1163 = vmatprep.subr.bf16.mxu0 %v890
        %1164 = vmatpush1.bf16.msra.mxu0 %v889
        %1165 = vmatprep.subr.bf16.mxu0 %v892
        %1166 = vmatpush1.bf16.msra.mxu0 %v891
        %1167 = vmatprep.subr.bf16.mxu0 %v894
        %1168 = vmatpush1.bf16.msra.mxu0 %v893
        %1169 = vmatprep.subr.bf16.mxu0 %v896
        %1170 = vmatpush1.bf16.msra.mxu0 %v895
        %1171 = vmatprep.subr.bf16.mxu0 %v898
        %1172 = vmatpush1.bf16.msra.mxu0 %v897
        %1173 = vmatprep.subr.bf16.mxu0 %v900
        %1174 = vmatpush1.bf16.msra.mxu0 %v899
        %1175 = vmatprep.subr.bf16.mxu0 %v902
        %1176 = vmatpush1.bf16.msra.mxu0 %v901
        %1177 = vmatprep.subr.bf16.mxu0 %v904
        %1178 = vmatpush1.bf16.msra.mxu0 %v903
        %1179 = vmatprep.subr.bf16.mxu0 %v906
        %1180 = vmatpush1.bf16.msra.mxu0 %v905
        %1181 = vmatprep.subr.bf16.mxu0 %v908
        %1182 = vmatpush1.bf16.msra.mxu0 %v907
        %1183 = vmatprep.mubr.bf16.mxu0 %v416
        %1184 = vmatmul.mubr.bf16.gmra.mrb[0].mxu0 %v402
        %v1185 = vpop.f32.mrb[0].mxu0
        %v1186 = vadd.f32 %v1145, %v1185
        %v1187 = vpop.f32.mrb[0].mxu0
        %v1188 = vadd.f32 %v1147, %v1187
        %v1189 = vpop.f32.mrb[0].mxu0
        %v1190 = vpop.f32.mrb[0].mxu0
        %1191 = vdwg.mxu0
        %1192 = vmatprep.subr.bf16.mxu0 %v910
        %1193 = vmatpush1.bf16.msra.mxu0 %v909
        %1194 = vmatprep.subr.bf16.mxu0 %v912
        %1195 = vmatpush1.bf16.msra.mxu0 %v911
        %1196 = vmatprep.subr.bf16.mxu0 %v914
        %1197 = vmatpush1.bf16.msra.mxu0 %v913
        %1198 = vmatprep.subr.bf16.mxu0 %v916
        %1199 = vmatpush1.bf16.msra.mxu0 %v915
        %1200 = vmatprep.subr.bf16.mxu0 %v918
        %1201 = vmatpush1.bf16.msra.mxu0 %v917
        %1202 = vmatprep.subr.bf16.mxu0 %v920
        %1203 = vmatpush1.bf16.msra.mxu0 %v919
        %1204 = vmatprep.subr.bf16.mxu0 %v922
        %1205 = vmatpush1.bf16.msra.mxu0 %v921
        %1206 = vmatprep.subr.bf16.mxu0 %v924
        %1207 = vmatpush1.bf16.msra.mxu0 %v923
        %1208 = vmatprep.subr.bf16.mxu0 %v926
        %1209 = vmatpush1.bf16.msra.mxu0 %v925
        %1210 = vmatprep.subr.bf16.mxu0 %v928
        %1211 = vmatpush1.bf16.msra.mxu0 %v927
        %1212 = vmatprep.subr.bf16.mxu0 %v930
        %1213 = vmatpush1.bf16.msra.mxu0 %v929
        %1214 = vmatprep.subr.bf16.mxu0 %v932
        %1215 = vmatpush1.bf16.msra.mxu0 %v931
        %1216 = vmatprep.subr.bf16.mxu0 %v934
        %1217 = vmatpush1.bf16.msra.mxu0 %v933
        %1218 = vmatprep.subr.bf16.mxu0 %v936
        %1219 = vmatpush1.bf16.msra.mxu0 %v935
        %1220 = vmatprep.subr.bf16.mxu0 %v938
        %1221 = vmatpush1.bf16.msra.mxu0 %v937
        %1222 = vmatprep.subr.bf16.mxu0 %v940
        %1223 = vmatpush1.bf16.msra.mxu0 %v939
        %1224 = vmatprep.mubr.bf16.mxu0 %v420
        %1225 = vmatmul.mubr.bf16.gmra.mrb[0].mxu0 %v418
        %v1226 = vpop.f32.mrb[0].mxu0
        %v1227 = vadd.f32 %v1186, %v1226
        %v1228 = vpop.f32.mrb[0].mxu0
        %v1229 = vadd.f32 %v1188, %v1228
        %v1230 = vpop.f32.mrb[0].mxu0
        %v1231 = vpop.f32.mrb[0].mxu0
        %1232 = vdwg.mxu0
        %v1235 = vcombine.low %v1227, %v1229
        %v1237 = vunpack.c.l.s4 1983009808
        %v1238 = vunpack.c.0.s8 %v1237
        %v1239 = vlaneseq
        %v1240 = vshrl.u32 %v1239, 7
        %v1241 = vsub.s32 %v1238, %v1240
        %v1242 = vrot.slane %v1235, %v1241
        %v1244 = vadd.f32 %v241, %v1242
        %1245 = vst [vmem:[#allocation2] sm:$0xf] %v1244
        %p1246 = scmp.eq.s32.totalorder %s17, 3
        // Predicated region
        $region45: #{road_sign_cnn_forward.5} parent=39 // pred_check
          %p1247 = pneg %p1246
        $region46: #{road_sign_cnn_forward.5} parent=39 // pred_check_branch
          %1249 = sbr.rel (%p1247) target = $region48
        $region47: #{road_sign_cnn_forward.5} parent=39 // pred_region
          %v1250 = vld [vmem:[#allocation2] sm:$0xf]
          %v1251 = vld [vmem:[%s2] sm:$0x3]
          %v1253 = vlaneseq
          %v1254 = vshrl.u32 %v1253, 7
          %v1255 = vsub.s32 0, %v1254
          %v1256 = vrot.slane %v1251, %v1255
          %v1257 = vlaneseq
          %v1258 = vshrl.u32 %v1257, 7
          %v1259 = vsub.s32 1, %v1258
          %v1260 = vrot.slane %v1251, %v1259
          %v1261 = vcombine.low %v1256, %v1260
          %v1263 = vunpack.c.l.s4 1983009808
          %v1264 = vunpack.c.0.s8 %v1263
          %v1265 = vlaneseq
          %v1266 = vshrl.u32 %v1265, 7
          %v1267 = vsub.s32 %v1264, %v1266
          %v1268 = vrot.slane %v1261, %v1267
          %v1270 = vadd.f32 %v1250, %v1268
          %v1271 = vmax.f32 %v1270, 0.0
          %v1274 = vunpack.c.l.s4 1983009808
          %v1275 = vunpack.c.0.s8 %v1274
          %v1276 = vlaneseq
          %v1277 = vshrl.u32 %v1276, 7
          %v1278 = vsub.s32 %v1275, %v1277
          %v1279 = vrot.slane %v1271, %v1278
          %v1280 = vcombine.high %v1279, %v1279
          %v1283 = vpack.c.bf16 %v1279, %v1279
          %v1284 = vpack.c.bf16 %v1280, %v1280
          %v1285 = vld [vmem:[%s3] sm:$0xf]
          %v1286 = vld [vmem:[%s3 + $0x4] sm:$0xf]
          %v1287 = vld [vmem:[%s3 + $0x8] sm:$0xf]
          %v1288 = vld [vmem:[%s3 + $0xc] sm:$0xf]
          %v1289 = vld [vmem:[%s3 + $0x10] sm:$0xf]
          %v1290 = vld [vmem:[%s3 + $0x14] sm:$0xf]
          %v1291 = vld [vmem:[%s3 + $0x18] sm:$0xf]
          %v1292 = vld [vmem:[%s3 + $0x1c] sm:$0xf]
          %v1293 = vld [vmem:[%s3 + $0x20] sm:$0xf]
          %v1294 = vld [vmem:[%s3 + $0x24] sm:$0xf]
          %v1295 = vld [vmem:[%s3 + $0x28] sm:$0xf]
          %v1296 = vld [vmem:[%s3 + $0x2c] sm:$0xf]
          %v1297 = vld [vmem:[%s3 + $0x30] sm:$0xf]
          %v1298 = vld [vmem:[%s3 + $0x34] sm:$0xf]
          %v1299 = vld [vmem:[%s3 + $0x38] sm:$0xf]
          %v1300 = vld [vmem:[%s3 + $0x3c] sm:$0xf]
          %v1301 = vld [vmem:[%s3 + $0x40] sm:$0xf]
          %v1302 = vld [vmem:[%s3 + $0x44] sm:$0xf]
          %v1303 = vld [vmem:[%s3 + $0x48] sm:$0xf]
          %v1304 = vld [vmem:[%s3 + $0x4c] sm:$0xf]
          %v1305 = vld [vmem:[%s3 + $0x50] sm:$0xf]
          %v1306 = vld [vmem:[%s3 + $0x54] sm:$0xf]
          %v1307 = vld [vmem:[%s3 + $0x58] sm:$0xf]
          %v1308 = vld [vmem:[%s3 + $0x5c] sm:$0xf]
          %v1309 = vld [vmem:[%s3 + $0x60] sm:$0xf]
          %v1310 = vld [vmem:[%s3 + $0x64] sm:$0xf]
          %v1311 = vld [vmem:[%s3 + $0x68] sm:$0xf]
          %v1312 = vld [vmem:[%s3 + $0x6c] sm:$0xf]
          %v1313 = vld [vmem:[%s3 + $0x70] sm:$0xf]
          %v1314 = vld [vmem:[%s3 + $0x74] sm:$0xf]
          %v1315 = vld [vmem:[%s3 + $0x78] sm:$0xf]
          %v1316 = vld [vmem:[%s3 + $0x7c] sm:$0xf]
          %v1317 = vld [vmem:[%s4] sm:$0x1]
          %v1319 = vlaneseq
          %v1320 = vshrl.u32 %v1319, 7
          %v1321 = vsub.s32 0, %v1320
          %v1322 = vrot.slane %v1317, %v1321
          %v1356 = vunpack.c.l.b16 %v1285
          %v1357 = vunpack.c.l.b16 %v1286
          %v1358 = vunpack.c.l.b16 %v1287
          %v1359 = vunpack.c.l.b16 %v1288
          %v1360 = vunpack.c.l.b16 %v1289
          %v1361 = vunpack.c.l.b16 %v1290
          %v1362 = vunpack.c.l.b16 %v1291
          %v1363 = vunpack.c.l.b16 %v1292
          %v1364 = vunpack.c.l.b16 %v1293
          %v1365 = vunpack.c.l.b16 %v1294
          %v1366 = vunpack.c.l.b16 %v1295
          %v1367 = vunpack.c.l.b16 %v1296
          %v1368 = vunpack.c.l.b16 %v1297
          %v1369 = vunpack.c.l.b16 %v1298
          %v1370 = vunpack.c.l.b16 %v1299
          %v1371 = vunpack.c.l.b16 %v1300
          %v1372 = vunpack.c.l.b16 %v1301
          %v1373 = vunpack.c.l.b16 %v1302
          %v1374 = vunpack.c.l.b16 %v1303
          %v1375 = vunpack.c.l.b16 %v1304
          %v1376 = vunpack.c.l.b16 %v1305
          %v1377 = vunpack.c.l.b16 %v1306
          %v1378 = vunpack.c.l.b16 %v1307
          %v1379 = vunpack.c.l.b16 %v1308
          %v1380 = vunpack.c.l.b16 %v1309
          %v1381 = vunpack.c.l.b16 %v1310
          %v1382 = vunpack.c.l.b16 %v1311
          %v1383 = vunpack.c.l.b16 %v1312
          %v1384 = vunpack.c.l.b16 %v1313
          %v1385 = vunpack.c.l.b16 %v1314
          %v1386 = vunpack.c.l.b16 %v1315
          %v1387 = vunpack.c.l.b16 %v1316
          %v1388 = vpack.c.b16 %v1357, %v1356
          %v1389 = vpack.c.b16 %v1359, %v1358
          %v1390 = vpack.c.b16 %v1361, %v1360
          %v1391 = vpack.c.b16 %v1363, %v1362
          %v1392 = vpack.c.b16 %v1365, %v1364
          %v1393 = vpack.c.b16 %v1367, %v1366
          %v1394 = vpack.c.b16 %v1369, %v1368
          %v1395 = vpack.c.b16 %v1371, %v1370
          %v1396 = vpack.c.b16 %v1373, %v1372
          %v1397 = vpack.c.b16 %v1375, %v1374
          %v1398 = vpack.c.b16 %v1377, %v1376
          %v1399 = vpack.c.b16 %v1379, %v1378
          %v1400 = vpack.c.b16 %v1381, %v1380
          %v1401 = vpack.c.b16 %v1383, %v1382
          %v1402 = vpack.c.b16 %v1385, %v1384
          %v1403 = vpack.c.b16 %v1387, %v1386
          %1420 = vmatprep.subr.bf16.mxu0 0
          %1421 = vmatpush1.bf16.msra.mxu0 %v1388
          %1422 = vmatprep.subr.bf16.mxu0 0
          %1423 = vmatpush1.bf16.msra.mxu0 %v1389
          %1424 = vmatprep.subr.bf16.mxu0 0
          %1425 = vmatpush1.bf16.msra.mxu0 %v1390
          %1426 = vmatprep.subr.bf16.mxu0 0
          %1427 = vmatpush1.bf16.msra.mxu0 %v1391
          %1428 = vmatprep.subr.bf16.mxu0 0
          %1429 = vmatpush1.bf16.msra.mxu0 %v1392
          %1430 = vmatprep.subr.bf16.mxu0 0
          %1431 = vmatpush1.bf16.msra.mxu0 %v1393
          %1432 = vmatprep.subr.bf16.mxu0 0
          %1433 = vmatpush1.bf16.msra.mxu0 %v1394
          %1434 = vmatprep.subr.bf16.mxu0 0
          %1435 = vmatpush1.bf16.msra.mxu0 %v1395
          %1436 = vmatprep.subr.bf16.mxu0 0
          %1437 = vmatpush1.bf16.msra.mxu0 %v1396
          %1438 = vmatprep.subr.bf16.mxu0 0
          %1439 = vmatpush1.bf16.msra.mxu0 %v1397
          %1440 = vmatprep.subr.bf16.mxu0 0
          %1441 = vmatpush1.bf16.msra.mxu0 %v1398
          %1442 = vmatprep.subr.bf16.mxu0 0
          %1443 = vmatpush1.bf16.msra.mxu0 %v1399
          %1444 = vmatprep.subr.bf16.mxu0 0
          %1445 = vmatpush1.bf16.msra.mxu0 %v1400
          %1446 = vmatprep.subr.bf16.mxu0 0
          %1447 = vmatpush1.bf16.msra.mxu0 %v1401
          %1448 = vmatprep.subr.bf16.mxu0 0
          %1449 = vmatpush1.bf16.msra.mxu0 %v1402
          %1450 = vmatprep.subr.bf16.mxu0 0
          %1451 = vmatpush1.bf16.msra.mxu0 %v1403
          %1452 = vmatprep.mubr.bf16.mxu0 %v1284
          %1453 = vmatmul.mubr.bf16.gmra.mrb[0].mxu0 %v1283
          %v1454 = vpop.f32.mrb[0].mxu0
          %v1455 = vadd.f32 %v1322, %v1454
          %v1456 = vpop.f32.mrb[0].mxu0
          %v1457 = vpop.f32.mrb[0].mxu0
          %v1458 = vpop.f32.mrb[0].mxu0
          %1459 = vdwg.mxu0
          %vm1460 = vcmask 74752
          %1461 = vst.msk [vmem:[#allocation3] sm:$0x3] %vm1460, %v1455
        $region48: #{road_sign_cnn_forward.5} parent=39 // pred_fallthru
          _
        // Predicated region
        $region49: #{road_sign_cnn_forward.5} parent=39 // pred_check
          %p1462 = pneg %p145
        $region50: #{road_sign_cnn_forward.5} parent=39 // pred_check_branch
          %1464 = sbr.rel (%p1462) target = $region52
        $region51: #{road_sign_cnn_forward.5} parent=39 // pred_region
          %s1466 = ssub.s32 32, 32
          %1467 = vsyncadd [#allocation4], %s1466
          %s1469 = sshll.u32 [#allocation3], 4
          %s1470 = int_to_ptr.vmem [resolvable:$true] %s1469
          %1472 = dma.vmem_to_hbm [thread:$0]  %s1470, 32, %s5, [#allocation4]
        $region52: #{road_sign_cnn_forward.5} parent=39 // pred_fallthru
          _
        // Predicated region
        $region53: #{road_sign_cnn_forward.5} parent=39 // pred_check
          %p1473 = pneg %p145
        $region54: #{road_sign_cnn_forward.5} parent=39 // pred_check_branch
          %1475 = sbr.rel (%p1473) target = $region56
        $region55: #{road_sign_cnn_forward.5} parent=39 // pred_region
          %1476 = dma.done [#allocation4], 32
        $region56: #{road_sign_cnn_forward.5} parent=39 // pred_fallthru
          _
      $region40: #{road_sign_cnn_forward.5} parent=5 // pred_fallthru
        _
      %p1477 = scmp.le.s32.totalorder 2, %s12
      // Predicated region
      $region57: #{road_sign_cnn_forward.5} parent=5 // pred_check
        %p1478 = pneg %p1477
      $region58: #{road_sign_cnn_forward.5} parent=5 // pred_check_branch
        %1480 = sbr.rel (%p1478) target = $region60
      $region59: #{road_sign_cnn_forward.5} parent=5 // pred_region
        %s1481 = ssub.s32 %s12, 2
      $region60: #{road_sign_cnn_forward.5} parent=5 // pred_fallthru
        _
    $region6: #{road_sign_cnn_forward.5} parent=1 // loop_footer
      %s16 = sadd.s32 1, %s12
    $region7: #{road_sign_cnn_forward.5} parent=1 // loop_footer_branch
      %11 = sbr.rel target = $region3
    $region8: #{road_sign_cnn_forward.5} parent=1 // loop_exit
      _
    %1482 = vsyncpa [#allocation4], 1
    %s1483 = scalar_lea.sflag [#allocation4], 1
    %1484 = vsyncpa %s1483, 1

// kernel: road_sign_cnn_forward.4
$region0: #{road_sign_cnn_forward.4}
  #allocation0 [shape = 'u32[]', space=smem, size = 0x4, offset = 0x4, fixed_abs, tag = 'smem constant byte address 0x4 - core index']
  #allocation1 [shape = 'u32[144,128]{1,0:T(1,128)}', space=vmem, size = 0x12000, scoped, tag = 'internal scratch']
  %s0 = inlined_call_operand.vmem [shape: bf16[2,4,9,9,32], index: 0, kind: input, shape index: {}]
  %s1 = inlined_call_operand.vmem [shape: bf16[288,128], index: 1, kind: input, shape index: {}]
  %s2 = inlined_call_operand.vmem [shape: f32[1,128], index: 2, kind: input, shape index: {}]
  %s3 = inlined_call_operand.vmem [shape: bf16[2,8,8,128], index: 3, kind: output, shape index: {}]
  %s4 = sld [smem:[#allocation0]]
  $region45: #{road_sign_cnn_forward.4} parent=0
    _
  %s6 = ssub.s32 1, %s4
  %s7 = scalar_select 0, %s6, %s4
  loop: start=0, step=1, limit=4
  $region2: #{road_sign_cnn_forward.4} parent=0 // loop_pre_header
    _
  $region3: #{road_sign_cnn_forward.4} parent=0 // loop_header
    %s9 = sphi 0, %s13
    %p10 = scmp.ge.s32.totalorder %s9, 4
    %s19 = sphi 0, %s21
    %s22 = sphi 0, %s19
    %s23 = sphi 0, %s22
    %s39 = sphi 0, %s23
    %s43 = sphi 0, %s43
    %s45 = sphi 0, %s43
    %s46 = sphi 0, %s45
    %s60 = sphi 0, %s46
    %s64 = sphi 0, %s64
    %s66 = sphi 0, %s64
    %s67 = sphi 0, %s66
    %s81 = sphi 0, %s67
    %s87 = sphi 0, %s89
    %s90 = sphi 0, %s87
    %s91 = sphi 0, %s90
    %s107 = sphi 0, %s91
  $region4: #{road_sign_cnn_forward.4} parent=0 // loop_header_branch
    %12 = sbr.rel (%p10) target = $region8
  $region5: #{road_sign_cnn_forward.4} parent=0 // loop_body
    %s14 = ssub.s32 %s9, 1
    %s15 = ssub.s32 %s9, 2
    %s16 = sadd.s32 %s9, 1
    %s17 = ssub.s32 %s9, %s16
    %p18 = scmp.eq.s32.totalorder %s17, 0
    %s20 = sadd.s32 %s19, 1
    %s21 = scalar_select %p18, %s19, %s20
    %p24 = pneg %p18
    %p25 = scmp.eq.s32.totalorder %s9, 1
    %p26 = por %p24, %p25
    %p27 = scmp.ne.s32.totalorder %s19, %s22
    %p28 = scmp.eq.s32.totalorder %s9, 0
    %p29 = por %p27, %p28
    %p30 = scmp.ne.s32.totalorder %s19, %s22
    %p31 = scmp.eq.s32.totalorder %s14, 1
    %p32 = por %p30, %p31
    %p33 = scmp.ne.s32.totalorder %s22, %s23
    %p34 = scmp.eq.s32.totalorder %s14, 0
    %p35 = por %p33, %p34
    %p36 = scmp.ne.s32.totalorder %s22, %s23
    %p37 = scmp.eq.s32.totalorder %s15, 1
    %p38 = por %p36, %p37
    %p40 = scmp.ne.s32.totalorder %s23, %s39
    %p41 = scmp.eq.s32.totalorder %s15, 0
    %p42 = por %p40, %p41
    %s44 = sadd.s32 %s43, 1
    %p47 = scmp.eq.s32.totalorder %s9, 1
    %p48 = scmp.ne.s32.totalorder %s43, %s45
    %p49 = scmp.eq.s32.totalorder %s9, 0
    %p50 = por %p48, %p49
    %p51 = scmp.ne.s32.totalorder %s43, %s45
    %p52 = scmp.eq.s32.totalorder %s14, 1
    %p53 = por %p51, %p52
    %p54 = scmp.ne.s32.totalorder %s45, %s46
    %p55 = scmp.eq.s32.totalorder %s14, 0
    %p56 = por %p54, %p55
    %p57 = scmp.ne.s32.totalorder %s45, %s46
    %p58 = scmp.eq.s32.totalorder %s15, 1
    %p59 = por %p57, %p58
    %p61 = scmp.ne.s32.totalorder %s46, %s60
    %p62 = scmp.eq.s32.totalorder %s15, 0
    %p63 = por %p61, %p62
    %s65 = sadd.s32 %s64, 1
    %p68 = scmp.eq.s32.totalorder %s9, 1
    %p69 = scmp.ne.s32.totalorder %s64, %s66
    %p70 = scmp.eq.s32.totalorder %s9, 0
    %p71 = por %p69, %p70
    %p72 = scmp.ne.s32.totalorder %s64, %s66
    %p73 = scmp.eq.s32.totalorder %s14, 1
    %p74 = por %p72, %p73
    %p75 = scmp.ne.s32.totalorder %s66, %s67
    %p76 = scmp.eq.s32.totalorder %s14, 0
    %p77 = por %p75, %p76
    %p78 = scmp.ne.s32.totalorder %s66, %s67
    %p79 = scmp.eq.s32.totalorder %s15, 1
    %p80 = por %p78, %p79
    %p82 = scmp.ne.s32.totalorder %s67, %s81
    %p83 = scmp.eq.s32.totalorder %s15, 0
    %p84 = por %p82, %p83
    %s85 = ssub.s32 %s9, %s16
    %p86 = scmp.eq.s32.totalorder %s85, 0
    %s88 = sadd.s32 %s87, 1
    %s89 = scalar_select %p86, %s87, %s88
    %p92 = pneg %p86
    %p93 = scmp.eq.s32.totalorder %s9, 1
    %p94 = por %p92, %p93
    %p95 = scmp.ne.s32.totalorder %s87, %s90
    %p96 = scmp.eq.s32.totalorder %s9, 0
    %p97 = por %p95, %p96
    %p98 = scmp.ne.s32.totalorder %s87, %s90
    %p99 = scmp.eq.s32.totalorder %s14, 1
    %p100 = por %p98, %p99
    %p101 = scmp.ne.s32.totalorder %s90, %s91
    %p102 = scmp.eq.s32.totalorder %s14, 0
    %p103 = por %p101, %p102
    %p104 = scmp.ne.s32.totalorder %s90, %s91
    %p105 = scmp.eq.s32.totalorder %s15, 1
    %p106 = por %p104, %p105
    %p108 = scmp.ne.s32.totalorder %s91, %s107
    %p109 = scmp.eq.s32.totalorder %s15, 0
    %p110 = por %p108, %p109
    %p111 = scmp.le.s32.totalorder 1, %s9
    %p112 = scmp.lt.s32.totalorder %s9, 3
    %p113 = pnand %p111, %p112
    %p114 = pneg %p113
    // Predicated region
    $region9: #{road_sign_cnn_forward.4} parent=5 // pred_check
      _
    $region10: #{road_sign_cnn_forward.4} parent=5 // pred_check_branch
      %116 = sbr.rel (%p113) target = $region12
    $region11: #{road_sign_cnn_forward.4} parent=5 // pred_region
      %s117 = ssub.s32 %s9, 1
      // Predicated region
      $region13: #{road_sign_cnn_forward.4} parent=11 // pred_check
        %p118 = pneg %p56
      $region14: #{road_sign_cnn_forward.4} parent=11 // pred_check_branch
        %120 = sbr.rel (%p118) target = $region16
      $region15: #{road_sign_cnn_forward.4} parent=11 // pred_region
        _
      $region16: #{road_sign_cnn_forward.4} parent=11 // pred_fallthru
        _
      // Predicated region
      $region17: #{road_sign_cnn_forward.4} parent=11 // pred_check
        %p121 = pneg %p77
      $region18: #{road_sign_cnn_forward.4} parent=11 // pred_check_branch
        %123 = sbr.rel (%p121) target = $region20
      $region19: #{road_sign_cnn_forward.4} parent=11 // pred_region
        _
      $region20: #{road_sign_cnn_forward.4} parent=11 // pred_fallthru
        _
    $region12: #{road_sign_cnn_forward.4} parent=5 // pred_fallthru
      _
    %p124 = scmp.lt.s32.totalorder %s9, 2
    // Predicated region
    $region21: #{road_sign_cnn_forward.4} parent=5 // pred_check
      %p125 = pneg %p124
    $region22: #{road_sign_cnn_forward.4} parent=5 // pred_check_branch
      %127 = sbr.rel (%p125) target = $region24
    $region23: #{road_sign_cnn_forward.4} parent=5 // pred_region
      // Predicated region
      $region25: #{road_sign_cnn_forward.4} parent=23 // pred_check
        %p128 = pneg %p29
      $region26: #{road_sign_cnn_forward.4} parent=23 // pred_check_branch
        %130 = sbr.rel (%p128) target = $region28
      $region27: #{road_sign_cnn_forward.4} parent=23 // pred_region
        %p131 = scmp.lt.s32.totalorder %s9, 1
        %s132 = scalar_select %p131, %s9, 1
        %s133 = smul.addr %s132, 72
        %s134 = smul.addr %s133, 4
        %s135 = scalar_lea.vmem %s0, %s134
      $region28: #{road_sign_cnn_forward.4} parent=23 // pred_fallthru
        _
    $region24: #{road_sign_cnn_forward.4} parent=5 // pred_fallthru
      _
    %p136 = scmp.le.s32.totalorder 1, %s9
    %p137 = scmp.lt.s32.totalorder %s9, 3
    %p138 = pnand %p136, %p137
    %p139 = pneg %p138
    // Predicated region
    $region29: #{road_sign_cnn_forward.4} parent=5 // pred_check
      _
    $region30: #{road_sign_cnn_forward.4} parent=5 // pred_check_branch
      %141 = sbr.rel (%p138) target = $region32
    $region31: #{road_sign_cnn_forward.4} parent=5 // pred_region
      %s142 = ssub.s32 %s9, 1
      %p143 = scmp.lt.s32.totalorder %s14, 1
      %s144 = scalar_select %p143, %s14, 1
      %s145 = smul.addr %s144, 72
      %s146 = smul.addr %s145, 4
      %s147 = scalar_lea.vmem %s0, %s146
      %p148 = pneg %p35
      %p149 = pneg %p32
      %p150 = pneg %p56
      %p151 = pneg %p53
      %p152 = pneg %p77
      %p153 = pneg %p74
      %p154 = pneg %p103
      %p155 = pneg %p100
      %p156 = scmp.lt.s32.totalorder %s14, 1
      %s157 = scalar_select %p156, %s14, 1
      %s158 = smul.addr %s157, 8
      %s159 = smul.addr %s158, 4
      %s160 = scalar_lea.vmem %s3, %s159
      %p161 = scmp.lt.s32.totalorder %s14, 1
      %s162 = scalar_select %p161, %s14, 1
      %s163 = smul.addr %s162, 72
      %s164 = smul.addr %s163, 4
      %s165 = scalar_lea.vmem %s0, %s164
      %p166 = scmp.lt.s32.totalorder %s14, 1
      %s167 = scalar_select %p166, %s14, 1
      %s168 = smul.addr %s167, 8
      %s169 = smul.addr %s168, 4
      %s170 = scalar_lea.vmem %s3, %s169
      %v172 = vld [vmem:[%s165] sm:$0xf]
      %v173 = vld [vmem:[%s165 + $0x8] sm:$0xf]
      %v174 = vld [vmem:[%s165 + $0x10] sm:$0xf]
      %v175 = vld [vmem:[%s165 + $0x18] sm:$0xf]
      %v176 = vld [vmem:[%s165 + $0x20] sm:$0xf]
      %v177 = vld [vmem:[%s165 + $0x28] sm:$0xf]
      %v178 = vld [vmem:[%s165 + $0x30] sm:$0xf]
      %v179 = vld [vmem:[%s165 + $0x38] sm:$0xf]
      %s180 = scalar_lea.vmem %s165, 72
      %v181 = vld [vmem:[%s180] sm:$0xf]
      %v182 = vld [vmem:[%s180 + $0x8] sm:$0xf]
      %v183 = vld [vmem:[%s180 + $0x10] sm:$0xf]
      %v184 = vld [vmem:[%s180 + $0x18] sm:$0xf]
      %v185 = vld [vmem:[%s180 + $0x20] sm:$0xf]
      %v186 = vld [vmem:[%s180 + $0x28] sm:$0xf]
      %v187 = vld [vmem:[%s180 + $0x30] sm:$0xf]
      %v188 = vld [vmem:[%s180 + $0x38] sm:$0xf]
      %v189 = vld [vmem:[%s165 + $0x4] sm:$0x1]
      %v190 = vld [vmem:[%s165 + $0xc] sm:$0x1]
      %v191 = vld [vmem:[%s165 + $0x14] sm:$0x1]
      %v192 = vld [vmem:[%s165 + $0x1c] sm:$0x1]
      %v193 = vld [vmem:[%s165 + $0x24] sm:$0x1]
      %v194 = vld [vmem:[%s165 + $0x2c] sm:$0x1]
      %v195 = vld [vmem:[%s165 + $0x34] sm:$0x1]
      %v196 = vld [vmem:[%s165 + $0x3c] sm:$0x1]
      %s197 = scalar_lea.vmem %s165, 144
      %v198 = vld [vmem:[%s197] sm:$0xf]
      %v199 = vld [vmem:[%s197 + $0x8] sm:$0xf]
      %v200 = vld [vmem:[%s197 + $0x10] sm:$0xf]
      %v201 = vld [vmem:[%s197 + $0x18] sm:$0xf]
      %v202 = vld [vmem:[%s197 + $0x20] sm:$0xf]
      %v203 = vld [vmem:[%s197 + $0x28] sm:$0xf]
      %v204 = vld [vmem:[%s197 + $0x30] sm:$0xf]
      %v205 = vld [vmem:[%s197 + $0x38] sm:$0xf]
      %s206 = scalar_lea.vmem %s165, 216
      %v207 = vld [vmem:[%s206] sm:$0xf]
      %v208 = vld [vmem:[%s206 + $0x8] sm:$0xf]
      %v209 = vld [vmem:[%s206 + $0x10] sm:$0xf]
      %v210 = vld [vmem:[%s206 + $0x18] sm:$0xf]
      %v211 = vld [vmem:[%s206 + $0x20] sm:$0xf]
      %v212 = vld [vmem:[%s206 + $0x28] sm:$0xf]
      %v213 = vld [vmem:[%s206 + $0x30] sm:$0xf]
      %v214 = vld [vmem:[%s206 + $0x38] sm:$0xf]
      %v215 = vld [vmem:[%s197 + $0x4] sm:$0x1]
      %v216 = vld [vmem:[%s197 + $0xc] sm:$0x1]
      %v217 = vld [vmem:[%s197 + $0x14] sm:$0x1]
      %v218 = vld [vmem:[%s197 + $0x1c] sm:$0x1]
      %v219 = vld [vmem:[%s197 + $0x24] sm:$0x1]
      %v220 = vld [vmem:[%s197 + $0x2c] sm:$0x1]
      %v221 = vld [vmem:[%s197 + $0x34] sm:$0x1]
      %v222 = vld [vmem:[%s197 + $0x3c] sm:$0x1]
      %s223 = scalar_lea.vmem %s165, 8
      %v224 = vld [vmem:[%s223] sm:$0xf]
      %v225 = vld [vmem:[%s223 + $0x8] sm:$0xf]
      %v226 = vld [vmem:[%s223 + $0x10] sm:$0xf]
      %v227 = vld [vmem:[%s223 + $0x18] sm:$0xf]
      %v228 = vld [vmem:[%s223 + $0x20] sm:$0xf]
      %v229 = vld [vmem:[%s223 + $0x28] sm:$0xf]
      %v230 = vld [vmem:[%s223 + $0x30] sm:$0xf]
      %v231 = vld [vmem:[%s223 + $0x38] sm:$0xf]
      %s232 = scalar_lea.vmem %s165, 80
      %v233 = vld [vmem:[%s232] sm:$0xf]
      %v234 = vld [vmem:[%s232 + $0x8] sm:$0xf]
      %v235 = vld [vmem:[%s232 + $0x10] sm:$0xf]
      %v236 = vld [vmem:[%s232 + $0x18] sm:$0xf]
      %v237 = vld [vmem:[%s232 + $0x20] sm:$0xf]
      %v238 = vld [vmem:[%s232 + $0x28] sm:$0xf]
      %v239 = vld [vmem:[%s232 + $0x30] sm:$0xf]
      %v240 = vld [vmem:[%s232 + $0x38] sm:$0xf]
      %v241 = vld [vmem:[%s223 + $0x4] sm:$0x1]
      %v242 = vld [vmem:[%s223 + $0xc] sm:$0x1]
      %v243 = vld [vmem:[%s223 + $0x14] sm:$0x1]
      %v244 = vld [vmem:[%s223 + $0x1c] sm:$0x1]
      %v245 = vld [vmem:[%s223 + $0x24] sm:$0x1]
      %v246 = vld [vmem:[%s223 + $0x2c] sm:$0x1]
      %v247 = vld [vmem:[%s223 + $0x34] sm:$0x1]
      %v248 = vld [vmem:[%s223 + $0x3c] sm:$0x1]
      %v257 = vunpack.c.l.b16 %v181
      %v258 = vunpack.c.l.b16 %v182
      %v259 = vunpack.c.l.b16 %v183
      %v260 = vunpack.c.l.b16 %v184
      %v261 = vunpack.c.l.b16 %v185
      %v262 = vunpack.c.l.b16 %v186
      %v263 = vunpack.c.l.b16 %v187
      %v264 = vunpack.c.l.b16 %v188
      %v265 = vpack.c.b16 %v257, %v257
      %v266 = vpack.c.b16 %v258, %v258
      %v267 = vpack.c.b16 %v259, %v259
      %v268 = vpack.c.b16 %v260, %v260
      %v269 = vpack.c.b16 %v261, %v261
      %v270 = vpack.c.b16 %v262, %v262
      %v271 = vpack.c.b16 %v263, %v263
      %v272 = vpack.c.b16 %v264, %v264
      %273 = vrot.lane.b32.xlu0 %v265, 32
      %v274 = vpop.permute.xlu0 %273
      %275 = vrot.lane.b32.xlu0 %v266, 32
      %v276 = vpop.permute.xlu0 %275
      %277 = vrot.lane.b32.xlu0 %v267, 32
      %v278 = vpop.permute.xlu0 %277
      %279 = vrot.lane.b32.xlu0 %v268, 32
      %v280 = vpop.permute.xlu0 %279
      %281 = vrot.lane.b32.xlu0 %v269, 32
      %v282 = vpop.permute.xlu0 %281
      %283 = vrot.lane.b32.xlu0 %v270, 32
      %v284 = vpop.permute.xlu0 %283
      %285 = vrot.lane.b32.xlu0 %v271, 32
      %v286 = vpop.permute.xlu0 %285
      %287 = vrot.lane.b32.xlu0 %v272, 32
      %v288 = vpop.permute.xlu0 %287
      %v305 = vunpack.c.l.b16 %v172
      %v306 = vunpack.c.l.b16 %v189
      %v307 = vunpack.c.l.b16 %v173
      %v308 = vunpack.c.l.b16 %v190
      %v309 = vunpack.c.l.b16 %v174
      %v310 = vunpack.c.l.b16 %v191
      %v311 = vunpack.c.l.b16 %v175
      %v312 = vunpack.c.l.b16 %v192
      %v313 = vunpack.c.l.b16 %v176
      %v314 = vunpack.c.l.b16 %v193
      %v315 = vunpack.c.l.b16 %v177
      %v316 = vunpack.c.l.b16 %v194
      %v317 = vunpack.c.l.b16 %v178
      %v318 = vunpack.c.l.b16 %v195
      %v319 = vunpack.c.l.b16 %v179
      %v320 = vunpack.c.l.b16 %v196
      %v321 = vpack.c.b16 %v306, %v305
      %v322 = vpack.c.b16 %v308, %v307
      %v323 = vpack.c.b16 %v310, %v309
      %v324 = vpack.c.b16 %v312, %v311
      %v325 = vpack.c.b16 %v314, %v313
      %v326 = vpack.c.b16 %v316, %v315
      %v327 = vpack.c.b16 %v318, %v317
      %v328 = vpack.c.b16 %v320, %v319
      %v330 = vshrl.u32 %v321, 16
      %v332 = vshll.u32 %v321, 16
      %v334 = vrot.slane %v332, 1
      %v335 = vor.u32 %v330, %v334
      %v337 = vshrl.u32 %v322, 16
      %v339 = vshll.u32 %v322, 16
      %v341 = vrot.slane %v339, 1
      %v342 = vor.u32 %v337, %v341
      %v344 = vshrl.u32 %v323, 16
      %v346 = vshll.u32 %v323, 16
      %v348 = vrot.slane %v346, 1
      %v349 = vor.u32 %v344, %v348
      %v351 = vshrl.u32 %v324, 16
      %v353 = vshll.u32 %v324, 16
      %v355 = vrot.slane %v353, 1
      %v356 = vor.u32 %v351, %v355
      %v358 = vshrl.u32 %v325, 16
      %v360 = vshll.u32 %v325, 16
      %v362 = vrot.slane %v360, 1
      %v363 = vor.u32 %v358, %v362
      %v365 = vshrl.u32 %v326, 16
      %v367 = vshll.u32 %v326, 16
      %v369 = vrot.slane %v367, 1
      %v370 = vor.u32 %v365, %v369
      %v372 = vshrl.u32 %v327, 16
      %v374 = vshll.u32 %v327, 16
      %v376 = vrot.slane %v374, 1
      %v377 = vor.u32 %v372, %v376
      %v379 = vshrl.u32 %v328, 16
      %v381 = vshll.u32 %v328, 16
      %v383 = vrot.slane %v381, 1
      %v384 = vor.u32 %v379, %v383
      %385 = vrot.lane.b32.xlu0 %v335, 64
      %v386 = vpop.permute.xlu0 %385
      %387 = vrot.lane.b32.xlu0 %v342, 64
      %v388 = vpop.permute.xlu0 %387
      %389 = vrot.lane.b32.xlu0 %v349, 64
      %v390 = vpop.permute.xlu0 %389
      %391 = vrot.lane.b32.xlu0 %v356, 64
      %v392 = vpop.permute.xlu0 %391
      %393 = vrot.lane.b32.xlu0 %v363, 64
      %v394 = vpop.permute.xlu0 %393
      %395 = vrot.lane.b32.xlu0 %v370, 64
      %v396 = vpop.permute.xlu0 %395
      %397 = vrot.lane.b32.xlu0 %v377, 64
      %v398 = vpop.permute.xlu0 %397
      %399 = vrot.lane.b32.xlu0 %v384, 64
      %v400 = vpop.permute.xlu0 %399
      %v409 = vunpack.c.l.b16 %v198
      %v410 = vunpack.c.l.b16 %v199
      %v411 = vunpack.c.l.b16 %v200
      %v412 = vunpack.c.l.b16 %v201
      %v413 = vunpack.c.l.b16 %v202
      %v414 = vunpack.c.l.b16 %v203
      %v415 = vunpack.c.l.b16 %v204
      %v416 = vunpack.c.l.b16 %v205
      %v417 = vpack.c.b16 %v409, %v409
      %v418 = vpack.c.b16 %v410, %v410
      %v419 = vpack.c.b16 %v411, %v411
      %v420 = vpack.c.b16 %v412, %v412
      %v421 = vpack.c.b16 %v413, %v413
      %v422 = vpack.c.b16 %v414, %v414
      %v423 = vpack.c.b16 %v415, %v415
      %v424 = vpack.c.b16 %v416, %v416
      %425 = vrot.lane.b32.xlu0 %v417, 96
      %v426 = vpop.permute.xlu0 %425
      %427 = vrot.lane.b32.xlu0 %v418, 96
      %v428 = vpop.permute.xlu0 %427
      %429 = vrot.lane.b32.xlu0 %v419, 96
      %v430 = vpop.permute.xlu0 %429
      %431 = vrot.lane.b32.xlu0 %v420, 96
      %v432 = vpop.permute.xlu0 %431
      %433 = vrot.lane.b32.xlu0 %v421, 96
      %v434 = vpop.permute.xlu0 %433
      %435 = vrot.lane.b32.xlu0 %v422, 96
      %v436 = vpop.permute.xlu0 %435
      %437 = vrot.lane.b32.xlu0 %v423, 96
      %v438 = vpop.permute.xlu0 %437
      %439 = vrot.lane.b32.xlu0 %v424, 96
      %v440 = vpop.permute.xlu0 %439
      %v449 = vunpack.c.l.b16 %v215
      %v450 = vunpack.c.l.b16 %v216
      %v451 = vunpack.c.l.b16 %v217
      %v452 = vunpack.c.l.b16 %v218
      %v453 = vunpack.c.l.b16 %v219
      %v454 = vunpack.c.l.b16 %v220
      %v455 = vunpack.c.l.b16 %v221
      %v456 = vunpack.c.l.b16 %v222
      %v457 = vpack.c.b16 %v449, %v409
      %v458 = vpack.c.b16 %v450, %v410
      %v459 = vpack.c.b16 %v451, %v411
      %v460 = vpack.c.b16 %v452, %v412
      %v461 = vpack.c.b16 %v453, %v413
      %v462 = vpack.c.b16 %v454, %v414
      %v463 = vpack.c.b16 %v455, %v415
      %v464 = vpack.c.b16 %v456, %v416
      %v466 = vshrl.u32 %v457, 16
      %v468 = vshll.u32 %v457, 16
      %v470 = vrot.slane %v468, 1
      %v471 = vor.u32 %v466, %v470
      %v473 = vshrl.u32 %v458, 16
      %v475 = vshll.u32 %v458, 16
      %v477 = vrot.slane %v475, 1
      %v478 = vor.u32 %v473, %v477
      %v480 = vshrl.u32 %v459, 16
      %v482 = vshll.u32 %v459, 16
      %v484 = vrot.slane %v482, 1
      %v485 = vor.u32 %v480, %v484
      %v487 = vshrl.u32 %v460, 16
      %v489 = vshll.u32 %v460, 16
      %v491 = vrot.slane %v489, 1
      %v492 = vor.u32 %v487, %v491
      %v494 = vshrl.u32 %v461, 16
      %v496 = vshll.u32 %v461, 16
      %v498 = vrot.slane %v496, 1
      %v499 = vor.u32 %v494, %v498
      %v501 = vshrl.u32 %v462, 16
      %v503 = vshll.u32 %v462, 16
      %v505 = vrot.slane %v503, 1
      %v506 = vor.u32 %v501, %v505
      %v508 = vshrl.u32 %v463, 16
      %v510 = vshll.u32 %v463, 16
      %v512 = vrot.slane %v510, 1
      %v513 = vor.u32 %v508, %v512
      %v515 = vshrl.u32 %v464, 16
      %v517 = vshll.u32 %v464, 16
      %v519 = vrot.slane %v517, 1
      %v520 = vor.u32 %v515, %v519
      %521 = vrot.lane.b32.xlu0 %v471, 32
      %v522 = vpop.permute.xlu0 %521
      %523 = vrot.lane.b32.xlu0 %v478, 32
      %v524 = vpop.permute.xlu0 %523
      %525 = vrot.lane.b32.xlu0 %v485, 32
      %v526 = vpop.permute.xlu0 %525
      %527 = vrot.lane.b32.xlu0 %v492, 32
      %v528 = vpop.permute.xlu0 %527
      %529 = vrot.lane.b32.xlu0 %v499, 32
      %v530 = vpop.permute.xlu0 %529
      %531 = vrot.lane.b32.xlu0 %v506, 32
      %v532 = vpop.permute.xlu0 %531
      %533 = vrot.lane.b32.xlu0 %v513, 32
      %v534 = vpop.permute.xlu0 %533
      %535 = vrot.lane.b32.xlu0 %v520, 32
      %v536 = vpop.permute.xlu0 %535
      %v545 = vunpack.c.l.b16 %v224
      %v546 = vunpack.c.l.b16 %v225
      %v547 = vunpack.c.l.b16 %v226
      %v548 = vunpack.c.l.b16 %v227
      %v549 = vunpack.c.l.b16 %v228
      %v550 = vunpack.c.l.b16 %v229
      %v551 = vunpack.c.l.b16 %v230
      %v552 = vunpack.c.l.b16 %v231
      %v553 = vpack.c.b16 %v545, %v545
      %v554 = vpack.c.b16 %v546, %v546
      %v555 = vpack.c.b16 %v547, %v547
      %v556 = vpack.c.b16 %v548, %v548
      %v557 = vpack.c.b16 %v549, %v549
      %v558 = vpack.c.b16 %v550, %v550
      %v559 = vpack.c.b16 %v551, %v551
      %v560 = vpack.c.b16 %v552, %v552
      %561 = vrot.lane.b32.xlu0 %v553, 64
      %v562 = vpop.permute.xlu0 %561
      %563 = vrot.lane.b32.xlu0 %v554, 64
      %v564 = vpop.permute.xlu0 %563
      %565 = vrot.lane.b32.xlu0 %v555, 64
      %v566 = vpop.permute.xlu0 %565
      %567 = vrot.lane.b32.xlu0 %v556, 64
      %v568 = vpop.permute.xlu0 %567
      %569 = vrot.lane.b32.xlu0 %v557, 64
      %v570 = vpop.permute.xlu0 %569
      %571 = vrot.lane.b32.xlu0 %v558, 64
      %v572 = vpop.permute.xlu0 %571
      %573 = vrot.lane.b32.xlu0 %v559, 64
      %v574 = vpop.permute.xlu0 %573
      %575 = vrot.lane.b32.xlu0 %v560, 64
      %v576 = vpop.permute.xlu0 %575
      %v585 = vunpack.c.l.b16 %v233
      %v586 = vunpack.c.l.b16 %v234
      %v587 = vunpack.c.l.b16 %v235
      %v588 = vunpack.c.l.b16 %v236
      %v589 = vunpack.c.l.b16 %v237
      %v590 = vunpack.c.l.b16 %v238
      %v591 = vunpack.c.l.b16 %v239
      %v592 = vunpack.c.l.b16 %v240
      %v593 = vpack.c.b16 %v585, %v585
      %v594 = vpack.c.b16 %v586, %v586
      %v595 = vpack.c.b16 %v587, %v587
      %v596 = vpack.c.b16 %v588, %v588
      %v597 = vpack.c.b16 %v589, %v589
      %v598 = vpack.c.b16 %v590, %v590
      %v599 = vpack.c.b16 %v591, %v591
      %v600 = vpack.c.b16 %v592, %v592
      %601 = vrot.lane.b32.xlu0 %v593, 96
      %v602 = vpop.permute.xlu0 %601
      %603 = vrot.lane.b32.xlu0 %v594, 96
      %v604 = vpop.permute.xlu0 %603
      %605 = vrot.lane.b32.xlu0 %v595, 96
      %v606 = vpop.permute.xlu0 %605
      %607 = vrot.lane.b32.xlu0 %v596, 96
      %v608 = vpop.permute.xlu0 %607
      %609 = vrot.lane.b32.xlu0 %v597, 96
      %v610 = vpop.permute.xlu0 %609
      %611 = vrot.lane.b32.xlu0 %v598, 96
      %v612 = vpop.permute.xlu0 %611
      %613 = vrot.lane.b32.xlu0 %v599, 96
      %v614 = vpop.permute.xlu0 %613
      %615 = vrot.lane.b32.xlu0 %v600, 96
      %v616 = vpop.permute.xlu0 %615
      %v625 = vunpack.c.l.b16 %v241
      %v626 = vunpack.c.l.b16 %v242
      %v627 = vunpack.c.l.b16 %v243
      %v628 = vunpack.c.l.b16 %v244
      %v629 = vunpack.c.l.b16 %v245
      %v630 = vunpack.c.l.b16 %v246
      %v631 = vunpack.c.l.b16 %v247
      %v632 = vunpack.c.l.b16 %v248
      %v633 = vpack.c.b16 %v625, %v545
      %v634 = vpack.c.b16 %v626, %v546
      %v635 = vpack.c.b16 %v627, %v547
      %v636 = vpack.c.b16 %v628, %v548
      %v637 = vpack.c.b16 %v629, %v549
      %v638 = vpack.c.b16 %v630, %v550
      %v639 = vpack.c.b16 %v631, %v551
      %v640 = vpack.c.b16 %v632, %v552
      %v642 = vshrl.u32 %v633, 16
      %v644 = vshll.u32 %v633, 16
      %v646 = vrot.slane %v644, 1
      %v647 = vor.u32 %v642, %v646
      %v649 = vshrl.u32 %v634, 16
      %v651 = vshll.u32 %v634, 16
      %v653 = vrot.slane %v651, 1
      %v654 = vor.u32 %v649, %v653
      %v656 = vshrl.u32 %v635, 16
      %v658 = vshll.u32 %v635, 16
      %v660 = vrot.slane %v658, 1
      %v661 = vor.u32 %v656, %v660
      %v663 = vshrl.u32 %v636, 16
      %v665 = vshll.u32 %v636, 16
      %v667 = vrot.slane %v665, 1
      %v668 = vor.u32 %v663, %v667
      %v670 = vshrl.u32 %v637, 16
      %v672 = vshll.u32 %v637, 16
      %v674 = vrot.slane %v672, 1
      %v675 = vor.u32 %v670, %v674
      %v677 = vshrl.u32 %v638, 16
      %v679 = vshll.u32 %v638, 16
      %v681 = vrot.slane %v679, 1
      %v682 = vor.u32 %v677, %v681
      %v684 = vshrl.u32 %v639, 16
      %v686 = vshll.u32 %v639, 16
      %v688 = vrot.slane %v686, 1
      %v689 = vor.u32 %v684, %v688
      %v691 = vshrl.u32 %v640, 16
      %v693 = vshll.u32 %v640, 16
      %v695 = vrot.slane %v693, 1
      %v696 = vor.u32 %v691, %v695
      %vm697 = vcmask 261120
      %v700 = vsel %vm697, %v172, %v274
      %v703 = vsel %vm697, %v173, %v276
      %v706 = vsel %vm697, %v174, %v278
      %v709 = vsel %vm697, %v175, %v280
      %v712 = vsel %vm697, %v176, %v282
      %v715 = vsel %vm697, %v177, %v284
      %v718 = vsel %vm697, %v178, %v286
      %v721 = vsel %vm697, %v179, %v288
      %vm722 = vcmask 523264
      %v724 = vsel %vm722, %v700, %v386
      %v726 = vsel %vm722, %v703, %v388
      %v728 = vsel %vm722, %v706, %v390
      %v730 = vsel %vm722, %v709, %v392
      %v732 = vsel %vm722, %v712, %v394
      %v734 = vsel %vm722, %v715, %v396
      %v736 = vsel %vm722, %v718, %v398
      %v738 = vsel %vm722, %v721, %v400
      %vm739 = vcmask 785408
      %v741 = vsel %vm739, %v724, %v426
      %v743 = vsel %vm739, %v726, %v428
      %v745 = vsel %vm739, %v728, %v430
      %v747 = vsel %vm739, %v730, %v432
      %v749 = vsel %vm739, %v732, %v434
      %v751 = vsel %vm739, %v734, %v436
      %v753 = vsel %vm739, %v736, %v438
      %v755 = vsel %vm739, %v738, %v440
      %v758 = vsel %vm697, %v207, %v522
      %v761 = vsel %vm697, %v208, %v524
      %v764 = vsel %vm697, %v209, %v526
      %v767 = vsel %vm697, %v210, %v528
      %v770 = vsel %vm697, %v211, %v530
      %v773 = vsel %vm697, %v212, %v532
      %v776 = vsel %vm697, %v213, %v534
      %v779 = vsel %vm697, %v214, %v536
      %v781 = vsel %vm722, %v758, %v562
      %v783 = vsel %vm722, %v761, %v564
      %v785 = vsel %vm722, %v764, %v566
      %v787 = vsel %vm722, %v767, %v568
      %v789 = vsel %vm722, %v770, %v570
      %v791 = vsel %vm722, %v773, %v572
      %v793 = vsel %vm722, %v776, %v574
      %v795 = vsel %vm722, %v779, %v576
      %v797 = vsel %vm739, %v781, %v602
      %v799 = vsel %vm739, %v783, %v604
      %v801 = vsel %vm739, %v785, %v606
      %v803 = vsel %vm739, %v787, %v608
      %v805 = vsel %vm739, %v789, %v610
      %v807 = vsel %vm739, %v791, %v612
      %v809 = vsel %vm739, %v793, %v614
      %v811 = vsel %vm739, %v795, %v616
      %v812 = vld [vmem:[%s180 + $0x4] sm:$0x1]
      %v813 = vld [vmem:[%s180 + $0xc] sm:$0x1]
      %v814 = vld [vmem:[%s180 + $0x14] sm:$0x1]
      %v815 = vld [vmem:[%s180 + $0x1c] sm:$0x1]
      %v816 = vld [vmem:[%s180 + $0x24] sm:$0x1]
      %v817 = vld [vmem:[%s180 + $0x2c] sm:$0x1]
      %v818 = vld [vmem:[%s180 + $0x34] sm:$0x1]
      %v819 = vld [vmem:[%s180 + $0x3c] sm:$0x1]
      %v820 = vld [vmem:[%s206 + $0x4] sm:$0x1]
      %v821 = vld [vmem:[%s206 + $0xc] sm:$0x1]
      %v822 = vld [vmem:[%s206 + $0x14] sm:$0x1]
      %v823 = vld [vmem:[%s206 + $0x1c] sm:$0x1]
      %v824 = vld [vmem:[%s206 + $0x24] sm:$0x1]
      %v825 = vld [vmem:[%s206 + $0x2c] sm:$0x1]
      %v826 = vld [vmem:[%s206 + $0x34] sm:$0x1]
      %v827 = vld [vmem:[%s206 + $0x3c] sm:$0x1]
      %v828 = vld [vmem:[%s232 + $0x4] sm:$0x1]
      %v829 = vld [vmem:[%s232 + $0xc] sm:$0x1]
      %v830 = vld [vmem:[%s232 + $0x14] sm:$0x1]
      %v831 = vld [vmem:[%s232 + $0x1c] sm:$0x1]
      %v832 = vld [vmem:[%s232 + $0x24] sm:$0x1]
      %v833 = vld [vmem:[%s232 + $0x2c] sm:$0x1]
      %v834 = vld [vmem:[%s232 + $0x34] sm:$0x1]
      %v835 = vld [vmem:[%s232 + $0x3c] sm:$0x1]
      %836 = vrot.lane.b32.xlu0 %v335, 32
      %v837 = vpop.permute.xlu0 %836
      %838 = vrot.lane.b32.xlu0 %v342, 32
      %v839 = vpop.permute.xlu0 %838
      %840 = vrot.lane.b32.xlu0 %v349, 32
      %v841 = vpop.permute.xlu0 %840
      %842 = vrot.lane.b32.xlu0 %v356, 32
      %v843 = vpop.permute.xlu0 %842
      %844 = vrot.lane.b32.xlu0 %v363, 32
      %v845 = vpop.permute.xlu0 %844
      %846 = vrot.lane.b32.xlu0 %v370, 32
      %v847 = vpop.permute.xlu0 %846
      %848 = vrot.lane.b32.xlu0 %v377, 32
      %v849 = vpop.permute.xlu0 %848
      %850 = vrot.lane.b32.xlu0 %v384, 32
      %v851 = vpop.permute.xlu0 %850
      %v860 = vunpack.c.l.b16 %v812
      %v861 = vunpack.c.l.b16 %v813
      %v862 = vunpack.c.l.b16 %v814
      %v863 = vunpack.c.l.b16 %v815
      %v864 = vunpack.c.l.b16 %v816
      %v865 = vunpack.c.l.b16 %v817
      %v866 = vunpack.c.l.b16 %v818
      %v867 = vunpack.c.l.b16 %v819
      %v868 = vpack.c.b16 %v860, %v257
      %v869 = vpack.c.b16 %v861, %v258
      %v870 = vpack.c.b16 %v862, %v259
      %v871 = vpack.c.b16 %v863, %v260
      %v872 = vpack.c.b16 %v864, %v261
      %v873 = vpack.c.b16 %v865, %v262
      %v874 = vpack.c.b16 %v866, %v263
      %v875 = vpack.c.b16 %v867, %v264
      %v877 = vshrl.u32 %v868, 16
      %v879 = vshll.u32 %v868, 16
      %v881 = vrot.slane %v879, 1
      %v882 = vor.u32 %v877, %v881
      %v884 = vshrl.u32 %v869, 16
      %v886 = vshll.u32 %v869, 16
      %v888 = vrot.slane %v886, 1
      %v889 = vor.u32 %v884, %v888
      %v891 = vshrl.u32 %v870, 16
      %v893 = vshll.u32 %v870, 16
      %v895 = vrot.slane %v893, 1
      %v896 = vor.u32 %v891, %v895
      %v898 = vshrl.u32 %v871, 16
      %v900 = vshll.u32 %v871, 16
      %v902 = vrot.slane %v900, 1
      %v903 = vor.u32 %v898, %v902
      %v905 = vshrl.u32 %v872, 16
      %v907 = vshll.u32 %v872, 16
      %v909 = vrot.slane %v907, 1
      %v910 = vor.u32 %v905, %v909
      %v912 = vshrl.u32 %v873, 16
      %v914 = vshll.u32 %v873, 16
      %v916 = vrot.slane %v914, 1
      %v917 = vor.u32 %v912, %v916
      %v919 = vshrl.u32 %v874, 16
      %v921 = vshll.u32 %v874, 16
      %v923 = vrot.slane %v921, 1
      %v924 = vor.u32 %v919, %v923
      %v926 = vshrl.u32 %v875, 16
      %v928 = vshll.u32 %v875, 16
      %v930 = vrot.slane %v928, 1
      %v931 = vor.u32 %v926, %v930
      %932 = vrot.lane.b32.xlu0 %v882, 64
      %v933 = vpop.permute.xlu0 %932
      %934 = vrot.lane.b32.xlu0 %v889, 64
      %v935 = vpop.permute.xlu0 %934
      %936 = vrot.lane.b32.xlu0 %v896, 64
      %v937 = vpop.permute.xlu0 %936
      %938 = vrot.lane.b32.xlu0 %v903, 64
      %v939 = vpop.permute.xlu0 %938
      %940 = vrot.lane.b32.xlu0 %v910, 64
      %v941 = vpop.permute.xlu0 %940
      %942 = vrot.lane.b32.xlu0 %v917, 64
      %v943 = vpop.permute.xlu0 %942
      %944 = vrot.lane.b32.xlu0 %v924, 64
      %v945 = vpop.permute.xlu0 %944
      %946 = vrot.lane.b32.xlu0 %v931, 64
      %v947 = vpop.permute.xlu0 %946
      %v956 = vunpack.c.l.b16 %v207
      %v957 = vunpack.c.l.b16 %v208
      %v958 = vunpack.c.l.b16 %v209
      %v959 = vunpack.c.l.b16 %v210
      %v960 = vunpack.c.l.b16 %v211
      %v961 = vunpack.c.l.b16 %v212
      %v962 = vunpack.c.l.b16 %v213
      %v963 = vunpack.c.l.b16 %v214
      %v964 = vpack.c.b16 %v956, %v956
      %v965 = vpack.c.b16 %v957, %v957
      %v966 = vpack.c.b16 %v958, %v958
      %v967 = vpack.c.b16 %v959, %v959
      %v968 = vpack.c.b16 %v960, %v960
      %v969 = vpack.c.b16 %v961, %v961
      %v970 = vpack.c.b16 %v962, %v962
      %v971 = vpack.c.b16 %v963, %v963
      %972 = vrot.lane.b32.xlu0 %v964, 96
      %v973 = vpop.permute.xlu0 %972
      %974 = vrot.lane.b32.xlu0 %v965, 96
      %v975 = vpop.permute.xlu0 %974
      %976 = vrot.lane.b32.xlu0 %v966, 96
      %v977 = vpop.permute.xlu0 %976
      %978 = vrot.lane.b32.xlu0 %v967, 96
      %v979 = vpop.permute.xlu0 %978
      %980 = vrot.lane.b32.xlu0 %v968, 96
      %v981 = vpop.permute.xlu0 %980
      %982 = vrot.lane.b32.xlu0 %v969, 96
      %v983 = vpop.permute.xlu0 %982
      %984 = vrot.lane.b32.xlu0 %v970, 96
      %v985 = vpop.permute.xlu0 %984
      %986 = vrot.lane.b32.xlu0 %v971, 96
      %v987 = vpop.permute.xlu0 %986
      %v996 = vunpack.c.l.b16 %v820
      %v997 = vunpack.c.l.b16 %v821
      %v998 = vunpack.c.l.b16 %v822
      %v999 = vunpack.c.l.b16 %v823
      %v1000 = vunpack.c.l.b16 %v824
      %v1001 = vunpack.c.l.b16 %v825
      %v1002 = vunpack.c.l.b16 %v826
      %v1003 = vunpack.c.l.b16 %v827
      %v1004 = vpack.c.b16 %v996, %v956
      %v1005 = vpack.c.b16 %v997, %v957
      %v1006 = vpack.c.b16 %v998, %v958
      %v1007 = vpack.c.b16 %v999, %v959
      %v1008 = vpack.c.b16 %v1000, %v960
      %v1009 = vpack.c.b16 %v1001, %v961
      %v1010 = vpack.c.b16 %v1002, %v962
      %v1011 = vpack.c.b16 %v1003, %v963
      %v1013 = vshrl.u32 %v1004, 16
      %v1015 = vshll.u32 %v1004, 16
      %v1017 = vrot.slane %v1015, 1
      %v1018 = vor.u32 %v1013, %v1017
      %v1020 = vshrl.u32 %v1005, 16
      %v1022 = vshll.u32 %v1005, 16
      %v1024 = vrot.slane %v1022, 1
      %v1025 = vor.u32 %v1020, %v1024
      %v1027 = vshrl.u32 %v1006, 16
      %v1029 = vshll.u32 %v1006, 16
      %v1031 = vrot.slane %v1029, 1
      %v1032 = vor.u32 %v1027, %v1031
      %v1034 = vshrl.u32 %v1007, 16
      %v1036 = vshll.u32 %v1007, 16
      %v1038 = vrot.slane %v1036, 1
      %v1039 = vor.u32 %v1034, %v1038
      %v1041 = vshrl.u32 %v1008, 16
      %v1043 = vshll.u32 %v1008, 16
      %v1045 = vrot.slane %v1043, 1
      %v1046 = vor.u32 %v1041, %v1045
      %v1048 = vshrl.u32 %v1009, 16
      %v1050 = vshll.u32 %v1009, 16
      %v1052 = vrot.slane %v1050, 1
      %v1053 = vor.u32 %v1048, %v1052
      %v1055 = vshrl.u32 %v1010, 16
      %v1057 = vshll.u32 %v1010, 16
      %v1059 = vrot.slane %v1057, 1
      %v1060 = vor.u32 %v1055, %v1059
      %v1062 = vshrl.u32 %v1011, 16
      %v1064 = vshll.u32 %v1011, 16
      %v1066 = vrot.slane %v1064, 1
      %v1067 = vor.u32 %v1062, %v1066
      %1068 = vrot.lane.b32.xlu0 %v1018, 32
      %v1069 = vpop.permute.xlu0 %1068
      %1070 = vrot.lane.b32.xlu0 %v1025, 32
      %v1071 = vpop.permute.xlu0 %1070
      %1072 = vrot.lane.b32.xlu0 %v1032, 32
      %v1073 = vpop.permute.xlu0 %1072
      %1074 = vrot.lane.b32.xlu0 %v1039, 32
      %v1075 = vpop.permute.xlu0 %1074
      %1076 = vrot.lane.b32.xlu0 %v1046, 32
      %v1077 = vpop.permute.xlu0 %1076
      %1078 = vrot.lane.b32.xlu0 %v1053, 32
      %v1079 = vpop.permute.xlu0 %1078
      %1080 = vrot.lane.b32.xlu0 %v1060, 32
      %v1081 = vpop.permute.xlu0 %1080
      %1082 = vrot.lane.b32.xlu0 %v1067, 32
      %v1083 = vpop.permute.xlu0 %1082
      %1084 = vrot.lane.b32.xlu0 %v593, 64
      %v1085 = vpop.permute.xlu0 %1084
      %1086 = vrot.lane.b32.xlu0 %v594, 64
      %v1087 = vpop.permute.xlu0 %1086
      %1088 = vrot.lane.b32.xlu0 %v595, 64
      %v1089 = vpop.permute.xlu0 %1088
      %1090 = vrot.lane.b32.xlu0 %v596, 64
      %v1091 = vpop.permute.xlu0 %1090
      %1092 = vrot.lane.b32.xlu0 %v597, 64
      %v1093 = vpop.permute.xlu0 %1092
      %1094 = vrot.lane.b32.xlu0 %v598, 64
      %v1095 = vpop.permute.xlu0 %1094
      %1096 = vrot.lane.b32.xlu0 %v599, 64
      %v1097 = vpop.permute.xlu0 %1096
      %1098 = vrot.lane.b32.xlu0 %v600, 64
      %v1099 = vpop.permute.xlu0 %1098
      %1100 = vrot.lane.b32.xlu0 %v647, 96
      %v1101 = vpop.permute.xlu0 %1100
      %1102 = vrot.lane.b32.xlu0 %v654, 96
      %v1103 = vpop.permute.xlu0 %1102
      %1104 = vrot.lane.b32.xlu0 %v661, 96
      %v1105 = vpop.permute.xlu0 %1104
      %1106 = vrot.lane.b32.xlu0 %v668, 96
      %v1107 = vpop.permute.xlu0 %1106
      %1108 = vrot.lane.b32.xlu0 %v675, 96
      %v1109 = vpop.permute.xlu0 %1108
      %1110 = vrot.lane.b32.xlu0 %v682, 96
      %v1111 = vpop.permute.xlu0 %1110
      %1112 = vrot.lane.b32.xlu0 %v689, 96
      %v1113 = vpop.permute.xlu0 %1112
      %1114 = vrot.lane.b32.xlu0 %v696, 96
      %v1115 = vpop.permute.xlu0 %1114
      %v1124 = vunpack.c.l.b16 %v828
      %v1125 = vunpack.c.l.b16 %v829
      %v1126 = vunpack.c.l.b16 %v830
      %v1127 = vunpack.c.l.b16 %v831
      %v1128 = vunpack.c.l.b16 %v832
      %v1129 = vunpack.c.l.b16 %v833
      %v1130 = vunpack.c.l.b16 %v834
      %v1131 = vunpack.c.l.b16 %v835
      %v1132 = vpack.c.b16 %v1124, %v585
      %v1133 = vpack.c.b16 %v1125, %v586
      %v1134 = vpack.c.b16 %v1126, %v587
      %v1135 = vpack.c.b16 %v1127, %v588
      %v1136 = vpack.c.b16 %v1128, %v589
      %v1137 = vpack.c.b16 %v1129, %v590
      %v1138 = vpack.c.b16 %v1130, %v591
      %v1139 = vpack.c.b16 %v1131, %v592
      %v1141 = vshrl.u32 %v1132, 16
      %v1143 = vshll.u32 %v1132, 16
      %v1145 = vrot.slane %v1143, 1
      %v1146 = vor.u32 %v1141, %v1145
      %v1148 = vshrl.u32 %v1133, 16
      %v1150 = vshll.u32 %v1133, 16
      %v1152 = vrot.slane %v1150, 1
      %v1153 = vor.u32 %v1148, %v1152
      %v1155 = vshrl.u32 %v1134, 16
      %v1157 = vshll.u32 %v1134, 16
      %v1159 = vrot.slane %v1157, 1
      %v1160 = vor.u32 %v1155, %v1159
      %v1162 = vshrl.u32 %v1135, 16
      %v1164 = vshll.u32 %v1135, 16
      %v1166 = vrot.slane %v1164, 1
      %v1167 = vor.u32 %v1162, %v1166
      %v1169 = vshrl.u32 %v1136, 16
      %v1171 = vshll.u32 %v1136, 16
      %v1173 = vrot.slane %v1171, 1
      %v1174 = vor.u32 %v1169, %v1173
      %v1176 = vshrl.u32 %v1137, 16
      %v1178 = vshll.u32 %v1137, 16
      %v1180 = vrot.slane %v1178, 1
      %v1181 = vor.u32 %v1176, %v1180
      %v1183 = vshrl.u32 %v1138, 16
      %v1185 = vshll.u32 %v1138, 16
      %v1187 = vrot.slane %v1185, 1
      %v1188 = vor.u32 %v1183, %v1187
      %v1190 = vshrl.u32 %v1139, 16
      %v1192 = vshll.u32 %v1139, 16
      %v1194 = vrot.slane %v1192, 1
      %v1195 = vor.u32 %v1190, %v1194
      %v1198 = vsel %vm697, %v181, %v837
      %v1201 = vsel %vm697, %v182, %v839
      %v1204 = vsel %vm697, %v183, %v841
      %v1207 = vsel %vm697, %v184, %v843
      %v1210 = vsel %vm697, %v185, %v845
      %v1213 = vsel %vm697, %v186, %v847
      %v1216 = vsel %vm697, %v187, %v849
      %v1219 = vsel %vm697, %v188, %v851
      %v1221 = vsel %vm722, %v1198, %v933
      %v1223 = vsel %vm722, %v1201, %v935
      %v1225 = vsel %vm722, %v1204, %v937
      %v1227 = vsel %vm722, %v1207, %v939
      %v1229 = vsel %vm722, %v1210, %v941
      %v1231 = vsel %vm722, %v1213, %v943
      %v1233 = vsel %vm722, %v1216, %v945
      %v1235 = vsel %vm722, %v1219, %v947
      %v1237 = vsel %vm739, %v1221, %v973
      %v1239 = vsel %vm739, %v1223, %v975
      %v1241 = vsel %vm739, %v1225, %v977
      %v1243 = vsel %vm739, %v1227, %v979
      %v1245 = vsel %vm739, %v1229, %v981
      %v1247 = vsel %vm739, %v1231, %v983
      %v1249 = vsel %vm739, %v1233, %v985
      %v1251 = vsel %vm739, %v1235, %v987
      %v1254 = vsel %vm697, %v471, %v1069
      %v1257 = vsel %vm697, %v478, %v1071
      %v1260 = vsel %vm697, %v485, %v1073
      %v1263 = vsel %vm697, %v492, %v1075
      %v1266 = vsel %vm697, %v499, %v1077
      %v1269 = vsel %vm697, %v506, %v1079
      %v1272 = vsel %vm697, %v513, %v1081
      %v1275 = vsel %vm697, %v520, %v1083
      %v1277 = vsel %vm722, %v1254, %v1085
      %v1279 = vsel %vm722, %v1257, %v1087
      %v1281 = vsel %vm722, %v1260, %v1089
      %v1283 = vsel %vm722, %v1263, %v1091
      %v1285 = vsel %vm722, %v1266, %v1093
      %v1287 = vsel %vm722, %v1269, %v1095
      %v1289 = vsel %vm722, %v1272, %v1097
      %v1291 = vsel %vm722, %v1275, %v1099
      %v1293 = vsel %vm739, %v1277, %v1101
      %v1295 = vsel %vm739, %v1279, %v1103
      %v1297 = vsel %vm739, %v1281, %v1105
      %v1299 = vsel %vm739, %v1283, %v1107
      %v1301 = vsel %vm739, %v1285, %v1109
      %v1303 = vsel %vm739, %v1287, %v1111
      %v1305 = vsel %vm739, %v1289, %v1113
      %v1307 = vsel %vm739, %v1291, %v1115
      %s1308 = scalar_lea.vmem %s165, 152
      %v1309 = vld [vmem:[%s1308] sm:$0xf]
      %v1310 = vld [vmem:[%s1308 + $0x8] sm:$0xf]
      %v1311 = vld [vmem:[%s1308 + $0x10] sm:$0xf]
      %v1312 = vld [vmem:[%s1308 + $0x18] sm:$0xf]
      %v1313 = vld [vmem:[%s1308 + $0x20] sm:$0xf]
      %v1314 = vld [vmem:[%s1308 + $0x28] sm:$0xf]
      %v1315 = vld [vmem:[%s1308 + $0x30] sm:$0xf]
      %v1316 = vld [vmem:[%s1308 + $0x38] sm:$0xf]
      %s1317 = scalar_lea.vmem %s165, 224
      %v1318 = vld [vmem:[%s1317] sm:$0xf]
      %v1319 = vld [vmem:[%s1317 + $0x8] sm:$0xf]
      %v1320 = vld [vmem:[%s1317 + $0x10] sm:$0xf]
      %v1321 = vld [vmem:[%s1317 + $0x18] sm:$0xf]
      %v1322 = vld [vmem:[%s1317 + $0x20] sm:$0xf]
      %v1323 = vld [vmem:[%s1317 + $0x28] sm:$0xf]
      %v1324 = vld [vmem:[%s1317 + $0x30] sm:$0xf]
      %v1325 = vld [vmem:[%s1317 + $0x38] sm:$0xf]
      %v1326 = vld [vmem:[%s1308 + $0x4] sm:$0x1]
      %v1327 = vld [vmem:[%s1308 + $0xc] sm:$0x1]
      %v1328 = vld [vmem:[%s1308 + $0x14] sm:$0x1]
      %v1329 = vld [vmem:[%s1308 + $0x1c] sm:$0x1]
      %v1330 = vld [vmem:[%s1308 + $0x24] sm:$0x1]
      %v1331 = vld [vmem:[%s1308 + $0x2c] sm:$0x1]
      %v1332 = vld [vmem:[%s1308 + $0x34] sm:$0x1]
      %v1333 = vld [vmem:[%s1308 + $0x3c] sm:$0x1]
      %1334 = vrot.lane.b32.xlu0 %v964, 32
      %v1335 = vpop.permute.xlu0 %1334
      %1336 = vrot.lane.b32.xlu0 %v965, 32
      %v1337 = vpop.permute.xlu0 %1336
      %1338 = vrot.lane.b32.xlu0 %v966, 32
      %v1339 = vpop.permute.xlu0 %1338
      %1340 = vrot.lane.b32.xlu0 %v967, 32
      %v1341 = vpop.permute.xlu0 %1340
      %1342 = vrot.lane.b32.xlu0 %v968, 32
      %v1343 = vpop.permute.xlu0 %1342
      %1344 = vrot.lane.b32.xlu0 %v969, 32
      %v1345 = vpop.permute.xlu0 %1344
      %1346 = vrot.lane.b32.xlu0 %v970, 32
      %v1347 = vpop.permute.xlu0 %1346
      %1348 = vrot.lane.b32.xlu0 %v971, 32
      %v1349 = vpop.permute.xlu0 %1348
      %1350 = vrot.lane.b32.xlu0 %v471, 64
      %v1351 = vpop.permute.xlu0 %1350
      %1352 = vrot.lane.b32.xlu0 %v478, 64
      %v1353 = vpop.permute.xlu0 %1352
      %1354 = vrot.lane.b32.xlu0 %v485, 64
      %v1355 = vpop.permute.xlu0 %1354
      %1356 = vrot.lane.b32.xlu0 %v492, 64
      %v1357 = vpop.permute.xlu0 %1356
      %1358 = vrot.lane.b32.xlu0 %v499, 64
      %v1359 = vpop.permute.xlu0 %1358
      %1360 = vrot.lane.b32.xlu0 %v506, 64
      %v1361 = vpop.permute.xlu0 %1360
      %1362 = vrot.lane.b32.xlu0 %v513, 64
      %v1363 = vpop.permute.xlu0 %1362
      %1364 = vrot.lane.b32.xlu0 %v520, 64
      %v1365 = vpop.permute.xlu0 %1364
      %1366 = vrot.lane.b32.xlu0 %v553, 96
      %v1367 = vpop.permute.xlu0 %1366
      %1368 = vrot.lane.b32.xlu0 %v554, 96
      %v1369 = vpop.permute.xlu0 %1368
      %1370 = vrot.lane.b32.xlu0 %v555, 96
      %v1371 = vpop.permute.xlu0 %1370
      %1372 = vrot.lane.b32.xlu0 %v556, 96
      %v1373 = vpop.permute.xlu0 %1372
      %1374 = vrot.lane.b32.xlu0 %v557, 96
      %v1375 = vpop.permute.xlu0 %1374
      %1376 = vrot.lane.b32.xlu0 %v558, 96
      %v1377 = vpop.permute.xlu0 %1376
      %1378 = vrot.lane.b32.xlu0 %v559, 96
      %v1379 = vpop.permute.xlu0 %1378
      %1380 = vrot.lane.b32.xlu0 %v560, 96
      %v1381 = vpop.permute.xlu0 %1380
      %1382 = vrot.lane.b32.xlu0 %v647, 32
      %v1383 = vpop.permute.xlu0 %1382
      %1384 = vrot.lane.b32.xlu0 %v654, 32
      %v1385 = vpop.permute.xlu0 %1384
      %1386 = vrot.lane.b32.xlu0 %v661, 32
      %v1387 = vpop.permute.xlu0 %1386
      %1388 = vrot.lane.b32.xlu0 %v668, 32
      %v1389 = vpop.permute.xlu0 %1388
      %1390 = vrot.lane.b32.xlu0 %v675, 32
      %v1391 = vpop.permute.xlu0 %1390
      %1392 = vrot.lane.b32.xlu0 %v682, 32
      %v1393 = vpop.permute.xlu0 %1392
      %1394 = vrot.lane.b32.xlu0 %v689, 32
      %v1395 = vpop.permute.xlu0 %1394
      %1396 = vrot.lane.b32.xlu0 %v696, 32
      %v1397 = vpop.permute.xlu0 %1396
      %v1406 = vunpack.c.l.b16 %v1309
      %v1407 = vunpack.c.l.b16 %v1310
      %v1408 = vunpack.c.l.b16 %v1311
      %v1409 = vunpack.c.l.b16 %v1312
      %v1410 = vunpack.c.l.b16 %v1313
      %v1411 = vunpack.c.l.b16 %v1314
      %v1412 = vunpack.c.l.b16 %v1315
      %v1413 = vunpack.c.l.b16 %v1316
      %v1414 = vpack.c.b16 %v1406, %v1406
      %v1415 = vpack.c.b16 %v1407, %v1407
      %v1416 = vpack.c.b16 %v1408, %v1408
      %v1417 = vpack.c.b16 %v1409, %v1409
      %v1418 = vpack.c.b16 %v1410, %v1410
      %v1419 = vpack.c.b16 %v1411, %v1411
      %v1420 = vpack.c.b16 %v1412, %v1412
      %v1421 = vpack.c.b16 %v1413, %v1413
      %1422 = vrot.lane.b32.xlu0 %v1414, 64
      %v1423 = vpop.permute.xlu0 %1422
      %1424 = vrot.lane.b32.xlu0 %v1415, 64
      %v1425 = vpop.permute.xlu0 %1424
      %1426 = vrot.lane.b32.xlu0 %v1416, 64
      %v1427 = vpop.permute.xlu0 %1426
      %1428 = vrot.lane.b32.xlu0 %v1417, 64
      %v1429 = vpop.permute.xlu0 %1428
      %1430 = vrot.lane.b32.xlu0 %v1418, 64
      %v1431 = vpop.permute.xlu0 %1430
      %1432 = vrot.lane.b32.xlu0 %v1419, 64
      %v1433 = vpop.permute.xlu0 %1432
      %1434 = vrot.lane.b32.xlu0 %v1420, 64
      %v1435 = vpop.permute.xlu0 %1434
      %1436 = vrot.lane.b32.xlu0 %v1421, 64
      %v1437 = vpop.permute.xlu0 %1436
      %v1446 = vunpack.c.l.b16 %v1318
      %v1447 = vunpack.c.l.b16 %v1319
      %v1448 = vunpack.c.l.b16 %v1320
      %v1449 = vunpack.c.l.b16 %v1321
      %v1450 = vunpack.c.l.b16 %v1322
      %v1451 = vunpack.c.l.b16 %v1323
      %v1452 = vunpack.c.l.b16 %v1324
      %v1453 = vunpack.c.l.b16 %v1325
      %v1454 = vpack.c.b16 %v1446, %v1446
      %v1455 = vpack.c.b16 %v1447, %v1447
      %v1456 = vpack.c.b16 %v1448, %v1448
      %v1457 = vpack.c.b16 %v1449, %v1449
      %v1458 = vpack.c.b16 %v1450, %v1450
      %v1459 = vpack.c.b16 %v1451, %v1451
      %v1460 = vpack.c.b16 %v1452, %v1452
      %v1461 = vpack.c.b16 %v1453, %v1453
      %1462 = vrot.lane.b32.xlu0 %v1454, 96
      %v1463 = vpop.permute.xlu0 %1462
      %1464 = vrot.lane.b32.xlu0 %v1455, 96
      %v1465 = vpop.permute.xlu0 %1464
      %1466 = vrot.lane.b32.xlu0 %v1456, 96
      %v1467 = vpop.permute.xlu0 %1466
      %1468 = vrot.lane.b32.xlu0 %v1457, 96
      %v1469 = vpop.permute.xlu0 %1468
      %1470 = vrot.lane.b32.xlu0 %v1458, 96
      %v1471 = vpop.permute.xlu0 %1470
      %1472 = vrot.lane.b32.xlu0 %v1459, 96
      %v1473 = vpop.permute.xlu0 %1472
      %1474 = vrot.lane.b32.xlu0 %v1460, 96
      %v1475 = vpop.permute.xlu0 %1474
      %1476 = vrot.lane.b32.xlu0 %v1461, 96
      %v1477 = vpop.permute.xlu0 %1476
      %v1486 = vunpack.c.l.b16 %v1326
      %v1487 = vunpack.c.l.b16 %v1327
      %v1488 = vunpack.c.l.b16 %v1328
      %v1489 = vunpack.c.l.b16 %v1329
      %v1490 = vunpack.c.l.b16 %v1330
      %v1491 = vunpack.c.l.b16 %v1331
      %v1492 = vunpack.c.l.b16 %v1332
      %v1493 = vunpack.c.l.b16 %v1333
      %v1494 = vpack.c.b16 %v1486, %v1406
      %v1495 = vpack.c.b16 %v1487, %v1407
      %v1496 = vpack.c.b16 %v1488, %v1408
      %v1497 = vpack.c.b16 %v1489, %v1409
      %v1498 = vpack.c.b16 %v1490, %v1410
      %v1499 = vpack.c.b16 %v1491, %v1411
      %v1500 = vpack.c.b16 %v1492, %v1412
      %v1501 = vpack.c.b16 %v1493, %v1413
      %v1503 = vshrl.u32 %v1494, 16
      %v1505 = vshll.u32 %v1494, 16
      %v1507 = vrot.slane %v1505, 1
      %v1508 = vor.u32 %v1503, %v1507
      %v1510 = vshrl.u32 %v1495, 16
      %v1512 = vshll.u32 %v1495, 16
      %v1514 = vrot.slane %v1512, 1
      %v1515 = vor.u32 %v1510, %v1514
      %v1517 = vshrl.u32 %v1496, 16
      %v1519 = vshll.u32 %v1496, 16
      %v1521 = vrot.slane %v1519, 1
      %v1522 = vor.u32 %v1517, %v1521
      %v1524 = vshrl.u32 %v1497, 16
      %v1526 = vshll.u32 %v1497, 16
      %v1528 = vrot.slane %v1526, 1
      %v1529 = vor.u32 %v1524, %v1528
      %v1531 = vshrl.u32 %v1498, 16
      %v1533 = vshll.u32 %v1498, 16
      %v1535 = vrot.slane %v1533, 1
      %v1536 = vor.u32 %v1531, %v1535
      %v1538 = vshrl.u32 %v1499, 16
      %v1540 = vshll.u32 %v1499, 16
      %v1542 = vrot.slane %v1540, 1
      %v1543 = vor.u32 %v1538, %v1542
      %v1545 = vshrl.u32 %v1500, 16
      %v1547 = vshll.u32 %v1500, 16
      %v1549 = vrot.slane %v1547, 1
      %v1550 = vor.u32 %v1545, %v1549
      %v1552 = vshrl.u32 %v1501, 16
      %v1554 = vshll.u32 %v1501, 16
      %v1556 = vrot.slane %v1554, 1
      %v1557 = vor.u32 %v1552, %v1556
      %v1560 = vsel %vm697, %v198, %v1335
      %v1563 = vsel %vm697, %v199, %v1337
      %v1566 = vsel %vm697, %v200, %v1339
      %v1569 = vsel %vm697, %v201, %v1341
      %v1572 = vsel %vm697, %v202, %v1343
      %v1575 = vsel %vm697, %v203, %v1345
      %v1578 = vsel %vm697, %v204, %v1347
      %v1581 = vsel %vm697, %v205, %v1349
      %v1583 = vsel %vm722, %v1560, %v1351
      %v1585 = vsel %vm722, %v1563, %v1353
      %v1587 = vsel %vm722, %v1566, %v1355
      %v1589 = vsel %vm722, %v1569, %v1357
      %v1591 = vsel %vm722, %v1572, %v1359
      %v1593 = vsel %vm722, %v1575, %v1361
      %v1595 = vsel %vm722, %v1578, %v1363
      %v1597 = vsel %vm722, %v1581, %v1365
      %v1599 = vsel %vm739, %v1583, %v1367
      %v1601 = vsel %vm739, %v1585, %v1369
      %v1603 = vsel %vm739, %v1587, %v1371
      %v1605 = vsel %vm739, %v1589, %v1373
      %v1607 = vsel %vm739, %v1591, %v1375
      %v1609 = vsel %vm739, %v1593, %v1377
      %v1611 = vsel %vm739, %v1595, %v1379
      %v1613 = vsel %vm739, %v1597, %v1381
      %v1616 = vsel %vm697, %v233, %v1383
      %v1619 = vsel %vm697, %v234, %v1385
      %v1622 = vsel %vm697, %v235, %v1387
      %v1625 = vsel %vm697, %v236, %v1389
      %v1628 = vsel %vm697, %v237, %v1391
      %v1631 = vsel %vm697, %v238, %v1393
      %v1634 = vsel %vm697, %v239, %v1395
      %v1637 = vsel %vm697, %v240, %v1397
      %v1639 = vsel %vm722, %v1616, %v1423
      %v1641 = vsel %vm722, %v1619, %v1425
      %v1643 = vsel %vm722, %v1622, %v1427
      %v1645 = vsel %vm722, %v1625, %v1429
      %v1647 = vsel %vm722, %v1628, %v1431
      %v1649 = vsel %vm722, %v1631, %v1433
      %v1651 = vsel %vm722, %v1634, %v1435
      %v1653 = vsel %vm722, %v1637, %v1437
      %v1655 = vsel %vm739, %v1639, %v1463
      %v1657 = vsel %vm739, %v1641, %v1465
      %v1659 = vsel %vm739, %v1643, %v1467
      %v1661 = vsel %vm739, %v1645, %v1469
      %v1663 = vsel %vm739, %v1647, %v1471
      %v1665 = vsel %vm739, %v1649, %v1473
      %v1667 = vsel %vm739, %v1651, %v1475
      %v1669 = vsel %vm739, %v1653, %v1477
      %v1670 = vld [vmem:[%s1317 + $0x4] sm:$0x1]
      %v1671 = vld [vmem:[%s1317 + $0xc] sm:$0x1]
      %v1672 = vld [vmem:[%s1317 + $0x14] sm:$0x1]
      %v1673 = vld [vmem:[%s1317 + $0x1c] sm:$0x1]
      %v1674 = vld [vmem:[%s1317 + $0x24] sm:$0x1]
      %v1675 = vld [vmem:[%s1317 + $0x2c] sm:$0x1]
      %v1676 = vld [vmem:[%s1317 + $0x34] sm:$0x1]
      %v1677 = vld [vmem:[%s1317 + $0x3c] sm:$0x1]
      %1678 = vrot.lane.b32.xlu0 %v1018, 64
      %v1679 = vpop.permute.xlu0 %1678
      %1680 = vrot.lane.b32.xlu0 %v1025, 64
      %v1681 = vpop.permute.xlu0 %1680
      %1682 = vrot.lane.b32.xlu0 %v1032, 64
      %v1683 = vpop.permute.xlu0 %1682
      %1684 = vrot.lane.b32.xlu0 %v1039, 64
      %v1685 = vpop.permute.xlu0 %1684
      %1686 = vrot.lane.b32.xlu0 %v1046, 64
      %v1687 = vpop.permute.xlu0 %1686
      %1688 = vrot.lane.b32.xlu0 %v1053, 64
      %v1689 = vpop.permute.xlu0 %1688
      %1690 = vrot.lane.b32.xlu0 %v1060, 64
      %v1691 = vpop.permute.xlu0 %1690
      %1692 = vrot.lane.b32.xlu0 %v1067, 64
      %v1693 = vpop.permute.xlu0 %1692
      %1694 = vrot.lane.b32.xlu0 %v1146, 32
      %v1695 = vpop.permute.xlu0 %1694
      %1696 = vrot.lane.b32.xlu0 %v1153, 32
      %v1697 = vpop.permute.xlu0 %1696
      %1698 = vrot.lane.b32.xlu0 %v1160, 32
      %v1699 = vpop.permute.xlu0 %1698
      %1700 = vrot.lane.b32.xlu0 %v1167, 32
      %v1701 = vpop.permute.xlu0 %1700
      %1702 = vrot.lane.b32.xlu0 %v1174, 32
      %v1703 = vpop.permute.xlu0 %1702
      %1704 = vrot.lane.b32.xlu0 %v1181, 32
      %v1705 = vpop.permute.xlu0 %1704
      %1706 = vrot.lane.b32.xlu0 %v1188, 32
      %v1707 = vpop.permute.xlu0 %1706
      %1708 = vrot.lane.b32.xlu0 %v1195, 32
      %v1709 = vpop.permute.xlu0 %1708
      %1710 = vrot.lane.b32.xlu0 %v1454, 64
      %v1711 = vpop.permute.xlu0 %1710
      %1712 = vrot.lane.b32.xlu0 %v1455, 64
      %v1713 = vpop.permute.xlu0 %1712
      %1714 = vrot.lane.b32.xlu0 %v1456, 64
      %v1715 = vpop.permute.xlu0 %1714
      %1716 = vrot.lane.b32.xlu0 %v1457, 64
      %v1717 = vpop.permute.xlu0 %1716
      %1718 = vrot.lane.b32.xlu0 %v1458, 64
      %v1719 = vpop.permute.xlu0 %1718
      %1720 = vrot.lane.b32.xlu0 %v1459, 64
      %v1721 = vpop.permute.xlu0 %1720
      %1722 = vrot.lane.b32.xlu0 %v1460, 64
      %v1723 = vpop.permute.xlu0 %1722
      %1724 = vrot.lane.b32.xlu0 %v1461, 64
      %v1725 = vpop.permute.xlu0 %1724
      %1726 = vrot.lane.b32.xlu0 %v1508, 96
      %v1727 = vpop.permute.xlu0 %1726
      %1728 = vrot.lane.b32.xlu0 %v1515, 96
      %v1729 = vpop.permute.xlu0 %1728
      %1730 = vrot.lane.b32.xlu0 %v1522, 96
      %v1731 = vpop.permute.xlu0 %1730
      %1732 = vrot.lane.b32.xlu0 %v1529, 96
      %v1733 = vpop.permute.xlu0 %1732
      %1734 = vrot.lane.b32.xlu0 %v1536, 96
      %v1735 = vpop.permute.xlu0 %1734
      %1736 = vrot.lane.b32.xlu0 %v1543, 96
      %v1737 = vpop.permute.xlu0 %1736
      %1738 = vrot.lane.b32.xlu0 %v1550, 96
      %v1739 = vpop.permute.xlu0 %1738
      %1740 = vrot.lane.b32.xlu0 %v1557, 96
      %v1741 = vpop.permute.xlu0 %1740
      %v1750 = vunpack.c.l.b16 %v1670
      %v1751 = vunpack.c.l.b16 %v1671
      %v1752 = vunpack.c.l.b16 %v1672
      %v1753 = vunpack.c.l.b16 %v1673
      %v1754 = vunpack.c.l.b16 %v1674
      %v1755 = vunpack.c.l.b16 %v1675
      %v1756 = vunpack.c.l.b16 %v1676
      %v1757 = vunpack.c.l.b16 %v1677
      %v1758 = vpack.c.b16 %v1750, %v1446
      %v1759 = vpack.c.b16 %v1751, %v1447
      %v1760 = vpack.c.b16 %v1752, %v1448
      %v1761 = vpack.c.b16 %v1753, %v1449
      %v1762 = vpack.c.b16 %v1754, %v1450
      %v1763 = vpack.c.b16 %v1755, %v1451
      %v1764 = vpack.c.b16 %v1756, %v1452
      %v1765 = vpack.c.b16 %v1757, %v1453
      %v1767 = vshrl.u32 %v1758, 16
      %v1769 = vshll.u32 %v1758, 16
      %v1771 = vrot.slane %v1769, 1
      %v1772 = vor.u32 %v1767, %v1771
      %v1774 = vshrl.u32 %v1759, 16
      %v1776 = vshll.u32 %v1759, 16
      %v1778 = vrot.slane %v1776, 1
      %v1779 = vor.u32 %v1774, %v1778
      %v1781 = vshrl.u32 %v1760, 16
      %v1783 = vshll.u32 %v1760, 16
      %v1785 = vrot.slane %v1783, 1
      %v1786 = vor.u32 %v1781, %v1785
      %v1788 = vshrl.u32 %v1761, 16
      %v1790 = vshll.u32 %v1761, 16
      %v1792 = vrot.slane %v1790, 1
      %v1793 = vor.u32 %v1788, %v1792
      %v1795 = vshrl.u32 %v1762, 16
      %v1797 = vshll.u32 %v1762, 16
      %v1799 = vrot.slane %v1797, 1
      %v1800 = vor.u32 %v1795, %v1799
      %v1802 = vshrl.u32 %v1763, 16
      %v1804 = vshll.u32 %v1763, 16
      %v1806 = vrot.slane %v1804, 1
      %v1807 = vor.u32 %v1802, %v1806
      %v1809 = vshrl.u32 %v1764, 16
      %v1811 = vshll.u32 %v1764, 16
      %v1813 = vrot.slane %v1811, 1
      %v1814 = vor.u32 %v1809, %v1813
      %v1816 = vshrl.u32 %v1765, 16
      %v1818 = vshll.u32 %v1765, 16
      %v1820 = vrot.slane %v1818, 1
      %v1821 = vor.u32 %v1816, %v1820
      %v1823 = vsel %vm722, %v758, %v1679
      %v1825 = vsel %vm722, %v761, %v1681
      %v1827 = vsel %vm722, %v764, %v1683
      %v1829 = vsel %vm722, %v767, %v1685
      %v1831 = vsel %vm722, %v770, %v1687
      %v1833 = vsel %vm722, %v773, %v1689
      %v1835 = vsel %vm722, %v776, %v1691
      %v1837 = vsel %vm722, %v779, %v1693
      %v1838 = vsel %vm739, %v1823, %v602
      %v1839 = vsel %vm739, %v1825, %v604
      %v1840 = vsel %vm739, %v1827, %v606
      %v1841 = vsel %vm739, %v1829, %v608
      %v1842 = vsel %vm739, %v1831, %v610
      %v1843 = vsel %vm739, %v1833, %v612
      %v1844 = vsel %vm739, %v1835, %v614
      %v1845 = vsel %vm739, %v1837, %v616
      %v1848 = vsel %vm697, %v647, %v1695
      %v1851 = vsel %vm697, %v654, %v1697
      %v1854 = vsel %vm697, %v661, %v1699
      %v1857 = vsel %vm697, %v668, %v1701
      %v1860 = vsel %vm697, %v675, %v1703
      %v1863 = vsel %vm697, %v682, %v1705
      %v1866 = vsel %vm697, %v689, %v1707
      %v1869 = vsel %vm697, %v696, %v1709
      %v1871 = vsel %vm722, %v1848, %v1711
      %v1873 = vsel %vm722, %v1851, %v1713
      %v1875 = vsel %vm722, %v1854, %v1715
      %v1877 = vsel %vm722, %v1857, %v1717
      %v1879 = vsel %vm722, %v1860, %v1719
      %v1881 = vsel %vm722, %v1863, %v1721
      %v1883 = vsel %vm722, %v1866, %v1723
      %v1885 = vsel %vm722, %v1869, %v1725
      %v1887 = vsel %vm739, %v1871, %v1727
      %v1889 = vsel %vm739, %v1873, %v1729
      %v1891 = vsel %vm739, %v1875, %v1731
      %v1893 = vsel %vm739, %v1877, %v1733
      %v1895 = vsel %vm739, %v1879, %v1735
      %v1897 = vsel %vm739, %v1881, %v1737
      %v1899 = vsel %vm739, %v1883, %v1739
      %v1901 = vsel %vm739, %v1885, %v1741
      %v1966 = vunpack.c.l.b16 %v741
      %v1967 = vunpack.c.l.b16 %v797
      %v1968 = vunpack.c.l.b16 %v647
      %v1969 = vunpack.c.l.b16 %v743
      %v1970 = vunpack.c.l.b16 %v799
      %v1971 = vunpack.c.l.b16 %v654
      %v1972 = vunpack.c.l.b16 %v745
      %v1973 = vunpack.c.l.b16 %v801
      %v1974 = vunpack.c.l.b16 %v661
      %v1975 = vunpack.c.l.b16 %v747
      %v1976 = vunpack.c.l.b16 %v803
      %v1977 = vunpack.c.l.b16 %v668
      %v1978 = vunpack.c.l.b16 %v749
      %v1979 = vunpack.c.l.b16 %v805
      %v1980 = vunpack.c.l.b16 %v675
      %v1981 = vunpack.c.l.b16 %v751
      %v1982 = vunpack.c.l.b16 %v807
      %v1983 = vunpack.c.l.b16 %v682
      %v1984 = vunpack.c.l.b16 %v753
      %v1985 = vunpack.c.l.b16 %v809
      %v1986 = vunpack.c.l.b16 %v689
      %v1987 = vunpack.c.l.b16 %v755
      %v1988 = vunpack.c.l.b16 %v811
      %v1989 = vunpack.c.l.b16 %v696
      %v1990 = vunpack.c.l.b16 %v1237
      %v1991 = vunpack.c.l.b16 %v1293
      %v1992 = vunpack.c.l.b16 %v1146
      %v1993 = vunpack.c.l.b16 %v1239
      %v1994 = vunpack.c.l.b16 %v1295
      %v1995 = vunpack.c.l.b16 %v1153
      %v1996 = vunpack.c.l.b16 %v1241
      %v1997 = vunpack.c.l.b16 %v1297
      %v1998 = vunpack.c.l.b16 %v1160
      %v1999 = vunpack.c.l.b16 %v1243
      %v2000 = vunpack.c.l.b16 %v1299
      %v2001 = vunpack.c.l.b16 %v1167
      %v2002 = vunpack.c.l.b16 %v1245
      %v2003 = vunpack.c.l.b16 %v1301
      %v2004 = vunpack.c.l.b16 %v1174
      %v2005 = vunpack.c.l.b16 %v1247
      %v2006 = vunpack.c.l.b16 %v1303
      %v2007 = vunpack.c.l.b16 %v1181
      %v2008 = vunpack.c.l.b16 %v1249
      %v2009 = vunpack.c.l.b16 %v1305
      %v2010 = vunpack.c.l.b16 %v1188
      %v2011 = vunpack.c.l.b16 %v1251
      %v2012 = vunpack.c.l.b16 %v1307
      %v2013 = vunpack.c.l.b16 %v1195
      %v2014 = vunpack.c.l.b16 %v1599
      %v2015 = vunpack.c.l.b16 %v1655
      %v2016 = vunpack.c.l.b16 %v1508
      %v2017 = vunpack.c.l.b16 %v1601
      %v2018 = vunpack.c.l.b16 %v1657
      %v2019 = vunpack.c.l.b16 %v1515
      %v2020 = vunpack.c.l.b16 %v1603
      %v2021 = vunpack.c.l.b16 %v1659
      %v2022 = vunpack.c.l.b16 %v1522
      %v2023 = vunpack.c.l.b16 %v1605
      %v2024 = vunpack.c.l.b16 %v1661
      %v2025 = vunpack.c.l.b16 %v1529
      %v2026 = vunpack.c.l.b16 %v1607
      %v2027 = vunpack.c.l.b16 %v1663
      %v2028 = vunpack.c.l.b16 %v1536
      %v2029 = vunpack.c.l.b16 %v1609
      %v2030 = vunpack.c.l.b16 %v1665
      %v2031 = vunpack.c.l.b16 %v1543
      %v2032 = vunpack.c.l.b16 %v1611
      %v2033 = vunpack.c.l.b16 %v1667
      %v2034 = vunpack.c.l.b16 %v1550
      %v2035 = vunpack.c.l.b16 %v1613
      %v2036 = vunpack.c.l.b16 %v1669
      %v2037 = vunpack.c.l.b16 %v1557
      %v2038 = vunpack.c.l.b16 %v1838
      %v2039 = vunpack.c.l.b16 %v1887
      %v2040 = vunpack.c.l.b16 %v1772
      %v2041 = vunpack.c.l.b16 %v1839
      %v2042 = vunpack.c.l.b16 %v1889
      %v2043 = vunpack.c.l.b16 %v1779
      %v2044 = vunpack.c.l.b16 %v1840
      %v2045 = vunpack.c.l.b16 %v1891
      %v2046 = vunpack.c.l.b16 %v1786
      %v2047 = vunpack.c.l.b16 %v1841
      %v2048 = vunpack.c.l.b16 %v1893
      %v2049 = vunpack.c.l.b16 %v1793
      %v2050 = vunpack.c.l.b16 %v1842
      %v2051 = vunpack.c.l.b16 %v1895
      %v2052 = vunpack.c.l.b16 %v1800
      %v2053 = vunpack.c.l.b16 %v1843
      %v2054 = vunpack.c.l.b16 %v1897
      %v2055 = vunpack.c.l.b16 %v1807
      %v2056 = vunpack.c.l.b16 %v1844
      %v2057 = vunpack.c.l.b16 %v1899
      %v2058 = vunpack.c.l.b16 %v1814
      %v2059 = vunpack.c.l.b16 %v1845
      %v2060 = vunpack.c.l.b16 %v1901
      %v2061 = vunpack.c.l.b16 %v1821
      %v2062 = vld [vmem:[%s1] sm:$0xf]
      %v2063 = vld [vmem:[%s1 + $0x4] sm:$0xf]
      %v2064 = vld [vmem:[%s1 + $0x8] sm:$0xf]
      %v2065 = vld [vmem:[%s1 + $0xc] sm:$0xf]
      %v2066 = vld [vmem:[%s1 + $0x10] sm:$0xf]
      %v2067 = vld [vmem:[%s1 + $0x14] sm:$0xf]
      %v2068 = vld [vmem:[%s1 + $0x18] sm:$0xf]
      %v2069 = vld [vmem:[%s1 + $0x1c] sm:$0xf]
      %v2070 = vld [vmem:[%s1 + $0x20] sm:$0xf]
      %v2071 = vld [vmem:[%s1 + $0x24] sm:$0xf]
      %v2072 = vld [vmem:[%s1 + $0x28] sm:$0xf]
      %v2073 = vld [vmem:[%s1 + $0x2c] sm:$0xf]
      %v2074 = vld [vmem:[%s1 + $0x30] sm:$0xf]
      %v2075 = vld [vmem:[%s1 + $0x34] sm:$0xf]
      %v2076 = vld [vmem:[%s1 + $0x38] sm:$0xf]
      %v2077 = vld [vmem:[%s1 + $0x3c] sm:$0xf]
      %v2078 = vld [vmem:[%s1 + $0x40] sm:$0xf]
      %v2079 = vld [vmem:[%s1 + $0x44] sm:$0xf]
      %v2080 = vld [vmem:[%s1 + $0x48] sm:$0xf]
      %v2081 = vld [vmem:[%s1 + $0x4c] sm:$0xf]
      %v2082 = vld [vmem:[%s1 + $0x50] sm:$0xf]
      %v2083 = vld [vmem:[%s1 + $0x54] sm:$0xf]
      %v2084 = vld [vmem:[%s1 + $0x58] sm:$0xf]
      %v2085 = vld [vmem:[%s1 + $0x5c] sm:$0xf]
      %v2086 = vld [vmem:[%s1 + $0x60] sm:$0xf]
      %v2087 = vld [vmem:[%s1 + $0x64] sm:$0xf]
      %v2088 = vld [vmem:[%s1 + $0x68] sm:$0xf]
      %v2089 = vld [vmem:[%s1 + $0x6c] sm:$0xf]
      %v2090 = vld [vmem:[%s1 + $0x70] sm:$0xf]
      %v2091 = vld [vmem:[%s1 + $0x74] sm:$0xf]
      %v2092 = vld [vmem:[%s1 + $0x78] sm:$0xf]
      %v2093 = vld [vmem:[%s1 + $0x7c] sm:$0xf]
      %v2094 = vld [vmem:[%s1 + $0x80] sm:$0xf]
      %v2095 = vld [vmem:[%s1 + $0x84] sm:$0xf]
      %v2096 = vld [vmem:[%s1 + $0x88] sm:$0xf]
      %v2097 = vld [vmem:[%s1 + $0x8c] sm:$0xf]
      %v2098 = vpack.c.b16 %v1969, %v1966
      %v2099 = vpack.c.b16 %v1970, %v1967
      %v2100 = vpack.c.b16 %v1971, %v1968
      %v2101 = vpack.c.b16 %v1975, %v1972
      %v2102 = vpack.c.b16 %v1976, %v1973
      %v2103 = vpack.c.b16 %v1977, %v1974
      %v2104 = vpack.c.b16 %v1981, %v1978
      %v2105 = vpack.c.b16 %v1982, %v1979
      %v2106 = vpack.c.b16 %v1983, %v1980
      %v2107 = vpack.c.b16 %v1987, %v1984
      %v2108 = vpack.c.b16 %v1988, %v1985
      %v2109 = vpack.c.b16 %v1989, %v1986
      %v2110 = vpack.c.b16 %v1993, %v1990
      %v2111 = vpack.c.b16 %v1994, %v1991
      %v2112 = vpack.c.b16 %v1995, %v1992
      %v2113 = vpack.c.b16 %v1999, %v1996
      %v2114 = vpack.c.b16 %v2000, %v1997
      %v2115 = vpack.c.b16 %v2001, %v1998
      %v2116 = vpack.c.b16 %v2005, %v2002
      %v2117 = vpack.c.b16 %v2006, %v2003
      %v2118 = vpack.c.b16 %v2007, %v2004
      %v2119 = vpack.c.b16 %v2011, %v2008
      %v2120 = vpack.c.b16 %v2012, %v2009
      %v2121 = vpack.c.b16 %v2013, %v2010
      %v2122 = vpack.c.b16 %v2017, %v2014
      %v2123 = vpack.c.b16 %v2018, %v2015
      %v2124 = vpack.c.b16 %v2019, %v2016
      %v2125 = vpack.c.b16 %v2023, %v2020
      %v2126 = vpack.c.b16 %v2024, %v2021
      %v2127 = vpack.c.b16 %v2025, %v2022
      %v2128 = vpack.c.b16 %v2029, %v2026
      %v2129 = vpack.c.b16 %v2030, %v2027
      %v2130 = vpack.c.b16 %v2031, %v2028
      %v2131 = vpack.c.b16 %v2035, %v2032
      %v2132 = vpack.c.b16 %v2036, %v2033
      %v2133 = vpack.c.b16 %v2037, %v2034
      %v2134 = vpack.c.b16 %v2041, %v2038
      %v2135 = vpack.c.b16 %v2042, %v2039
      %v2136 = vpack.c.b16 %v2043, %v2040
      %v2137 = vpack.c.b16 %v2047, %v2044
      %v2138 = vpack.c.b16 %v2048, %v2045
      %v2139 = vpack.c.b16 %v2049, %v2046
      %v2140 = vpack.c.b16 %v2053, %v2050
      %v2141 = vpack.c.b16 %v2054, %v2051
      %v2142 = vpack.c.b16 %v2055, %v2052
      %v2143 = vpack.c.b16 %v2059, %v2056
      %v2144 = vpack.c.b16 %v2060, %v2057
      %v2145 = vpack.c.b16 %v2061, %v2058
      %v2214 = vunpack.c.l.b16 %v2062
      %v2215 = vunpack.c.l.b16 %v2063
      %v2216 = vunpack.c.l.b16 %v2064
      %v2217 = vunpack.c.l.b16 %v2065
      %v2218 = vunpack.c.l.b16 %v2066
      %v2219 = vunpack.c.l.b16 %v2067
      %v2220 = vunpack.c.l.b16 %v2068
      %v2221 = vunpack.c.l.b16 %v2069
      %v2222 = vunpack.c.l.b16 %v2070
      %v2223 = vunpack.c.l.b16 %v2071
      %v2224 = vunpack.c.l.b16 %v2072
      %v2225 = vunpack.c.l.b16 %v2073
      %v2226 = vunpack.c.l.b16 %v2074
      %v2227 = vunpack.c.l.b16 %v2075
      %v2228 = vunpack.c.l.b16 %v2076
      %v2229 = vunpack.c.l.b16 %v2077
      %v2230 = vunpack.c.l.b16 %v2078
      %v2231 = vunpack.c.l.b16 %v2079
      %v2232 = vunpack.c.l.b16 %v2080
      %v2233 = vunpack.c.l.b16 %v2081
      %v2234 = vunpack.c.l.b16 %v2082
      %v2235 = vunpack.c.l.b16 %v2083
      %v2236 = vunpack.c.l.b16 %v2084
      %v2237 = vunpack.c.l.b16 %v2085
      %v2238 = vunpack.c.l.b16 %v2086
      %v2239 = vunpack.c.l.b16 %v2087
      %v2240 = vunpack.c.l.b16 %v2088
      %v2241 = vunpack.c.l.b16 %v2089
      %v2242 = vunpack.c.l.b16 %v2090
      %v2243 = vunpack.c.l.b16 %v2091
      %v2244 = vunpack.c.l.b16 %v2092
      %v2245 = vunpack.c.l.b16 %v2093
      %v2246 = vunpack.c.l.b16 %v2094
      %v2247 = vunpack.c.l.b16 %v2095
      %v2248 = vunpack.c.l.b16 %v2096
      %v2249 = vunpack.c.l.b16 %v2097
      %v2250 = vpack.c.b16 %v2215, %v2214
      %v2251 = vpack.c.b16 %v2217, %v2216
      %v2252 = vpack.c.b16 %v2219, %v2218
      %v2253 = vpack.c.b16 %v2221, %v2220
      %v2254 = vpack.c.b16 %v2223, %v2222
      %v2255 = vpack.c.b16 %v2225, %v2224
      %v2256 = vpack.c.b16 %v2227, %v2226
      %v2257 = vpack.c.b16 %v2229, %v2228
      %v2258 = vpack.c.b16 %v2231, %v2230
      %v2259 = vpack.c.b16 %v2233, %v2232
      %v2260 = vpack.c.b16 %v2235, %v2234
      %v2261 = vpack.c.b16 %v2237, %v2236
      %v2262 = vpack.c.b16 %v2239, %v2238
      %v2263 = vpack.c.b16 %v2241, %v2240
      %v2264 = vpack.c.b16 %v2243, %v2242
      %v2265 = vpack.c.b16 %v2245, %v2244
      %v2266 = vpack.c.b16 %v2247, %v2246
      %v2267 = vpack.c.b16 %v2249, %v2248
      %v2287 = vsel %vm697, %v2100, 0
      %v2290 = vsel %vm697, %v2103, 0
      %v2293 = vsel %vm697, %v2106, 0
      %v2296 = vsel %vm697, %v2109, 0
      %v2299 = vsel %vm697, %v2112, 0
      %v2302 = vsel %vm697, %v2115, 0
      %v2305 = vsel %vm697, %v2118, 0
      %v2308 = vsel %vm697, %v2121, 0
      %v2311 = vsel %vm697, %v2124, 0
      %v2314 = vsel %vm697, %v2127, 0
      %v2317 = vsel %vm697, %v2130, 0
      %v2320 = vsel %vm697, %v2133, 0
      %v2323 = vsel %vm697, %v2136, 0
      %v2326 = vsel %vm697, %v2139, 0
      %v2329 = vsel %vm697, %v2142, 0
      %v2332 = vsel %vm697, %v2145, 0
      %2334 = vmatprep.subr.bf16.mxu0 0
      %2335 = vmatpush1.bf16.msra.mxu0 %v2250
      %2336 = vmatprep.subr.bf16.mxu0 0
      %2337 = vmatpush1.bf16.msra.mxu0 %v2251
      %2338 = vmatprep.subr.bf16.mxu0 0
      %2339 = vmatpush1.bf16.msra.mxu0 %v2252
      %2340 = vmatprep.subr.bf16.mxu0 0
      %2341 = vmatpush1.bf16.msra.mxu0 %v2253
      %2342 = vmatprep.subr.bf16.mxu0 0
      %2343 = vmatpush1.bf16.msra.mxu0 %v2254
      %2344 = vmatprep.subr.bf16.mxu0 0
      %2345 = vmatpush1.bf16.msra.mxu0 %v2255
      %2346 = vmatprep.subr.bf16.mxu0 0
      %2347 = vmatpush1.bf16.msra.mxu0 %v2256
      %2348 = vmatprep.subr.bf16.mxu0 0
      %2349 = vmatpush1.bf16.msra.mxu0 %v2257
      %2350 = vmatprep.subr.bf16.mxu0 0
      %2351 = vmatpush1.bf16.msra.mxu0 %v2258
      %2352 = vmatprep.subr.bf16.mxu0 0
      %2353 = vmatpush1.bf16.msra.mxu0 %v2259
      %2354 = vmatprep.subr.bf16.mxu0 0
      %2355 = vmatpush1.bf16.msra.mxu0 %v2260
      %2356 = vmatprep.subr.bf16.mxu0 0
      %2357 = vmatpush1.bf16.msra.mxu0 %v2261
      %2358 = vmatprep.subr.bf16.mxu0 0
      %2359 = vmatpush1.bf16.msra.mxu0 %v2262
      %2360 = vmatprep.subr.bf16.mxu0 0
      %2361 = vmatpush1.bf16.msra.mxu0 %v2263
      %2362 = vmatprep.subr.bf16.mxu0 0
      %2363 = vmatpush1.bf16.msra.mxu0 %v2264
      %2364 = vmatprep.subr.bf16.mxu0 0
      %2365 = vmatpush1.bf16.msra.mxu0 %v2265
      %2366 = vmatprep.mubr.bf16.mxu0 %v2099
      %2367 = vmatmul.mubr.bf16.gmra.mrb[0].mxu0 %v2098
      %v2368 = vpop.f32.mrb[0].mxu0
      %v2369 = vadd.f32 0.0, %v2368
      %v2370 = vpop.f32.mrb[0].mxu0
      %v2371 = vpop.f32.mrb[0].mxu0
      %v2372 = vadd.f32 0.0, %v2371
      %v2373 = vpop.f32.mrb[0].mxu0
      %2374 = vmatprep.mubr.bf16.mxu0 %v2102
      %2375 = vmatmul.mubr.bf16.gmra.mrb[0].mxu0 %v2101
      %v2376 = vpop.f32.mrb[0].mxu0
      %v2377 = vadd.f32 0.0, %v2376
      %v2378 = vpop.f32.mrb[0].mxu0
      %v2379 = vpop.f32.mrb[0].mxu0
      %v2380 = vadd.f32 0.0, %v2379
      %v2381 = vpop.f32.mrb[0].mxu0
      %2382 = vmatprep.mubr.bf16.mxu0 %v2105
      %2383 = vmatmul.mubr.bf16.gmra.mrb[0].mxu0 %v2104
      %v2384 = vpop.f32.mrb[0].mxu0
      %v2385 = vadd.f32 0.0, %v2384
      %v2386 = vpop.f32.mrb[0].mxu0
      %v2387 = vpop.f32.mrb[0].mxu0
      %v2388 = vadd.f32 0.0, %v2387
      %v2389 = vpop.f32.mrb[0].mxu0
      %2390 = vmatprep.mubr.bf16.mxu0 %v2108
      %2391 = vmatmul.mubr.bf16.gmra.mrb[0].mxu0 %v2107
      %v2392 = vpop.f32.mrb[0].mxu0
      %v2393 = vadd.f32 0.0, %v2392
      %v2394 = vpop.f32.mrb[0].mxu0
      %v2395 = vpop.f32.mrb[0].mxu0
      %v2396 = vadd.f32 0.0, %v2395
      %v2397 = vpop.f32.mrb[0].mxu0
      %2398 = vmatprep.mubr.bf16.mxu0 %v2111
      %2399 = vmatmul.mubr.bf16.gmra.mrb[0].mxu0 %v2110
      %v2400 = vpop.f32.mrb[0].mxu0
      %v2401 = vadd.f32 0.0, %v2400
      %v2402 = vpop.f32.mrb[0].mxu0
      %v2403 = vpop.f32.mrb[0].mxu0
      %v2404 = vadd.f32 0.0, %v2403
      %v2405 = vpop.f32.mrb[0].mxu0
      %2406 = vmatprep.mubr.bf16.mxu0 %v2114
      %2407 = vmatmul.mubr.bf16.gmra.mrb[0].mxu0 %v2113
      %v2408 = vpop.f32.mrb[0].mxu0
      %v2409 = vadd.f32 0.0, %v2408
      %v2410 = vpop.f32.mrb[0].mxu0
      %v2411 = vpop.f32.mrb[0].mxu0
      %v2412 = vadd.f32 0.0, %v2411
      %v2413 = vpop.f32.mrb[0].mxu0
      %2414 = vmatprep.mubr.bf16.mxu0 %v2117
      %2415 = vmatmul.mubr.bf16.gmra.mrb[0].mxu0 %v2116
      %v2416 = vpop.f32.mrb[0].mxu0
      %v2417 = vadd.f32 0.0, %v2416
      %v2418 = vpop.f32.mrb[0].mxu0
      %v2419 = vpop.f32.mrb[0].mxu0
      %v2420 = vadd.f32 0.0, %v2419
      %v2421 = vpop.f32.mrb[0].mxu0
      %2422 = vmatprep.mubr.bf16.mxu0 %v2120
      %2423 = vmatmul.mubr.bf16.gmra.mrb[0].mxu0 %v2119
      %v2424 = vpop.f32.mrb[0].mxu0
      %v2425 = vadd.f32 0.0, %v2424
      %v2426 = vpop.f32.mrb[0].mxu0
      %v2427 = vpop.f32.mrb[0].mxu0
      %v2428 = vadd.f32 0.0, %v2427
      %v2429 = vpop.f32.mrb[0].mxu0
      %2430 = vmatprep.mubr.bf16.mxu0 %v2123
      %2431 = vmatmul.mubr.bf16.gmra.mrb[0].mxu0 %v2122
      %v2432 = vpop.f32.mrb[0].mxu0
      %v2433 = vadd.f32 0.0, %v2432
      %v2434 = vpop.f32.mrb[0].mxu0
      %v2435 = vpop.f32.mrb[0].mxu0
      %v2436 = vadd.f32 0.0, %v2435
      %v2437 = vpop.f32.mrb[0].mxu0
      %2438 = vmatprep.mubr.bf16.mxu0 %v2126
      %2439 = vmatmul.mubr.bf16.gmra.mrb[0].mxu0 %v2125
      %v2440 = vpop.f32.mrb[0].mxu0
      %v2441 = vadd.f32 0.0, %v2440
      %v2442 = vpop.f32.mrb[0].mxu0
      %v2443 = vpop.f32.mrb[0].mxu0
      %v2444 = vadd.f32 0.0, %v2443
      %v2445 = vpop.f32.mrb[0].mxu0
      %2446 = vmatprep.mubr.bf16.mxu0 %v2129
      %2447 = vmatmul.mubr.bf16.gmra.mrb[0].mxu0 %v2128
      %v2448 = vpop.f32.mrb[0].mxu0
      %v2449 = vadd.f32 0.0, %v2448
      %v2450 = vpop.f32.mrb[0].mxu0
      %v2451 = vpop.f32.mrb[0].mxu0
      %v2452 = vadd.f32 0.0, %v2451
      %v2453 = vpop.f32.mrb[0].mxu0
      %2454 = vmatprep.mubr.bf16.mxu0 %v2132
      %2455 = vmatmul.mubr.bf16.gmra.mrb[0].mxu0 %v2131
      %v2456 = vpop.f32.mrb[0].mxu0
      %v2457 = vadd.f32 0.0, %v2456
      %v2458 = vpop.f32.mrb[0].mxu0
      %v2459 = vpop.f32.mrb[0].mxu0
      %v2460 = vadd.f32 0.0, %v2459
      %v2461 = vpop.f32.mrb[0].mxu0
      %2462 = vmatprep.mubr.bf16.mxu0 %v2135
      %2463 = vmatmul.mubr.bf16.gmra.mrb[0].mxu0 %v2134
      %v2464 = vpop.f32.mrb[0].mxu0
      %v2465 = vadd.f32 0.0, %v2464
      %v2466 = vpop.f32.mrb[0].mxu0
      %v2467 = vpop.f32.mrb[0].mxu0
      %v2468 = vadd.f32 0.0, %v2467
      %v2469 = vpop.f32.mrb[0].mxu0
      %2470 = vmatprep.mubr.bf16.mxu0 %v2138
      %2471 = vmatmul.mubr.bf16.gmra.mrb[0].mxu0 %v2137
      %v2472 = vpop.f32.mrb[0].mxu0
      %v2473 = vadd.f32 0.0, %v2472
      %v2474 = vpop.f32.mrb[0].mxu0
      %v2475 = vpop.f32.mrb[0].mxu0
      %v2476 = vadd.f32 0.0, %v2475
      %v2477 = vpop.f32.mrb[0].mxu0
      %2478 = vmatprep.mubr.bf16.mxu0 %v2141
      %2479 = vmatmul.mubr.bf16.gmra.mrb[0].mxu0 %v2140
      %v2480 = vpop.f32.mrb[0].mxu0
      %v2481 = vadd.f32 0.0, %v2480
      %v2482 = vpop.f32.mrb[0].mxu0
      %v2483 = vpop.f32.mrb[0].mxu0
      %v2484 = vadd.f32 0.0, %v2483
      %v2485 = vpop.f32.mrb[0].mxu0
      %2486 = vmatprep.mubr.bf16.mxu0 %v2144
      %2487 = vmatmul.mubr.bf16.gmra.mrb[0].mxu0 %v2143
      %v2488 = vpop.f32.mrb[0].mxu0
      %v2489 = vadd.f32 0.0, %v2488
      %v2490 = vpop.f32.mrb[0].mxu0
      %v2491 = vpop.f32.mrb[0].mxu0
      %v2492 = vadd.f32 0.0, %v2491
      %v2493 = vpop.f32.mrb[0].mxu0
      %2494 = vdwg.mxu0
      %2495 = vmatprep.subr.bf16.mxu0 0
      %2496 = vmatpush1.bf16.msra.mxu0 %v2266
      %2497 = vmatprep.subr.bf16.mxu0 0
      %2498 = vmatpush1.bf16.msra.mxu0 %v2267
      %2499 = vmatprep.subr.bf16.mxu0 0
      %2500 = vmatpush1.bf16.msra.mxu0 0
      %2501 = vmatprep.subr.bf16.mxu0 0
      %2502 = vmatpush1.bf16.msra.mxu0 0
      %2503 = vmatprep.subr.bf16.mxu0 0
      %2504 = vmatpush1.bf16.msra.mxu0 0
      %2505 = vmatprep.subr.bf16.mxu0 0
      %2506 = vmatpush1.bf16.msra.mxu0 0
      %2507 = vmatprep.subr.bf16.mxu0 0
      %2508 = vmatpush1.bf16.msra.mxu0 0
      %2509 = vmatprep.subr.bf16.mxu0 0
      %2510 = vmatpush1.bf16.msra.mxu0 0
      %2511 = vmatprep.subr.bf16.mxu0 0
      %2512 = vmatpush1.bf16.msra.mxu0 0
      %2513 = vmatprep.subr.bf16.mxu0 0
      %2514 = vmatpush1.bf16.msra.mxu0 0
      %2515 = vmatprep.subr.bf16.mxu0 0
      %2516 = vmatpush1.bf16.msra.mxu0 0
      %2517 = vmatprep.subr.bf16.mxu0 0
      %2518 = vmatpush1.bf16.msra.mxu0 0
      %2519 = vmatprep.subr.bf16.mxu0 0
      %2520 = vmatpush1.bf16.msra.mxu0 0
      %2521 = vmatprep.subr.bf16.mxu0 0
      %2522 = vmatpush1.bf16.msra.mxu0 0
      %2523 = vmatprep.subr.bf16.mxu0 0
      %2524 = vmatpush1.bf16.msra.mxu0 0
      %2525 = vmatprep.subr.bf16.mxu0 0
      %2526 = vmatpush1.bf16.msra.mxu0 0
      %2527 = vmatprep.mubr.bf16.mxu0 0
      %2528 = vmatmul.mubr.bf16.gmra.mrb[0].mxu0 %v2287
      %v2529 = vpop.f32.mrb[0].mxu0
      %v2530 = vadd.f32 %v2369, %v2529
      %v2531 = vpop.f32.mrb[0].mxu0
      %v2532 = vpop.f32.mrb[0].mxu0
      %v2533 = vadd.f32 %v2372, %v2532
      %v2534 = vpop.f32.mrb[0].mxu0
      %2535 = vmatprep.mubr.bf16.mxu0 0
      %2536 = vmatmul.mubr.bf16.gmra.mrb[0].mxu0 %v2290
      %v2537 = vpop.f32.mrb[0].mxu0
      %v2538 = vadd.f32 %v2377, %v2537
      %v2539 = vpop.f32.mrb[0].mxu0
      %v2540 = vpop.f32.mrb[0].mxu0
      %v2541 = vadd.f32 %v2380, %v2540
      %v2542 = vpop.f32.mrb[0].mxu0
      %2543 = vmatprep.mubr.bf16.mxu0 0
      %2544 = vmatmul.mubr.bf16.gmra.mrb[0].mxu0 %v2293
      %v2545 = vpop.f32.mrb[0].mxu0
      %v2546 = vadd.f32 %v2385, %v2545
      %v2547 = vpop.f32.mrb[0].mxu0
      %v2548 = vpop.f32.mrb[0].mxu0
      %v2549 = vadd.f32 %v2388, %v2548
      %v2550 = vpop.f32.mrb[0].mxu0
      %2551 = vmatprep.mubr.bf16.mxu0 0
      %2552 = vmatmul.mubr.bf16.gmra.mrb[0].mxu0 %v2296
      %v2553 = vpop.f32.mrb[0].mxu0
      %v2554 = vadd.f32 %v2393, %v2553
      %v2555 = vpop.f32.mrb[0].mxu0
      %v2556 = vpop.f32.mrb[0].mxu0
      %v2557 = vadd.f32 %v2396, %v2556
      %v2558 = vpop.f32.mrb[0].mxu0
      %2559 = vmatprep.mubr.bf16.mxu0 0
      %2560 = vmatmul.mubr.bf16.gmra.mrb[0].mxu0 %v2299
      %v2561 = vpop.f32.mrb[0].mxu0
      %v2562 = vadd.f32 %v2401, %v2561
      %v2563 = vpop.f32.mrb[0].mxu0
      %v2564 = vpop.f32.mrb[0].mxu0
      %v2565 = vadd.f32 %v2404, %v2564
      %v2566 = vpop.f32.mrb[0].mxu0
      %2567 = vmatprep.mubr.bf16.mxu0 0
      %2568 = vmatmul.mubr.bf16.gmra.mrb[0].mxu0 %v2302
      %v2569 = vpop.f32.mrb[0].mxu0
      %v2570 = vadd.f32 %v2409, %v2569
      %v2571 = vpop.f32.mrb[0].mxu0
      %v2572 = vpop.f32.mrb[0].mxu0
      %v2573 = vadd.f32 %v2412, %v2572
      %v2574 = vpop.f32.mrb[0].mxu0
      %2575 = vmatprep.mubr.bf16.mxu0 0
      %2576 = vmatmul.mubr.bf16.gmra.mrb[0].mxu0 %v2305
      %v2577 = vpop.f32.mrb[0].mxu0
      %v2578 = vadd.f32 %v2417, %v2577
      %v2579 = vpop.f32.mrb[0].mxu0
      %v2580 = vpop.f32.mrb[0].mxu0
      %v2581 = vadd.f32 %v2420, %v2580
      %v2582 = vpop.f32.mrb[0].mxu0
      %2583 = vmatprep.mubr.bf16.mxu0 0
      %2584 = vmatmul.mubr.bf16.gmra.mrb[0].mxu0 %v2308
      %v2585 = vpop.f32.mrb[0].mxu0
      %v2586 = vadd.f32 %v2425, %v2585
      %v2587 = vpop.f32.mrb[0].mxu0
      %v2588 = vpop.f32.mrb[0].mxu0
      %v2589 = vadd.f32 %v2428, %v2588
      %v2590 = vpop.f32.mrb[0].mxu0
      %2591 = vmatprep.mubr.bf16.mxu0 0
      %2592 = vmatmul.mubr.bf16.gmra.mrb[0].mxu0 %v2311
      %v2593 = vpop.f32.mrb[0].mxu0
      %v2594 = vadd.f32 %v2433, %v2593
      %v2595 = vpop.f32.mrb[0].mxu0
      %v2596 = vpop.f32.mrb[0].mxu0
      %v2597 = vadd.f32 %v2436, %v2596
      %v2598 = vpop.f32.mrb[0].mxu0
      %2599 = vmatprep.mubr.bf16.mxu0 0
      %2600 = vmatmul.mubr.bf16.gmra.mrb[0].mxu0 %v2314
      %v2601 = vpop.f32.mrb[0].mxu0
      %v2602 = vadd.f32 %v2441, %v2601
      %v2603 = vpop.f32.mrb[0].mxu0
      %v2604 = vpop.f32.mrb[0].mxu0
      %v2605 = vadd.f32 %v2444, %v2604
      %v2606 = vpop.f32.mrb[0].mxu0
      %2607 = vmatprep.mubr.bf16.mxu0 0
      %2608 = vmatmul.mubr.bf16.gmra.mrb[0].mxu0 %v2317
      %v2609 = vpop.f32.mrb[0].mxu0
      %v2610 = vadd.f32 %v2449, %v2609
      %v2611 = vpop.f32.mrb[0].mxu0
      %v2612 = vpop.f32.mrb[0].mxu0
      %v2613 = vadd.f32 %v2452, %v2612
      %v2614 = vpop.f32.mrb[0].mxu0
      %2615 = vmatprep.mubr.bf16.mxu0 0
      %2616 = vmatmul.mubr.bf16.gmra.mrb[0].mxu0 %v2320
      %v2617 = vpop.f32.mrb[0].mxu0
      %v2618 = vadd.f32 %v2457, %v2617
      %v2619 = vpop.f32.mrb[0].mxu0
      %v2620 = vpop.f32.mrb[0].mxu0
      %v2621 = vadd.f32 %v2460, %v2620
      %v2622 = vpop.f32.mrb[0].mxu0
      %2623 = vmatprep.mubr.bf16.mxu0 0
      %2624 = vmatmul.mubr.bf16.gmra.mrb[0].mxu0 %v2323
      %v2625 = vpop.f32.mrb[0].mxu0
      %v2626 = vadd.f32 %v2465, %v2625
      %v2627 = vpop.f32.mrb[0].mxu0
      %v2628 = vpop.f32.mrb[0].mxu0
      %v2629 = vadd.f32 %v2468, %v2628
      %v2630 = vpop.f32.mrb[0].mxu0
      %2631 = vmatprep.mubr.bf16.mxu0 0
      %2632 = vmatmul.mubr.bf16.gmra.mrb[0].mxu0 %v2326
      %v2633 = vpop.f32.mrb[0].mxu0
      %v2634 = vadd.f32 %v2473, %v2633
      %v2635 = vpop.f32.mrb[0].mxu0
      %v2636 = vpop.f32.mrb[0].mxu0
      %v2637 = vadd.f32 %v2476, %v2636
      %v2638 = vpop.f32.mrb[0].mxu0
      %2639 = vmatprep.mubr.bf16.mxu0 0
      %2640 = vmatmul.mubr.bf16.gmra.mrb[0].mxu0 %v2329
      %v2641 = vpop.f32.mrb[0].mxu0
      %v2642 = vadd.f32 %v2481, %v2641
      %v2643 = vpop.f32.mrb[0].mxu0
      %v2644 = vpop.f32.mrb[0].mxu0
      %v2645 = vadd.f32 %v2484, %v2644
      %v2646 = vpop.f32.mrb[0].mxu0
      %2647 = vmatprep.mubr.bf16.mxu0 0
      %2648 = vmatmul.mubr.bf16.gmra.mrb[0].mxu0 %v2332
      %v2649 = vpop.f32.mrb[0].mxu0
      %v2650 = vadd.f32 %v2489, %v2649
      %v2651 = vpop.f32.mrb[0].mxu0
      %v2652 = vpop.f32.mrb[0].mxu0
      %v2653 = vadd.f32 %v2492, %v2652
      %v2654 = vpop.f32.mrb[0].mxu0
      %2655 = vdwg.mxu0
      %v2656 = vmax.f32 %v2530, %v2562
      %v2657 = vmax.f32 %v2533, %v2565
      %v2658 = vmax.f32 %v2538, %v2570
      %v2659 = vmax.f32 %v2541, %v2573
      %v2660 = vmax.f32 %v2546, %v2578
      %v2661 = vmax.f32 %v2549, %v2581
      %v2662 = vmax.f32 %v2554, %v2586
      %v2663 = vmax.f32 %v2557, %v2589
      %v2664 = vmax.f32 %v2594, %v2626
      %v2665 = vmax.f32 %v2597, %v2629
      %v2666 = vmax.f32 %v2602, %v2634
      %v2667 = vmax.f32 %v2605, %v2637
      %v2668 = vmax.f32 %v2610, %v2642
      %v2669 = vmax.f32 %v2613, %v2645
      %v2670 = vmax.f32 %v2618, %v2650
      %v2671 = vmax.f32 %v2621, %v2653
      %v2672 = vmax.f32 %v2656, %v2664
      %v2673 = vmax.f32 %v2657, %v2665
      %v2674 = vmax.f32 %v2658, %v2666
      %v2675 = vmax.f32 %v2659, %v2667
      %v2676 = vmax.f32 %v2660, %v2668
      %v2677 = vmax.f32 %v2661, %v2669
      %v2678 = vmax.f32 %v2662, %v2670
      %v2679 = vmax.f32 %v2663, %v2671
      %v2680 = vld [vmem:[%s2] sm:$0x1]
      %v2682 = vlaneseq
      %v2683 = vshrl.u32 %v2682, 7
      %v2684 = vsub.s32 0, %v2683
      %v2685 = vrot.slane %v2680, %v2684
      %v2687 = vadd.f32 %v2672, %v2685
      %v2688 = vadd.f32 %v2673, %v2685
      %v2689 = vadd.f32 %v2674, %v2685
      %v2690 = vadd.f32 %v2675, %v2685
      %v2691 = vadd.f32 %v2676, %v2685
      %v2692 = vadd.f32 %v2677, %v2685
      %v2693 = vadd.f32 %v2678, %v2685
      %v2694 = vadd.f32 %v2679, %v2685
      %v2695 = vmax.f32 %v2687, 0.0
      %v2696 = vmax.f32 %v2688, 0.0
      %v2697 = vmax.f32 %v2689, 0.0
      %v2698 = vmax.f32 %v2690, 0.0
      %v2699 = vmax.f32 %v2691, 0.0
      %v2700 = vmax.f32 %v2692, 0.0
      %v2701 = vmax.f32 %v2693, 0.0
      %v2702 = vmax.f32 %v2694, 0.0
      %v2703 = vpack.c.bf16 %v2695, %v2695
      %v2704 = vpack.c.bf16 %v2696, %v2696
      %v2705 = vpack.c.bf16 %v2697, %v2697
      %v2706 = vpack.c.bf16 %v2698, %v2698
      %v2707 = vpack.c.bf16 %v2699, %v2699
      %v2708 = vpack.c.bf16 %v2700, %v2700
      %v2709 = vpack.c.bf16 %v2701, %v2701
      %v2710 = vpack.c.bf16 %v2702, %v2702
      %2711 = vst [vmem:[%s170] sm:$0xf] %v2703
      %2712 = vst [vmem:[%s170 + $0x4] sm:$0xf] %v2704
      %2713 = vst [vmem:[%s170 + $0x8] sm:$0xf] %v2705
      %2714 = vst [vmem:[%s170 + $0xc] sm:$0xf] %v2706
      %2715 = vst [vmem:[%s170 + $0x10] sm:$0xf] %v2707
      %2716 = vst [vmem:[%s170 + $0x14] sm:$0xf] %v2708
      %2717 = vst [vmem:[%s170 + $0x18] sm:$0xf] %v2709
      %2718 = vst [vmem:[%s170 + $0x1c] sm:$0xf] %v2710
      %p2719 = scmp.lt.s32.totalorder %s14, 1
      %s2720 = scalar_select %p2719, %s14, 1
      %s2721 = smul.addr %s2720, 8
      %s2722 = smul.addr %s2721, 4
      %s2723 = scalar_lea.vmem %s3, %s2722
      // Predicated region
      $region33: #{road_sign_cnn_forward.4} parent=31 // pred_check
        %p2724 = pneg %p100
      $region34: #{road_sign_cnn_forward.4} parent=31 // pred_check_branch
        %2726 = sbr.rel (%p2724) target = $region36
      $region35: #{road_sign_cnn_forward.4} parent=31 // pred_region
        _
      $region36: #{road_sign_cnn_forward.4} parent=31 // pred_fallthru
        _
    $region32: #{road_sign_cnn_forward.4} parent=5 // pred_fallthru
      _
    %p2727 = scmp.le.s32.totalorder 2, %s9
    // Predicated region
    $region37: #{road_sign_cnn_forward.4} parent=5 // pred_check
      %p2728 = pneg %p2727
    $region38: #{road_sign_cnn_forward.4} parent=5 // pred_check_branch
      %2730 = sbr.rel (%p2728) target = $region40
    $region39: #{road_sign_cnn_forward.4} parent=5 // pred_region
      %s2731 = ssub.s32 %s9, 2
      // Predicated region
      $region41: #{road_sign_cnn_forward.4} parent=39 // pred_check
        %p2732 = pneg %p106
      $region42: #{road_sign_cnn_forward.4} parent=39 // pred_check_branch
        %2734 = sbr.rel (%p2732) target = $region44
      $region43: #{road_sign_cnn_forward.4} parent=39 // pred_region
        %p2735 = scmp.lt.s32.totalorder %s15, 1
        %s2736 = scalar_select %p2735, %s15, 1
        %s2737 = smul.addr %s2736, 8
        %s2738 = smul.addr %s2737, 4
        %s2739 = scalar_lea.vmem %s3, %s2738
      $region44: #{road_sign_cnn_forward.4} parent=39 // pred_fallthru
        _
    $region40: #{road_sign_cnn_forward.4} parent=5 // pred_fallthru
      _
  $region6: #{road_sign_cnn_forward.4} parent=0 // loop_footer
    %s13 = sadd.s32 1, %s9
  $region7: #{road_sign_cnn_forward.4} parent=0 // loop_footer_branch
    %8 = sbr.rel target = $region3
  $region8: #{road_sign_cnn_forward.4} parent=0 // loop_exit
    _

// kernel: road_sign_cnn_forward.3
$region0: #{road_sign_cnn_forward.3}
  #allocation0 [shape = 'u32[]', space=smem, size = 0x4, offset = 0x4, fixed_abs, tag = 'smem constant byte address 0x4 - core index']
  #allocation1 [shape = 'u32[144,128]{1,0:T(1,128)}', space=vmem, size = 0x12000, scoped, tag = 'internal scratch']
  %s0 = inlined_call_operand.vmem [shape: bf16[2,4,17,17,3], index: 0, kind: input, shape index: {}]
  %s1 = inlined_call_operand.vmem [shape: bf16[27,128], index: 1, kind: input, shape index: {}]
  %s2 = inlined_call_operand.vmem [shape: f32[1,128], index: 2, kind: input, shape index: {}]
  %s3 = inlined_call_operand.vmem [shape: bf16[2,16,16,128], index: 3, kind: output, shape index: {}]
  %s4 = sld [smem:[#allocation0]]
  $region45: #{road_sign_cnn_forward.3} parent=0
    _
  %s6 = ssub.s32 1, %s4
  %s7 = scalar_select 0, %s6, %s4
  loop: start=0, step=1, limit=4
  $region2: #{road_sign_cnn_forward.3} parent=0 // loop_pre_header
    _
  $region3: #{road_sign_cnn_forward.3} parent=0 // loop_header
    %s9 = sphi 0, %s13
    %p10 = scmp.ge.s32.totalorder %s9, 4
    %s19 = sphi 0, %s21
    %s22 = sphi 0, %s19
    %s23 = sphi 0, %s22
    %s39 = sphi 0, %s23
    %s43 = sphi 0, %s43
    %s45 = sphi 0, %s43
    %s46 = sphi 0, %s45
    %s60 = sphi 0, %s46
    %s64 = sphi 0, %s64
    %s66 = sphi 0, %s64
    %s67 = sphi 0, %s66
    %s81 = sphi 0, %s67
    %s87 = sphi 0, %s89
    %s90 = sphi 0, %s87
    %s91 = sphi 0, %s90
    %s107 = sphi 0, %s91
  $region4: #{road_sign_cnn_forward.3} parent=0 // loop_header_branch
    %12 = sbr.rel (%p10) target = $region8
  $region5: #{road_sign_cnn_forward.3} parent=0 // loop_body
    %s14 = ssub.s32 %s9, 1
    %s15 = ssub.s32 %s9, 2
    %s16 = sadd.s32 %s9, 1
    %s17 = ssub.s32 %s9, %s16
    %p18 = scmp.eq.s32.totalorder %s17, 0
    %s20 = sadd.s32 %s19, 1
    %s21 = scalar_select %p18, %s19, %s20
    %p24 = pneg %p18
    %p25 = scmp.eq.s32.totalorder %s9, 1
    %p26 = por %p24, %p25
    %p27 = scmp.ne.s32.totalorder %s19, %s22
    %p28 = scmp.eq.s32.totalorder %s9, 0
    %p29 = por %p27, %p28
    %p30 = scmp.ne.s32.totalorder %s19, %s22
    %p31 = scmp.eq.s32.totalorder %s14, 1
    %p32 = por %p30, %p31
    %p33 = scmp.ne.s32.totalorder %s22, %s23
    %p34 = scmp.eq.s32.totalorder %s14, 0
    %p35 = por %p33, %p34
    %p36 = scmp.ne.s32.totalorder %s22, %s23
    %p37 = scmp.eq.s32.totalorder %s15, 1
    %p38 = por %p36, %p37
    %p40 = scmp.ne.s32.totalorder %s23, %s39
    %p41 = scmp.eq.s32.totalorder %s15, 0
    %p42 = por %p40, %p41
    %s44 = sadd.s32 %s43, 1
    %p47 = scmp.eq.s32.totalorder %s9, 1
    %p48 = scmp.ne.s32.totalorder %s43, %s45
    %p49 = scmp.eq.s32.totalorder %s9, 0
    %p50 = por %p48, %p49
    %p51 = scmp.ne.s32.totalorder %s43, %s45
    %p52 = scmp.eq.s32.totalorder %s14, 1
    %p53 = por %p51, %p52
    %p54 = scmp.ne.s32.totalorder %s45, %s46
    %p55 = scmp.eq.s32.totalorder %s14, 0
    %p56 = por %p54, %p55
    %p57 = scmp.ne.s32.totalorder %s45, %s46
    %p58 = scmp.eq.s32.totalorder %s15, 1
    %p59 = por %p57, %p58
    %p61 = scmp.ne.s32.totalorder %s46, %s60
    %p62 = scmp.eq.s32.totalorder %s15, 0
    %p63 = por %p61, %p62
    %s65 = sadd.s32 %s64, 1
    %p68 = scmp.eq.s32.totalorder %s9, 1
    %p69 = scmp.ne.s32.totalorder %s64, %s66
    %p70 = scmp.eq.s32.totalorder %s9, 0
    %p71 = por %p69, %p70
    %p72 = scmp.ne.s32.totalorder %s64, %s66
    %p73 = scmp.eq.s32.totalorder %s14, 1
    %p74 = por %p72, %p73
    %p75 = scmp.ne.s32.totalorder %s66, %s67
    %p76 = scmp.eq.s32.totalorder %s14, 0
    %p77 = por %p75, %p76
    %p78 = scmp.ne.s32.totalorder %s66, %s67
    %p79 = scmp.eq.s32.totalorder %s15, 1
    %p80 = por %p78, %p79
    %p82 = scmp.ne.s32.totalorder %s67, %s81
    %p83 = scmp.eq.s32.totalorder %s15, 0
    %p84 = por %p82, %p83
    %s85 = ssub.s32 %s9, %s16
    %p86 = scmp.eq.s32.totalorder %s85, 0
    %s88 = sadd.s32 %s87, 1
    %s89 = scalar_select %p86, %s87, %s88
    %p92 = pneg %p86
    %p93 = scmp.eq.s32.totalorder %s9, 1
    %p94 = por %p92, %p93
    %p95 = scmp.ne.s32.totalorder %s87, %s90
    %p96 = scmp.eq.s32.totalorder %s9, 0
    %p97 = por %p95, %p96
    %p98 = scmp.ne.s32.totalorder %s87, %s90
    %p99 = scmp.eq.s32.totalorder %s14, 1
    %p100 = por %p98, %p99
    %p101 = scmp.ne.s32.totalorder %s90, %s91
    %p102 = scmp.eq.s32.totalorder %s14, 0
    %p103 = por %p101, %p102
    %p104 = scmp.ne.s32.totalorder %s90, %s91
    %p105 = scmp.eq.s32.totalorder %s15, 1
    %p106 = por %p104, %p105
    %p108 = scmp.ne.s32.totalorder %s91, %s107
    %p109 = scmp.eq.s32.totalorder %s15, 0
    %p110 = por %p108, %p109
    %p111 = scmp.le.s32.totalorder 1, %s9
    %p112 = scmp.lt.s32.totalorder %s9, 3
    %p113 = pnand %p111, %p112
    %p114 = pneg %p113
    // Predicated region
    $region9: #{road_sign_cnn_forward.3} parent=5 // pred_check
      _
    $region10: #{road_sign_cnn_forward.3} parent=5 // pred_check_branch
      %116 = sbr.rel (%p113) target = $region12
    $region11: #{road_sign_cnn_forward.3} parent=5 // pred_region
      %s117 = ssub.s32 %s9, 1
      // Predicated region
      $region13: #{road_sign_cnn_forward.3} parent=11 // pred_check
        %p118 = pneg %p56
      $region14: #{road_sign_cnn_forward.3} parent=11 // pred_check_branch
        %120 = sbr.rel (%p118) target = $region16
      $region15: #{road_sign_cnn_forward.3} parent=11 // pred_region
        _
      $region16: #{road_sign_cnn_forward.3} parent=11 // pred_fallthru
        _
      // Predicated region
      $region17: #{road_sign_cnn_forward.3} parent=11 // pred_check
        %p121 = pneg %p77
      $region18: #{road_sign_cnn_forward.3} parent=11 // pred_check_branch
        %123 = sbr.rel (%p121) target = $region20
      $region19: #{road_sign_cnn_forward.3} parent=11 // pred_region
        _
      $region20: #{road_sign_cnn_forward.3} parent=11 // pred_fallthru
        _
    $region12: #{road_sign_cnn_forward.3} parent=5 // pred_fallthru
      _
    %p124 = scmp.lt.s32.totalorder %s9, 2
    // Predicated region
    $region21: #{road_sign_cnn_forward.3} parent=5 // pred_check
      %p125 = pneg %p124
    $region22: #{road_sign_cnn_forward.3} parent=5 // pred_check_branch
      %127 = sbr.rel (%p125) target = $region24
    $region23: #{road_sign_cnn_forward.3} parent=5 // pred_region
      // Predicated region
      $region25: #{road_sign_cnn_forward.3} parent=23 // pred_check
        %p128 = pneg %p29
      $region26: #{road_sign_cnn_forward.3} parent=23 // pred_check_branch
        %130 = sbr.rel (%p128) target = $region28
      $region27: #{road_sign_cnn_forward.3} parent=23 // pred_region
        %p131 = scmp.lt.s32.totalorder %s9, 1
        %s132 = scalar_select %p131, %s9, 1
        %s133 = smul.addr %s132, 204
        %s134 = smul.addr %s133, 4
        %s135 = scalar_lea.vmem %s0, %s134
      $region28: #{road_sign_cnn_forward.3} parent=23 // pred_fallthru
        _
    $region24: #{road_sign_cnn_forward.3} parent=5 // pred_fallthru
      _
    %p136 = scmp.le.s32.totalorder 1, %s9
    %p137 = scmp.lt.s32.totalorder %s9, 3
    %p138 = pnand %p136, %p137
    %p139 = pneg %p138
    // Predicated region
    $region29: #{road_sign_cnn_forward.3} parent=5 // pred_check
      _
    $region30: #{road_sign_cnn_forward.3} parent=5 // pred_check_branch
      %141 = sbr.rel (%p138) target = $region32
    $region31: #{road_sign_cnn_forward.3} parent=5 // pred_region
      %s142 = ssub.s32 %s9, 1
      %p143 = scmp.lt.s32.totalorder %s14, 1
      %s144 = scalar_select %p143, %s14, 1
      %s145 = smul.addr %s144, 204
      %s146 = smul.addr %s145, 4
      %s147 = scalar_lea.vmem %s0, %s146
      %p148 = pneg %p35
      %p149 = pneg %p32
      %p150 = pneg %p56
      %p151 = pneg %p53
      %p152 = pneg %p77
      %p153 = pneg %p74
      %p154 = pneg %p103
      %p155 = pneg %p100
      %p156 = scmp.lt.s32.totalorder %s14, 1
      %s157 = scalar_select %p156, %s14, 1
      %s158 = smul.addr %s157, 32
      %s159 = smul.addr %s158, 4
      %s160 = scalar_lea.vmem %s3, %s159
      %p161 = scmp.lt.s32.totalorder %s14, 1
      %s162 = scalar_select %p161, %s14, 1
      %s163 = smul.addr %s162, 204
      %s164 = smul.addr %s163, 4
      %s165 = scalar_lea.vmem %s0, %s164
      %p166 = scmp.lt.s32.totalorder %s14, 1
      %s167 = scalar_select %p166, %s14, 1
      %s168 = smul.addr %s167, 32
      %s169 = smul.addr %s168, 4
      %s170 = scalar_lea.vmem %s3, %s169
      %v172 = vld [vmem:[%s165] sm:$0xf]
      %v173 = vld [vmem:[%s165 + $0x4] sm:$0xf]
      %v174 = vld [vmem:[%s165 + $0xc] sm:$0xf]
      %v175 = vld [vmem:[%s165 + $0x10] sm:$0xf]
      %v176 = vld [vmem:[%s165 + $0x18] sm:$0xf]
      %v177 = vld [vmem:[%s165 + $0x1c] sm:$0xf]
      %v178 = vld [vmem:[%s165 + $0x24] sm:$0xf]
      %v179 = vld [vmem:[%s165 + $0x28] sm:$0xf]
      %v180 = vld [vmem:[%s165 + $0x30] sm:$0xf]
      %v181 = vld [vmem:[%s165 + $0x34] sm:$0xf]
      %v182 = vld [vmem:[%s165 + $0x3c] sm:$0xf]
      %v183 = vld [vmem:[%s165 + $0x40] sm:$0xf]
      %v184 = vld [vmem:[%s165 + $0x48] sm:$0xf]
      %v185 = vld [vmem:[%s165 + $0x4c] sm:$0xf]
      %v186 = vld [vmem:[%s165 + $0x54] sm:$0xf]
      %v187 = vld [vmem:[%s165 + $0x58] sm:$0xf]
      %v188 = vld [vmem:[%s165 + $0x60] sm:$0xf]
      %v189 = vld [vmem:[%s165 + $0x64] sm:$0xf]
      %v190 = vld [vmem:[%s165 + $0x6c] sm:$0xf]
      %v191 = vld [vmem:[%s165 + $0x70] sm:$0xf]
      %v192 = vld [vmem:[%s165 + $0x78] sm:$0xf]
      %v193 = vld [vmem:[%s165 + $0x7c] sm:$0xf]
      %v194 = vld [vmem:[%s165 + $0x84] sm:$0xf]
      %v195 = vld [vmem:[%s165 + $0x88] sm:$0xf]
      %v196 = vld [vmem:[%s165 + $0x90] sm:$0xf]
      %v197 = vld [vmem:[%s165 + $0x94] sm:$0xf]
      %v198 = vld [vmem:[%s165 + $0x9c] sm:$0xf]
      %v199 = vld [vmem:[%s165 + $0xa0] sm:$0xf]
      %v200 = vld [vmem:[%s165 + $0xa8] sm:$0xf]
      %v201 = vld [vmem:[%s165 + $0xac] sm:$0xf]
      %v202 = vld [vmem:[%s165 + $0xb4] sm:$0xf]
      %v203 = vld [vmem:[%s165 + $0xb8] sm:$0xf]
      %s204 = scalar_lea.vmem %s165, 204
      %v205 = vld [vmem:[%s204] sm:$0xf]
      %v206 = vld [vmem:[%s204 + $0x4] sm:$0xf]
      %v207 = vld [vmem:[%s204 + $0xc] sm:$0xf]
      %v208 = vld [vmem:[%s204 + $0x10] sm:$0xf]
      %v209 = vld [vmem:[%s204 + $0x18] sm:$0xf]
      %v210 = vld [vmem:[%s204 + $0x1c] sm:$0xf]
      %v211 = vld [vmem:[%s204 + $0x24] sm:$0xf]
      %v212 = vld [vmem:[%s204 + $0x28] sm:$0xf]
      %v213 = vld [vmem:[%s204 + $0x30] sm:$0xf]
      %v214 = vld [vmem:[%s204 + $0x34] sm:$0xf]
      %v215 = vld [vmem:[%s204 + $0x3c] sm:$0xf]
      %v216 = vld [vmem:[%s204 + $0x40] sm:$0xf]
      %v217 = vld [vmem:[%s204 + $0x48] sm:$0xf]
      %v218 = vld [vmem:[%s204 + $0x4c] sm:$0xf]
      %v219 = vld [vmem:[%s204 + $0x54] sm:$0xf]
      %v220 = vld [vmem:[%s204 + $0x58] sm:$0xf]
      %v221 = vld [vmem:[%s204 + $0x60] sm:$0xf]
      %v222 = vld [vmem:[%s204 + $0x64] sm:$0xf]
      %v223 = vld [vmem:[%s204 + $0x6c] sm:$0xf]
      %v224 = vld [vmem:[%s204 + $0x70] sm:$0xf]
      %v225 = vld [vmem:[%s204 + $0x78] sm:$0xf]
      %v226 = vld [vmem:[%s204 + $0x7c] sm:$0xf]
      %v227 = vld [vmem:[%s204 + $0x84] sm:$0xf]
      %v228 = vld [vmem:[%s204 + $0x88] sm:$0xf]
      %v229 = vld [vmem:[%s204 + $0x90] sm:$0xf]
      %v230 = vld [vmem:[%s204 + $0x94] sm:$0xf]
      %v231 = vld [vmem:[%s204 + $0x9c] sm:$0xf]
      %v232 = vld [vmem:[%s204 + $0xa0] sm:$0xf]
      %v233 = vld [vmem:[%s204 + $0xa8] sm:$0xf]
      %v234 = vld [vmem:[%s204 + $0xac] sm:$0xf]
      %v235 = vld [vmem:[%s204 + $0xb4] sm:$0xf]
      %v236 = vld [vmem:[%s204 + $0xb8] sm:$0xf]
      %v237 = vld [vmem:[%s165 + $0x8] sm:$0x1]
      %v238 = vld [vmem:[%s165 + $0x14] sm:$0x1]
      %v239 = vld [vmem:[%s165 + $0x20] sm:$0x1]
      %v240 = vld [vmem:[%s165 + $0x2c] sm:$0x1]
      %v241 = vld [vmem:[%s165 + $0x38] sm:$0x1]
      %v242 = vld [vmem:[%s165 + $0x44] sm:$0x1]
      %v243 = vld [vmem:[%s165 + $0x50] sm:$0x1]
      %v244 = vld [vmem:[%s165 + $0x5c] sm:$0x1]
      %v245 = vld [vmem:[%s165 + $0x68] sm:$0x1]
      %v246 = vld [vmem:[%s165 + $0x74] sm:$0x1]
      %v247 = vld [vmem:[%s165 + $0x80] sm:$0x1]
      %v248 = vld [vmem:[%s165 + $0x8c] sm:$0x1]
      %v249 = vld [vmem:[%s165 + $0x98] sm:$0x1]
      %v250 = vld [vmem:[%s165 + $0xa4] sm:$0x1]
      %v251 = vld [vmem:[%s165 + $0xb0] sm:$0x1]
      %v252 = vld [vmem:[%s165 + $0xbc] sm:$0x1]
      %s253 = scalar_lea.vmem %s165, 408
      %v254 = vld [vmem:[%s253] sm:$0xf]
      %v255 = vld [vmem:[%s253 + $0x4] sm:$0xf]
      %v256 = vld [vmem:[%s253 + $0xc] sm:$0xf]
      %v257 = vld [vmem:[%s253 + $0x10] sm:$0xf]
      %v258 = vld [vmem:[%s253 + $0x18] sm:$0xf]
      %v259 = vld [vmem:[%s253 + $0x1c] sm:$0xf]
      %v260 = vld [vmem:[%s253 + $0x24] sm:$0xf]
      %v261 = vld [vmem:[%s253 + $0x28] sm:$0xf]
      %v262 = vld [vmem:[%s253 + $0x30] sm:$0xf]
      %v263 = vld [vmem:[%s253 + $0x34] sm:$0xf]
      %v264 = vld [vmem:[%s253 + $0x3c] sm:$0xf]
      %v265 = vld [vmem:[%s253 + $0x40] sm:$0xf]
      %v266 = vld [vmem:[%s253 + $0x48] sm:$0xf]
      %v267 = vld [vmem:[%s253 + $0x4c] sm:$0xf]
      %v268 = vld [vmem:[%s253 + $0x54] sm:$0xf]
      %v269 = vld [vmem:[%s253 + $0x58] sm:$0xf]
      %v270 = vld [vmem:[%s253 + $0x60] sm:$0xf]
      %v271 = vld [vmem:[%s253 + $0x64] sm:$0xf]
      %v272 = vld [vmem:[%s253 + $0x6c] sm:$0xf]
      %v273 = vld [vmem:[%s253 + $0x70] sm:$0xf]
      %v274 = vld [vmem:[%s253 + $0x78] sm:$0xf]
      %v275 = vld [vmem:[%s253 + $0x7c] sm:$0xf]
      %v276 = vld [vmem:[%s253 + $0x84] sm:$0xf]
      %v277 = vld [vmem:[%s253 + $0x88] sm:$0xf]
      %v278 = vld [vmem:[%s253 + $0x90] sm:$0xf]
      %v279 = vld [vmem:[%s253 + $0x94] sm:$0xf]
      %v280 = vld [vmem:[%s253 + $0x9c] sm:$0xf]
      %v281 = vld [vmem:[%s253 + $0xa0] sm:$0xf]
      %v282 = vld [vmem:[%s253 + $0xa8] sm:$0xf]
      %v283 = vld [vmem:[%s253 + $0xac] sm:$0xf]
      %v284 = vld [vmem:[%s253 + $0xb4] sm:$0xf]
      %v285 = vld [vmem:[%s253 + $0xb8] sm:$0xf]
      %s286 = scalar_lea.vmem %s165, 612
      %v287 = vld [vmem:[%s286] sm:$0xf]
      %v288 = vld [vmem:[%s286 + $0x4] sm:$0xf]
      %v289 = vld [vmem:[%s286 + $0xc] sm:$0xf]
      %v290 = vld [vmem:[%s286 + $0x10] sm:$0xf]
      %v291 = vld [vmem:[%s286 + $0x18] sm:$0xf]
      %v292 = vld [vmem:[%s286 + $0x1c] sm:$0xf]
      %v293 = vld [vmem:[%s286 + $0x24] sm:$0xf]
      %v294 = vld [vmem:[%s286 + $0x28] sm:$0xf]
      %v295 = vld [vmem:[%s286 + $0x30] sm:$0xf]
      %v296 = vld [vmem:[%s286 + $0x34] sm:$0xf]
      %v297 = vld [vmem:[%s286 + $0x3c] sm:$0xf]
      %v298 = vld [vmem:[%s286 + $0x40] sm:$0xf]
      %v299 = vld [vmem:[%s286 + $0x48] sm:$0xf]
      %v300 = vld [vmem:[%s286 + $0x4c] sm:$0xf]
      %v301 = vld [vmem:[%s286 + $0x54] sm:$0xf]
      %v302 = vld [vmem:[%s286 + $0x58] sm:$0xf]
      %v303 = vld [vmem:[%s286 + $0x60] sm:$0xf]
      %v304 = vld [vmem:[%s286 + $0x64] sm:$0xf]
      %v305 = vld [vmem:[%s286 + $0x6c] sm:$0xf]
      %v306 = vld [vmem:[%s286 + $0x70] sm:$0xf]
      %v307 = vld [vmem:[%s286 + $0x78] sm:$0xf]
      %v308 = vld [vmem:[%s286 + $0x7c] sm:$0xf]
      %v309 = vld [vmem:[%s286 + $0x84] sm:$0xf]
      %v310 = vld [vmem:[%s286 + $0x88] sm:$0xf]
      %v311 = vld [vmem:[%s286 + $0x90] sm:$0xf]
      %v312 = vld [vmem:[%s286 + $0x94] sm:$0xf]
      %v313 = vld [vmem:[%s286 + $0x9c] sm:$0xf]
      %v314 = vld [vmem:[%s286 + $0xa0] sm:$0xf]
      %v315 = vld [vmem:[%s286 + $0xa8] sm:$0xf]
      %v316 = vld [vmem:[%s286 + $0xac] sm:$0xf]
      %v317 = vld [vmem:[%s286 + $0xb4] sm:$0xf]
      %v318 = vld [vmem:[%s286 + $0xb8] sm:$0xf]
      %v319 = vld [vmem:[%s253 + $0x8] sm:$0x1]
      %v320 = vld [vmem:[%s253 + $0x14] sm:$0x1]
      %v321 = vld [vmem:[%s253 + $0x20] sm:$0x1]
      %v322 = vld [vmem:[%s253 + $0x2c] sm:$0x1]
      %v323 = vld [vmem:[%s253 + $0x38] sm:$0x1]
      %v324 = vld [vmem:[%s253 + $0x44] sm:$0x1]
      %v325 = vld [vmem:[%s253 + $0x50] sm:$0x1]
      %v326 = vld [vmem:[%s253 + $0x5c] sm:$0x1]
      %v327 = vld [vmem:[%s253 + $0x68] sm:$0x1]
      %v328 = vld [vmem:[%s253 + $0x74] sm:$0x1]
      %v329 = vld [vmem:[%s253 + $0x80] sm:$0x1]
      %v330 = vld [vmem:[%s253 + $0x8c] sm:$0x1]
      %v331 = vld [vmem:[%s253 + $0x98] sm:$0x1]
      %v332 = vld [vmem:[%s253 + $0xa4] sm:$0x1]
      %v333 = vld [vmem:[%s253 + $0xb0] sm:$0x1]
      %v334 = vld [vmem:[%s253 + $0xbc] sm:$0x1]
      %s335 = scalar_lea.vmem %s165, 12
      %v336 = vld [vmem:[%s335] sm:$0xf]
      %v337 = vld [vmem:[%s335 + $0x4] sm:$0xf]
      %v338 = vld [vmem:[%s335 + $0xc] sm:$0xf]
      %v339 = vld [vmem:[%s335 + $0x10] sm:$0xf]
      %v340 = vld [vmem:[%s335 + $0x18] sm:$0xf]
      %v341 = vld [vmem:[%s335 + $0x1c] sm:$0xf]
      %v342 = vld [vmem:[%s335 + $0x24] sm:$0xf]
      %v343 = vld [vmem:[%s335 + $0x28] sm:$0xf]
      %v344 = vld [vmem:[%s335 + $0x30] sm:$0xf]
      %v345 = vld [vmem:[%s335 + $0x34] sm:$0xf]
      %v346 = vld [vmem:[%s335 + $0x3c] sm:$0xf]
      %v347 = vld [vmem:[%s335 + $0x40] sm:$0xf]
      %v348 = vld [vmem:[%s335 + $0x48] sm:$0xf]
      %v349 = vld [vmem:[%s335 + $0x4c] sm:$0xf]
      %v350 = vld [vmem:[%s335 + $0x54] sm:$0xf]
      %v351 = vld [vmem:[%s335 + $0x58] sm:$0xf]
      %v352 = vld [vmem:[%s335 + $0x60] sm:$0xf]
      %v353 = vld [vmem:[%s335 + $0x64] sm:$0xf]
      %v354 = vld [vmem:[%s335 + $0x6c] sm:$0xf]
      %v355 = vld [vmem:[%s335 + $0x70] sm:$0xf]
      %v356 = vld [vmem:[%s335 + $0x78] sm:$0xf]
      %v357 = vld [vmem:[%s335 + $0x7c] sm:$0xf]
      %v358 = vld [vmem:[%s335 + $0x84] sm:$0xf]
      %v359 = vld [vmem:[%s335 + $0x88] sm:$0xf]
      %v360 = vld [vmem:[%s335 + $0x90] sm:$0xf]
      %v361 = vld [vmem:[%s335 + $0x94] sm:$0xf]
      %v362 = vld [vmem:[%s335 + $0x9c] sm:$0xf]
      %v363 = vld [vmem:[%s335 + $0xa0] sm:$0xf]
      %v364 = vld [vmem:[%s335 + $0xa8] sm:$0xf]
      %v365 = vld [vmem:[%s335 + $0xac] sm:$0xf]
      %v366 = vld [vmem:[%s335 + $0xb4] sm:$0xf]
      %v367 = vld [vmem:[%s335 + $0xb8] sm:$0xf]
      %s368 = scalar_lea.vmem %s165, 216
      %v369 = vld [vmem:[%s368] sm:$0xf]
      %v370 = vld [vmem:[%s368 + $0x4] sm:$0xf]
      %v371 = vld [vmem:[%s368 + $0xc] sm:$0xf]
      %v372 = vld [vmem:[%s368 + $0x10] sm:$0xf]
      %v373 = vld [vmem:[%s368 + $0x18] sm:$0xf]
      %v374 = vld [vmem:[%s368 + $0x1c] sm:$0xf]
      %v375 = vld [vmem:[%s368 + $0x24] sm:$0xf]
      %v376 = vld [vmem:[%s368 + $0x28] sm:$0xf]
      %v377 = vld [vmem:[%s368 + $0x30] sm:$0xf]
      %v378 = vld [vmem:[%s368 + $0x34] sm:$0xf]
      %v379 = vld [vmem:[%s368 + $0x3c] sm:$0xf]
      %v380 = vld [vmem:[%s368 + $0x40] sm:$0xf]
      %v381 = vld [vmem:[%s368 + $0x48] sm:$0xf]
      %v382 = vld [vmem:[%s368 + $0x4c] sm:$0xf]
      %v383 = vld [vmem:[%s368 + $0x54] sm:$0xf]
      %v384 = vld [vmem:[%s368 + $0x58] sm:$0xf]
      %v385 = vld [vmem:[%s368 + $0x60] sm:$0xf]
      %v386 = vld [vmem:[%s368 + $0x64] sm:$0xf]
      %v387 = vld [vmem:[%s368 + $0x6c] sm:$0xf]
      %v388 = vld [vmem:[%s368 + $0x70] sm:$0xf]
      %v389 = vld [vmem:[%s368 + $0x78] sm:$0xf]
      %v390 = vld [vmem:[%s368 + $0x7c] sm:$0xf]
      %v391 = vld [vmem:[%s368 + $0x84] sm:$0xf]
      %v392 = vld [vmem:[%s368 + $0x88] sm:$0xf]
      %v393 = vld [vmem:[%s368 + $0x90] sm:$0xf]
      %v394 = vld [vmem:[%s368 + $0x94] sm:$0xf]
      %v395 = vld [vmem:[%s368 + $0x9c] sm:$0xf]
      %v396 = vld [vmem:[%s368 + $0xa0] sm:$0xf]
      %v397 = vld [vmem:[%s368 + $0xa8] sm:$0xf]
      %v398 = vld [vmem:[%s368 + $0xac] sm:$0xf]
      %v399 = vld [vmem:[%s368 + $0xb4] sm:$0xf]
      %v400 = vld [vmem:[%s368 + $0xb8] sm:$0xf]
      %v401 = vld [vmem:[%s335 + $0x8] sm:$0x1]
      %v402 = vld [vmem:[%s335 + $0x14] sm:$0x1]
      %v403 = vld [vmem:[%s335 + $0x20] sm:$0x1]
      %v404 = vld [vmem:[%s335 + $0x2c] sm:$0x1]
      %v405 = vld [vmem:[%s335 + $0x38] sm:$0x1]
      %v406 = vld [vmem:[%s335 + $0x44] sm:$0x1]
      %v407 = vld [vmem:[%s335 + $0x50] sm:$0x1]
      %v408 = vld [vmem:[%s335 + $0x5c] sm:$0x1]
      %v409 = vld [vmem:[%s335 + $0x68] sm:$0x1]
      %v410 = vld [vmem:[%s335 + $0x74] sm:$0x1]
      %v411 = vld [vmem:[%s335 + $0x80] sm:$0x1]
      %v412 = vld [vmem:[%s335 + $0x8c] sm:$0x1]
      %v413 = vld [vmem:[%s335 + $0x98] sm:$0x1]
      %v414 = vld [vmem:[%s335 + $0xa4] sm:$0x1]
      %v415 = vld [vmem:[%s335 + $0xb0] sm:$0x1]
      %v416 = vld [vmem:[%s335 + $0xbc] sm:$0x1]
      %v449 = vunpack.c.l.b16 %v172
      %v450 = vunpack.c.l.b16 %v173
      %v451 = vunpack.c.l.b16 %v174
      %v452 = vunpack.c.l.b16 %v175
      %v453 = vunpack.c.l.b16 %v176
      %v454 = vunpack.c.l.b16 %v177
      %v455 = vunpack.c.l.b16 %v178
      %v456 = vunpack.c.l.b16 %v179
      %v457 = vunpack.c.l.b16 %v180
      %v458 = vunpack.c.l.b16 %v181
      %v459 = vunpack.c.l.b16 %v182
      %v460 = vunpack.c.l.b16 %v183
      %v461 = vunpack.c.l.b16 %v184
      %v462 = vunpack.c.l.b16 %v185
      %v463 = vunpack.c.l.b16 %v186
      %v464 = vunpack.c.l.b16 %v187
      %v465 = vunpack.c.l.b16 %v188
      %v466 = vunpack.c.l.b16 %v189
      %v467 = vunpack.c.l.b16 %v190
      %v468 = vunpack.c.l.b16 %v191
      %v469 = vunpack.c.l.b16 %v192
      %v470 = vunpack.c.l.b16 %v193
      %v471 = vunpack.c.l.b16 %v194
      %v472 = vunpack.c.l.b16 %v195
      %v473 = vunpack.c.l.b16 %v196
      %v474 = vunpack.c.l.b16 %v197
      %v475 = vunpack.c.l.b16 %v198
      %v476 = vunpack.c.l.b16 %v199
      %v477 = vunpack.c.l.b16 %v200
      %v478 = vunpack.c.l.b16 %v201
      %v479 = vunpack.c.l.b16 %v202
      %v480 = vunpack.c.l.b16 %v203
      %v481 = vpack.c.b16 %v450, %v449
      %v482 = vpack.c.b16 %v452, %v451
      %v483 = vpack.c.b16 %v454, %v453
      %v484 = vpack.c.b16 %v456, %v455
      %v485 = vpack.c.b16 %v458, %v457
      %v486 = vpack.c.b16 %v460, %v459
      %v487 = vpack.c.b16 %v462, %v461
      %v488 = vpack.c.b16 %v464, %v463
      %v489 = vpack.c.b16 %v466, %v465
      %v490 = vpack.c.b16 %v468, %v467
      %v491 = vpack.c.b16 %v470, %v469
      %v492 = vpack.c.b16 %v472, %v471
      %v493 = vpack.c.b16 %v474, %v473
      %v494 = vpack.c.b16 %v476, %v475
      %v495 = vpack.c.b16 %v478, %v477
      %v496 = vpack.c.b16 %v480, %v479
      %v529 = vunpack.c.l.b16 %v205
      %v530 = vunpack.c.l.b16 %v206
      %v531 = vunpack.c.l.b16 %v207
      %v532 = vunpack.c.l.b16 %v208
      %v533 = vunpack.c.l.b16 %v209
      %v534 = vunpack.c.l.b16 %v210
      %v535 = vunpack.c.l.b16 %v211
      %v536 = vunpack.c.l.b16 %v212
      %v537 = vunpack.c.l.b16 %v213
      %v538 = vunpack.c.l.b16 %v214
      %v539 = vunpack.c.l.b16 %v215
      %v540 = vunpack.c.l.b16 %v216
      %v541 = vunpack.c.l.b16 %v217
      %v542 = vunpack.c.l.b16 %v218
      %v543 = vunpack.c.l.b16 %v219
      %v544 = vunpack.c.l.b16 %v220
      %v545 = vunpack.c.l.b16 %v221
      %v546 = vunpack.c.l.b16 %v222
      %v547 = vunpack.c.l.b16 %v223
      %v548 = vunpack.c.l.b16 %v224
      %v549 = vunpack.c.l.b16 %v225
      %v550 = vunpack.c.l.b16 %v226
      %v551 = vunpack.c.l.b16 %v227
      %v552 = vunpack.c.l.b16 %v228
      %v553 = vunpack.c.l.b16 %v229
      %v554 = vunpack.c.l.b16 %v230
      %v555 = vunpack.c.l.b16 %v231
      %v556 = vunpack.c.l.b16 %v232
      %v557 = vunpack.c.l.b16 %v233
      %v558 = vunpack.c.l.b16 %v234
      %v559 = vunpack.c.l.b16 %v235
      %v560 = vunpack.c.l.b16 %v236
      %v561 = vpack.c.b16 %v530, %v529
      %v562 = vpack.c.b16 %v532, %v531
      %v563 = vpack.c.b16 %v534, %v533
      %v564 = vpack.c.b16 %v536, %v535
      %v565 = vpack.c.b16 %v538, %v537
      %v566 = vpack.c.b16 %v540, %v539
      %v567 = vpack.c.b16 %v542, %v541
      %v568 = vpack.c.b16 %v544, %v543
      %v569 = vpack.c.b16 %v546, %v545
      %v570 = vpack.c.b16 %v548, %v547
      %v571 = vpack.c.b16 %v550, %v549
      %v572 = vpack.c.b16 %v552, %v551
      %v573 = vpack.c.b16 %v554, %v553
      %v574 = vpack.c.b16 %v556, %v555
      %v575 = vpack.c.b16 %v558, %v557
      %v576 = vpack.c.b16 %v560, %v559
      %577 = vrot.lane.b32.xlu0 %v561, 3
      %v578 = vpop.permute.xlu0 %577
      %579 = vrot.lane.b32.xlu0 %v562, 3
      %v580 = vpop.permute.xlu0 %579
      %581 = vrot.lane.b32.xlu0 %v563, 3
      %v582 = vpop.permute.xlu0 %581
      %583 = vrot.lane.b32.xlu0 %v564, 3
      %v584 = vpop.permute.xlu0 %583
      %585 = vrot.lane.b32.xlu0 %v565, 3
      %v586 = vpop.permute.xlu0 %585
      %587 = vrot.lane.b32.xlu0 %v566, 3
      %v588 = vpop.permute.xlu0 %587
      %589 = vrot.lane.b32.xlu0 %v567, 3
      %v590 = vpop.permute.xlu0 %589
      %591 = vrot.lane.b32.xlu0 %v568, 3
      %v592 = vpop.permute.xlu0 %591
      %593 = vrot.lane.b32.xlu0 %v569, 3
      %v594 = vpop.permute.xlu0 %593
      %595 = vrot.lane.b32.xlu0 %v570, 3
      %v596 = vpop.permute.xlu0 %595
      %597 = vrot.lane.b32.xlu0 %v571, 3
      %v598 = vpop.permute.xlu0 %597
      %599 = vrot.lane.b32.xlu0 %v572, 3
      %v600 = vpop.permute.xlu0 %599
      %601 = vrot.lane.b32.xlu0 %v573, 3
      %v602 = vpop.permute.xlu0 %601
      %603 = vrot.lane.b32.xlu0 %v574, 3
      %v604 = vpop.permute.xlu0 %603
      %605 = vrot.lane.b32.xlu0 %v575, 3
      %v606 = vpop.permute.xlu0 %605
      %607 = vrot.lane.b32.xlu0 %v576, 3
      %v608 = vpop.permute.xlu0 %607
      %v625 = vunpack.c.l.b16 %v237
      %v626 = vunpack.c.l.b16 %v238
      %v627 = vunpack.c.l.b16 %v239
      %v628 = vunpack.c.l.b16 %v240
      %v629 = vunpack.c.l.b16 %v241
      %v630 = vunpack.c.l.b16 %v242
      %v631 = vunpack.c.l.b16 %v243
      %v632 = vunpack.c.l.b16 %v244
      %v633 = vunpack.c.l.b16 %v245
      %v634 = vunpack.c.l.b16 %v246
      %v635 = vunpack.c.l.b16 %v247
      %v636 = vunpack.c.l.b16 %v248
      %v637 = vunpack.c.l.b16 %v249
      %v638 = vunpack.c.l.b16 %v250
      %v639 = vunpack.c.l.b16 %v251
      %v640 = vunpack.c.l.b16 %v252
      %v641 = vpack.c.b16 %v625, %v625
      %v642 = vpack.c.b16 %v626, %v626
      %v643 = vpack.c.b16 %v627, %v627
      %v644 = vpack.c.b16 %v628, %v628
      %v645 = vpack.c.b16 %v629, %v629
      %v646 = vpack.c.b16 %v630, %v630
      %v647 = vpack.c.b16 %v631, %v631
      %v648 = vpack.c.b16 %v632, %v632
      %v649 = vpack.c.b16 %v633, %v633
      %v650 = vpack.c.b16 %v634, %v634
      %v651 = vpack.c.b16 %v635, %v635
      %v652 = vpack.c.b16 %v636, %v636
      %v653 = vpack.c.b16 %v637, %v637
      %v654 = vpack.c.b16 %v638, %v638
      %v655 = vpack.c.b16 %v639, %v639
      %v656 = vpack.c.b16 %v640, %v640
      %vm657 = vsmask.f32 7424
      %v659 = vshrl.u32 %v481, 16
      %v661 = vshll.u32 %v481, 16
      %v663 = vrot.slane %v661, 1
      %v664 = vor.u32 %v659, %v663
      %v666 = vshll.u32 %v641, 16
      %v668 = vrot.slane %v666, 1
      %v669 = vsel %vm657, %v664, %v668
      %v671 = vshrl.u32 %v482, 16
      %v673 = vshll.u32 %v482, 16
      %v675 = vrot.slane %v673, 1
      %v676 = vor.u32 %v671, %v675
      %v678 = vshll.u32 %v642, 16
      %v680 = vrot.slane %v678, 1
      %v681 = vsel %vm657, %v676, %v680
      %v683 = vshrl.u32 %v483, 16
      %v685 = vshll.u32 %v483, 16
      %v687 = vrot.slane %v685, 1
      %v688 = vor.u32 %v683, %v687
      %v690 = vshll.u32 %v643, 16
      %v692 = vrot.slane %v690, 1
      %v693 = vsel %vm657, %v688, %v692
      %v695 = vshrl.u32 %v484, 16
      %v697 = vshll.u32 %v484, 16
      %v699 = vrot.slane %v697, 1
      %v700 = vor.u32 %v695, %v699
      %v702 = vshll.u32 %v644, 16
      %v704 = vrot.slane %v702, 1
      %v705 = vsel %vm657, %v700, %v704
      %v707 = vshrl.u32 %v485, 16
      %v709 = vshll.u32 %v485, 16
      %v711 = vrot.slane %v709, 1
      %v712 = vor.u32 %v707, %v711
      %v714 = vshll.u32 %v645, 16
      %v716 = vrot.slane %v714, 1
      %v717 = vsel %vm657, %v712, %v716
      %v719 = vshrl.u32 %v486, 16
      %v721 = vshll.u32 %v486, 16
      %v723 = vrot.slane %v721, 1
      %v724 = vor.u32 %v719, %v723
      %v726 = vshll.u32 %v646, 16
      %v728 = vrot.slane %v726, 1
      %v729 = vsel %vm657, %v724, %v728
      %v731 = vshrl.u32 %v487, 16
      %v733 = vshll.u32 %v487, 16
      %v735 = vrot.slane %v733, 1
      %v736 = vor.u32 %v731, %v735
      %v738 = vshll.u32 %v647, 16
      %v740 = vrot.slane %v738, 1
      %v741 = vsel %vm657, %v736, %v740
      %v743 = vshrl.u32 %v488, 16
      %v745 = vshll.u32 %v488, 16
      %v747 = vrot.slane %v745, 1
      %v748 = vor.u32 %v743, %v747
      %v750 = vshll.u32 %v648, 16
      %v752 = vrot.slane %v750, 1
      %v753 = vsel %vm657, %v748, %v752
      %v755 = vshrl.u32 %v489, 16
      %v757 = vshll.u32 %v489, 16
      %v759 = vrot.slane %v757, 1
      %v760 = vor.u32 %v755, %v759
      %v762 = vshll.u32 %v649, 16
      %v764 = vrot.slane %v762, 1
      %v765 = vsel %vm657, %v760, %v764
      %v767 = vshrl.u32 %v490, 16
      %v769 = vshll.u32 %v490, 16
      %v771 = vrot.slane %v769, 1
      %v772 = vor.u32 %v767, %v771
      %v774 = vshll.u32 %v650, 16
      %v776 = vrot.slane %v774, 1
      %v777 = vsel %vm657, %v772, %v776
      %v779 = vshrl.u32 %v491, 16
      %v781 = vshll.u32 %v491, 16
      %v783 = vrot.slane %v781, 1
      %v784 = vor.u32 %v779, %v783
      %v786 = vshll.u32 %v651, 16
      %v788 = vrot.slane %v786, 1
      %v789 = vsel %vm657, %v784, %v788
      %v791 = vshrl.u32 %v492, 16
      %v793 = vshll.u32 %v492, 16
      %v795 = vrot.slane %v793, 1
      %v796 = vor.u32 %v791, %v795
      %v798 = vshll.u32 %v652, 16
      %v800 = vrot.slane %v798, 1
      %v801 = vsel %vm657, %v796, %v800
      %v803 = vshrl.u32 %v493, 16
      %v805 = vshll.u32 %v493, 16
      %v807 = vrot.slane %v805, 1
      %v808 = vor.u32 %v803, %v807
      %v810 = vshll.u32 %v653, 16
      %v812 = vrot.slane %v810, 1
      %v813 = vsel %vm657, %v808, %v812
      %v815 = vshrl.u32 %v494, 16
      %v817 = vshll.u32 %v494, 16
      %v819 = vrot.slane %v817, 1
      %v820 = vor.u32 %v815, %v819
      %v822 = vshll.u32 %v654, 16
      %v824 = vrot.slane %v822, 1
      %v825 = vsel %vm657, %v820, %v824
      %v827 = vshrl.u32 %v495, 16
      %v829 = vshll.u32 %v495, 16
      %v831 = vrot.slane %v829, 1
      %v832 = vor.u32 %v827, %v831
      %v834 = vshll.u32 %v655, 16
      %v836 = vrot.slane %v834, 1
      %v837 = vsel %vm657, %v832, %v836
      %v839 = vshrl.u32 %v496, 16
      %v841 = vshll.u32 %v496, 16
      %v843 = vrot.slane %v841, 1
      %v844 = vor.u32 %v839, %v843
      %v846 = vshll.u32 %v656, 16
      %v848 = vrot.slane %v846, 1
      %v849 = vsel %vm657, %v844, %v848
      %850 = vrot.lane.b32.xlu0 %v669, 6
      %v851 = vpop.permute.xlu0 %850
      %852 = vrot.lane.b32.xlu0 %v681, 6
      %v853 = vpop.permute.xlu0 %852
      %854 = vrot.lane.b32.xlu0 %v693, 6
      %v855 = vpop.permute.xlu0 %854
      %856 = vrot.lane.b32.xlu0 %v705, 6
      %v857 = vpop.permute.xlu0 %856
      %858 = vrot.lane.b32.xlu0 %v717, 6
      %v859 = vpop.permute.xlu0 %858
      %860 = vrot.lane.b32.xlu0 %v729, 6
      %v861 = vpop.permute.xlu0 %860
      %862 = vrot.lane.b32.xlu0 %v741, 6
      %v863 = vpop.permute.xlu0 %862
      %864 = vrot.lane.b32.xlu0 %v753, 6
      %v865 = vpop.permute.xlu0 %864
      %866 = vrot.lane.b32.xlu0 %v765, 6
      %v867 = vpop.permute.xlu0 %866
      %868 = vrot.lane.b32.xlu0 %v777, 6
      %v869 = vpop.permute.xlu0 %868
      %870 = vrot.lane.b32.xlu0 %v789, 6
      %v871 = vpop.permute.xlu0 %870
      %872 = vrot.lane.b32.xlu0 %v801, 6
      %v873 = vpop.permute.xlu0 %872
      %874 = vrot.lane.b32.xlu0 %v813, 6
      %v875 = vpop.permute.xlu0 %874
      %876 = vrot.lane.b32.xlu0 %v825, 6
      %v877 = vpop.permute.xlu0 %876
      %878 = vrot.lane.b32.xlu0 %v837, 6
      %v879 = vpop.permute.xlu0 %878
      %880 = vrot.lane.b32.xlu0 %v849, 6
      %v881 = vpop.permute.xlu0 %880
      %v914 = vunpack.c.l.b16 %v254
      %v915 = vunpack.c.l.b16 %v255
      %v916 = vunpack.c.l.b16 %v256
      %v917 = vunpack.c.l.b16 %v257
      %v918 = vunpack.c.l.b16 %v258
      %v919 = vunpack.c.l.b16 %v259
      %v920 = vunpack.c.l.b16 %v260
      %v921 = vunpack.c.l.b16 %v261
      %v922 = vunpack.c.l.b16 %v262
      %v923 = vunpack.c.l.b16 %v263
      %v924 = vunpack.c.l.b16 %v264
      %v925 = vunpack.c.l.b16 %v265
      %v926 = vunpack.c.l.b16 %v266
      %v927 = vunpack.c.l.b16 %v267
      %v928 = vunpack.c.l.b16 %v268
      %v929 = vunpack.c.l.b16 %v269
      %v930 = vunpack.c.l.b16 %v270
      %v931 = vunpack.c.l.b16 %v271
      %v932 = vunpack.c.l.b16 %v272
      %v933 = vunpack.c.l.b16 %v273
      %v934 = vunpack.c.l.b16 %v274
      %v935 = vunpack.c.l.b16 %v275
      %v936 = vunpack.c.l.b16 %v276
      %v937 = vunpack.c.l.b16 %v277
      %v938 = vunpack.c.l.b16 %v278
      %v939 = vunpack.c.l.b16 %v279
      %v940 = vunpack.c.l.b16 %v280
      %v941 = vunpack.c.l.b16 %v281
      %v942 = vunpack.c.l.b16 %v282
      %v943 = vunpack.c.l.b16 %v283
      %v944 = vunpack.c.l.b16 %v284
      %v945 = vunpack.c.l.b16 %v285
      %v946 = vpack.c.b16 %v915, %v914
      %v947 = vpack.c.b16 %v917, %v916
      %v948 = vpack.c.b16 %v919, %v918
      %v949 = vpack.c.b16 %v921, %v920
      %v950 = vpack.c.b16 %v923, %v922
      %v951 = vpack.c.b16 %v925, %v924
      %v952 = vpack.c.b16 %v927, %v926
      %v953 = vpack.c.b16 %v929, %v928
      %v954 = vpack.c.b16 %v931, %v930
      %v955 = vpack.c.b16 %v933, %v932
      %v956 = vpack.c.b16 %v935, %v934
      %v957 = vpack.c.b16 %v937, %v936
      %v958 = vpack.c.b16 %v939, %v938
      %v959 = vpack.c.b16 %v941, %v940
      %v960 = vpack.c.b16 %v943, %v942
      %v961 = vpack.c.b16 %v945, %v944
      %962 = vrot.lane.b32.xlu0 %v946, 9
      %v963 = vpop.permute.xlu0 %962
      %964 = vrot.lane.b32.xlu0 %v947, 9
      %v965 = vpop.permute.xlu0 %964
      %966 = vrot.lane.b32.xlu0 %v948, 9
      %v967 = vpop.permute.xlu0 %966
      %968 = vrot.lane.b32.xlu0 %v949, 9
      %v969 = vpop.permute.xlu0 %968
      %970 = vrot.lane.b32.xlu0 %v950, 9
      %v971 = vpop.permute.xlu0 %970
      %972 = vrot.lane.b32.xlu0 %v951, 9
      %v973 = vpop.permute.xlu0 %972
      %974 = vrot.lane.b32.xlu0 %v952, 9
      %v975 = vpop.permute.xlu0 %974
      %976 = vrot.lane.b32.xlu0 %v953, 9
      %v977 = vpop.permute.xlu0 %976
      %978 = vrot.lane.b32.xlu0 %v954, 9
      %v979 = vpop.permute.xlu0 %978
      %980 = vrot.lane.b32.xlu0 %v955, 9
      %v981 = vpop.permute.xlu0 %980
      %982 = vrot.lane.b32.xlu0 %v956, 9
      %v983 = vpop.permute.xlu0 %982
      %984 = vrot.lane.b32.xlu0 %v957, 9
      %v985 = vpop.permute.xlu0 %984
      %986 = vrot.lane.b32.xlu0 %v958, 9
      %v987 = vpop.permute.xlu0 %986
      %988 = vrot.lane.b32.xlu0 %v959, 9
      %v989 = vpop.permute.xlu0 %988
      %990 = vrot.lane.b32.xlu0 %v960, 9
      %v991 = vpop.permute.xlu0 %990
      %992 = vrot.lane.b32.xlu0 %v961, 9
      %v993 = vpop.permute.xlu0 %992
      %v1026 = vunpack.c.l.b16 %v287
      %v1027 = vunpack.c.l.b16 %v288
      %v1028 = vunpack.c.l.b16 %v289
      %v1029 = vunpack.c.l.b16 %v290
      %v1030 = vunpack.c.l.b16 %v291
      %v1031 = vunpack.c.l.b16 %v292
      %v1032 = vunpack.c.l.b16 %v293
      %v1033 = vunpack.c.l.b16 %v294
      %v1034 = vunpack.c.l.b16 %v295
      %v1035 = vunpack.c.l.b16 %v296
      %v1036 = vunpack.c.l.b16 %v297
      %v1037 = vunpack.c.l.b16 %v298
      %v1038 = vunpack.c.l.b16 %v299
      %v1039 = vunpack.c.l.b16 %v300
      %v1040 = vunpack.c.l.b16 %v301
      %v1041 = vunpack.c.l.b16 %v302
      %v1042 = vunpack.c.l.b16 %v303
      %v1043 = vunpack.c.l.b16 %v304
      %v1044 = vunpack.c.l.b16 %v305
      %v1045 = vunpack.c.l.b16 %v306
      %v1046 = vunpack.c.l.b16 %v307
      %v1047 = vunpack.c.l.b16 %v308
      %v1048 = vunpack.c.l.b16 %v309
      %v1049 = vunpack.c.l.b16 %v310
      %v1050 = vunpack.c.l.b16 %v311
      %v1051 = vunpack.c.l.b16 %v312
      %v1052 = vunpack.c.l.b16 %v313
      %v1053 = vunpack.c.l.b16 %v314
      %v1054 = vunpack.c.l.b16 %v315
      %v1055 = vunpack.c.l.b16 %v316
      %v1056 = vunpack.c.l.b16 %v317
      %v1057 = vunpack.c.l.b16 %v318
      %v1058 = vpack.c.b16 %v1027, %v1026
      %v1059 = vpack.c.b16 %v1029, %v1028
      %v1060 = vpack.c.b16 %v1031, %v1030
      %v1061 = vpack.c.b16 %v1033, %v1032
      %v1062 = vpack.c.b16 %v1035, %v1034
      %v1063 = vpack.c.b16 %v1037, %v1036
      %v1064 = vpack.c.b16 %v1039, %v1038
      %v1065 = vpack.c.b16 %v1041, %v1040
      %v1066 = vpack.c.b16 %v1043, %v1042
      %v1067 = vpack.c.b16 %v1045, %v1044
      %v1068 = vpack.c.b16 %v1047, %v1046
      %v1069 = vpack.c.b16 %v1049, %v1048
      %v1070 = vpack.c.b16 %v1051, %v1050
      %v1071 = vpack.c.b16 %v1053, %v1052
      %v1072 = vpack.c.b16 %v1055, %v1054
      %v1073 = vpack.c.b16 %v1057, %v1056
      %1074 = vrot.lane.b32.xlu0 %v1058, 12
      %v1075 = vpop.permute.xlu0 %1074
      %1076 = vrot.lane.b32.xlu0 %v1059, 12
      %v1077 = vpop.permute.xlu0 %1076
      %1078 = vrot.lane.b32.xlu0 %v1060, 12
      %v1079 = vpop.permute.xlu0 %1078
      %1080 = vrot.lane.b32.xlu0 %v1061, 12
      %v1081 = vpop.permute.xlu0 %1080
      %1082 = vrot.lane.b32.xlu0 %v1062, 12
      %v1083 = vpop.permute.xlu0 %1082
      %1084 = vrot.lane.b32.xlu0 %v1063, 12
      %v1085 = vpop.permute.xlu0 %1084
      %1086 = vrot.lane.b32.xlu0 %v1064, 12
      %v1087 = vpop.permute.xlu0 %1086
      %1088 = vrot.lane.b32.xlu0 %v1065, 12
      %v1089 = vpop.permute.xlu0 %1088
      %1090 = vrot.lane.b32.xlu0 %v1066, 12
      %v1091 = vpop.permute.xlu0 %1090
      %1092 = vrot.lane.b32.xlu0 %v1067, 12
      %v1093 = vpop.permute.xlu0 %1092
      %1094 = vrot.lane.b32.xlu0 %v1068, 12
      %v1095 = vpop.permute.xlu0 %1094
      %1096 = vrot.lane.b32.xlu0 %v1069, 12
      %v1097 = vpop.permute.xlu0 %1096
      %1098 = vrot.lane.b32.xlu0 %v1070, 12
      %v1099 = vpop.permute.xlu0 %1098
      %1100 = vrot.lane.b32.xlu0 %v1071, 12
      %v1101 = vpop.permute.xlu0 %1100
      %1102 = vrot.lane.b32.xlu0 %v1072, 12
      %v1103 = vpop.permute.xlu0 %1102
      %1104 = vrot.lane.b32.xlu0 %v1073, 12
      %v1105 = vpop.permute.xlu0 %1104
      %v1122 = vunpack.c.l.b16 %v319
      %v1123 = vunpack.c.l.b16 %v320
      %v1124 = vunpack.c.l.b16 %v321
      %v1125 = vunpack.c.l.b16 %v322
      %v1126 = vunpack.c.l.b16 %v323
      %v1127 = vunpack.c.l.b16 %v324
      %v1128 = vunpack.c.l.b16 %v325
      %v1129 = vunpack.c.l.b16 %v326
      %v1130 = vunpack.c.l.b16 %v327
      %v1131 = vunpack.c.l.b16 %v328
      %v1132 = vunpack.c.l.b16 %v329
      %v1133 = vunpack.c.l.b16 %v330
      %v1134 = vunpack.c.l.b16 %v331
      %v1135 = vunpack.c.l.b16 %v332
      %v1136 = vunpack.c.l.b16 %v333
      %v1137 = vunpack.c.l.b16 %v334
      %v1138 = vpack.c.b16 %v1122, %v1122
      %v1139 = vpack.c.b16 %v1123, %v1123
      %v1140 = vpack.c.b16 %v1124, %v1124
      %v1141 = vpack.c.b16 %v1125, %v1125
      %v1142 = vpack.c.b16 %v1126, %v1126
      %v1143 = vpack.c.b16 %v1127, %v1127
      %v1144 = vpack.c.b16 %v1128, %v1128
      %v1145 = vpack.c.b16 %v1129, %v1129
      %v1146 = vpack.c.b16 %v1130, %v1130
      %v1147 = vpack.c.b16 %v1131, %v1131
      %v1148 = vpack.c.b16 %v1132, %v1132
      %v1149 = vpack.c.b16 %v1133, %v1133
      %v1150 = vpack.c.b16 %v1134, %v1134
      %v1151 = vpack.c.b16 %v1135, %v1135
      %v1152 = vpack.c.b16 %v1136, %v1136
      %v1153 = vpack.c.b16 %v1137, %v1137
      %v1155 = vshrl.u32 %v946, 16
      %v1157 = vshll.u32 %v946, 16
      %v1159 = vrot.slane %v1157, 1
      %v1160 = vor.u32 %v1155, %v1159
      %v1162 = vshll.u32 %v1138, 16
      %v1164 = vrot.slane %v1162, 1
      %v1165 = vsel %vm657, %v1160, %v1164
      %v1167 = vshrl.u32 %v947, 16
      %v1169 = vshll.u32 %v947, 16
      %v1171 = vrot.slane %v1169, 1
      %v1172 = vor.u32 %v1167, %v1171
      %v1174 = vshll.u32 %v1139, 16
      %v1176 = vrot.slane %v1174, 1
      %v1177 = vsel %vm657, %v1172, %v1176
      %v1179 = vshrl.u32 %v948, 16
      %v1181 = vshll.u32 %v948, 16
      %v1183 = vrot.slane %v1181, 1
      %v1184 = vor.u32 %v1179, %v1183
      %v1186 = vshll.u32 %v1140, 16
      %v1188 = vrot.slane %v1186, 1
      %v1189 = vsel %vm657, %v1184, %v1188
      %v1191 = vshrl.u32 %v949, 16
      %v1193 = vshll.u32 %v949, 16
      %v1195 = vrot.slane %v1193, 1
      %v1196 = vor.u32 %v1191, %v1195
      %v1198 = vshll.u32 %v1141, 16
      %v1200 = vrot.slane %v1198, 1
      %v1201 = vsel %vm657, %v1196, %v1200
      %v1203 = vshrl.u32 %v950, 16
      %v1205 = vshll.u32 %v950, 16
      %v1207 = vrot.slane %v1205, 1
      %v1208 = vor.u32 %v1203, %v1207
      %v1210 = vshll.u32 %v1142, 16
      %v1212 = vrot.slane %v1210, 1
      %v1213 = vsel %vm657, %v1208, %v1212
      %v1215 = vshrl.u32 %v951, 16
      %v1217 = vshll.u32 %v951, 16
      %v1219 = vrot.slane %v1217, 1
      %v1220 = vor.u32 %v1215, %v1219
      %v1222 = vshll.u32 %v1143, 16
      %v1224 = vrot.slane %v1222, 1
      %v1225 = vsel %vm657, %v1220, %v1224
      %v1227 = vshrl.u32 %v952, 16
      %v1229 = vshll.u32 %v952, 16
      %v1231 = vrot.slane %v1229, 1
      %v1232 = vor.u32 %v1227, %v1231
      %v1234 = vshll.u32 %v1144, 16
      %v1236 = vrot.slane %v1234, 1
      %v1237 = vsel %vm657, %v1232, %v1236
      %v1239 = vshrl.u32 %v953, 16
      %v1241 = vshll.u32 %v953, 16
      %v1243 = vrot.slane %v1241, 1
      %v1244 = vor.u32 %v1239, %v1243
      %v1246 = vshll.u32 %v1145, 16
      %v1248 = vrot.slane %v1246, 1
      %v1249 = vsel %vm657, %v1244, %v1248
      %v1251 = vshrl.u32 %v954, 16
      %v1253 = vshll.u32 %v954, 16
      %v1255 = vrot.slane %v1253, 1
      %v1256 = vor.u32 %v1251, %v1255
      %v1258 = vshll.u32 %v1146, 16
      %v1260 = vrot.slane %v1258, 1
      %v1261 = vsel %vm657, %v1256, %v1260
      %v1263 = vshrl.u32 %v955, 16
      %v1265 = vshll.u32 %v955, 16
      %v1267 = vrot.slane %v1265, 1
      %v1268 = vor.u32 %v1263, %v1267
      %v1270 = vshll.u32 %v1147, 16
      %v1272 = vrot.slane %v1270, 1
      %v1273 = vsel %vm657, %v1268, %v1272
      %v1275 = vshrl.u32 %v956, 16
      %v1277 = vshll.u32 %v956, 16
      %v1279 = vrot.slane %v1277, 1
      %v1280 = vor.u32 %v1275, %v1279
      %v1282 = vshll.u32 %v1148, 16
      %v1284 = vrot.slane %v1282, 1
      %v1285 = vsel %vm657, %v1280, %v1284
      %v1287 = vshrl.u32 %v957, 16
      %v1289 = vshll.u32 %v957, 16
      %v1291 = vrot.slane %v1289, 1
      %v1292 = vor.u32 %v1287, %v1291
      %v1294 = vshll.u32 %v1149, 16
      %v1296 = vrot.slane %v1294, 1
      %v1297 = vsel %vm657, %v1292, %v1296
      %v1299 = vshrl.u32 %v958, 16
      %v1301 = vshll.u32 %v958, 16
      %v1303 = vrot.slane %v1301, 1
      %v1304 = vor.u32 %v1299, %v1303
      %v1306 = vshll.u32 %v1150, 16
      %v1308 = vrot.slane %v1306, 1
      %v1309 = vsel %vm657, %v1304, %v1308
      %v1311 = vshrl.u32 %v959, 16
      %v1313 = vshll.u32 %v959, 16
      %v1315 = vrot.slane %v1313, 1
      %v1316 = vor.u32 %v1311, %v1315
      %v1318 = vshll.u32 %v1151, 16
      %v1320 = vrot.slane %v1318, 1
      %v1321 = vsel %vm657, %v1316, %v1320
      %v1323 = vshrl.u32 %v960, 16
      %v1325 = vshll.u32 %v960, 16
      %v1327 = vrot.slane %v1325, 1
      %v1328 = vor.u32 %v1323, %v1327
      %v1330 = vshll.u32 %v1152, 16
      %v1332 = vrot.slane %v1330, 1
      %v1333 = vsel %vm657, %v1328, %v1332
      %v1335 = vshrl.u32 %v961, 16
      %v1337 = vshll.u32 %v961, 16
      %v1339 = vrot.slane %v1337, 1
      %v1340 = vor.u32 %v1335, %v1339
      %v1342 = vshll.u32 %v1153, 16
      %v1344 = vrot.slane %v1342, 1
      %v1345 = vsel %vm657, %v1340, %v1344
      %1346 = vrot.lane.b32.xlu0 %v1165, 15
      %v1347 = vpop.permute.xlu0 %1346
      %1348 = vrot.lane.b32.xlu0 %v1177, 15
      %v1349 = vpop.permute.xlu0 %1348
      %1350 = vrot.lane.b32.xlu0 %v1189, 15
      %v1351 = vpop.permute.xlu0 %1350
      %1352 = vrot.lane.b32.xlu0 %v1201, 15
      %v1353 = vpop.permute.xlu0 %1352
      %1354 = vrot.lane.b32.xlu0 %v1213, 15
      %v1355 = vpop.permute.xlu0 %1354
      %1356 = vrot.lane.b32.xlu0 %v1225, 15
      %v1357 = vpop.permute.xlu0 %1356
      %1358 = vrot.lane.b32.xlu0 %v1237, 15
      %v1359 = vpop.permute.xlu0 %1358
      %1360 = vrot.lane.b32.xlu0 %v1249, 15
      %v1361 = vpop.permute.xlu0 %1360
      %1362 = vrot.lane.b32.xlu0 %v1261, 15
      %v1363 = vpop.permute.xlu0 %1362
      %1364 = vrot.lane.b32.xlu0 %v1273, 15
      %v1365 = vpop.permute.xlu0 %1364
      %1366 = vrot.lane.b32.xlu0 %v1285, 15
      %v1367 = vpop.permute.xlu0 %1366
      %1368 = vrot.lane.b32.xlu0 %v1297, 15
      %v1369 = vpop.permute.xlu0 %1368
      %1370 = vrot.lane.b32.xlu0 %v1309, 15
      %v1371 = vpop.permute.xlu0 %1370
      %1372 = vrot.lane.b32.xlu0 %v1321, 15
      %v1373 = vpop.permute.xlu0 %1372
      %1374 = vrot.lane.b32.xlu0 %v1333, 15
      %v1375 = vpop.permute.xlu0 %1374
      %1376 = vrot.lane.b32.xlu0 %v1345, 15
      %v1377 = vpop.permute.xlu0 %1376
      %v1410 = vunpack.c.l.b16 %v336
      %v1411 = vunpack.c.l.b16 %v337
      %v1412 = vunpack.c.l.b16 %v338
      %v1413 = vunpack.c.l.b16 %v339
      %v1414 = vunpack.c.l.b16 %v340
      %v1415 = vunpack.c.l.b16 %v341
      %v1416 = vunpack.c.l.b16 %v342
      %v1417 = vunpack.c.l.b16 %v343
      %v1418 = vunpack.c.l.b16 %v344
      %v1419 = vunpack.c.l.b16 %v345
      %v1420 = vunpack.c.l.b16 %v346
      %v1421 = vunpack.c.l.b16 %v347
      %v1422 = vunpack.c.l.b16 %v348
      %v1423 = vunpack.c.l.b16 %v349
      %v1424 = vunpack.c.l.b16 %v350
      %v1425 = vunpack.c.l.b16 %v351
      %v1426 = vunpack.c.l.b16 %v352
      %v1427 = vunpack.c.l.b16 %v353
      %v1428 = vunpack.c.l.b16 %v354
      %v1429 = vunpack.c.l.b16 %v355
      %v1430 = vunpack.c.l.b16 %v356
      %v1431 = vunpack.c.l.b16 %v357
      %v1432 = vunpack.c.l.b16 %v358
      %v1433 = vunpack.c.l.b16 %v359
      %v1434 = vunpack.c.l.b16 %v360
      %v1435 = vunpack.c.l.b16 %v361
      %v1436 = vunpack.c.l.b16 %v362
      %v1437 = vunpack.c.l.b16 %v363
      %v1438 = vunpack.c.l.b16 %v364
      %v1439 = vunpack.c.l.b16 %v365
      %v1440 = vunpack.c.l.b16 %v366
      %v1441 = vunpack.c.l.b16 %v367
      %v1442 = vpack.c.b16 %v1411, %v1410
      %v1443 = vpack.c.b16 %v1413, %v1412
      %v1444 = vpack.c.b16 %v1415, %v1414
      %v1445 = vpack.c.b16 %v1417, %v1416
      %v1446 = vpack.c.b16 %v1419, %v1418
      %v1447 = vpack.c.b16 %v1421, %v1420
      %v1448 = vpack.c.b16 %v1423, %v1422
      %v1449 = vpack.c.b16 %v1425, %v1424
      %v1450 = vpack.c.b16 %v1427, %v1426
      %v1451 = vpack.c.b16 %v1429, %v1428
      %v1452 = vpack.c.b16 %v1431, %v1430
      %v1453 = vpack.c.b16 %v1433, %v1432
      %v1454 = vpack.c.b16 %v1435, %v1434
      %v1455 = vpack.c.b16 %v1437, %v1436
      %v1456 = vpack.c.b16 %v1439, %v1438
      %v1457 = vpack.c.b16 %v1441, %v1440
      %1458 = vrot.lane.b32.xlu0 %v1442, 18
      %v1459 = vpop.permute.xlu0 %1458
      %1460 = vrot.lane.b32.xlu0 %v1443, 18
      %v1461 = vpop.permute.xlu0 %1460
      %1462 = vrot.lane.b32.xlu0 %v1444, 18
      %v1463 = vpop.permute.xlu0 %1462
      %1464 = vrot.lane.b32.xlu0 %v1445, 18
      %v1465 = vpop.permute.xlu0 %1464
      %1466 = vrot.lane.b32.xlu0 %v1446, 18
      %v1467 = vpop.permute.xlu0 %1466
      %1468 = vrot.lane.b32.xlu0 %v1447, 18
      %v1469 = vpop.permute.xlu0 %1468
      %1470 = vrot.lane.b32.xlu0 %v1448, 18
      %v1471 = vpop.permute.xlu0 %1470
      %1472 = vrot.lane.b32.xlu0 %v1449, 18
      %v1473 = vpop.permute.xlu0 %1472
      %1474 = vrot.lane.b32.xlu0 %v1450, 18
      %v1475 = vpop.permute.xlu0 %1474
      %1476 = vrot.lane.b32.xlu0 %v1451, 18
      %v1477 = vpop.permute.xlu0 %1476
      %1478 = vrot.lane.b32.xlu0 %v1452, 18
      %v1479 = vpop.permute.xlu0 %1478
      %1480 = vrot.lane.b32.xlu0 %v1453, 18
      %v1481 = vpop.permute.xlu0 %1480
      %1482 = vrot.lane.b32.xlu0 %v1454, 18
      %v1483 = vpop.permute.xlu0 %1482
      %1484 = vrot.lane.b32.xlu0 %v1455, 18
      %v1485 = vpop.permute.xlu0 %1484
      %1486 = vrot.lane.b32.xlu0 %v1456, 18
      %v1487 = vpop.permute.xlu0 %1486
      %1488 = vrot.lane.b32.xlu0 %v1457, 18
      %v1489 = vpop.permute.xlu0 %1488
      %v1522 = vunpack.c.l.b16 %v369
      %v1523 = vunpack.c.l.b16 %v370
      %v1524 = vunpack.c.l.b16 %v371
      %v1525 = vunpack.c.l.b16 %v372
      %v1526 = vunpack.c.l.b16 %v373
      %v1527 = vunpack.c.l.b16 %v374
      %v1528 = vunpack.c.l.b16 %v375
      %v1529 = vunpack.c.l.b16 %v376
      %v1530 = vunpack.c.l.b16 %v377
      %v1531 = vunpack.c.l.b16 %v378
      %v1532 = vunpack.c.l.b16 %v379
      %v1533 = vunpack.c.l.b16 %v380
      %v1534 = vunpack.c.l.b16 %v381
      %v1535 = vunpack.c.l.b16 %v382
      %v1536 = vunpack.c.l.b16 %v383
      %v1537 = vunpack.c.l.b16 %v384
      %v1538 = vunpack.c.l.b16 %v385
      %v1539 = vunpack.c.l.b16 %v386
      %v1540 = vunpack.c.l.b16 %v387
      %v1541 = vunpack.c.l.b16 %v388
      %v1542 = vunpack.c.l.b16 %v389
      %v1543 = vunpack.c.l.b16 %v390
      %v1544 = vunpack.c.l.b16 %v391
      %v1545 = vunpack.c.l.b16 %v392
      %v1546 = vunpack.c.l.b16 %v393
      %v1547 = vunpack.c.l.b16 %v394
      %v1548 = vunpack.c.l.b16 %v395
      %v1549 = vunpack.c.l.b16 %v396
      %v1550 = vunpack.c.l.b16 %v397
      %v1551 = vunpack.c.l.b16 %v398
      %v1552 = vunpack.c.l.b16 %v399
      %v1553 = vunpack.c.l.b16 %v400
      %v1554 = vpack.c.b16 %v1523, %v1522
      %v1555 = vpack.c.b16 %v1525, %v1524
      %v1556 = vpack.c.b16 %v1527, %v1526
      %v1557 = vpack.c.b16 %v1529, %v1528
      %v1558 = vpack.c.b16 %v1531, %v1530
      %v1559 = vpack.c.b16 %v1533, %v1532
      %v1560 = vpack.c.b16 %v1535, %v1534
      %v1561 = vpack.c.b16 %v1537, %v1536
      %v1562 = vpack.c.b16 %v1539, %v1538
      %v1563 = vpack.c.b16 %v1541, %v1540
      %v1564 = vpack.c.b16 %v1543, %v1542
      %v1565 = vpack.c.b16 %v1545, %v1544
      %v1566 = vpack.c.b16 %v1547, %v1546
      %v1567 = vpack.c.b16 %v1549, %v1548
      %v1568 = vpack.c.b16 %v1551, %v1550
      %v1569 = vpack.c.b16 %v1553, %v1552
      %1570 = vrot.lane.b32.xlu0 %v1554, 21
      %v1571 = vpop.permute.xlu0 %1570
      %1572 = vrot.lane.b32.xlu0 %v1555, 21
      %v1573 = vpop.permute.xlu0 %1572
      %1574 = vrot.lane.b32.xlu0 %v1556, 21
      %v1575 = vpop.permute.xlu0 %1574
      %1576 = vrot.lane.b32.xlu0 %v1557, 21
      %v1577 = vpop.permute.xlu0 %1576
      %1578 = vrot.lane.b32.xlu0 %v1558, 21
      %v1579 = vpop.permute.xlu0 %1578
      %1580 = vrot.lane.b32.xlu0 %v1559, 21
      %v1581 = vpop.permute.xlu0 %1580
      %1582 = vrot.lane.b32.xlu0 %v1560, 21
      %v1583 = vpop.permute.xlu0 %1582
      %1584 = vrot.lane.b32.xlu0 %v1561, 21
      %v1585 = vpop.permute.xlu0 %1584
      %1586 = vrot.lane.b32.xlu0 %v1562, 21
      %v1587 = vpop.permute.xlu0 %1586
      %1588 = vrot.lane.b32.xlu0 %v1563, 21
      %v1589 = vpop.permute.xlu0 %1588
      %1590 = vrot.lane.b32.xlu0 %v1564, 21
      %v1591 = vpop.permute.xlu0 %1590
      %1592 = vrot.lane.b32.xlu0 %v1565, 21
      %v1593 = vpop.permute.xlu0 %1592
      %1594 = vrot.lane.b32.xlu0 %v1566, 21
      %v1595 = vpop.permute.xlu0 %1594
      %1596 = vrot.lane.b32.xlu0 %v1567, 21
      %v1597 = vpop.permute.xlu0 %1596
      %1598 = vrot.lane.b32.xlu0 %v1568, 21
      %v1599 = vpop.permute.xlu0 %1598
      %1600 = vrot.lane.b32.xlu0 %v1569, 21
      %v1601 = vpop.permute.xlu0 %1600
      %v1618 = vunpack.c.l.b16 %v401
      %v1619 = vunpack.c.l.b16 %v402
      %v1620 = vunpack.c.l.b16 %v403
      %v1621 = vunpack.c.l.b16 %v404
      %v1622 = vunpack.c.l.b16 %v405
      %v1623 = vunpack.c.l.b16 %v406
      %v1624 = vunpack.c.l.b16 %v407
      %v1625 = vunpack.c.l.b16 %v408
      %v1626 = vunpack.c.l.b16 %v409
      %v1627 = vunpack.c.l.b16 %v410
      %v1628 = vunpack.c.l.b16 %v411
      %v1629 = vunpack.c.l.b16 %v412
      %v1630 = vunpack.c.l.b16 %v413
      %v1631 = vunpack.c.l.b16 %v414
      %v1632 = vunpack.c.l.b16 %v415
      %v1633 = vunpack.c.l.b16 %v416
      %v1634 = vpack.c.b16 %v1618, %v1618
      %v1635 = vpack.c.b16 %v1619, %v1619
      %v1636 = vpack.c.b16 %v1620, %v1620
      %v1637 = vpack.c.b16 %v1621, %v1621
      %v1638 = vpack.c.b16 %v1622, %v1622
      %v1639 = vpack.c.b16 %v1623, %v1623
      %v1640 = vpack.c.b16 %v1624, %v1624
      %v1641 = vpack.c.b16 %v1625, %v1625
      %v1642 = vpack.c.b16 %v1626, %v1626
      %v1643 = vpack.c.b16 %v1627, %v1627
      %v1644 = vpack.c.b16 %v1628, %v1628
      %v1645 = vpack.c.b16 %v1629, %v1629
      %v1646 = vpack.c.b16 %v1630, %v1630
      %v1647 = vpack.c.b16 %v1631, %v1631
      %v1648 = vpack.c.b16 %v1632, %v1632
      %v1649 = vpack.c.b16 %v1633, %v1633
      %v1651 = vshrl.u32 %v1442, 16
      %v1653 = vshll.u32 %v1442, 16
      %v1655 = vrot.slane %v1653, 1
      %v1656 = vor.u32 %v1651, %v1655
      %v1658 = vshll.u32 %v1634, 16
      %v1660 = vrot.slane %v1658, 1
      %v1661 = vsel %vm657, %v1656, %v1660
      %v1663 = vshrl.u32 %v1443, 16
      %v1665 = vshll.u32 %v1443, 16
      %v1667 = vrot.slane %v1665, 1
      %v1668 = vor.u32 %v1663, %v1667
      %v1670 = vshll.u32 %v1635, 16
      %v1672 = vrot.slane %v1670, 1
      %v1673 = vsel %vm657, %v1668, %v1672
      %v1675 = vshrl.u32 %v1444, 16
      %v1677 = vshll.u32 %v1444, 16
      %v1679 = vrot.slane %v1677, 1
      %v1680 = vor.u32 %v1675, %v1679
      %v1682 = vshll.u32 %v1636, 16
      %v1684 = vrot.slane %v1682, 1
      %v1685 = vsel %vm657, %v1680, %v1684
      %v1687 = vshrl.u32 %v1445, 16
      %v1689 = vshll.u32 %v1445, 16
      %v1691 = vrot.slane %v1689, 1
      %v1692 = vor.u32 %v1687, %v1691
      %v1694 = vshll.u32 %v1637, 16
      %v1696 = vrot.slane %v1694, 1
      %v1697 = vsel %vm657, %v1692, %v1696
      %v1699 = vshrl.u32 %v1446, 16
      %v1701 = vshll.u32 %v1446, 16
      %v1703 = vrot.slane %v1701, 1
      %v1704 = vor.u32 %v1699, %v1703
      %v1706 = vshll.u32 %v1638, 16
      %v1708 = vrot.slane %v1706, 1
      %v1709 = vsel %vm657, %v1704, %v1708
      %v1711 = vshrl.u32 %v1447, 16
      %v1713 = vshll.u32 %v1447, 16
      %v1715 = vrot.slane %v1713, 1
      %v1716 = vor.u32 %v1711, %v1715
      %v1718 = vshll.u32 %v1639, 16
      %v1720 = vrot.slane %v1718, 1
      %v1721 = vsel %vm657, %v1716, %v1720
      %v1723 = vshrl.u32 %v1448, 16
      %v1725 = vshll.u32 %v1448, 16
      %v1727 = vrot.slane %v1725, 1
      %v1728 = vor.u32 %v1723, %v1727
      %v1730 = vshll.u32 %v1640, 16
      %v1732 = vrot.slane %v1730, 1
      %v1733 = vsel %vm657, %v1728, %v1732
      %v1735 = vshrl.u32 %v1449, 16
      %v1737 = vshll.u32 %v1449, 16
      %v1739 = vrot.slane %v1737, 1
      %v1740 = vor.u32 %v1735, %v1739
      %v1742 = vshll.u32 %v1641, 16
      %v1744 = vrot.slane %v1742, 1
      %v1745 = vsel %vm657, %v1740, %v1744
      %v1747 = vshrl.u32 %v1450, 16
      %v1749 = vshll.u32 %v1450, 16
      %v1751 = vrot.slane %v1749, 1
      %v1752 = vor.u32 %v1747, %v1751
      %v1754 = vshll.u32 %v1642, 16
      %v1756 = vrot.slane %v1754, 1
      %v1757 = vsel %vm657, %v1752, %v1756
      %v1759 = vshrl.u32 %v1451, 16
      %v1761 = vshll.u32 %v1451, 16
      %v1763 = vrot.slane %v1761, 1
      %v1764 = vor.u32 %v1759, %v1763
      %v1766 = vshll.u32 %v1643, 16
      %v1768 = vrot.slane %v1766, 1
      %v1769 = vsel %vm657, %v1764, %v1768
      %v1771 = vshrl.u32 %v1452, 16
      %v1773 = vshll.u32 %v1452, 16
      %v1775 = vrot.slane %v1773, 1
      %v1776 = vor.u32 %v1771, %v1775
      %v1778 = vshll.u32 %v1644, 16
      %v1780 = vrot.slane %v1778, 1
      %v1781 = vsel %vm657, %v1776, %v1780
      %v1783 = vshrl.u32 %v1453, 16
      %v1785 = vshll.u32 %v1453, 16
      %v1787 = vrot.slane %v1785, 1
      %v1788 = vor.u32 %v1783, %v1787
      %v1790 = vshll.u32 %v1645, 16
      %v1792 = vrot.slane %v1790, 1
      %v1793 = vsel %vm657, %v1788, %v1792
      %v1795 = vshrl.u32 %v1454, 16
      %v1797 = vshll.u32 %v1454, 16
      %v1799 = vrot.slane %v1797, 1
      %v1800 = vor.u32 %v1795, %v1799
      %v1802 = vshll.u32 %v1646, 16
      %v1804 = vrot.slane %v1802, 1
      %v1805 = vsel %vm657, %v1800, %v1804
      %v1807 = vshrl.u32 %v1455, 16
      %v1809 = vshll.u32 %v1455, 16
      %v1811 = vrot.slane %v1809, 1
      %v1812 = vor.u32 %v1807, %v1811
      %v1814 = vshll.u32 %v1647, 16
      %v1816 = vrot.slane %v1814, 1
      %v1817 = vsel %vm657, %v1812, %v1816
      %v1819 = vshrl.u32 %v1456, 16
      %v1821 = vshll.u32 %v1456, 16
      %v1823 = vrot.slane %v1821, 1
      %v1824 = vor.u32 %v1819, %v1823
      %v1826 = vshll.u32 %v1648, 16
      %v1828 = vrot.slane %v1826, 1
      %v1829 = vsel %vm657, %v1824, %v1828
      %v1831 = vshrl.u32 %v1457, 16
      %v1833 = vshll.u32 %v1457, 16
      %v1835 = vrot.slane %v1833, 1
      %v1836 = vor.u32 %v1831, %v1835
      %v1838 = vshll.u32 %v1649, 16
      %v1840 = vrot.slane %v1838, 1
      %v1841 = vsel %vm657, %v1836, %v1840
      %1842 = vrot.lane.b32.xlu0 %v1661, 24
      %v1843 = vpop.permute.xlu0 %1842
      %1844 = vrot.lane.b32.xlu0 %v1673, 24
      %v1845 = vpop.permute.xlu0 %1844
      %1846 = vrot.lane.b32.xlu0 %v1685, 24
      %v1847 = vpop.permute.xlu0 %1846
      %1848 = vrot.lane.b32.xlu0 %v1697, 24
      %v1849 = vpop.permute.xlu0 %1848
      %1850 = vrot.lane.b32.xlu0 %v1709, 24
      %v1851 = vpop.permute.xlu0 %1850
      %1852 = vrot.lane.b32.xlu0 %v1721, 24
      %v1853 = vpop.permute.xlu0 %1852
      %1854 = vrot.lane.b32.xlu0 %v1733, 24
      %v1855 = vpop.permute.xlu0 %1854
      %1856 = vrot.lane.b32.xlu0 %v1745, 24
      %v1857 = vpop.permute.xlu0 %1856
      %1858 = vrot.lane.b32.xlu0 %v1757, 24
      %v1859 = vpop.permute.xlu0 %1858
      %1860 = vrot.lane.b32.xlu0 %v1769, 24
      %v1861 = vpop.permute.xlu0 %1860
      %1862 = vrot.lane.b32.xlu0 %v1781, 24
      %v1863 = vpop.permute.xlu0 %1862
      %1864 = vrot.lane.b32.xlu0 %v1793, 24
      %v1865 = vpop.permute.xlu0 %1864
      %1866 = vrot.lane.b32.xlu0 %v1805, 24
      %v1867 = vpop.permute.xlu0 %1866
      %1868 = vrot.lane.b32.xlu0 %v1817, 24
      %v1869 = vpop.permute.xlu0 %1868
      %1870 = vrot.lane.b32.xlu0 %v1829, 24
      %v1871 = vpop.permute.xlu0 %1870
      %1872 = vrot.lane.b32.xlu0 %v1841, 24
      %v1873 = vpop.permute.xlu0 %1872
      %vm1874 = vcmask 23552
      %v1876 = vsel %vm1874, %v481, %v578
      %v1878 = vsel %vm1874, %v482, %v580
      %v1880 = vsel %vm1874, %v483, %v582
      %v1882 = vsel %vm1874, %v484, %v584
      %v1884 = vsel %vm1874, %v485, %v586
      %v1886 = vsel %vm1874, %v486, %v588
      %v1888 = vsel %vm1874, %v487, %v590
      %v1890 = vsel %vm1874, %v488, %v592
      %v1892 = vsel %vm1874, %v489, %v594
      %v1894 = vsel %vm1874, %v490, %v596
      %v1896 = vsel %vm1874, %v491, %v598
      %v1898 = vsel %vm1874, %v492, %v600
      %v1900 = vsel %vm1874, %v493, %v602
      %v1902 = vsel %vm1874, %v494, %v604
      %v1904 = vsel %vm1874, %v495, %v606
      %v1906 = vsel %vm1874, %v496, %v608
      %vm1907 = vcmask 48128
      %v1909 = vsel %vm1907, %v1876, %v851
      %v1911 = vsel %vm1907, %v1878, %v853
      %v1913 = vsel %vm1907, %v1880, %v855
      %v1915 = vsel %vm1907, %v1882, %v857
      %v1917 = vsel %vm1907, %v1884, %v859
      %v1919 = vsel %vm1907, %v1886, %v861
      %v1921 = vsel %vm1907, %v1888, %v863
      %v1923 = vsel %vm1907, %v1890, %v865
      %v1925 = vsel %vm1907, %v1892, %v867
      %v1927 = vsel %vm1907, %v1894, %v869
      %v1929 = vsel %vm1907, %v1896, %v871
      %v1931 = vsel %vm1907, %v1898, %v873
      %v1933 = vsel %vm1907, %v1900, %v875
      %v1935 = vsel %vm1907, %v1902, %v877
      %v1937 = vsel %vm1907, %v1904, %v879
      %v1939 = vsel %vm1907, %v1906, %v881
      %vm1940 = vcmask 72704
      %v1942 = vsel %vm1940, %v1909, %v963
      %v1944 = vsel %vm1940, %v1911, %v965
      %v1946 = vsel %vm1940, %v1913, %v967
      %v1948 = vsel %vm1940, %v1915, %v969
      %v1950 = vsel %vm1940, %v1917, %v971
      %v1952 = vsel %vm1940, %v1919, %v973
      %v1954 = vsel %vm1940, %v1921, %v975
      %v1956 = vsel %vm1940, %v1923, %v977
      %v1958 = vsel %vm1940, %v1925, %v979
      %v1960 = vsel %vm1940, %v1927, %v981
      %v1962 = vsel %vm1940, %v1929, %v983
      %v1964 = vsel %vm1940, %v1931, %v985
      %v1966 = vsel %vm1940, %v1933, %v987
      %v1968 = vsel %vm1940, %v1935, %v989
      %v1970 = vsel %vm1940, %v1937, %v991
      %v1972 = vsel %vm1940, %v1939, %v993
      %vm1973 = vcmask 97280
      %v1975 = vsel %vm1973, %v1942, %v1075
      %v1977 = vsel %vm1973, %v1944, %v1077
      %v1979 = vsel %vm1973, %v1946, %v1079
      %v1981 = vsel %vm1973, %v1948, %v1081
      %v1983 = vsel %vm1973, %v1950, %v1083
      %v1985 = vsel %vm1973, %v1952, %v1085
      %v1987 = vsel %vm1973, %v1954, %v1087
      %v1989 = vsel %vm1973, %v1956, %v1089
      %v1991 = vsel %vm1973, %v1958, %v1091
      %v1993 = vsel %vm1973, %v1960, %v1093
      %v1995 = vsel %vm1973, %v1962, %v1095
      %v1997 = vsel %vm1973, %v1964, %v1097
      %v1999 = vsel %vm1973, %v1966, %v1099
      %v2001 = vsel %vm1973, %v1968, %v1101
      %v2003 = vsel %vm1973, %v1970, %v1103
      %v2005 = vsel %vm1973, %v1972, %v1105
      %vm2006 = vcmask 121856
      %v2008 = vsel %vm2006, %v1975, %v1347
      %v2010 = vsel %vm2006, %v1977, %v1349
      %v2012 = vsel %vm2006, %v1979, %v1351
      %v2014 = vsel %vm2006, %v1981, %v1353
      %v2016 = vsel %vm2006, %v1983, %v1355
      %v2018 = vsel %vm2006, %v1985, %v1357
      %v2020 = vsel %vm2006, %v1987, %v1359
      %v2022 = vsel %vm2006, %v1989, %v1361
      %v2024 = vsel %vm2006, %v1991, %v1363
      %v2026 = vsel %vm2006, %v1993, %v1365
      %v2028 = vsel %vm2006, %v1995, %v1367
      %v2030 = vsel %vm2006, %v1997, %v1369
      %v2032 = vsel %vm2006, %v1999, %v1371
      %v2034 = vsel %vm2006, %v2001, %v1373
      %v2036 = vsel %vm2006, %v2003, %v1375
      %v2038 = vsel %vm2006, %v2005, %v1377
      %vm2039 = vcmask 146432
      %v2041 = vsel %vm2039, %v2008, %v1459
      %v2043 = vsel %vm2039, %v2010, %v1461
      %v2045 = vsel %vm2039, %v2012, %v1463
      %v2047 = vsel %vm2039, %v2014, %v1465
      %v2049 = vsel %vm2039, %v2016, %v1467
      %v2051 = vsel %vm2039, %v2018, %v1469
      %v2053 = vsel %vm2039, %v2020, %v1471
      %v2055 = vsel %vm2039, %v2022, %v1473
      %v2057 = vsel %vm2039, %v2024, %v1475
      %v2059 = vsel %vm2039, %v2026, %v1477
      %v2061 = vsel %vm2039, %v2028, %v1479
      %v2063 = vsel %vm2039, %v2030, %v1481
      %v2065 = vsel %vm2039, %v2032, %v1483
      %v2067 = vsel %vm2039, %v2034, %v1485
      %v2069 = vsel %vm2039, %v2036, %v1487
      %v2071 = vsel %vm2039, %v2038, %v1489
      %vm2072 = vcmask 171008
      %v2074 = vsel %vm2072, %v2041, %v1571
      %v2076 = vsel %vm2072, %v2043, %v1573
      %v2078 = vsel %vm2072, %v2045, %v1575
      %v2080 = vsel %vm2072, %v2047, %v1577
      %v2082 = vsel %vm2072, %v2049, %v1579
      %v2084 = vsel %vm2072, %v2051, %v1581
      %v2086 = vsel %vm2072, %v2053, %v1583
      %v2088 = vsel %vm2072, %v2055, %v1585
      %v2090 = vsel %vm2072, %v2057, %v1587
      %v2092 = vsel %vm2072, %v2059, %v1589
      %v2094 = vsel %vm2072, %v2061, %v1591
      %v2096 = vsel %vm2072, %v2063, %v1593
      %v2098 = vsel %vm2072, %v2065, %v1595
      %v2100 = vsel %vm2072, %v2067, %v1597
      %v2102 = vsel %vm2072, %v2069, %v1599
      %v2104 = vsel %vm2072, %v2071, %v1601
      %vm2105 = vcmask 195584
      %v2107 = vsel %vm2105, %v2074, %v1843
      %v2109 = vsel %vm2105, %v2076, %v1845
      %v2111 = vsel %vm2105, %v2078, %v1847
      %v2113 = vsel %vm2105, %v2080, %v1849
      %v2115 = vsel %vm2105, %v2082, %v1851
      %v2117 = vsel %vm2105, %v2084, %v1853
      %v2119 = vsel %vm2105, %v2086, %v1855
      %v2121 = vsel %vm2105, %v2088, %v1857
      %v2123 = vsel %vm2105, %v2090, %v1859
      %v2125 = vsel %vm2105, %v2092, %v1861
      %v2127 = vsel %vm2105, %v2094, %v1863
      %v2129 = vsel %vm2105, %v2096, %v1865
      %v2131 = vsel %vm2105, %v2098, %v1867
      %v2133 = vsel %vm2105, %v2100, %v1869
      %v2135 = vsel %vm2105, %v2102, %v1871
      %v2137 = vsel %vm2105, %v2104, %v1873
      %v2138 = vld [vmem:[%s204 + $0x8] sm:$0x1]
      %v2139 = vld [vmem:[%s204 + $0x14] sm:$0x1]
      %v2140 = vld [vmem:[%s204 + $0x20] sm:$0x1]
      %v2141 = vld [vmem:[%s204 + $0x2c] sm:$0x1]
      %v2142 = vld [vmem:[%s204 + $0x38] sm:$0x1]
      %v2143 = vld [vmem:[%s204 + $0x44] sm:$0x1]
      %v2144 = vld [vmem:[%s204 + $0x50] sm:$0x1]
      %v2145 = vld [vmem:[%s204 + $0x5c] sm:$0x1]
      %v2146 = vld [vmem:[%s204 + $0x68] sm:$0x1]
      %v2147 = vld [vmem:[%s204 + $0x74] sm:$0x1]
      %v2148 = vld [vmem:[%s204 + $0x80] sm:$0x1]
      %v2149 = vld [vmem:[%s204 + $0x8c] sm:$0x1]
      %v2150 = vld [vmem:[%s204 + $0x98] sm:$0x1]
      %v2151 = vld [vmem:[%s204 + $0xa4] sm:$0x1]
      %v2152 = vld [vmem:[%s204 + $0xb0] sm:$0x1]
      %v2153 = vld [vmem:[%s204 + $0xbc] sm:$0x1]
      %v2154 = vld [vmem:[%s286 + $0x8] sm:$0x1]
      %v2155 = vld [vmem:[%s286 + $0x14] sm:$0x1]
      %v2156 = vld [vmem:[%s286 + $0x20] sm:$0x1]
      %v2157 = vld [vmem:[%s286 + $0x2c] sm:$0x1]
      %v2158 = vld [vmem:[%s286 + $0x38] sm:$0x1]
      %v2159 = vld [vmem:[%s286 + $0x44] sm:$0x1]
      %v2160 = vld [vmem:[%s286 + $0x50] sm:$0x1]
      %v2161 = vld [vmem:[%s286 + $0x5c] sm:$0x1]
      %v2162 = vld [vmem:[%s286 + $0x68] sm:$0x1]
      %v2163 = vld [vmem:[%s286 + $0x74] sm:$0x1]
      %v2164 = vld [vmem:[%s286 + $0x80] sm:$0x1]
      %v2165 = vld [vmem:[%s286 + $0x8c] sm:$0x1]
      %v2166 = vld [vmem:[%s286 + $0x98] sm:$0x1]
      %v2167 = vld [vmem:[%s286 + $0xa4] sm:$0x1]
      %v2168 = vld [vmem:[%s286 + $0xb0] sm:$0x1]
      %v2169 = vld [vmem:[%s286 + $0xbc] sm:$0x1]
      %v2170 = vld [vmem:[%s368 + $0x8] sm:$0x1]
      %v2171 = vld [vmem:[%s368 + $0x14] sm:$0x1]
      %v2172 = vld [vmem:[%s368 + $0x20] sm:$0x1]
      %v2173 = vld [vmem:[%s368 + $0x2c] sm:$0x1]
      %v2174 = vld [vmem:[%s368 + $0x38] sm:$0x1]
      %v2175 = vld [vmem:[%s368 + $0x44] sm:$0x1]
      %v2176 = vld [vmem:[%s368 + $0x50] sm:$0x1]
      %v2177 = vld [vmem:[%s368 + $0x5c] sm:$0x1]
      %v2178 = vld [vmem:[%s368 + $0x68] sm:$0x1]
      %v2179 = vld [vmem:[%s368 + $0x74] sm:$0x1]
      %v2180 = vld [vmem:[%s368 + $0x80] sm:$0x1]
      %v2181 = vld [vmem:[%s368 + $0x8c] sm:$0x1]
      %v2182 = vld [vmem:[%s368 + $0x98] sm:$0x1]
      %v2183 = vld [vmem:[%s368 + $0xa4] sm:$0x1]
      %v2184 = vld [vmem:[%s368 + $0xb0] sm:$0x1]
      %v2185 = vld [vmem:[%s368 + $0xbc] sm:$0x1]
      %2186 = vrot.lane.b32.xlu0 %v669, 3
      %v2187 = vpop.permute.xlu0 %2186
      %2188 = vrot.lane.b32.xlu0 %v681, 3
      %v2189 = vpop.permute.xlu0 %2188
      %2190 = vrot.lane.b32.xlu0 %v693, 3
      %v2191 = vpop.permute.xlu0 %2190
      %2192 = vrot.lane.b32.xlu0 %v705, 3
      %v2193 = vpop.permute.xlu0 %2192
      %2194 = vrot.lane.b32.xlu0 %v717, 3
      %v2195 = vpop.permute.xlu0 %2194
      %2196 = vrot.lane.b32.xlu0 %v729, 3
      %v2197 = vpop.permute.xlu0 %2196
      %2198 = vrot.lane.b32.xlu0 %v741, 3
      %v2199 = vpop.permute.xlu0 %2198
      %2200 = vrot.lane.b32.xlu0 %v753, 3
      %v2201 = vpop.permute.xlu0 %2200
      %2202 = vrot.lane.b32.xlu0 %v765, 3
      %v2203 = vpop.permute.xlu0 %2202
      %2204 = vrot.lane.b32.xlu0 %v777, 3
      %v2205 = vpop.permute.xlu0 %2204
      %2206 = vrot.lane.b32.xlu0 %v789, 3
      %v2207 = vpop.permute.xlu0 %2206
      %2208 = vrot.lane.b32.xlu0 %v801, 3
      %v2209 = vpop.permute.xlu0 %2208
      %2210 = vrot.lane.b32.xlu0 %v813, 3
      %v2211 = vpop.permute.xlu0 %2210
      %2212 = vrot.lane.b32.xlu0 %v825, 3
      %v2213 = vpop.permute.xlu0 %2212
      %2214 = vrot.lane.b32.xlu0 %v837, 3
      %v2215 = vpop.permute.xlu0 %2214
      %2216 = vrot.lane.b32.xlu0 %v849, 3
      %v2217 = vpop.permute.xlu0 %2216
      %v2234 = vunpack.c.l.b16 %v2138
      %v2235 = vunpack.c.l.b16 %v2139
      %v2236 = vunpack.c.l.b16 %v2140
      %v2237 = vunpack.c.l.b16 %v2141
      %v2238 = vunpack.c.l.b16 %v2142
      %v2239 = vunpack.c.l.b16 %v2143
      %v2240 = vunpack.c.l.b16 %v2144
      %v2241 = vunpack.c.l.b16 %v2145
      %v2242 = vunpack.c.l.b16 %v2146
      %v2243 = vunpack.c.l.b16 %v2147
      %v2244 = vunpack.c.l.b16 %v2148
      %v2245 = vunpack.c.l.b16 %v2149
      %v2246 = vunpack.c.l.b16 %v2150
      %v2247 = vunpack.c.l.b16 %v2151
      %v2248 = vunpack.c.l.b16 %v2152
      %v2249 = vunpack.c.l.b16 %v2153
      %v2250 = vpack.c.b16 %v2234, %v2234
      %v2251 = vpack.c.b16 %v2235, %v2235
      %v2252 = vpack.c.b16 %v2236, %v2236
      %v2253 = vpack.c.b16 %v2237, %v2237
      %v2254 = vpack.c.b16 %v2238, %v2238
      %v2255 = vpack.c.b16 %v2239, %v2239
      %v2256 = vpack.c.b16 %v2240, %v2240
      %v2257 = vpack.c.b16 %v2241, %v2241
      %v2258 = vpack.c.b16 %v2242, %v2242
      %v2259 = vpack.c.b16 %v2243, %v2243
      %v2260 = vpack.c.b16 %v2244, %v2244
      %v2261 = vpack.c.b16 %v2245, %v2245
      %v2262 = vpack.c.b16 %v2246, %v2246
      %v2263 = vpack.c.b16 %v2247, %v2247
      %v2264 = vpack.c.b16 %v2248, %v2248
      %v2265 = vpack.c.b16 %v2249, %v2249
      %v2267 = vshrl.u32 %v561, 16
      %v2269 = vshll.u32 %v561, 16
      %v2271 = vrot.slane %v2269, 1
      %v2272 = vor.u32 %v2267, %v2271
      %v2274 = vshll.u32 %v2250, 16
      %v2276 = vrot.slane %v2274, 1
      %v2277 = vsel %vm657, %v2272, %v2276
      %v2279 = vshrl.u32 %v562, 16
      %v2281 = vshll.u32 %v562, 16
      %v2283 = vrot.slane %v2281, 1
      %v2284 = vor.u32 %v2279, %v2283
      %v2286 = vshll.u32 %v2251, 16
      %v2288 = vrot.slane %v2286, 1
      %v2289 = vsel %vm657, %v2284, %v2288
      %v2291 = vshrl.u32 %v563, 16
      %v2293 = vshll.u32 %v563, 16
      %v2295 = vrot.slane %v2293, 1
      %v2296 = vor.u32 %v2291, %v2295
      %v2298 = vshll.u32 %v2252, 16
      %v2300 = vrot.slane %v2298, 1
      %v2301 = vsel %vm657, %v2296, %v2300
      %v2303 = vshrl.u32 %v564, 16
      %v2305 = vshll.u32 %v564, 16
      %v2307 = vrot.slane %v2305, 1
      %v2308 = vor.u32 %v2303, %v2307
      %v2310 = vshll.u32 %v2253, 16
      %v2312 = vrot.slane %v2310, 1
      %v2313 = vsel %vm657, %v2308, %v2312
      %v2315 = vshrl.u32 %v565, 16
      %v2317 = vshll.u32 %v565, 16
      %v2319 = vrot.slane %v2317, 1
      %v2320 = vor.u32 %v2315, %v2319
      %v2322 = vshll.u32 %v2254, 16
      %v2324 = vrot.slane %v2322, 1
      %v2325 = vsel %vm657, %v2320, %v2324
      %v2327 = vshrl.u32 %v566, 16
      %v2329 = vshll.u32 %v566, 16
      %v2331 = vrot.slane %v2329, 1
      %v2332 = vor.u32 %v2327, %v2331
      %v2334 = vshll.u32 %v2255, 16
      %v2336 = vrot.slane %v2334, 1
      %v2337 = vsel %vm657, %v2332, %v2336
      %v2339 = vshrl.u32 %v567, 16
      %v2341 = vshll.u32 %v567, 16
      %v2343 = vrot.slane %v2341, 1
      %v2344 = vor.u32 %v2339, %v2343
      %v2346 = vshll.u32 %v2256, 16
      %v2348 = vrot.slane %v2346, 1
      %v2349 = vsel %vm657, %v2344, %v2348
      %v2351 = vshrl.u32 %v568, 16
      %v2353 = vshll.u32 %v568, 16
      %v2355 = vrot.slane %v2353, 1
      %v2356 = vor.u32 %v2351, %v2355
      %v2358 = vshll.u32 %v2257, 16
      %v2360 = vrot.slane %v2358, 1
      %v2361 = vsel %vm657, %v2356, %v2360
      %v2363 = vshrl.u32 %v569, 16
      %v2365 = vshll.u32 %v569, 16
      %v2367 = vrot.slane %v2365, 1
      %v2368 = vor.u32 %v2363, %v2367
      %v2370 = vshll.u32 %v2258, 16
      %v2372 = vrot.slane %v2370, 1
      %v2373 = vsel %vm657, %v2368, %v2372
      %v2375 = vshrl.u32 %v570, 16
      %v2377 = vshll.u32 %v570, 16
      %v2379 = vrot.slane %v2377, 1
      %v2380 = vor.u32 %v2375, %v2379
      %v2382 = vshll.u32 %v2259, 16
      %v2384 = vrot.slane %v2382, 1
      %v2385 = vsel %vm657, %v2380, %v2384
      %v2387 = vshrl.u32 %v571, 16
      %v2389 = vshll.u32 %v571, 16
      %v2391 = vrot.slane %v2389, 1
      %v2392 = vor.u32 %v2387, %v2391
      %v2394 = vshll.u32 %v2260, 16
      %v2396 = vrot.slane %v2394, 1
      %v2397 = vsel %vm657, %v2392, %v2396
      %v2399 = vshrl.u32 %v572, 16
      %v2401 = vshll.u32 %v572, 16
      %v2403 = vrot.slane %v2401, 1
      %v2404 = vor.u32 %v2399, %v2403
      %v2406 = vshll.u32 %v2261, 16
      %v2408 = vrot.slane %v2406, 1
      %v2409 = vsel %vm657, %v2404, %v2408
      %v2411 = vshrl.u32 %v573, 16
      %v2413 = vshll.u32 %v573, 16
      %v2415 = vrot.slane %v2413, 1
      %v2416 = vor.u32 %v2411, %v2415
      %v2418 = vshll.u32 %v2262, 16
      %v2420 = vrot.slane %v2418, 1
      %v2421 = vsel %vm657, %v2416, %v2420
      %v2423 = vshrl.u32 %v574, 16
      %v2425 = vshll.u32 %v574, 16
      %v2427 = vrot.slane %v2425, 1
      %v2428 = vor.u32 %v2423, %v2427
      %v2430 = vshll.u32 %v2263, 16
      %v2432 = vrot.slane %v2430, 1
      %v2433 = vsel %vm657, %v2428, %v2432
      %v2435 = vshrl.u32 %v575, 16
      %v2437 = vshll.u32 %v575, 16
      %v2439 = vrot.slane %v2437, 1
      %v2440 = vor.u32 %v2435, %v2439
      %v2442 = vshll.u32 %v2264, 16
      %v2444 = vrot.slane %v2442, 1
      %v2445 = vsel %vm657, %v2440, %v2444
      %v2447 = vshrl.u32 %v576, 16
      %v2449 = vshll.u32 %v576, 16
      %v2451 = vrot.slane %v2449, 1
      %v2452 = vor.u32 %v2447, %v2451
      %v2454 = vshll.u32 %v2265, 16
      %v2456 = vrot.slane %v2454, 1
      %v2457 = vsel %vm657, %v2452, %v2456
      %2458 = vrot.lane.b32.xlu0 %v2277, 6
      %v2459 = vpop.permute.xlu0 %2458
      %2460 = vrot.lane.b32.xlu0 %v2289, 6
      %v2461 = vpop.permute.xlu0 %2460
      %2462 = vrot.lane.b32.xlu0 %v2301, 6
      %v2463 = vpop.permute.xlu0 %2462
      %2464 = vrot.lane.b32.xlu0 %v2313, 6
      %v2465 = vpop.permute.xlu0 %2464
      %2466 = vrot.lane.b32.xlu0 %v2325, 6
      %v2467 = vpop.permute.xlu0 %2466
      %2468 = vrot.lane.b32.xlu0 %v2337, 6
      %v2469 = vpop.permute.xlu0 %2468
      %2470 = vrot.lane.b32.xlu0 %v2349, 6
      %v2471 = vpop.permute.xlu0 %2470
      %2472 = vrot.lane.b32.xlu0 %v2361, 6
      %v2473 = vpop.permute.xlu0 %2472
      %2474 = vrot.lane.b32.xlu0 %v2373, 6
      %v2475 = vpop.permute.xlu0 %2474
      %2476 = vrot.lane.b32.xlu0 %v2385, 6
      %v2477 = vpop.permute.xlu0 %2476
      %2478 = vrot.lane.b32.xlu0 %v2397, 6
      %v2479 = vpop.permute.xlu0 %2478
      %2480 = vrot.lane.b32.xlu0 %v2409, 6
      %v2481 = vpop.permute.xlu0 %2480
      %2482 = vrot.lane.b32.xlu0 %v2421, 6
      %v2483 = vpop.permute.xlu0 %2482
      %2484 = vrot.lane.b32.xlu0 %v2433, 6
      %v2485 = vpop.permute.xlu0 %2484
      %2486 = vrot.lane.b32.xlu0 %v2445, 6
      %v2487 = vpop.permute.xlu0 %2486
      %2488 = vrot.lane.b32.xlu0 %v2457, 6
      %v2489 = vpop.permute.xlu0 %2488
      %2490 = vrot.lane.b32.xlu0 %v1058, 9
      %v2491 = vpop.permute.xlu0 %2490
      %2492 = vrot.lane.b32.xlu0 %v1059, 9
      %v2493 = vpop.permute.xlu0 %2492
      %2494 = vrot.lane.b32.xlu0 %v1060, 9
      %v2495 = vpop.permute.xlu0 %2494
      %2496 = vrot.lane.b32.xlu0 %v1061, 9
      %v2497 = vpop.permute.xlu0 %2496
      %2498 = vrot.lane.b32.xlu0 %v1062, 9
      %v2499 = vpop.permute.xlu0 %2498
      %2500 = vrot.lane.b32.xlu0 %v1063, 9
      %v2501 = vpop.permute.xlu0 %2500
      %2502 = vrot.lane.b32.xlu0 %v1064, 9
      %v2503 = vpop.permute.xlu0 %2502
      %2504 = vrot.lane.b32.xlu0 %v1065, 9
      %v2505 = vpop.permute.xlu0 %2504
      %2506 = vrot.lane.b32.xlu0 %v1066, 9
      %v2507 = vpop.permute.xlu0 %2506
      %2508 = vrot.lane.b32.xlu0 %v1067, 9
      %v2509 = vpop.permute.xlu0 %2508
      %2510 = vrot.lane.b32.xlu0 %v1068, 9
      %v2511 = vpop.permute.xlu0 %2510
      %2512 = vrot.lane.b32.xlu0 %v1069, 9
      %v2513 = vpop.permute.xlu0 %2512
      %2514 = vrot.lane.b32.xlu0 %v1070, 9
      %v2515 = vpop.permute.xlu0 %2514
      %2516 = vrot.lane.b32.xlu0 %v1071, 9
      %v2517 = vpop.permute.xlu0 %2516
      %2518 = vrot.lane.b32.xlu0 %v1072, 9
      %v2519 = vpop.permute.xlu0 %2518
      %2520 = vrot.lane.b32.xlu0 %v1073, 9
      %v2521 = vpop.permute.xlu0 %2520
      %2522 = vrot.lane.b32.xlu0 %v1165, 12
      %v2523 = vpop.permute.xlu0 %2522
      %2524 = vrot.lane.b32.xlu0 %v1177, 12
      %v2525 = vpop.permute.xlu0 %2524
      %2526 = vrot.lane.b32.xlu0 %v1189, 12
      %v2527 = vpop.permute.xlu0 %2526
      %2528 = vrot.lane.b32.xlu0 %v1201, 12
      %v2529 = vpop.permute.xlu0 %2528
      %2530 = vrot.lane.b32.xlu0 %v1213, 12
      %v2531 = vpop.permute.xlu0 %2530
      %2532 = vrot.lane.b32.xlu0 %v1225, 12
      %v2533 = vpop.permute.xlu0 %2532
      %2534 = vrot.lane.b32.xlu0 %v1237, 12
      %v2535 = vpop.permute.xlu0 %2534
      %2536 = vrot.lane.b32.xlu0 %v1249, 12
      %v2537 = vpop.permute.xlu0 %2536
      %2538 = vrot.lane.b32.xlu0 %v1261, 12
      %v2539 = vpop.permute.xlu0 %2538
      %2540 = vrot.lane.b32.xlu0 %v1273, 12
      %v2541 = vpop.permute.xlu0 %2540
      %2542 = vrot.lane.b32.xlu0 %v1285, 12
      %v2543 = vpop.permute.xlu0 %2542
      %2544 = vrot.lane.b32.xlu0 %v1297, 12
      %v2545 = vpop.permute.xlu0 %2544
      %2546 = vrot.lane.b32.xlu0 %v1309, 12
      %v2547 = vpop.permute.xlu0 %2546
      %2548 = vrot.lane.b32.xlu0 %v1321, 12
      %v2549 = vpop.permute.xlu0 %2548
      %2550 = vrot.lane.b32.xlu0 %v1333, 12
      %v2551 = vpop.permute.xlu0 %2550
      %2552 = vrot.lane.b32.xlu0 %v1345, 12
      %v2553 = vpop.permute.xlu0 %2552
      %v2570 = vunpack.c.l.b16 %v2154
      %v2571 = vunpack.c.l.b16 %v2155
      %v2572 = vunpack.c.l.b16 %v2156
      %v2573 = vunpack.c.l.b16 %v2157
      %v2574 = vunpack.c.l.b16 %v2158
      %v2575 = vunpack.c.l.b16 %v2159
      %v2576 = vunpack.c.l.b16 %v2160
      %v2577 = vunpack.c.l.b16 %v2161
      %v2578 = vunpack.c.l.b16 %v2162
      %v2579 = vunpack.c.l.b16 %v2163
      %v2580 = vunpack.c.l.b16 %v2164
      %v2581 = vunpack.c.l.b16 %v2165
      %v2582 = vunpack.c.l.b16 %v2166
      %v2583 = vunpack.c.l.b16 %v2167
      %v2584 = vunpack.c.l.b16 %v2168
      %v2585 = vunpack.c.l.b16 %v2169
      %v2586 = vpack.c.b16 %v2570, %v2570
      %v2587 = vpack.c.b16 %v2571, %v2571
      %v2588 = vpack.c.b16 %v2572, %v2572
      %v2589 = vpack.c.b16 %v2573, %v2573
      %v2590 = vpack.c.b16 %v2574, %v2574
      %v2591 = vpack.c.b16 %v2575, %v2575
      %v2592 = vpack.c.b16 %v2576, %v2576
      %v2593 = vpack.c.b16 %v2577, %v2577
      %v2594 = vpack.c.b16 %v2578, %v2578
      %v2595 = vpack.c.b16 %v2579, %v2579
      %v2596 = vpack.c.b16 %v2580, %v2580
      %v2597 = vpack.c.b16 %v2581, %v2581
      %v2598 = vpack.c.b16 %v2582, %v2582
      %v2599 = vpack.c.b16 %v2583, %v2583
      %v2600 = vpack.c.b16 %v2584, %v2584
      %v2601 = vpack.c.b16 %v2585, %v2585
      %v2603 = vshrl.u32 %v1058, 16
      %v2605 = vshll.u32 %v1058, 16
      %v2607 = vrot.slane %v2605, 1
      %v2608 = vor.u32 %v2603, %v2607
      %v2610 = vshll.u32 %v2586, 16
      %v2612 = vrot.slane %v2610, 1
      %v2613 = vsel %vm657, %v2608, %v2612
      %v2615 = vshrl.u32 %v1059, 16
      %v2617 = vshll.u32 %v1059, 16
      %v2619 = vrot.slane %v2617, 1
      %v2620 = vor.u32 %v2615, %v2619
      %v2622 = vshll.u32 %v2587, 16
      %v2624 = vrot.slane %v2622, 1
      %v2625 = vsel %vm657, %v2620, %v2624
      %v2627 = vshrl.u32 %v1060, 16
      %v2629 = vshll.u32 %v1060, 16
      %v2631 = vrot.slane %v2629, 1
      %v2632 = vor.u32 %v2627, %v2631
      %v2634 = vshll.u32 %v2588, 16
      %v2636 = vrot.slane %v2634, 1
      %v2637 = vsel %vm657, %v2632, %v2636
      %v2639 = vshrl.u32 %v1061, 16
      %v2641 = vshll.u32 %v1061, 16
      %v2643 = vrot.slane %v2641, 1
      %v2644 = vor.u32 %v2639, %v2643
      %v2646 = vshll.u32 %v2589, 16
      %v2648 = vrot.slane %v2646, 1
      %v2649 = vsel %vm657, %v2644, %v2648
      %v2651 = vshrl.u32 %v1062, 16
      %v2653 = vshll.u32 %v1062, 16
      %v2655 = vrot.slane %v2653, 1
      %v2656 = vor.u32 %v2651, %v2655
      %v2658 = vshll.u32 %v2590, 16
      %v2660 = vrot.slane %v2658, 1
      %v2661 = vsel %vm657, %v2656, %v2660
      %v2663 = vshrl.u32 %v1063, 16
      %v2665 = vshll.u32 %v1063, 16
      %v2667 = vrot.slane %v2665, 1
      %v2668 = vor.u32 %v2663, %v2667
      %v2670 = vshll.u32 %v2591, 16
      %v2672 = vrot.slane %v2670, 1
      %v2673 = vsel %vm657, %v2668, %v2672
      %v2675 = vshrl.u32 %v1064, 16
      %v2677 = vshll.u32 %v1064, 16
      %v2679 = vrot.slane %v2677, 1
      %v2680 = vor.u32 %v2675, %v2679
      %v2682 = vshll.u32 %v2592, 16
      %v2684 = vrot.slane %v2682, 1
      %v2685 = vsel %vm657, %v2680, %v2684
      %v2687 = vshrl.u32 %v1065, 16
      %v2689 = vshll.u32 %v1065, 16
      %v2691 = vrot.slane %v2689, 1
      %v2692 = vor.u32 %v2687, %v2691
      %v2694 = vshll.u32 %v2593, 16
      %v2696 = vrot.slane %v2694, 1
      %v2697 = vsel %vm657, %v2692, %v2696
      %v2699 = vshrl.u32 %v1066, 16
      %v2701 = vshll.u32 %v1066, 16
      %v2703 = vrot.slane %v2701, 1
      %v2704 = vor.u32 %v2699, %v2703
      %v2706 = vshll.u32 %v2594, 16
      %v2708 = vrot.slane %v2706, 1
      %v2709 = vsel %vm657, %v2704, %v2708
      %v2711 = vshrl.u32 %v1067, 16
      %v2713 = vshll.u32 %v1067, 16
      %v2715 = vrot.slane %v2713, 1
      %v2716 = vor.u32 %v2711, %v2715
      %v2718 = vshll.u32 %v2595, 16
      %v2720 = vrot.slane %v2718, 1
      %v2721 = vsel %vm657, %v2716, %v2720
      %v2723 = vshrl.u32 %v1068, 16
      %v2725 = vshll.u32 %v1068, 16
      %v2727 = vrot.slane %v2725, 1
      %v2728 = vor.u32 %v2723, %v2727
      %v2730 = vshll.u32 %v2596, 16
      %v2732 = vrot.slane %v2730, 1
      %v2733 = vsel %vm657, %v2728, %v2732
      %v2735 = vshrl.u32 %v1069, 16
      %v2737 = vshll.u32 %v1069, 16
      %v2739 = vrot.slane %v2737, 1
      %v2740 = vor.u32 %v2735, %v2739
      %v2742 = vshll.u32 %v2597, 16
      %v2744 = vrot.slane %v2742, 1
      %v2745 = vsel %vm657, %v2740, %v2744
      %v2747 = vshrl.u32 %v1070, 16
      %v2749 = vshll.u32 %v1070, 16
      %v2751 = vrot.slane %v2749, 1
      %v2752 = vor.u32 %v2747, %v2751
      %v2754 = vshll.u32 %v2598, 16
      %v2756 = vrot.slane %v2754, 1
      %v2757 = vsel %vm657, %v2752, %v2756
      %v2759 = vshrl.u32 %v1071, 16
      %v2761 = vshll.u32 %v1071, 16
      %v2763 = vrot.slane %v2761, 1
      %v2764 = vor.u32 %v2759, %v2763
      %v2766 = vshll.u32 %v2599, 16
      %v2768 = vrot.slane %v2766, 1
      %v2769 = vsel %vm657, %v2764, %v2768
      %v2771 = vshrl.u32 %v1072, 16
      %v2773 = vshll.u32 %v1072, 16
      %v2775 = vrot.slane %v2773, 1
      %v2776 = vor.u32 %v2771, %v2775
      %v2778 = vshll.u32 %v2600, 16
      %v2780 = vrot.slane %v2778, 1
      %v2781 = vsel %vm657, %v2776, %v2780
      %v2783 = vshrl.u32 %v1073, 16
      %v2785 = vshll.u32 %v1073, 16
      %v2787 = vrot.slane %v2785, 1
      %v2788 = vor.u32 %v2783, %v2787
      %v2790 = vshll.u32 %v2601, 16
      %v2792 = vrot.slane %v2790, 1
      %v2793 = vsel %vm657, %v2788, %v2792
      %2794 = vrot.lane.b32.xlu0 %v2613, 15
      %v2795 = vpop.permute.xlu0 %2794
      %2796 = vrot.lane.b32.xlu0 %v2625, 15
      %v2797 = vpop.permute.xlu0 %2796
      %2798 = vrot.lane.b32.xlu0 %v2637, 15
      %v2799 = vpop.permute.xlu0 %2798
      %2800 = vrot.lane.b32.xlu0 %v2649, 15
      %v2801 = vpop.permute.xlu0 %2800
      %2802 = vrot.lane.b32.xlu0 %v2661, 15
      %v2803 = vpop.permute.xlu0 %2802
      %2804 = vrot.lane.b32.xlu0 %v2673, 15
      %v2805 = vpop.permute.xlu0 %2804
      %2806 = vrot.lane.b32.xlu0 %v2685, 15
      %v2807 = vpop.permute.xlu0 %2806
      %2808 = vrot.lane.b32.xlu0 %v2697, 15
      %v2809 = vpop.permute.xlu0 %2808
      %2810 = vrot.lane.b32.xlu0 %v2709, 15
      %v2811 = vpop.permute.xlu0 %2810
      %2812 = vrot.lane.b32.xlu0 %v2721, 15
      %v2813 = vpop.permute.xlu0 %2812
      %2814 = vrot.lane.b32.xlu0 %v2733, 15
      %v2815 = vpop.permute.xlu0 %2814
      %2816 = vrot.lane.b32.xlu0 %v2745, 15
      %v2817 = vpop.permute.xlu0 %2816
      %2818 = vrot.lane.b32.xlu0 %v2757, 15
      %v2819 = vpop.permute.xlu0 %2818
      %2820 = vrot.lane.b32.xlu0 %v2769, 15
      %v2821 = vpop.permute.xlu0 %2820
      %2822 = vrot.lane.b32.xlu0 %v2781, 15
      %v2823 = vpop.permute.xlu0 %2822
      %2824 = vrot.lane.b32.xlu0 %v2793, 15
      %v2825 = vpop.permute.xlu0 %2824
      %2826 = vrot.lane.b32.xlu0 %v1554, 18
      %v2827 = vpop.permute.xlu0 %2826
      %2828 = vrot.lane.b32.xlu0 %v1555, 18
      %v2829 = vpop.permute.xlu0 %2828
      %2830 = vrot.lane.b32.xlu0 %v1556, 18
      %v2831 = vpop.permute.xlu0 %2830
      %2832 = vrot.lane.b32.xlu0 %v1557, 18
      %v2833 = vpop.permute.xlu0 %2832
      %2834 = vrot.lane.b32.xlu0 %v1558, 18
      %v2835 = vpop.permute.xlu0 %2834
      %2836 = vrot.lane.b32.xlu0 %v1559, 18
      %v2837 = vpop.permute.xlu0 %2836
      %2838 = vrot.lane.b32.xlu0 %v1560, 18
      %v2839 = vpop.permute.xlu0 %2838
      %2840 = vrot.lane.b32.xlu0 %v1561, 18
      %v2841 = vpop.permute.xlu0 %2840
      %2842 = vrot.lane.b32.xlu0 %v1562, 18
      %v2843 = vpop.permute.xlu0 %2842
      %2844 = vrot.lane.b32.xlu0 %v1563, 18
      %v2845 = vpop.permute.xlu0 %2844
      %2846 = vrot.lane.b32.xlu0 %v1564, 18
      %v2847 = vpop.permute.xlu0 %2846
      %2848 = vrot.lane.b32.xlu0 %v1565, 18
      %v2849 = vpop.permute.xlu0 %2848
      %2850 = vrot.lane.b32.xlu0 %v1566, 18
      %v2851 = vpop.permute.xlu0 %2850
      %2852 = vrot.lane.b32.xlu0 %v1567, 18
      %v2853 = vpop.permute.xlu0 %2852
      %2854 = vrot.lane.b32.xlu0 %v1568, 18
      %v2855 = vpop.permute.xlu0 %2854
      %2856 = vrot.lane.b32.xlu0 %v1569, 18
      %v2857 = vpop.permute.xlu0 %2856
      %2858 = vrot.lane.b32.xlu0 %v1661, 21
      %v2859 = vpop.permute.xlu0 %2858
      %2860 = vrot.lane.b32.xlu0 %v1673, 21
      %v2861 = vpop.permute.xlu0 %2860
      %2862 = vrot.lane.b32.xlu0 %v1685, 21
      %v2863 = vpop.permute.xlu0 %2862
      %2864 = vrot.lane.b32.xlu0 %v1697, 21
      %v2865 = vpop.permute.xlu0 %2864
      %2866 = vrot.lane.b32.xlu0 %v1709, 21
      %v2867 = vpop.permute.xlu0 %2866
      %2868 = vrot.lane.b32.xlu0 %v1721, 21
      %v2869 = vpop.permute.xlu0 %2868
      %2870 = vrot.lane.b32.xlu0 %v1733, 21
      %v2871 = vpop.permute.xlu0 %2870
      %2872 = vrot.lane.b32.xlu0 %v1745, 21
      %v2873 = vpop.permute.xlu0 %2872
      %2874 = vrot.lane.b32.xlu0 %v1757, 21
      %v2875 = vpop.permute.xlu0 %2874
      %2876 = vrot.lane.b32.xlu0 %v1769, 21
      %v2877 = vpop.permute.xlu0 %2876
      %2878 = vrot.lane.b32.xlu0 %v1781, 21
      %v2879 = vpop.permute.xlu0 %2878
      %2880 = vrot.lane.b32.xlu0 %v1793, 21
      %v2881 = vpop.permute.xlu0 %2880
      %2882 = vrot.lane.b32.xlu0 %v1805, 21
      %v2883 = vpop.permute.xlu0 %2882
      %2884 = vrot.lane.b32.xlu0 %v1817, 21
      %v2885 = vpop.permute.xlu0 %2884
      %2886 = vrot.lane.b32.xlu0 %v1829, 21
      %v2887 = vpop.permute.xlu0 %2886
      %2888 = vrot.lane.b32.xlu0 %v1841, 21
      %v2889 = vpop.permute.xlu0 %2888
      %v2906 = vunpack.c.l.b16 %v2170
      %v2907 = vunpack.c.l.b16 %v2171
      %v2908 = vunpack.c.l.b16 %v2172
      %v2909 = vunpack.c.l.b16 %v2173
      %v2910 = vunpack.c.l.b16 %v2174
      %v2911 = vunpack.c.l.b16 %v2175
      %v2912 = vunpack.c.l.b16 %v2176
      %v2913 = vunpack.c.l.b16 %v2177
      %v2914 = vunpack.c.l.b16 %v2178
      %v2915 = vunpack.c.l.b16 %v2179
      %v2916 = vunpack.c.l.b16 %v2180
      %v2917 = vunpack.c.l.b16 %v2181
      %v2918 = vunpack.c.l.b16 %v2182
      %v2919 = vunpack.c.l.b16 %v2183
      %v2920 = vunpack.c.l.b16 %v2184
      %v2921 = vunpack.c.l.b16 %v2185
      %v2922 = vpack.c.b16 %v2906, %v2906
      %v2923 = vpack.c.b16 %v2907, %v2907
      %v2924 = vpack.c.b16 %v2908, %v2908
      %v2925 = vpack.c.b16 %v2909, %v2909
      %v2926 = vpack.c.b16 %v2910, %v2910
      %v2927 = vpack.c.b16 %v2911, %v2911
      %v2928 = vpack.c.b16 %v2912, %v2912
      %v2929 = vpack.c.b16 %v2913, %v2913
      %v2930 = vpack.c.b16 %v2914, %v2914
      %v2931 = vpack.c.b16 %v2915, %v2915
      %v2932 = vpack.c.b16 %v2916, %v2916
      %v2933 = vpack.c.b16 %v2917, %v2917
      %v2934 = vpack.c.b16 %v2918, %v2918
      %v2935 = vpack.c.b16 %v2919, %v2919
      %v2936 = vpack.c.b16 %v2920, %v2920
      %v2937 = vpack.c.b16 %v2921, %v2921
      %v2939 = vshrl.u32 %v1554, 16
      %v2941 = vshll.u32 %v1554, 16
      %v2943 = vrot.slane %v2941, 1
      %v2944 = vor.u32 %v2939, %v2943
      %v2946 = vshll.u32 %v2922, 16
      %v2948 = vrot.slane %v2946, 1
      %v2949 = vsel %vm657, %v2944, %v2948
      %v2951 = vshrl.u32 %v1555, 16
      %v2953 = vshll.u32 %v1555, 16
      %v2955 = vrot.slane %v2953, 1
      %v2956 = vor.u32 %v2951, %v2955
      %v2958 = vshll.u32 %v2923, 16
      %v2960 = vrot.slane %v2958, 1
      %v2961 = vsel %vm657, %v2956, %v2960
      %v2963 = vshrl.u32 %v1556, 16
      %v2965 = vshll.u32 %v1556, 16
      %v2967 = vrot.slane %v2965, 1
      %v2968 = vor.u32 %v2963, %v2967
      %v2970 = vshll.u32 %v2924, 16
      %v2972 = vrot.slane %v2970, 1
      %v2973 = vsel %vm657, %v2968, %v2972
      %v2975 = vshrl.u32 %v1557, 16
      %v2977 = vshll.u32 %v1557, 16
      %v2979 = vrot.slane %v2977, 1
      %v2980 = vor.u32 %v2975, %v2979
      %v2982 = vshll.u32 %v2925, 16
      %v2984 = vrot.slane %v2982, 1
      %v2985 = vsel %vm657, %v2980, %v2984
      %v2987 = vshrl.u32 %v1558, 16
      %v2989 = vshll.u32 %v1558, 16
      %v2991 = vrot.slane %v2989, 1
      %v2992 = vor.u32 %v2987, %v2991
      %v2994 = vshll.u32 %v2926, 16
      %v2996 = vrot.slane %v2994, 1
      %v2997 = vsel %vm657, %v2992, %v2996
      %v2999 = vshrl.u32 %v1559, 16
      %v3001 = vshll.u32 %v1559, 16
      %v3003 = vrot.slane %v3001, 1
      %v3004 = vor.u32 %v2999, %v3003
      %v3006 = vshll.u32 %v2927, 16
      %v3008 = vrot.slane %v3006, 1
      %v3009 = vsel %vm657, %v3004, %v3008
      %v3011 = vshrl.u32 %v1560, 16
      %v3013 = vshll.u32 %v1560, 16
      %v3015 = vrot.slane %v3013, 1
      %v3016 = vor.u32 %v3011, %v3015
      %v3018 = vshll.u32 %v2928, 16
      %v3020 = vrot.slane %v3018, 1
      %v3021 = vsel %vm657, %v3016, %v3020
      %v3023 = vshrl.u32 %v1561, 16
      %v3025 = vshll.u32 %v1561, 16
      %v3027 = vrot.slane %v3025, 1
      %v3028 = vor.u32 %v3023, %v3027
      %v3030 = vshll.u32 %v2929, 16
      %v3032 = vrot.slane %v3030, 1
      %v3033 = vsel %vm657, %v3028, %v3032
      %v3035 = vshrl.u32 %v1562, 16
      %v3037 = vshll.u32 %v1562, 16
      %v3039 = vrot.slane %v3037, 1
      %v3040 = vor.u32 %v3035, %v3039
      %v3042 = vshll.u32 %v2930, 16
      %v3044 = vrot.slane %v3042, 1
      %v3045 = vsel %vm657, %v3040, %v3044
      %v3047 = vshrl.u32 %v1563, 16
      %v3049 = vshll.u32 %v1563, 16
      %v3051 = vrot.slane %v3049, 1
      %v3052 = vor.u32 %v3047, %v3051
      %v3054 = vshll.u32 %v2931, 16
      %v3056 = vrot.slane %v3054, 1
      %v3057 = vsel %vm657, %v3052, %v3056
      %v3059 = vshrl.u32 %v1564, 16
      %v3061 = vshll.u32 %v1564, 16
      %v3063 = vrot.slane %v3061, 1
      %v3064 = vor.u32 %v3059, %v3063
      %v3066 = vshll.u32 %v2932, 16
      %v3068 = vrot.slane %v3066, 1
      %v3069 = vsel %vm657, %v3064, %v3068
      %v3071 = vshrl.u32 %v1565, 16
      %v3073 = vshll.u32 %v1565, 16
      %v3075 = vrot.slane %v3073, 1
      %v3076 = vor.u32 %v3071, %v3075
      %v3078 = vshll.u32 %v2933, 16
      %v3080 = vrot.slane %v3078, 1
      %v3081 = vsel %vm657, %v3076, %v3080
      %v3083 = vshrl.u32 %v1566, 16
      %v3085 = vshll.u32 %v1566, 16
      %v3087 = vrot.slane %v3085, 1
      %v3088 = vor.u32 %v3083, %v3087
      %v3090 = vshll.u32 %v2934, 16
      %v3092 = vrot.slane %v3090, 1
      %v3093 = vsel %vm657, %v3088, %v3092
      %v3095 = vshrl.u32 %v1567, 16
      %v3097 = vshll.u32 %v1567, 16
      %v3099 = vrot.slane %v3097, 1
      %v3100 = vor.u32 %v3095, %v3099
      %v3102 = vshll.u32 %v2935, 16
      %v3104 = vrot.slane %v3102, 1
      %v3105 = vsel %vm657, %v3100, %v3104
      %v3107 = vshrl.u32 %v1568, 16
      %v3109 = vshll.u32 %v1568, 16
      %v3111 = vrot.slane %v3109, 1
      %v3112 = vor.u32 %v3107, %v3111
      %v3114 = vshll.u32 %v2936, 16
      %v3116 = vrot.slane %v3114, 1
      %v3117 = vsel %vm657, %v3112, %v3116
      %v3119 = vshrl.u32 %v1569, 16
      %v3121 = vshll.u32 %v1569, 16
      %v3123 = vrot.slane %v3121, 1
      %v3124 = vor.u32 %v3119, %v3123
      %v3126 = vshll.u32 %v2937, 16
      %v3128 = vrot.slane %v3126, 1
      %v3129 = vsel %vm657, %v3124, %v3128
      %3130 = vrot.lane.b32.xlu0 %v2949, 24
      %v3131 = vpop.permute.xlu0 %3130
      %3132 = vrot.lane.b32.xlu0 %v2961, 24
      %v3133 = vpop.permute.xlu0 %3132
      %3134 = vrot.lane.b32.xlu0 %v2973, 24
      %v3135 = vpop.permute.xlu0 %3134
      %3136 = vrot.lane.b32.xlu0 %v2985, 24
      %v3137 = vpop.permute.xlu0 %3136
      %3138 = vrot.lane.b32.xlu0 %v2997, 24
      %v3139 = vpop.permute.xlu0 %3138
      %3140 = vrot.lane.b32.xlu0 %v3009, 24
      %v3141 = vpop.permute.xlu0 %3140
      %3142 = vrot.lane.b32.xlu0 %v3021, 24
      %v3143 = vpop.permute.xlu0 %3142
      %3144 = vrot.lane.b32.xlu0 %v3033, 24
      %v3145 = vpop.permute.xlu0 %3144
      %3146 = vrot.lane.b32.xlu0 %v3045, 24
      %v3147 = vpop.permute.xlu0 %3146
      %3148 = vrot.lane.b32.xlu0 %v3057, 24
      %v3149 = vpop.permute.xlu0 %3148
      %3150 = vrot.lane.b32.xlu0 %v3069, 24
      %v3151 = vpop.permute.xlu0 %3150
      %3152 = vrot.lane.b32.xlu0 %v3081, 24
      %v3153 = vpop.permute.xlu0 %3152
      %3154 = vrot.lane.b32.xlu0 %v3093, 24
      %v3155 = vpop.permute.xlu0 %3154
      %3156 = vrot.lane.b32.xlu0 %v3105, 24
      %v3157 = vpop.permute.xlu0 %3156
      %3158 = vrot.lane.b32.xlu0 %v3117, 24
      %v3159 = vpop.permute.xlu0 %3158
      %3160 = vrot.lane.b32.xlu0 %v3129, 24
      %v3161 = vpop.permute.xlu0 %3160
      %v3163 = vsel %vm1874, %v561, %v2187
      %v3165 = vsel %vm1874, %v562, %v2189
      %v3167 = vsel %vm1874, %v563, %v2191
      %v3169 = vsel %vm1874, %v564, %v2193
      %v3171 = vsel %vm1874, %v565, %v2195
      %v3173 = vsel %vm1874, %v566, %v2197
      %v3175 = vsel %vm1874, %v567, %v2199
      %v3177 = vsel %vm1874, %v568, %v2201
      %v3179 = vsel %vm1874, %v569, %v2203
      %v3181 = vsel %vm1874, %v570, %v2205
      %v3183 = vsel %vm1874, %v571, %v2207
      %v3185 = vsel %vm1874, %v572, %v2209
      %v3187 = vsel %vm1874, %v573, %v2211
      %v3189 = vsel %vm1874, %v574, %v2213
      %v3191 = vsel %vm1874, %v575, %v2215
      %v3193 = vsel %vm1874, %v576, %v2217
      %v3195 = vsel %vm1907, %v3163, %v2459
      %v3197 = vsel %vm1907, %v3165, %v2461
      %v3199 = vsel %vm1907, %v3167, %v2463
      %v3201 = vsel %vm1907, %v3169, %v2465
      %v3203 = vsel %vm1907, %v3171, %v2467
      %v3205 = vsel %vm1907, %v3173, %v2469
      %v3207 = vsel %vm1907, %v3175, %v2471
      %v3209 = vsel %vm1907, %v3177, %v2473
      %v3211 = vsel %vm1907, %v3179, %v2475
      %v3213 = vsel %vm1907, %v3181, %v2477
      %v3215 = vsel %vm1907, %v3183, %v2479
      %v3217 = vsel %vm1907, %v3185, %v2481
      %v3219 = vsel %vm1907, %v3187, %v2483
      %v3221 = vsel %vm1907, %v3189, %v2485
      %v3223 = vsel %vm1907, %v3191, %v2487
      %v3225 = vsel %vm1907, %v3193, %v2489
      %v3227 = vsel %vm1940, %v3195, %v2491
      %v3229 = vsel %vm1940, %v3197, %v2493
      %v3231 = vsel %vm1940, %v3199, %v2495
      %v3233 = vsel %vm1940, %v3201, %v2497
      %v3235 = vsel %vm1940, %v3203, %v2499
      %v3237 = vsel %vm1940, %v3205, %v2501
      %v3239 = vsel %vm1940, %v3207, %v2503
      %v3241 = vsel %vm1940, %v3209, %v2505
      %v3243 = vsel %vm1940, %v3211, %v2507
      %v3245 = vsel %vm1940, %v3213, %v2509
      %v3247 = vsel %vm1940, %v3215, %v2511
      %v3249 = vsel %vm1940, %v3217, %v2513
      %v3251 = vsel %vm1940, %v3219, %v2515
      %v3253 = vsel %vm1940, %v3221, %v2517
      %v3255 = vsel %vm1940, %v3223, %v2519
      %v3257 = vsel %vm1940, %v3225, %v2521
      %v3259 = vsel %vm1973, %v3227, %v2523
      %v3261 = vsel %vm1973, %v3229, %v2525
      %v3263 = vsel %vm1973, %v3231, %v2527
      %v3265 = vsel %vm1973, %v3233, %v2529
      %v3267 = vsel %vm1973, %v3235, %v2531
      %v3269 = vsel %vm1973, %v3237, %v2533
      %v3271 = vsel %vm1973, %v3239, %v2535
      %v3273 = vsel %vm1973, %v3241, %v2537
      %v3275 = vsel %vm1973, %v3243, %v2539
      %v3277 = vsel %vm1973, %v3245, %v2541
      %v3279 = vsel %vm1973, %v3247, %v2543
      %v3281 = vsel %vm1973, %v3249, %v2545
      %v3283 = vsel %vm1973, %v3251, %v2547
      %v3285 = vsel %vm1973, %v3253, %v2549
      %v3287 = vsel %vm1973, %v3255, %v2551
      %v3289 = vsel %vm1973, %v3257, %v2553
      %v3291 = vsel %vm2006, %v3259, %v2795
      %v3293 = vsel %vm2006, %v3261, %v2797
      %v3295 = vsel %vm2006, %v3263, %v2799
      %v3297 = vsel %vm2006, %v3265, %v2801
      %v3299 = vsel %vm2006, %v3267, %v2803
      %v3301 = vsel %vm2006, %v3269, %v2805
      %v3303 = vsel %vm2006, %v3271, %v2807
      %v3305 = vsel %vm2006, %v3273, %v2809
      %v3307 = vsel %vm2006, %v3275, %v2811
      %v3309 = vsel %vm2006, %v3277, %v2813
      %v3311 = vsel %vm2006, %v3279, %v2815
      %v3313 = vsel %vm2006, %v3281, %v2817
      %v3315 = vsel %vm2006, %v3283, %v2819
      %v3317 = vsel %vm2006, %v3285, %v2821
      %v3319 = vsel %vm2006, %v3287, %v2823
      %v3321 = vsel %vm2006, %v3289, %v2825
      %v3323 = vsel %vm2039, %v3291, %v2827
      %v3325 = vsel %vm2039, %v3293, %v2829
      %v3327 = vsel %vm2039, %v3295, %v2831
      %v3329 = vsel %vm2039, %v3297, %v2833
      %v3331 = vsel %vm2039, %v3299, %v2835
      %v3333 = vsel %vm2039, %v3301, %v2837
      %v3335 = vsel %vm2039, %v3303, %v2839
      %v3337 = vsel %vm2039, %v3305, %v2841
      %v3339 = vsel %vm2039, %v3307, %v2843
      %v3341 = vsel %vm2039, %v3309, %v2845
      %v3343 = vsel %vm2039, %v3311, %v2847
      %v3345 = vsel %vm2039, %v3313, %v2849
      %v3347 = vsel %vm2039, %v3315, %v2851
      %v3349 = vsel %vm2039, %v3317, %v2853
      %v3351 = vsel %vm2039, %v3319, %v2855
      %v3353 = vsel %vm2039, %v3321, %v2857
      %v3355 = vsel %vm2072, %v3323, %v2859
      %v3357 = vsel %vm2072, %v3325, %v2861
      %v3359 = vsel %vm2072, %v3327, %v2863
      %v3361 = vsel %vm2072, %v3329, %v2865
      %v3363 = vsel %vm2072, %v3331, %v2867
      %v3365 = vsel %vm2072, %v3333, %v2869
      %v3367 = vsel %vm2072, %v3335, %v2871
      %v3369 = vsel %vm2072, %v3337, %v2873
      %v3371 = vsel %vm2072, %v3339, %v2875
      %v3373 = vsel %vm2072, %v3341, %v2877
      %v3375 = vsel %vm2072, %v3343, %v2879
      %v3377 = vsel %vm2072, %v3345, %v2881
      %v3379 = vsel %vm2072, %v3347, %v2883
      %v3381 = vsel %vm2072, %v3349, %v2885
      %v3383 = vsel %vm2072, %v3351, %v2887
      %v3385 = vsel %vm2072, %v3353, %v2889
      %v3387 = vsel %vm2105, %v3355, %v3131
      %v3389 = vsel %vm2105, %v3357, %v3133
      %v3391 = vsel %vm2105, %v3359, %v3135
      %v3393 = vsel %vm2105, %v3361, %v3137
      %v3395 = vsel %vm2105, %v3363, %v3139
      %v3397 = vsel %vm2105, %v3365, %v3141
      %v3399 = vsel %vm2105, %v3367, %v3143
      %v3401 = vsel %vm2105, %v3369, %v3145
      %v3403 = vsel %vm2105, %v3371, %v3147
      %v3405 = vsel %vm2105, %v3373, %v3149
      %v3407 = vsel %vm2105, %v3375, %v3151
      %v3409 = vsel %vm2105, %v3377, %v3153
      %v3411 = vsel %vm2105, %v3379, %v3155
      %v3413 = vsel %vm2105, %v3381, %v3157
      %v3415 = vsel %vm2105, %v3383, %v3159
      %v3417 = vsel %vm2105, %v3385, %v3161
      %s3418 = scalar_lea.vmem %s165, 420
      %v3419 = vld [vmem:[%s3418] sm:$0xf]
      %v3420 = vld [vmem:[%s3418 + $0x4] sm:$0xf]
      %v3421 = vld [vmem:[%s3418 + $0xc] sm:$0xf]
      %v3422 = vld [vmem:[%s3418 + $0x10] sm:$0xf]
      %v3423 = vld [vmem:[%s3418 + $0x18] sm:$0xf]
      %v3424 = vld [vmem:[%s3418 + $0x1c] sm:$0xf]
      %v3425 = vld [vmem:[%s3418 + $0x24] sm:$0xf]
      %v3426 = vld [vmem:[%s3418 + $0x28] sm:$0xf]
      %v3427 = vld [vmem:[%s3418 + $0x30] sm:$0xf]
      %v3428 = vld [vmem:[%s3418 + $0x34] sm:$0xf]
      %v3429 = vld [vmem:[%s3418 + $0x3c] sm:$0xf]
      %v3430 = vld [vmem:[%s3418 + $0x40] sm:$0xf]
      %v3431 = vld [vmem:[%s3418 + $0x48] sm:$0xf]
      %v3432 = vld [vmem:[%s3418 + $0x4c] sm:$0xf]
      %v3433 = vld [vmem:[%s3418 + $0x54] sm:$0xf]
      %v3434 = vld [vmem:[%s3418 + $0x58] sm:$0xf]
      %v3435 = vld [vmem:[%s3418 + $0x60] sm:$0xf]
      %v3436 = vld [vmem:[%s3418 + $0x64] sm:$0xf]
      %v3437 = vld [vmem:[%s3418 + $0x6c] sm:$0xf]
      %v3438 = vld [vmem:[%s3418 + $0x70] sm:$0xf]
      %v3439 = vld [vmem:[%s3418 + $0x78] sm:$0xf]
      %v3440 = vld [vmem:[%s3418 + $0x7c] sm:$0xf]
      %v3441 = vld [vmem:[%s3418 + $0x84] sm:$0xf]
      %v3442 = vld [vmem:[%s3418 + $0x88] sm:$0xf]
      %v3443 = vld [vmem:[%s3418 + $0x90] sm:$0xf]
      %v3444 = vld [vmem:[%s3418 + $0x94] sm:$0xf]
      %v3445 = vld [vmem:[%s3418 + $0x9c] sm:$0xf]
      %v3446 = vld [vmem:[%s3418 + $0xa0] sm:$0xf]
      %v3447 = vld [vmem:[%s3418 + $0xa8] sm:$0xf]
      %v3448 = vld [vmem:[%s3418 + $0xac] sm:$0xf]
      %v3449 = vld [vmem:[%s3418 + $0xb4] sm:$0xf]
      %v3450 = vld [vmem:[%s3418 + $0xb8] sm:$0xf]
      %s3451 = scalar_lea.vmem %s165, 624
      %v3452 = vld [vmem:[%s3451] sm:$0xf]
      %v3453 = vld [vmem:[%s3451 + $0x4] sm:$0xf]
      %v3454 = vld [vmem:[%s3451 + $0xc] sm:$0xf]
      %v3455 = vld [vmem:[%s3451 + $0x10] sm:$0xf]
      %v3456 = vld [vmem:[%s3451 + $0x18] sm:$0xf]
      %v3457 = vld [vmem:[%s3451 + $0x1c] sm:$0xf]
      %v3458 = vld [vmem:[%s3451 + $0x24] sm:$0xf]
      %v3459 = vld [vmem:[%s3451 + $0x28] sm:$0xf]
      %v3460 = vld [vmem:[%s3451 + $0x30] sm:$0xf]
      %v3461 = vld [vmem:[%s3451 + $0x34] sm:$0xf]
      %v3462 = vld [vmem:[%s3451 + $0x3c] sm:$0xf]
      %v3463 = vld [vmem:[%s3451 + $0x40] sm:$0xf]
      %v3464 = vld [vmem:[%s3451 + $0x48] sm:$0xf]
      %v3465 = vld [vmem:[%s3451 + $0x4c] sm:$0xf]
      %v3466 = vld [vmem:[%s3451 + $0x54] sm:$0xf]
      %v3467 = vld [vmem:[%s3451 + $0x58] sm:$0xf]
      %v3468 = vld [vmem:[%s3451 + $0x60] sm:$0xf]
      %v3469 = vld [vmem:[%s3451 + $0x64] sm:$0xf]
      %v3470 = vld [vmem:[%s3451 + $0x6c] sm:$0xf]
      %v3471 = vld [vmem:[%s3451 + $0x70] sm:$0xf]
      %v3472 = vld [vmem:[%s3451 + $0x78] sm:$0xf]
      %v3473 = vld [vmem:[%s3451 + $0x7c] sm:$0xf]
      %v3474 = vld [vmem:[%s3451 + $0x84] sm:$0xf]
      %v3475 = vld [vmem:[%s3451 + $0x88] sm:$0xf]
      %v3476 = vld [vmem:[%s3451 + $0x90] sm:$0xf]
      %v3477 = vld [vmem:[%s3451 + $0x94] sm:$0xf]
      %v3478 = vld [vmem:[%s3451 + $0x9c] sm:$0xf]
      %v3479 = vld [vmem:[%s3451 + $0xa0] sm:$0xf]
      %v3480 = vld [vmem:[%s3451 + $0xa8] sm:$0xf]
      %v3481 = vld [vmem:[%s3451 + $0xac] sm:$0xf]
      %v3482 = vld [vmem:[%s3451 + $0xb4] sm:$0xf]
      %v3483 = vld [vmem:[%s3451 + $0xb8] sm:$0xf]
      %v3484 = vld [vmem:[%s3418 + $0x8] sm:$0x1]
      %v3485 = vld [vmem:[%s3418 + $0x14] sm:$0x1]
      %v3486 = vld [vmem:[%s3418 + $0x20] sm:$0x1]
      %v3487 = vld [vmem:[%s3418 + $0x2c] sm:$0x1]
      %v3488 = vld [vmem:[%s3418 + $0x38] sm:$0x1]
      %v3489 = vld [vmem:[%s3418 + $0x44] sm:$0x1]
      %v3490 = vld [vmem:[%s3418 + $0x50] sm:$0x1]
      %v3491 = vld [vmem:[%s3418 + $0x5c] sm:$0x1]
      %v3492 = vld [vmem:[%s3418 + $0x68] sm:$0x1]
      %v3493 = vld [vmem:[%s3418 + $0x74] sm:$0x1]
      %v3494 = vld [vmem:[%s3418 + $0x80] sm:$0x1]
      %v3495 = vld [vmem:[%s3418 + $0x8c] sm:$0x1]
      %v3496 = vld [vmem:[%s3418 + $0x98] sm:$0x1]
      %v3497 = vld [vmem:[%s3418 + $0xa4] sm:$0x1]
      %v3498 = vld [vmem:[%s3418 + $0xb0] sm:$0x1]
      %v3499 = vld [vmem:[%s3418 + $0xbc] sm:$0x1]
      %3500 = vrot.lane.b32.xlu0 %v1058, 3
      %v3501 = vpop.permute.xlu0 %3500
      %3502 = vrot.lane.b32.xlu0 %v1059, 3
      %v3503 = vpop.permute.xlu0 %3502
      %3504 = vrot.lane.b32.xlu0 %v1060, 3
      %v3505 = vpop.permute.xlu0 %3504
      %3506 = vrot.lane.b32.xlu0 %v1061, 3
      %v3507 = vpop.permute.xlu0 %3506
      %3508 = vrot.lane.b32.xlu0 %v1062, 3
      %v3509 = vpop.permute.xlu0 %3508
      %3510 = vrot.lane.b32.xlu0 %v1063, 3
      %v3511 = vpop.permute.xlu0 %3510
      %3512 = vrot.lane.b32.xlu0 %v1064, 3
      %v3513 = vpop.permute.xlu0 %3512
      %3514 = vrot.lane.b32.xlu0 %v1065, 3
      %v3515 = vpop.permute.xlu0 %3514
      %3516 = vrot.lane.b32.xlu0 %v1066, 3
      %v3517 = vpop.permute.xlu0 %3516
      %3518 = vrot.lane.b32.xlu0 %v1067, 3
      %v3519 = vpop.permute.xlu0 %3518
      %3520 = vrot.lane.b32.xlu0 %v1068, 3
      %v3521 = vpop.permute.xlu0 %3520
      %3522 = vrot.lane.b32.xlu0 %v1069, 3
      %v3523 = vpop.permute.xlu0 %3522
      %3524 = vrot.lane.b32.xlu0 %v1070, 3
      %v3525 = vpop.permute.xlu0 %3524
      %3526 = vrot.lane.b32.xlu0 %v1071, 3
      %v3527 = vpop.permute.xlu0 %3526
      %3528 = vrot.lane.b32.xlu0 %v1072, 3
      %v3529 = vpop.permute.xlu0 %3528
      %3530 = vrot.lane.b32.xlu0 %v1073, 3
      %v3531 = vpop.permute.xlu0 %3530
      %3532 = vrot.lane.b32.xlu0 %v1165, 6
      %v3533 = vpop.permute.xlu0 %3532
      %3534 = vrot.lane.b32.xlu0 %v1177, 6
      %v3535 = vpop.permute.xlu0 %3534
      %3536 = vrot.lane.b32.xlu0 %v1189, 6
      %v3537 = vpop.permute.xlu0 %3536
      %3538 = vrot.lane.b32.xlu0 %v1201, 6
      %v3539 = vpop.permute.xlu0 %3538
      %3540 = vrot.lane.b32.xlu0 %v1213, 6
      %v3541 = vpop.permute.xlu0 %3540
      %3542 = vrot.lane.b32.xlu0 %v1225, 6
      %v3543 = vpop.permute.xlu0 %3542
      %3544 = vrot.lane.b32.xlu0 %v1237, 6
      %v3545 = vpop.permute.xlu0 %3544
      %3546 = vrot.lane.b32.xlu0 %v1249, 6
      %v3547 = vpop.permute.xlu0 %3546
      %3548 = vrot.lane.b32.xlu0 %v1261, 6
      %v3549 = vpop.permute.xlu0 %3548
      %3550 = vrot.lane.b32.xlu0 %v1273, 6
      %v3551 = vpop.permute.xlu0 %3550
      %3552 = vrot.lane.b32.xlu0 %v1285, 6
      %v3553 = vpop.permute.xlu0 %3552
      %3554 = vrot.lane.b32.xlu0 %v1297, 6
      %v3555 = vpop.permute.xlu0 %3554
      %3556 = vrot.lane.b32.xlu0 %v1309, 6
      %v3557 = vpop.permute.xlu0 %3556
      %3558 = vrot.lane.b32.xlu0 %v1321, 6
      %v3559 = vpop.permute.xlu0 %3558
      %3560 = vrot.lane.b32.xlu0 %v1333, 6
      %v3561 = vpop.permute.xlu0 %3560
      %3562 = vrot.lane.b32.xlu0 %v1345, 6
      %v3563 = vpop.permute.xlu0 %3562
      %3564 = vrot.lane.b32.xlu0 %v1442, 9
      %v3565 = vpop.permute.xlu0 %3564
      %3566 = vrot.lane.b32.xlu0 %v1443, 9
      %v3567 = vpop.permute.xlu0 %3566
      %3568 = vrot.lane.b32.xlu0 %v1444, 9
      %v3569 = vpop.permute.xlu0 %3568
      %3570 = vrot.lane.b32.xlu0 %v1445, 9
      %v3571 = vpop.permute.xlu0 %3570
      %3572 = vrot.lane.b32.xlu0 %v1446, 9
      %v3573 = vpop.permute.xlu0 %3572
      %3574 = vrot.lane.b32.xlu0 %v1447, 9
      %v3575 = vpop.permute.xlu0 %3574
      %3576 = vrot.lane.b32.xlu0 %v1448, 9
      %v3577 = vpop.permute.xlu0 %3576
      %3578 = vrot.lane.b32.xlu0 %v1449, 9
      %v3579 = vpop.permute.xlu0 %3578
      %3580 = vrot.lane.b32.xlu0 %v1450, 9
      %v3581 = vpop.permute.xlu0 %3580
      %3582 = vrot.lane.b32.xlu0 %v1451, 9
      %v3583 = vpop.permute.xlu0 %3582
      %3584 = vrot.lane.b32.xlu0 %v1452, 9
      %v3585 = vpop.permute.xlu0 %3584
      %3586 = vrot.lane.b32.xlu0 %v1453, 9
      %v3587 = vpop.permute.xlu0 %3586
      %3588 = vrot.lane.b32.xlu0 %v1454, 9
      %v3589 = vpop.permute.xlu0 %3588
      %3590 = vrot.lane.b32.xlu0 %v1455, 9
      %v3591 = vpop.permute.xlu0 %3590
      %3592 = vrot.lane.b32.xlu0 %v1456, 9
      %v3593 = vpop.permute.xlu0 %3592
      %3594 = vrot.lane.b32.xlu0 %v1457, 9
      %v3595 = vpop.permute.xlu0 %3594
      %3596 = vrot.lane.b32.xlu0 %v1554, 12
      %v3597 = vpop.permute.xlu0 %3596
      %3598 = vrot.lane.b32.xlu0 %v1555, 12
      %v3599 = vpop.permute.xlu0 %3598
      %3600 = vrot.lane.b32.xlu0 %v1556, 12
      %v3601 = vpop.permute.xlu0 %3600
      %3602 = vrot.lane.b32.xlu0 %v1557, 12
      %v3603 = vpop.permute.xlu0 %3602
      %3604 = vrot.lane.b32.xlu0 %v1558, 12
      %v3605 = vpop.permute.xlu0 %3604
      %3606 = vrot.lane.b32.xlu0 %v1559, 12
      %v3607 = vpop.permute.xlu0 %3606
      %3608 = vrot.lane.b32.xlu0 %v1560, 12
      %v3609 = vpop.permute.xlu0 %3608
      %3610 = vrot.lane.b32.xlu0 %v1561, 12
      %v3611 = vpop.permute.xlu0 %3610
      %3612 = vrot.lane.b32.xlu0 %v1562, 12
      %v3613 = vpop.permute.xlu0 %3612
      %3614 = vrot.lane.b32.xlu0 %v1563, 12
      %v3615 = vpop.permute.xlu0 %3614
      %3616 = vrot.lane.b32.xlu0 %v1564, 12
      %v3617 = vpop.permute.xlu0 %3616
      %3618 = vrot.lane.b32.xlu0 %v1565, 12
      %v3619 = vpop.permute.xlu0 %3618
      %3620 = vrot.lane.b32.xlu0 %v1566, 12
      %v3621 = vpop.permute.xlu0 %3620
      %3622 = vrot.lane.b32.xlu0 %v1567, 12
      %v3623 = vpop.permute.xlu0 %3622
      %3624 = vrot.lane.b32.xlu0 %v1568, 12
      %v3625 = vpop.permute.xlu0 %3624
      %3626 = vrot.lane.b32.xlu0 %v1569, 12
      %v3627 = vpop.permute.xlu0 %3626
      %3628 = vrot.lane.b32.xlu0 %v1661, 15
      %v3629 = vpop.permute.xlu0 %3628
      %3630 = vrot.lane.b32.xlu0 %v1673, 15
      %v3631 = vpop.permute.xlu0 %3630
      %3632 = vrot.lane.b32.xlu0 %v1685, 15
      %v3633 = vpop.permute.xlu0 %3632
      %3634 = vrot.lane.b32.xlu0 %v1697, 15
      %v3635 = vpop.permute.xlu0 %3634
      %3636 = vrot.lane.b32.xlu0 %v1709, 15
      %v3637 = vpop.permute.xlu0 %3636
      %3638 = vrot.lane.b32.xlu0 %v1721, 15
      %v3639 = vpop.permute.xlu0 %3638
      %3640 = vrot.lane.b32.xlu0 %v1733, 15
      %v3641 = vpop.permute.xlu0 %3640
      %3642 = vrot.lane.b32.xlu0 %v1745, 15
      %v3643 = vpop.permute.xlu0 %3642
      %3644 = vrot.lane.b32.xlu0 %v1757, 15
      %v3645 = vpop.permute.xlu0 %3644
      %3646 = vrot.lane.b32.xlu0 %v1769, 15
      %v3647 = vpop.permute.xlu0 %3646
      %3648 = vrot.lane.b32.xlu0 %v1781, 15
      %v3649 = vpop.permute.xlu0 %3648
      %3650 = vrot.lane.b32.xlu0 %v1793, 15
      %v3651 = vpop.permute.xlu0 %3650
      %3652 = vrot.lane.b32.xlu0 %v1805, 15
      %v3653 = vpop.permute.xlu0 %3652
      %3654 = vrot.lane.b32.xlu0 %v1817, 15
      %v3655 = vpop.permute.xlu0 %3654
      %3656 = vrot.lane.b32.xlu0 %v1829, 15
      %v3657 = vpop.permute.xlu0 %3656
      %3658 = vrot.lane.b32.xlu0 %v1841, 15
      %v3659 = vpop.permute.xlu0 %3658
      %v3692 = vunpack.c.l.b16 %v3419
      %v3693 = vunpack.c.l.b16 %v3420
      %v3694 = vunpack.c.l.b16 %v3421
      %v3695 = vunpack.c.l.b16 %v3422
      %v3696 = vunpack.c.l.b16 %v3423
      %v3697 = vunpack.c.l.b16 %v3424
      %v3698 = vunpack.c.l.b16 %v3425
      %v3699 = vunpack.c.l.b16 %v3426
      %v3700 = vunpack.c.l.b16 %v3427
      %v3701 = vunpack.c.l.b16 %v3428
      %v3702 = vunpack.c.l.b16 %v3429
      %v3703 = vunpack.c.l.b16 %v3430
      %v3704 = vunpack.c.l.b16 %v3431
      %v3705 = vunpack.c.l.b16 %v3432
      %v3706 = vunpack.c.l.b16 %v3433
      %v3707 = vunpack.c.l.b16 %v3434
      %v3708 = vunpack.c.l.b16 %v3435
      %v3709 = vunpack.c.l.b16 %v3436
      %v3710 = vunpack.c.l.b16 %v3437
      %v3711 = vunpack.c.l.b16 %v3438
      %v3712 = vunpack.c.l.b16 %v3439
      %v3713 = vunpack.c.l.b16 %v3440
      %v3714 = vunpack.c.l.b16 %v3441
      %v3715 = vunpack.c.l.b16 %v3442
      %v3716 = vunpack.c.l.b16 %v3443
      %v3717 = vunpack.c.l.b16 %v3444
      %v3718 = vunpack.c.l.b16 %v3445
      %v3719 = vunpack.c.l.b16 %v3446
      %v3720 = vunpack.c.l.b16 %v3447
      %v3721 = vunpack.c.l.b16 %v3448
      %v3722 = vunpack.c.l.b16 %v3449
      %v3723 = vunpack.c.l.b16 %v3450
      %v3724 = vpack.c.b16 %v3693, %v3692
      %v3725 = vpack.c.b16 %v3695, %v3694
      %v3726 = vpack.c.b16 %v3697, %v3696
      %v3727 = vpack.c.b16 %v3699, %v3698
      %v3728 = vpack.c.b16 %v3701, %v3700
      %v3729 = vpack.c.b16 %v3703, %v3702
      %v3730 = vpack.c.b16 %v3705, %v3704
      %v3731 = vpack.c.b16 %v3707, %v3706
      %v3732 = vpack.c.b16 %v3709, %v3708
      %v3733 = vpack.c.b16 %v3711, %v3710
      %v3734 = vpack.c.b16 %v3713, %v3712
      %v3735 = vpack.c.b16 %v3715, %v3714
      %v3736 = vpack.c.b16 %v3717, %v3716
      %v3737 = vpack.c.b16 %v3719, %v3718
      %v3738 = vpack.c.b16 %v3721, %v3720
      %v3739 = vpack.c.b16 %v3723, %v3722
      %3740 = vrot.lane.b32.xlu0 %v3724, 18
      %v3741 = vpop.permute.xlu0 %3740
      %3742 = vrot.lane.b32.xlu0 %v3725, 18
      %v3743 = vpop.permute.xlu0 %3742
      %3744 = vrot.lane.b32.xlu0 %v3726, 18
      %v3745 = vpop.permute.xlu0 %3744
      %3746 = vrot.lane.b32.xlu0 %v3727, 18
      %v3747 = vpop.permute.xlu0 %3746
      %3748 = vrot.lane.b32.xlu0 %v3728, 18
      %v3749 = vpop.permute.xlu0 %3748
      %3750 = vrot.lane.b32.xlu0 %v3729, 18
      %v3751 = vpop.permute.xlu0 %3750
      %3752 = vrot.lane.b32.xlu0 %v3730, 18
      %v3753 = vpop.permute.xlu0 %3752
      %3754 = vrot.lane.b32.xlu0 %v3731, 18
      %v3755 = vpop.permute.xlu0 %3754
      %3756 = vrot.lane.b32.xlu0 %v3732, 18
      %v3757 = vpop.permute.xlu0 %3756
      %3758 = vrot.lane.b32.xlu0 %v3733, 18
      %v3759 = vpop.permute.xlu0 %3758
      %3760 = vrot.lane.b32.xlu0 %v3734, 18
      %v3761 = vpop.permute.xlu0 %3760
      %3762 = vrot.lane.b32.xlu0 %v3735, 18
      %v3763 = vpop.permute.xlu0 %3762
      %3764 = vrot.lane.b32.xlu0 %v3736, 18
      %v3765 = vpop.permute.xlu0 %3764
      %3766 = vrot.lane.b32.xlu0 %v3737, 18
      %v3767 = vpop.permute.xlu0 %3766
      %3768 = vrot.lane.b32.xlu0 %v3738, 18
      %v3769 = vpop.permute.xlu0 %3768
      %3770 = vrot.lane.b32.xlu0 %v3739, 18
      %v3771 = vpop.permute.xlu0 %3770
      %v3804 = vunpack.c.l.b16 %v3452
      %v3805 = vunpack.c.l.b16 %v3453
      %v3806 = vunpack.c.l.b16 %v3454
      %v3807 = vunpack.c.l.b16 %v3455
      %v3808 = vunpack.c.l.b16 %v3456
      %v3809 = vunpack.c.l.b16 %v3457
      %v3810 = vunpack.c.l.b16 %v3458
      %v3811 = vunpack.c.l.b16 %v3459
      %v3812 = vunpack.c.l.b16 %v3460
      %v3813 = vunpack.c.l.b16 %v3461
      %v3814 = vunpack.c.l.b16 %v3462
      %v3815 = vunpack.c.l.b16 %v3463
      %v3816 = vunpack.c.l.b16 %v3464
      %v3817 = vunpack.c.l.b16 %v3465
      %v3818 = vunpack.c.l.b16 %v3466
      %v3819 = vunpack.c.l.b16 %v3467
      %v3820 = vunpack.c.l.b16 %v3468
      %v3821 = vunpack.c.l.b16 %v3469
      %v3822 = vunpack.c.l.b16 %v3470
      %v3823 = vunpack.c.l.b16 %v3471
      %v3824 = vunpack.c.l.b16 %v3472
      %v3825 = vunpack.c.l.b16 %v3473
      %v3826 = vunpack.c.l.b16 %v3474
      %v3827 = vunpack.c.l.b16 %v3475
      %v3828 = vunpack.c.l.b16 %v3476
      %v3829 = vunpack.c.l.b16 %v3477
      %v3830 = vunpack.c.l.b16 %v3478
      %v3831 = vunpack.c.l.b16 %v3479
      %v3832 = vunpack.c.l.b16 %v3480
      %v3833 = vunpack.c.l.b16 %v3481
      %v3834 = vunpack.c.l.b16 %v3482
      %v3835 = vunpack.c.l.b16 %v3483
      %v3836 = vpack.c.b16 %v3805, %v3804
      %v3837 = vpack.c.b16 %v3807, %v3806
      %v3838 = vpack.c.b16 %v3809, %v3808
      %v3839 = vpack.c.b16 %v3811, %v3810
      %v3840 = vpack.c.b16 %v3813, %v3812
      %v3841 = vpack.c.b16 %v3815, %v3814
      %v3842 = vpack.c.b16 %v3817, %v3816
      %v3843 = vpack.c.b16 %v3819, %v3818
      %v3844 = vpack.c.b16 %v3821, %v3820
      %v3845 = vpack.c.b16 %v3823, %v3822
      %v3846 = vpack.c.b16 %v3825, %v3824
      %v3847 = vpack.c.b16 %v3827, %v3826
      %v3848 = vpack.c.b16 %v3829, %v3828
      %v3849 = vpack.c.b16 %v3831, %v3830
      %v3850 = vpack.c.b16 %v3833, %v3832
      %v3851 = vpack.c.b16 %v3835, %v3834
      %3852 = vrot.lane.b32.xlu0 %v3836, 21
      %v3853 = vpop.permute.xlu0 %3852
      %3854 = vrot.lane.b32.xlu0 %v3837, 21
      %v3855 = vpop.permute.xlu0 %3854
      %3856 = vrot.lane.b32.xlu0 %v3838, 21
      %v3857 = vpop.permute.xlu0 %3856
      %3858 = vrot.lane.b32.xlu0 %v3839, 21
      %v3859 = vpop.permute.xlu0 %3858
      %3860 = vrot.lane.b32.xlu0 %v3840, 21
      %v3861 = vpop.permute.xlu0 %3860
      %3862 = vrot.lane.b32.xlu0 %v3841, 21
      %v3863 = vpop.permute.xlu0 %3862
      %3864 = vrot.lane.b32.xlu0 %v3842, 21
      %v3865 = vpop.permute.xlu0 %3864
      %3866 = vrot.lane.b32.xlu0 %v3843, 21
      %v3867 = vpop.permute.xlu0 %3866
      %3868 = vrot.lane.b32.xlu0 %v3844, 21
      %v3869 = vpop.permute.xlu0 %3868
      %3870 = vrot.lane.b32.xlu0 %v3845, 21
      %v3871 = vpop.permute.xlu0 %3870
      %3872 = vrot.lane.b32.xlu0 %v3846, 21
      %v3873 = vpop.permute.xlu0 %3872
      %3874 = vrot.lane.b32.xlu0 %v3847, 21
      %v3875 = vpop.permute.xlu0 %3874
      %3876 = vrot.lane.b32.xlu0 %v3848, 21
      %v3877 = vpop.permute.xlu0 %3876
      %3878 = vrot.lane.b32.xlu0 %v3849, 21
      %v3879 = vpop.permute.xlu0 %3878
      %3880 = vrot.lane.b32.xlu0 %v3850, 21
      %v3881 = vpop.permute.xlu0 %3880
      %3882 = vrot.lane.b32.xlu0 %v3851, 21
      %v3883 = vpop.permute.xlu0 %3882
      %v3900 = vunpack.c.l.b16 %v3484
      %v3901 = vunpack.c.l.b16 %v3485
      %v3902 = vunpack.c.l.b16 %v3486
      %v3903 = vunpack.c.l.b16 %v3487
      %v3904 = vunpack.c.l.b16 %v3488
      %v3905 = vunpack.c.l.b16 %v3489
      %v3906 = vunpack.c.l.b16 %v3490
      %v3907 = vunpack.c.l.b16 %v3491
      %v3908 = vunpack.c.l.b16 %v3492
      %v3909 = vunpack.c.l.b16 %v3493
      %v3910 = vunpack.c.l.b16 %v3494
      %v3911 = vunpack.c.l.b16 %v3495
      %v3912 = vunpack.c.l.b16 %v3496
      %v3913 = vunpack.c.l.b16 %v3497
      %v3914 = vunpack.c.l.b16 %v3498
      %v3915 = vunpack.c.l.b16 %v3499
      %v3916 = vpack.c.b16 %v3900, %v3900
      %v3917 = vpack.c.b16 %v3901, %v3901
      %v3918 = vpack.c.b16 %v3902, %v3902
      %v3919 = vpack.c.b16 %v3903, %v3903
      %v3920 = vpack.c.b16 %v3904, %v3904
      %v3921 = vpack.c.b16 %v3905, %v3905
      %v3922 = vpack.c.b16 %v3906, %v3906
      %v3923 = vpack.c.b16 %v3907, %v3907
      %v3924 = vpack.c.b16 %v3908, %v3908
      %v3925 = vpack.c.b16 %v3909, %v3909
      %v3926 = vpack.c.b16 %v3910, %v3910
      %v3927 = vpack.c.b16 %v3911, %v3911
      %v3928 = vpack.c.b16 %v3912, %v3912
      %v3929 = vpack.c.b16 %v3913, %v3913
      %v3930 = vpack.c.b16 %v3914, %v3914
      %v3931 = vpack.c.b16 %v3915, %v3915
      %v3933 = vshrl.u32 %v3724, 16
      %v3935 = vshll.u32 %v3724, 16
      %v3937 = vrot.slane %v3935, 1
      %v3938 = vor.u32 %v3933, %v3937
      %v3940 = vshll.u32 %v3916, 16
      %v3942 = vrot.slane %v3940, 1
      %v3943 = vsel %vm657, %v3938, %v3942
      %v3945 = vshrl.u32 %v3725, 16
      %v3947 = vshll.u32 %v3725, 16
      %v3949 = vrot.slane %v3947, 1
      %v3950 = vor.u32 %v3945, %v3949
      %v3952 = vshll.u32 %v3917, 16
      %v3954 = vrot.slane %v3952, 1
      %v3955 = vsel %vm657, %v3950, %v3954
      %v3957 = vshrl.u32 %v3726, 16
      %v3959 = vshll.u32 %v3726, 16
      %v3961 = vrot.slane %v3959, 1
      %v3962 = vor.u32 %v3957, %v3961
      %v3964 = vshll.u32 %v3918, 16
      %v3966 = vrot.slane %v3964, 1
      %v3967 = vsel %vm657, %v3962, %v3966
      %v3969 = vshrl.u32 %v3727, 16
      %v3971 = vshll.u32 %v3727, 16
      %v3973 = vrot.slane %v3971, 1
      %v3974 = vor.u32 %v3969, %v3973
      %v3976 = vshll.u32 %v3919, 16
      %v3978 = vrot.slane %v3976, 1
      %v3979 = vsel %vm657, %v3974, %v3978
      %v3981 = vshrl.u32 %v3728, 16
      %v3983 = vshll.u32 %v3728, 16
      %v3985 = vrot.slane %v3983, 1
      %v3986 = vor.u32 %v3981, %v3985
      %v3988 = vshll.u32 %v3920, 16
      %v3990 = vrot.slane %v3988, 1
      %v3991 = vsel %vm657, %v3986, %v3990
      %v3993 = vshrl.u32 %v3729, 16
      %v3995 = vshll.u32 %v3729, 16
      %v3997 = vrot.slane %v3995, 1
      %v3998 = vor.u32 %v3993, %v3997
      %v4000 = vshll.u32 %v3921, 16
      %v4002 = vrot.slane %v4000, 1
      %v4003 = vsel %vm657, %v3998, %v4002
      %v4005 = vshrl.u32 %v3730, 16
      %v4007 = vshll.u32 %v3730, 16
      %v4009 = vrot.slane %v4007, 1
      %v4010 = vor.u32 %v4005, %v4009
      %v4012 = vshll.u32 %v3922, 16
      %v4014 = vrot.slane %v4012, 1
      %v4015 = vsel %vm657, %v4010, %v4014
      %v4017 = vshrl.u32 %v3731, 16
      %v4019 = vshll.u32 %v3731, 16
      %v4021 = vrot.slane %v4019, 1
      %v4022 = vor.u32 %v4017, %v4021
      %v4024 = vshll.u32 %v3923, 16
      %v4026 = vrot.slane %v4024, 1
      %v4027 = vsel %vm657, %v4022, %v4026
      %v4029 = vshrl.u32 %v3732, 16
      %v4031 = vshll.u32 %v3732, 16
      %v4033 = vrot.slane %v4031, 1
      %v4034 = vor.u32 %v4029, %v4033
      %v4036 = vshll.u32 %v3924, 16
      %v4038 = vrot.slane %v4036, 1
      %v4039 = vsel %vm657, %v4034, %v4038
      %v4041 = vshrl.u32 %v3733, 16
      %v4043 = vshll.u32 %v3733, 16
      %v4045 = vrot.slane %v4043, 1
      %v4046 = vor.u32 %v4041, %v4045
      %v4048 = vshll.u32 %v3925, 16
      %v4050 = vrot.slane %v4048, 1
      %v4051 = vsel %vm657, %v4046, %v4050
      %v4053 = vshrl.u32 %v3734, 16
      %v4055 = vshll.u32 %v3734, 16
      %v4057 = vrot.slane %v4055, 1
      %v4058 = vor.u32 %v4053, %v4057
      %v4060 = vshll.u32 %v3926, 16
      %v4062 = vrot.slane %v4060, 1
      %v4063 = vsel %vm657, %v4058, %v4062
      %v4065 = vshrl.u32 %v3735, 16
      %v4067 = vshll.u32 %v3735, 16
      %v4069 = vrot.slane %v4067, 1
      %v4070 = vor.u32 %v4065, %v4069
      %v4072 = vshll.u32 %v3927, 16
      %v4074 = vrot.slane %v4072, 1
      %v4075 = vsel %vm657, %v4070, %v4074
      %v4077 = vshrl.u32 %v3736, 16
      %v4079 = vshll.u32 %v3736, 16
      %v4081 = vrot.slane %v4079, 1
      %v4082 = vor.u32 %v4077, %v4081
      %v4084 = vshll.u32 %v3928, 16
      %v4086 = vrot.slane %v4084, 1
      %v4087 = vsel %vm657, %v4082, %v4086
      %v4089 = vshrl.u32 %v3737, 16
      %v4091 = vshll.u32 %v3737, 16
      %v4093 = vrot.slane %v4091, 1
      %v4094 = vor.u32 %v4089, %v4093
      %v4096 = vshll.u32 %v3929, 16
      %v4098 = vrot.slane %v4096, 1
      %v4099 = vsel %vm657, %v4094, %v4098
      %v4101 = vshrl.u32 %v3738, 16
      %v4103 = vshll.u32 %v3738, 16
      %v4105 = vrot.slane %v4103, 1
      %v4106 = vor.u32 %v4101, %v4105
      %v4108 = vshll.u32 %v3930, 16
      %v4110 = vrot.slane %v4108, 1
      %v4111 = vsel %vm657, %v4106, %v4110
      %v4113 = vshrl.u32 %v3739, 16
      %v4115 = vshll.u32 %v3739, 16
      %v4117 = vrot.slane %v4115, 1
      %v4118 = vor.u32 %v4113, %v4117
      %v4120 = vshll.u32 %v3931, 16
      %v4122 = vrot.slane %v4120, 1
      %v4123 = vsel %vm657, %v4118, %v4122
      %4124 = vrot.lane.b32.xlu0 %v3943, 24
      %v4125 = vpop.permute.xlu0 %4124
      %4126 = vrot.lane.b32.xlu0 %v3955, 24
      %v4127 = vpop.permute.xlu0 %4126
      %4128 = vrot.lane.b32.xlu0 %v3967, 24
      %v4129 = vpop.permute.xlu0 %4128
      %4130 = vrot.lane.b32.xlu0 %v3979, 24
      %v4131 = vpop.permute.xlu0 %4130
      %4132 = vrot.lane.b32.xlu0 %v3991, 24
      %v4133 = vpop.permute.xlu0 %4132
      %4134 = vrot.lane.b32.xlu0 %v4003, 24
      %v4135 = vpop.permute.xlu0 %4134
      %4136 = vrot.lane.b32.xlu0 %v4015, 24
      %v4137 = vpop.permute.xlu0 %4136
      %4138 = vrot.lane.b32.xlu0 %v4027, 24
      %v4139 = vpop.permute.xlu0 %4138
      %4140 = vrot.lane.b32.xlu0 %v4039, 24
      %v4141 = vpop.permute.xlu0 %4140
      %4142 = vrot.lane.b32.xlu0 %v4051, 24
      %v4143 = vpop.permute.xlu0 %4142
      %4144 = vrot.lane.b32.xlu0 %v4063, 24
      %v4145 = vpop.permute.xlu0 %4144
      %4146 = vrot.lane.b32.xlu0 %v4075, 24
      %v4147 = vpop.permute.xlu0 %4146
      %4148 = vrot.lane.b32.xlu0 %v4087, 24
      %v4149 = vpop.permute.xlu0 %4148
      %4150 = vrot.lane.b32.xlu0 %v4099, 24
      %v4151 = vpop.permute.xlu0 %4150
      %4152 = vrot.lane.b32.xlu0 %v4111, 24
      %v4153 = vpop.permute.xlu0 %4152
      %4154 = vrot.lane.b32.xlu0 %v4123, 24
      %v4155 = vpop.permute.xlu0 %4154
      %v4157 = vsel %vm1874, %v946, %v3501
      %v4159 = vsel %vm1874, %v947, %v3503
      %v4161 = vsel %vm1874, %v948, %v3505
      %v4163 = vsel %vm1874, %v949, %v3507
      %v4165 = vsel %vm1874, %v950, %v3509
      %v4167 = vsel %vm1874, %v951, %v3511
      %v4169 = vsel %vm1874, %v952, %v3513
      %v4171 = vsel %vm1874, %v953, %v3515
      %v4173 = vsel %vm1874, %v954, %v3517
      %v4175 = vsel %vm1874, %v955, %v3519
      %v4177 = vsel %vm1874, %v956, %v3521
      %v4179 = vsel %vm1874, %v957, %v3523
      %v4181 = vsel %vm1874, %v958, %v3525
      %v4183 = vsel %vm1874, %v959, %v3527
      %v4185 = vsel %vm1874, %v960, %v3529
      %v4187 = vsel %vm1874, %v961, %v3531
      %v4189 = vsel %vm1907, %v4157, %v3533
      %v4191 = vsel %vm1907, %v4159, %v3535
      %v4193 = vsel %vm1907, %v4161, %v3537
      %v4195 = vsel %vm1907, %v4163, %v3539
      %v4197 = vsel %vm1907, %v4165, %v3541
      %v4199 = vsel %vm1907, %v4167, %v3543
      %v4201 = vsel %vm1907, %v4169, %v3545
      %v4203 = vsel %vm1907, %v4171, %v3547
      %v4205 = vsel %vm1907, %v4173, %v3549
      %v4207 = vsel %vm1907, %v4175, %v3551
      %v4209 = vsel %vm1907, %v4177, %v3553
      %v4211 = vsel %vm1907, %v4179, %v3555
      %v4213 = vsel %vm1907, %v4181, %v3557
      %v4215 = vsel %vm1907, %v4183, %v3559
      %v4217 = vsel %vm1907, %v4185, %v3561
      %v4219 = vsel %vm1907, %v4187, %v3563
      %v4221 = vsel %vm1940, %v4189, %v3565
      %v4223 = vsel %vm1940, %v4191, %v3567
      %v4225 = vsel %vm1940, %v4193, %v3569
      %v4227 = vsel %vm1940, %v4195, %v3571
      %v4229 = vsel %vm1940, %v4197, %v3573
      %v4231 = vsel %vm1940, %v4199, %v3575
      %v4233 = vsel %vm1940, %v4201, %v3577
      %v4235 = vsel %vm1940, %v4203, %v3579
      %v4237 = vsel %vm1940, %v4205, %v3581
      %v4239 = vsel %vm1940, %v4207, %v3583
      %v4241 = vsel %vm1940, %v4209, %v3585
      %v4243 = vsel %vm1940, %v4211, %v3587
      %v4245 = vsel %vm1940, %v4213, %v3589
      %v4247 = vsel %vm1940, %v4215, %v3591
      %v4249 = vsel %vm1940, %v4217, %v3593
      %v4251 = vsel %vm1940, %v4219, %v3595
      %v4253 = vsel %vm1973, %v4221, %v3597
      %v4255 = vsel %vm1973, %v4223, %v3599
      %v4257 = vsel %vm1973, %v4225, %v3601
      %v4259 = vsel %vm1973, %v4227, %v3603
      %v4261 = vsel %vm1973, %v4229, %v3605
      %v4263 = vsel %vm1973, %v4231, %v3607
      %v4265 = vsel %vm1973, %v4233, %v3609
      %v4267 = vsel %vm1973, %v4235, %v3611
      %v4269 = vsel %vm1973, %v4237, %v3613
      %v4271 = vsel %vm1973, %v4239, %v3615
      %v4273 = vsel %vm1973, %v4241, %v3617
      %v4275 = vsel %vm1973, %v4243, %v3619
      %v4277 = vsel %vm1973, %v4245, %v3621
      %v4279 = vsel %vm1973, %v4247, %v3623
      %v4281 = vsel %vm1973, %v4249, %v3625
      %v4283 = vsel %vm1973, %v4251, %v3627
      %v4285 = vsel %vm2006, %v4253, %v3629
      %v4287 = vsel %vm2006, %v4255, %v3631
      %v4289 = vsel %vm2006, %v4257, %v3633
      %v4291 = vsel %vm2006, %v4259, %v3635
      %v4293 = vsel %vm2006, %v4261, %v3637
      %v4295 = vsel %vm2006, %v4263, %v3639
      %v4297 = vsel %vm2006, %v4265, %v3641
      %v4299 = vsel %vm2006, %v4267, %v3643
      %v4301 = vsel %vm2006, %v4269, %v3645
      %v4303 = vsel %vm2006, %v4271, %v3647
      %v4305 = vsel %vm2006, %v4273, %v3649
      %v4307 = vsel %vm2006, %v4275, %v3651
      %v4309 = vsel %vm2006, %v4277, %v3653
      %v4311 = vsel %vm2006, %v4279, %v3655
      %v4313 = vsel %vm2006, %v4281, %v3657
      %v4315 = vsel %vm2006, %v4283, %v3659
      %v4317 = vsel %vm2039, %v4285, %v3741
      %v4319 = vsel %vm2039, %v4287, %v3743
      %v4321 = vsel %vm2039, %v4289, %v3745
      %v4323 = vsel %vm2039, %v4291, %v3747
      %v4325 = vsel %vm2039, %v4293, %v3749
      %v4327 = vsel %vm2039, %v4295, %v3751
      %v4329 = vsel %vm2039, %v4297, %v3753
      %v4331 = vsel %vm2039, %v4299, %v3755
      %v4333 = vsel %vm2039, %v4301, %v3757
      %v4335 = vsel %vm2039, %v4303, %v3759
      %v4337 = vsel %vm2039, %v4305, %v3761
      %v4339 = vsel %vm2039, %v4307, %v3763
      %v4341 = vsel %vm2039, %v4309, %v3765
      %v4343 = vsel %vm2039, %v4311, %v3767
      %v4345 = vsel %vm2039, %v4313, %v3769
      %v4347 = vsel %vm2039, %v4315, %v3771
      %v4349 = vsel %vm2072, %v4317, %v3853
      %v4351 = vsel %vm2072, %v4319, %v3855
      %v4353 = vsel %vm2072, %v4321, %v3857
      %v4355 = vsel %vm2072, %v4323, %v3859
      %v4357 = vsel %vm2072, %v4325, %v3861
      %v4359 = vsel %vm2072, %v4327, %v3863
      %v4361 = vsel %vm2072, %v4329, %v3865
      %v4363 = vsel %vm2072, %v4331, %v3867
      %v4365 = vsel %vm2072, %v4333, %v3869
      %v4367 = vsel %vm2072, %v4335, %v3871
      %v4369 = vsel %vm2072, %v4337, %v3873
      %v4371 = vsel %vm2072, %v4339, %v3875
      %v4373 = vsel %vm2072, %v4341, %v3877
      %v4375 = vsel %vm2072, %v4343, %v3879
      %v4377 = vsel %vm2072, %v4345, %v3881
      %v4379 = vsel %vm2072, %v4347, %v3883
      %v4381 = vsel %vm2105, %v4349, %v4125
      %v4383 = vsel %vm2105, %v4351, %v4127
      %v4385 = vsel %vm2105, %v4353, %v4129
      %v4387 = vsel %vm2105, %v4355, %v4131
      %v4389 = vsel %vm2105, %v4357, %v4133
      %v4391 = vsel %vm2105, %v4359, %v4135
      %v4393 = vsel %vm2105, %v4361, %v4137
      %v4395 = vsel %vm2105, %v4363, %v4139
      %v4397 = vsel %vm2105, %v4365, %v4141
      %v4399 = vsel %vm2105, %v4367, %v4143
      %v4401 = vsel %vm2105, %v4369, %v4145
      %v4403 = vsel %vm2105, %v4371, %v4147
      %v4405 = vsel %vm2105, %v4373, %v4149
      %v4407 = vsel %vm2105, %v4375, %v4151
      %v4409 = vsel %vm2105, %v4377, %v4153
      %v4411 = vsel %vm2105, %v4379, %v4155
      %v4412 = vld [vmem:[%s3451 + $0x8] sm:$0x1]
      %v4413 = vld [vmem:[%s3451 + $0x14] sm:$0x1]
      %v4414 = vld [vmem:[%s3451 + $0x20] sm:$0x1]
      %v4415 = vld [vmem:[%s3451 + $0x2c] sm:$0x1]
      %v4416 = vld [vmem:[%s3451 + $0x38] sm:$0x1]
      %v4417 = vld [vmem:[%s3451 + $0x44] sm:$0x1]
      %v4418 = vld [vmem:[%s3451 + $0x50] sm:$0x1]
      %v4419 = vld [vmem:[%s3451 + $0x5c] sm:$0x1]
      %v4420 = vld [vmem:[%s3451 + $0x68] sm:$0x1]
      %v4421 = vld [vmem:[%s3451 + $0x74] sm:$0x1]
      %v4422 = vld [vmem:[%s3451 + $0x80] sm:$0x1]
      %v4423 = vld [vmem:[%s3451 + $0x8c] sm:$0x1]
      %v4424 = vld [vmem:[%s3451 + $0x98] sm:$0x1]
      %v4425 = vld [vmem:[%s3451 + $0xa4] sm:$0x1]
      %v4426 = vld [vmem:[%s3451 + $0xb0] sm:$0x1]
      %v4427 = vld [vmem:[%s3451 + $0xbc] sm:$0x1]
      %4428 = vrot.lane.b32.xlu0 %v1165, 3
      %v4429 = vpop.permute.xlu0 %4428
      %4430 = vrot.lane.b32.xlu0 %v1177, 3
      %v4431 = vpop.permute.xlu0 %4430
      %4432 = vrot.lane.b32.xlu0 %v1189, 3
      %v4433 = vpop.permute.xlu0 %4432
      %4434 = vrot.lane.b32.xlu0 %v1201, 3
      %v4435 = vpop.permute.xlu0 %4434
      %4436 = vrot.lane.b32.xlu0 %v1213, 3
      %v4437 = vpop.permute.xlu0 %4436
      %4438 = vrot.lane.b32.xlu0 %v1225, 3
      %v4439 = vpop.permute.xlu0 %4438
      %4440 = vrot.lane.b32.xlu0 %v1237, 3
      %v4441 = vpop.permute.xlu0 %4440
      %4442 = vrot.lane.b32.xlu0 %v1249, 3
      %v4443 = vpop.permute.xlu0 %4442
      %4444 = vrot.lane.b32.xlu0 %v1261, 3
      %v4445 = vpop.permute.xlu0 %4444
      %4446 = vrot.lane.b32.xlu0 %v1273, 3
      %v4447 = vpop.permute.xlu0 %4446
      %4448 = vrot.lane.b32.xlu0 %v1285, 3
      %v4449 = vpop.permute.xlu0 %4448
      %4450 = vrot.lane.b32.xlu0 %v1297, 3
      %v4451 = vpop.permute.xlu0 %4450
      %4452 = vrot.lane.b32.xlu0 %v1309, 3
      %v4453 = vpop.permute.xlu0 %4452
      %4454 = vrot.lane.b32.xlu0 %v1321, 3
      %v4455 = vpop.permute.xlu0 %4454
      %4456 = vrot.lane.b32.xlu0 %v1333, 3
      %v4457 = vpop.permute.xlu0 %4456
      %4458 = vrot.lane.b32.xlu0 %v1345, 3
      %v4459 = vpop.permute.xlu0 %4458
      %4460 = vrot.lane.b32.xlu0 %v2613, 6
      %v4461 = vpop.permute.xlu0 %4460
      %4462 = vrot.lane.b32.xlu0 %v2625, 6
      %v4463 = vpop.permute.xlu0 %4462
      %4464 = vrot.lane.b32.xlu0 %v2637, 6
      %v4465 = vpop.permute.xlu0 %4464
      %4466 = vrot.lane.b32.xlu0 %v2649, 6
      %v4467 = vpop.permute.xlu0 %4466
      %4468 = vrot.lane.b32.xlu0 %v2661, 6
      %v4469 = vpop.permute.xlu0 %4468
      %4470 = vrot.lane.b32.xlu0 %v2673, 6
      %v4471 = vpop.permute.xlu0 %4470
      %4472 = vrot.lane.b32.xlu0 %v2685, 6
      %v4473 = vpop.permute.xlu0 %4472
      %4474 = vrot.lane.b32.xlu0 %v2697, 6
      %v4475 = vpop.permute.xlu0 %4474
      %4476 = vrot.lane.b32.xlu0 %v2709, 6
      %v4477 = vpop.permute.xlu0 %4476
      %4478 = vrot.lane.b32.xlu0 %v2721, 6
      %v4479 = vpop.permute.xlu0 %4478
      %4480 = vrot.lane.b32.xlu0 %v2733, 6
      %v4481 = vpop.permute.xlu0 %4480
      %4482 = vrot.lane.b32.xlu0 %v2745, 6
      %v4483 = vpop.permute.xlu0 %4482
      %4484 = vrot.lane.b32.xlu0 %v2757, 6
      %v4485 = vpop.permute.xlu0 %4484
      %4486 = vrot.lane.b32.xlu0 %v2769, 6
      %v4487 = vpop.permute.xlu0 %4486
      %4488 = vrot.lane.b32.xlu0 %v2781, 6
      %v4489 = vpop.permute.xlu0 %4488
      %4490 = vrot.lane.b32.xlu0 %v2793, 6
      %v4491 = vpop.permute.xlu0 %4490
      %4492 = vrot.lane.b32.xlu0 %v1554, 9
      %v4493 = vpop.permute.xlu0 %4492
      %4494 = vrot.lane.b32.xlu0 %v1555, 9
      %v4495 = vpop.permute.xlu0 %4494
      %4496 = vrot.lane.b32.xlu0 %v1556, 9
      %v4497 = vpop.permute.xlu0 %4496
      %4498 = vrot.lane.b32.xlu0 %v1557, 9
      %v4499 = vpop.permute.xlu0 %4498
      %4500 = vrot.lane.b32.xlu0 %v1558, 9
      %v4501 = vpop.permute.xlu0 %4500
      %4502 = vrot.lane.b32.xlu0 %v1559, 9
      %v4503 = vpop.permute.xlu0 %4502
      %4504 = vrot.lane.b32.xlu0 %v1560, 9
      %v4505 = vpop.permute.xlu0 %4504
      %4506 = vrot.lane.b32.xlu0 %v1561, 9
      %v4507 = vpop.permute.xlu0 %4506
      %4508 = vrot.lane.b32.xlu0 %v1562, 9
      %v4509 = vpop.permute.xlu0 %4508
      %4510 = vrot.lane.b32.xlu0 %v1563, 9
      %v4511 = vpop.permute.xlu0 %4510
      %4512 = vrot.lane.b32.xlu0 %v1564, 9
      %v4513 = vpop.permute.xlu0 %4512
      %4514 = vrot.lane.b32.xlu0 %v1565, 9
      %v4515 = vpop.permute.xlu0 %4514
      %4516 = vrot.lane.b32.xlu0 %v1566, 9
      %v4517 = vpop.permute.xlu0 %4516
      %4518 = vrot.lane.b32.xlu0 %v1567, 9
      %v4519 = vpop.permute.xlu0 %4518
      %4520 = vrot.lane.b32.xlu0 %v1568, 9
      %v4521 = vpop.permute.xlu0 %4520
      %4522 = vrot.lane.b32.xlu0 %v1569, 9
      %v4523 = vpop.permute.xlu0 %4522
      %4524 = vrot.lane.b32.xlu0 %v1661, 12
      %v4525 = vpop.permute.xlu0 %4524
      %4526 = vrot.lane.b32.xlu0 %v1673, 12
      %v4527 = vpop.permute.xlu0 %4526
      %4528 = vrot.lane.b32.xlu0 %v1685, 12
      %v4529 = vpop.permute.xlu0 %4528
      %4530 = vrot.lane.b32.xlu0 %v1697, 12
      %v4531 = vpop.permute.xlu0 %4530
      %4532 = vrot.lane.b32.xlu0 %v1709, 12
      %v4533 = vpop.permute.xlu0 %4532
      %4534 = vrot.lane.b32.xlu0 %v1721, 12
      %v4535 = vpop.permute.xlu0 %4534
      %4536 = vrot.lane.b32.xlu0 %v1733, 12
      %v4537 = vpop.permute.xlu0 %4536
      %4538 = vrot.lane.b32.xlu0 %v1745, 12
      %v4539 = vpop.permute.xlu0 %4538
      %4540 = vrot.lane.b32.xlu0 %v1757, 12
      %v4541 = vpop.permute.xlu0 %4540
      %4542 = vrot.lane.b32.xlu0 %v1769, 12
      %v4543 = vpop.permute.xlu0 %4542
      %4544 = vrot.lane.b32.xlu0 %v1781, 12
      %v4545 = vpop.permute.xlu0 %4544
      %4546 = vrot.lane.b32.xlu0 %v1793, 12
      %v4547 = vpop.permute.xlu0 %4546
      %4548 = vrot.lane.b32.xlu0 %v1805, 12
      %v4549 = vpop.permute.xlu0 %4548
      %4550 = vrot.lane.b32.xlu0 %v1817, 12
      %v4551 = vpop.permute.xlu0 %4550
      %4552 = vrot.lane.b32.xlu0 %v1829, 12
      %v4553 = vpop.permute.xlu0 %4552
      %4554 = vrot.lane.b32.xlu0 %v1841, 12
      %v4555 = vpop.permute.xlu0 %4554
      %4556 = vrot.lane.b32.xlu0 %v2949, 15
      %v4557 = vpop.permute.xlu0 %4556
      %4558 = vrot.lane.b32.xlu0 %v2961, 15
      %v4559 = vpop.permute.xlu0 %4558
      %4560 = vrot.lane.b32.xlu0 %v2973, 15
      %v4561 = vpop.permute.xlu0 %4560
      %4562 = vrot.lane.b32.xlu0 %v2985, 15
      %v4563 = vpop.permute.xlu0 %4562
      %4564 = vrot.lane.b32.xlu0 %v2997, 15
      %v4565 = vpop.permute.xlu0 %4564
      %4566 = vrot.lane.b32.xlu0 %v3009, 15
      %v4567 = vpop.permute.xlu0 %4566
      %4568 = vrot.lane.b32.xlu0 %v3021, 15
      %v4569 = vpop.permute.xlu0 %4568
      %4570 = vrot.lane.b32.xlu0 %v3033, 15
      %v4571 = vpop.permute.xlu0 %4570
      %4572 = vrot.lane.b32.xlu0 %v3045, 15
      %v4573 = vpop.permute.xlu0 %4572
      %4574 = vrot.lane.b32.xlu0 %v3057, 15
      %v4575 = vpop.permute.xlu0 %4574
      %4576 = vrot.lane.b32.xlu0 %v3069, 15
      %v4577 = vpop.permute.xlu0 %4576
      %4578 = vrot.lane.b32.xlu0 %v3081, 15
      %v4579 = vpop.permute.xlu0 %4578
      %4580 = vrot.lane.b32.xlu0 %v3093, 15
      %v4581 = vpop.permute.xlu0 %4580
      %4582 = vrot.lane.b32.xlu0 %v3105, 15
      %v4583 = vpop.permute.xlu0 %4582
      %4584 = vrot.lane.b32.xlu0 %v3117, 15
      %v4585 = vpop.permute.xlu0 %4584
      %4586 = vrot.lane.b32.xlu0 %v3129, 15
      %v4587 = vpop.permute.xlu0 %4586
      %4588 = vrot.lane.b32.xlu0 %v3836, 18
      %v4589 = vpop.permute.xlu0 %4588
      %4590 = vrot.lane.b32.xlu0 %v3837, 18
      %v4591 = vpop.permute.xlu0 %4590
      %4592 = vrot.lane.b32.xlu0 %v3838, 18
      %v4593 = vpop.permute.xlu0 %4592
      %4594 = vrot.lane.b32.xlu0 %v3839, 18
      %v4595 = vpop.permute.xlu0 %4594
      %4596 = vrot.lane.b32.xlu0 %v3840, 18
      %v4597 = vpop.permute.xlu0 %4596
      %4598 = vrot.lane.b32.xlu0 %v3841, 18
      %v4599 = vpop.permute.xlu0 %4598
      %4600 = vrot.lane.b32.xlu0 %v3842, 18
      %v4601 = vpop.permute.xlu0 %4600
      %4602 = vrot.lane.b32.xlu0 %v3843, 18
      %v4603 = vpop.permute.xlu0 %4602
      %4604 = vrot.lane.b32.xlu0 %v3844, 18
      %v4605 = vpop.permute.xlu0 %4604
      %4606 = vrot.lane.b32.xlu0 %v3845, 18
      %v4607 = vpop.permute.xlu0 %4606
      %4608 = vrot.lane.b32.xlu0 %v3846, 18
      %v4609 = vpop.permute.xlu0 %4608
      %4610 = vrot.lane.b32.xlu0 %v3847, 18
      %v4611 = vpop.permute.xlu0 %4610
      %4612 = vrot.lane.b32.xlu0 %v3848, 18
      %v4613 = vpop.permute.xlu0 %4612
      %4614 = vrot.lane.b32.xlu0 %v3849, 18
      %v4615 = vpop.permute.xlu0 %4614
      %4616 = vrot.lane.b32.xlu0 %v3850, 18
      %v4617 = vpop.permute.xlu0 %4616
      %4618 = vrot.lane.b32.xlu0 %v3851, 18
      %v4619 = vpop.permute.xlu0 %4618
      %4620 = vrot.lane.b32.xlu0 %v3943, 21
      %v4621 = vpop.permute.xlu0 %4620
      %4622 = vrot.lane.b32.xlu0 %v3955, 21
      %v4623 = vpop.permute.xlu0 %4622
      %4624 = vrot.lane.b32.xlu0 %v3967, 21
      %v4625 = vpop.permute.xlu0 %4624
      %4626 = vrot.lane.b32.xlu0 %v3979, 21
      %v4627 = vpop.permute.xlu0 %4626
      %4628 = vrot.lane.b32.xlu0 %v3991, 21
      %v4629 = vpop.permute.xlu0 %4628
      %4630 = vrot.lane.b32.xlu0 %v4003, 21
      %v4631 = vpop.permute.xlu0 %4630
      %4632 = vrot.lane.b32.xlu0 %v4015, 21
      %v4633 = vpop.permute.xlu0 %4632
      %4634 = vrot.lane.b32.xlu0 %v4027, 21
      %v4635 = vpop.permute.xlu0 %4634
      %4636 = vrot.lane.b32.xlu0 %v4039, 21
      %v4637 = vpop.permute.xlu0 %4636
      %4638 = vrot.lane.b32.xlu0 %v4051, 21
      %v4639 = vpop.permute.xlu0 %4638
      %4640 = vrot.lane.b32.xlu0 %v4063, 21
      %v4641 = vpop.permute.xlu0 %4640
      %4642 = vrot.lane.b32.xlu0 %v4075, 21
      %v4643 = vpop.permute.xlu0 %4642
      %4644 = vrot.lane.b32.xlu0 %v4087, 21
      %v4645 = vpop.permute.xlu0 %4644
      %4646 = vrot.lane.b32.xlu0 %v4099, 21
      %v4647 = vpop.permute.xlu0 %4646
      %4648 = vrot.lane.b32.xlu0 %v4111, 21
      %v4649 = vpop.permute.xlu0 %4648
      %4650 = vrot.lane.b32.xlu0 %v4123, 21
      %v4651 = vpop.permute.xlu0 %4650
      %v4668 = vunpack.c.l.b16 %v4412
      %v4669 = vunpack.c.l.b16 %v4413
      %v4670 = vunpack.c.l.b16 %v4414
      %v4671 = vunpack.c.l.b16 %v4415
      %v4672 = vunpack.c.l.b16 %v4416
      %v4673 = vunpack.c.l.b16 %v4417
      %v4674 = vunpack.c.l.b16 %v4418
      %v4675 = vunpack.c.l.b16 %v4419
      %v4676 = vunpack.c.l.b16 %v4420
      %v4677 = vunpack.c.l.b16 %v4421
      %v4678 = vunpack.c.l.b16 %v4422
      %v4679 = vunpack.c.l.b16 %v4423
      %v4680 = vunpack.c.l.b16 %v4424
      %v4681 = vunpack.c.l.b16 %v4425
      %v4682 = vunpack.c.l.b16 %v4426
      %v4683 = vunpack.c.l.b16 %v4427
      %v4684 = vpack.c.b16 %v4668, %v4668
      %v4685 = vpack.c.b16 %v4669, %v4669
      %v4686 = vpack.c.b16 %v4670, %v4670
      %v4687 = vpack.c.b16 %v4671, %v4671
      %v4688 = vpack.c.b16 %v4672, %v4672
      %v4689 = vpack.c.b16 %v4673, %v4673
      %v4690 = vpack.c.b16 %v4674, %v4674
      %v4691 = vpack.c.b16 %v4675, %v4675
      %v4692 = vpack.c.b16 %v4676, %v4676
      %v4693 = vpack.c.b16 %v4677, %v4677
      %v4694 = vpack.c.b16 %v4678, %v4678
      %v4695 = vpack.c.b16 %v4679, %v4679
      %v4696 = vpack.c.b16 %v4680, %v4680
      %v4697 = vpack.c.b16 %v4681, %v4681
      %v4698 = vpack.c.b16 %v4682, %v4682
      %v4699 = vpack.c.b16 %v4683, %v4683
      %v4701 = vshrl.u32 %v3836, 16
      %v4703 = vshll.u32 %v3836, 16
      %v4705 = vrot.slane %v4703, 1
      %v4706 = vor.u32 %v4701, %v4705
      %v4708 = vshll.u32 %v4684, 16
      %v4710 = vrot.slane %v4708, 1
      %v4711 = vsel %vm657, %v4706, %v4710
      %v4713 = vshrl.u32 %v3837, 16
      %v4715 = vshll.u32 %v3837, 16
      %v4717 = vrot.slane %v4715, 1
      %v4718 = vor.u32 %v4713, %v4717
      %v4720 = vshll.u32 %v4685, 16
      %v4722 = vrot.slane %v4720, 1
      %v4723 = vsel %vm657, %v4718, %v4722
      %v4725 = vshrl.u32 %v3838, 16
      %v4727 = vshll.u32 %v3838, 16
      %v4729 = vrot.slane %v4727, 1
      %v4730 = vor.u32 %v4725, %v4729
      %v4732 = vshll.u32 %v4686, 16
      %v4734 = vrot.slane %v4732, 1
      %v4735 = vsel %vm657, %v4730, %v4734
      %v4737 = vshrl.u32 %v3839, 16
      %v4739 = vshll.u32 %v3839, 16
      %v4741 = vrot.slane %v4739, 1
      %v4742 = vor.u32 %v4737, %v4741
      %v4744 = vshll.u32 %v4687, 16
      %v4746 = vrot.slane %v4744, 1
      %v4747 = vsel %vm657, %v4742, %v4746
      %v4749 = vshrl.u32 %v3840, 16
      %v4751 = vshll.u32 %v3840, 16
      %v4753 = vrot.slane %v4751, 1
      %v4754 = vor.u32 %v4749, %v4753
      %v4756 = vshll.u32 %v4688, 16
      %v4758 = vrot.slane %v4756, 1
      %v4759 = vsel %vm657, %v4754, %v4758
      %v4761 = vshrl.u32 %v3841, 16
      %v4763 = vshll.u32 %v3841, 16
      %v4765 = vrot.slane %v4763, 1
      %v4766 = vor.u32 %v4761, %v4765
      %v4768 = vshll.u32 %v4689, 16
      %v4770 = vrot.slane %v4768, 1
      %v4771 = vsel %vm657, %v4766, %v4770
      %v4773 = vshrl.u32 %v3842, 16
      %v4775 = vshll.u32 %v3842, 16
      %v4777 = vrot.slane %v4775, 1
      %v4778 = vor.u32 %v4773, %v4777
      %v4780 = vshll.u32 %v4690, 16
      %v4782 = vrot.slane %v4780, 1
      %v4783 = vsel %vm657, %v4778, %v4782
      %v4785 = vshrl.u32 %v3843, 16
      %v4787 = vshll.u32 %v3843, 16
      %v4789 = vrot.slane %v4787, 1
      %v4790 = vor.u32 %v4785, %v4789
      %v4792 = vshll.u32 %v4691, 16
      %v4794 = vrot.slane %v4792, 1
      %v4795 = vsel %vm657, %v4790, %v4794
      %v4797 = vshrl.u32 %v3844, 16
      %v4799 = vshll.u32 %v3844, 16
      %v4801 = vrot.slane %v4799, 1
      %v4802 = vor.u32 %v4797, %v4801
      %v4804 = vshll.u32 %v4692, 16
      %v4806 = vrot.slane %v4804, 1
      %v4807 = vsel %vm657, %v4802, %v4806
      %v4809 = vshrl.u32 %v3845, 16
      %v4811 = vshll.u32 %v3845, 16
      %v4813 = vrot.slane %v4811, 1
      %v4814 = vor.u32 %v4809, %v4813
      %v4816 = vshll.u32 %v4693, 16
      %v4818 = vrot.slane %v4816, 1
      %v4819 = vsel %vm657, %v4814, %v4818
      %v4821 = vshrl.u32 %v3846, 16
      %v4823 = vshll.u32 %v3846, 16
      %v4825 = vrot.slane %v4823, 1
      %v4826 = vor.u32 %v4821, %v4825
      %v4828 = vshll.u32 %v4694, 16
      %v4830 = vrot.slane %v4828, 1
      %v4831 = vsel %vm657, %v4826, %v4830
      %v4833 = vshrl.u32 %v3847, 16
      %v4835 = vshll.u32 %v3847, 16
      %v4837 = vrot.slane %v4835, 1
      %v4838 = vor.u32 %v4833, %v4837
      %v4840 = vshll.u32 %v4695, 16
      %v4842 = vrot.slane %v4840, 1
      %v4843 = vsel %vm657, %v4838, %v4842
      %v4845 = vshrl.u32 %v3848, 16
      %v4847 = vshll.u32 %v3848, 16
      %v4849 = vrot.slane %v4847, 1
      %v4850 = vor.u32 %v4845, %v4849
      %v4852 = vshll.u32 %v4696, 16
      %v4854 = vrot.slane %v4852, 1
      %v4855 = vsel %vm657, %v4850, %v4854
      %v4857 = vshrl.u32 %v3849, 16
      %v4859 = vshll.u32 %v3849, 16
      %v4861 = vrot.slane %v4859, 1
      %v4862 = vor.u32 %v4857, %v4861
      %v4864 = vshll.u32 %v4697, 16
      %v4866 = vrot.slane %v4864, 1
      %v4867 = vsel %vm657, %v4862, %v4866
      %v4869 = vshrl.u32 %v3850, 16
      %v4871 = vshll.u32 %v3850, 16
      %v4873 = vrot.slane %v4871, 1
      %v4874 = vor.u32 %v4869, %v4873
      %v4876 = vshll.u32 %v4698, 16
      %v4878 = vrot.slane %v4876, 1
      %v4879 = vsel %vm657, %v4874, %v4878
      %v4881 = vshrl.u32 %v3851, 16
      %v4883 = vshll.u32 %v3851, 16
      %v4885 = vrot.slane %v4883, 1
      %v4886 = vor.u32 %v4881, %v4885
      %v4888 = vshll.u32 %v4699, 16
      %v4890 = vrot.slane %v4888, 1
      %v4891 = vsel %vm657, %v4886, %v4890
      %4892 = vrot.lane.b32.xlu0 %v4711, 24
      %v4893 = vpop.permute.xlu0 %4892
      %4894 = vrot.lane.b32.xlu0 %v4723, 24
      %v4895 = vpop.permute.xlu0 %4894
      %4896 = vrot.lane.b32.xlu0 %v4735, 24
      %v4897 = vpop.permute.xlu0 %4896
      %4898 = vrot.lane.b32.xlu0 %v4747, 24
      %v4899 = vpop.permute.xlu0 %4898
      %4900 = vrot.lane.b32.xlu0 %v4759, 24
      %v4901 = vpop.permute.xlu0 %4900
      %4902 = vrot.lane.b32.xlu0 %v4771, 24
      %v4903 = vpop.permute.xlu0 %4902
      %4904 = vrot.lane.b32.xlu0 %v4783, 24
      %v4905 = vpop.permute.xlu0 %4904
      %4906 = vrot.lane.b32.xlu0 %v4795, 24
      %v4907 = vpop.permute.xlu0 %4906
      %4908 = vrot.lane.b32.xlu0 %v4807, 24
      %v4909 = vpop.permute.xlu0 %4908
      %4910 = vrot.lane.b32.xlu0 %v4819, 24
      %v4911 = vpop.permute.xlu0 %4910
      %4912 = vrot.lane.b32.xlu0 %v4831, 24
      %v4913 = vpop.permute.xlu0 %4912
      %4914 = vrot.lane.b32.xlu0 %v4843, 24
      %v4915 = vpop.permute.xlu0 %4914
      %4916 = vrot.lane.b32.xlu0 %v4855, 24
      %v4917 = vpop.permute.xlu0 %4916
      %4918 = vrot.lane.b32.xlu0 %v4867, 24
      %v4919 = vpop.permute.xlu0 %4918
      %4920 = vrot.lane.b32.xlu0 %v4879, 24
      %v4921 = vpop.permute.xlu0 %4920
      %4922 = vrot.lane.b32.xlu0 %v4891, 24
      %v4923 = vpop.permute.xlu0 %4922
      %v4925 = vsel %vm1874, %v1058, %v4429
      %v4927 = vsel %vm1874, %v1059, %v4431
      %v4929 = vsel %vm1874, %v1060, %v4433
      %v4931 = vsel %vm1874, %v1061, %v4435
      %v4933 = vsel %vm1874, %v1062, %v4437
      %v4935 = vsel %vm1874, %v1063, %v4439
      %v4937 = vsel %vm1874, %v1064, %v4441
      %v4939 = vsel %vm1874, %v1065, %v4443
      %v4941 = vsel %vm1874, %v1066, %v4445
      %v4943 = vsel %vm1874, %v1067, %v4447
      %v4945 = vsel %vm1874, %v1068, %v4449
      %v4947 = vsel %vm1874, %v1069, %v4451
      %v4949 = vsel %vm1874, %v1070, %v4453
      %v4951 = vsel %vm1874, %v1071, %v4455
      %v4953 = vsel %vm1874, %v1072, %v4457
      %v4955 = vsel %vm1874, %v1073, %v4459
      %v4957 = vsel %vm1907, %v4925, %v4461
      %v4959 = vsel %vm1907, %v4927, %v4463
      %v4961 = vsel %vm1907, %v4929, %v4465
      %v4963 = vsel %vm1907, %v4931, %v4467
      %v4965 = vsel %vm1907, %v4933, %v4469
      %v4967 = vsel %vm1907, %v4935, %v4471
      %v4969 = vsel %vm1907, %v4937, %v4473
      %v4971 = vsel %vm1907, %v4939, %v4475
      %v4973 = vsel %vm1907, %v4941, %v4477
      %v4975 = vsel %vm1907, %v4943, %v4479
      %v4977 = vsel %vm1907, %v4945, %v4481
      %v4979 = vsel %vm1907, %v4947, %v4483
      %v4981 = vsel %vm1907, %v4949, %v4485
      %v4983 = vsel %vm1907, %v4951, %v4487
      %v4985 = vsel %vm1907, %v4953, %v4489
      %v4987 = vsel %vm1907, %v4955, %v4491
      %v4989 = vsel %vm1940, %v4957, %v4493
      %v4991 = vsel %vm1940, %v4959, %v4495
      %v4993 = vsel %vm1940, %v4961, %v4497
      %v4995 = vsel %vm1940, %v4963, %v4499
      %v4997 = vsel %vm1940, %v4965, %v4501
      %v4999 = vsel %vm1940, %v4967, %v4503
      %v5001 = vsel %vm1940, %v4969, %v4505
      %v5003 = vsel %vm1940, %v4971, %v4507
      %v5005 = vsel %vm1940, %v4973, %v4509
      %v5007 = vsel %vm1940, %v4975, %v4511
      %v5009 = vsel %vm1940, %v4977, %v4513
      %v5011 = vsel %vm1940, %v4979, %v4515
      %v5013 = vsel %vm1940, %v4981, %v4517
      %v5015 = vsel %vm1940, %v4983, %v4519
      %v5017 = vsel %vm1940, %v4985, %v4521
      %v5019 = vsel %vm1940, %v4987, %v4523
      %v5021 = vsel %vm1973, %v4989, %v4525
      %v5023 = vsel %vm1973, %v4991, %v4527
      %v5025 = vsel %vm1973, %v4993, %v4529
      %v5027 = vsel %vm1973, %v4995, %v4531
      %v5029 = vsel %vm1973, %v4997, %v4533
      %v5031 = vsel %vm1973, %v4999, %v4535
      %v5033 = vsel %vm1973, %v5001, %v4537
      %v5035 = vsel %vm1973, %v5003, %v4539
      %v5037 = vsel %vm1973, %v5005, %v4541
      %v5039 = vsel %vm1973, %v5007, %v4543
      %v5041 = vsel %vm1973, %v5009, %v4545
      %v5043 = vsel %vm1973, %v5011, %v4547
      %v5045 = vsel %vm1973, %v5013, %v4549
      %v5047 = vsel %vm1973, %v5015, %v4551
      %v5049 = vsel %vm1973, %v5017, %v4553
      %v5051 = vsel %vm1973, %v5019, %v4555
      %v5053 = vsel %vm2006, %v5021, %v4557
      %v5055 = vsel %vm2006, %v5023, %v4559
      %v5057 = vsel %vm2006, %v5025, %v4561
      %v5059 = vsel %vm2006, %v5027, %v4563
      %v5061 = vsel %vm2006, %v5029, %v4565
      %v5063 = vsel %vm2006, %v5031, %v4567
      %v5065 = vsel %vm2006, %v5033, %v4569
      %v5067 = vsel %vm2006, %v5035, %v4571
      %v5069 = vsel %vm2006, %v5037, %v4573
      %v5071 = vsel %vm2006, %v5039, %v4575
      %v5073 = vsel %vm2006, %v5041, %v4577
      %v5075 = vsel %vm2006, %v5043, %v4579
      %v5077 = vsel %vm2006, %v5045, %v4581
      %v5079 = vsel %vm2006, %v5047, %v4583
      %v5081 = vsel %vm2006, %v5049, %v4585
      %v5083 = vsel %vm2006, %v5051, %v4587
      %v5085 = vsel %vm2039, %v5053, %v4589
      %v5087 = vsel %vm2039, %v5055, %v4591
      %v5089 = vsel %vm2039, %v5057, %v4593
      %v5091 = vsel %vm2039, %v5059, %v4595
      %v5093 = vsel %vm2039, %v5061, %v4597
      %v5095 = vsel %vm2039, %v5063, %v4599
      %v5097 = vsel %vm2039, %v5065, %v4601
      %v5099 = vsel %vm2039, %v5067, %v4603
      %v5101 = vsel %vm2039, %v5069, %v4605
      %v5103 = vsel %vm2039, %v5071, %v4607
      %v5105 = vsel %vm2039, %v5073, %v4609
      %v5107 = vsel %vm2039, %v5075, %v4611
      %v5109 = vsel %vm2039, %v5077, %v4613
      %v5111 = vsel %vm2039, %v5079, %v4615
      %v5113 = vsel %vm2039, %v5081, %v4617
      %v5115 = vsel %vm2039, %v5083, %v4619
      %v5117 = vsel %vm2072, %v5085, %v4621
      %v5119 = vsel %vm2072, %v5087, %v4623
      %v5121 = vsel %vm2072, %v5089, %v4625
      %v5123 = vsel %vm2072, %v5091, %v4627
      %v5125 = vsel %vm2072, %v5093, %v4629
      %v5127 = vsel %vm2072, %v5095, %v4631
      %v5129 = vsel %vm2072, %v5097, %v4633
      %v5131 = vsel %vm2072, %v5099, %v4635
      %v5133 = vsel %vm2072, %v5101, %v4637
      %v5135 = vsel %vm2072, %v5103, %v4639
      %v5137 = vsel %vm2072, %v5105, %v4641
      %v5139 = vsel %vm2072, %v5107, %v4643
      %v5141 = vsel %vm2072, %v5109, %v4645
      %v5143 = vsel %vm2072, %v5111, %v4647
      %v5145 = vsel %vm2072, %v5113, %v4649
      %v5147 = vsel %vm2072, %v5115, %v4651
      %v5149 = vsel %vm2105, %v5117, %v4893
      %v5151 = vsel %vm2105, %v5119, %v4895
      %v5153 = vsel %vm2105, %v5121, %v4897
      %v5155 = vsel %vm2105, %v5123, %v4899
      %v5157 = vsel %vm2105, %v5125, %v4901
      %v5159 = vsel %vm2105, %v5127, %v4903
      %v5161 = vsel %vm2105, %v5129, %v4905
      %v5163 = vsel %vm2105, %v5131, %v4907
      %v5165 = vsel %vm2105, %v5133, %v4909
      %v5167 = vsel %vm2105, %v5135, %v4911
      %v5169 = vsel %vm2105, %v5137, %v4913
      %v5171 = vsel %vm2105, %v5139, %v4915
      %v5173 = vsel %vm2105, %v5141, %v4917
      %v5175 = vsel %vm2105, %v5143, %v4919
      %v5177 = vsel %vm2105, %v5145, %v4921
      %v5179 = vsel %vm2105, %v5147, %v4923
      %v5180 = vld [vmem:[%s1] sm:$0xf]
      %v5181 = vld [vmem:[%s1 + $0x4] sm:$0xf]
      %v5182 = vld [vmem:[%s1 + $0x8] sm:$0xf]
      %v5183 = vld [vmem:[%s1 + $0xc] sm:$0x3]
      %v5188 = vunpack.c.l.b16 %v5180
      %v5189 = vunpack.c.l.b16 %v5181
      %v5190 = vunpack.c.l.b16 %v5182
      %v5191 = vunpack.c.l.b16 %v5183
      %v5192 = vpack.c.b16 %v5189, %v5188
      %v5193 = vpack.c.b16 %v5191, %v5190
      %vm5195 = vcmask 220160
      %v5196 = vsel %vm5195, %v2107, 0
      %v5198 = vsel %vm5195, %v2109, 0
      %v5200 = vsel %vm5195, %v2111, 0
      %v5202 = vsel %vm5195, %v2113, 0
      %v5204 = vsel %vm5195, %v2115, 0
      %v5206 = vsel %vm5195, %v2117, 0
      %v5208 = vsel %vm5195, %v2119, 0
      %v5210 = vsel %vm5195, %v2121, 0
      %v5212 = vsel %vm5195, %v2123, 0
      %v5214 = vsel %vm5195, %v2125, 0
      %v5216 = vsel %vm5195, %v2127, 0
      %v5218 = vsel %vm5195, %v2129, 0
      %v5220 = vsel %vm5195, %v2131, 0
      %v5222 = vsel %vm5195, %v2133, 0
      %v5224 = vsel %vm5195, %v2135, 0
      %v5226 = vsel %vm5195, %v2137, 0
      %v5228 = vsel %vm5195, %v3387, 0
      %v5230 = vsel %vm5195, %v3389, 0
      %v5232 = vsel %vm5195, %v3391, 0
      %v5234 = vsel %vm5195, %v3393, 0
      %v5236 = vsel %vm5195, %v3395, 0
      %v5238 = vsel %vm5195, %v3397, 0
      %v5240 = vsel %vm5195, %v3399, 0
      %v5242 = vsel %vm5195, %v3401, 0
      %v5244 = vsel %vm5195, %v3403, 0
      %v5246 = vsel %vm5195, %v3405, 0
      %v5248 = vsel %vm5195, %v3407, 0
      %v5250 = vsel %vm5195, %v3409, 0
      %v5252 = vsel %vm5195, %v3411, 0
      %v5254 = vsel %vm5195, %v3413, 0
      %v5256 = vsel %vm5195, %v3415, 0
      %v5258 = vsel %vm5195, %v3417, 0
      %v5260 = vsel %vm5195, %v4381, 0
      %v5262 = vsel %vm5195, %v4383, 0
      %v5264 = vsel %vm5195, %v4385, 0
      %v5266 = vsel %vm5195, %v4387, 0
      %v5268 = vsel %vm5195, %v4389, 0
      %v5270 = vsel %vm5195, %v4391, 0
      %v5272 = vsel %vm5195, %v4393, 0
      %v5274 = vsel %vm5195, %v4395, 0
      %v5276 = vsel %vm5195, %v4397, 0
      %v5278 = vsel %vm5195, %v4399, 0
      %v5280 = vsel %vm5195, %v4401, 0
      %v5282 = vsel %vm5195, %v4403, 0
      %v5284 = vsel %vm5195, %v4405, 0
      %v5286 = vsel %vm5195, %v4407, 0
      %v5288 = vsel %vm5195, %v4409, 0
      %v5290 = vsel %vm5195, %v4411, 0
      %v5292 = vsel %vm5195, %v5149, 0
      %v5294 = vsel %vm5195, %v5151, 0
      %v5296 = vsel %vm5195, %v5153, 0
      %v5298 = vsel %vm5195, %v5155, 0
      %v5300 = vsel %vm5195, %v5157, 0
      %v5302 = vsel %vm5195, %v5159, 0
      %v5304 = vsel %vm5195, %v5161, 0
      %v5306 = vsel %vm5195, %v5163, 0
      %v5308 = vsel %vm5195, %v5165, 0
      %v5310 = vsel %vm5195, %v5167, 0
      %v5312 = vsel %vm5195, %v5169, 0
      %v5314 = vsel %vm5195, %v5171, 0
      %v5316 = vsel %vm5195, %v5173, 0
      %v5318 = vsel %vm5195, %v5175, 0
      %v5320 = vsel %vm5195, %v5177, 0
      %v5322 = vsel %vm5195, %v5179, 0
      %vm5324 = vcmask 1044480
      %vm5325 = vcmask 1045504
      %v5326 = vsel %vm5324, 4294967295, 65535
      %v5327 = vsel %vm5325, %v5326, 0
      %v5329 = vand.u32 %v5193, %v5327
      %5331 = vmatprep.subr.bf16.mxu0 0
      %5332 = vmatpush1.bf16.msra.mxu0 %v5192
      %5333 = vmatprep.subr.bf16.mxu0 0
      %5334 = vmatpush1.bf16.msra.mxu0 %v5329
      %5335 = vmatprep.subr.bf16.mxu0 0
      %5336 = vmatpush1.bf16.msra.mxu0 0
      %5337 = vmatprep.subr.bf16.mxu0 0
      %5338 = vmatpush1.bf16.msra.mxu0 0
      %5339 = vmatprep.subr.bf16.mxu0 0
      %5340 = vmatpush1.bf16.msra.mxu0 0
      %5341 = vmatprep.subr.bf16.mxu0 0
      %5342 = vmatpush1.bf16.msra.mxu0 0
      %5343 = vmatprep.subr.bf16.mxu0 0
      %5344 = vmatpush1.bf16.msra.mxu0 0
      %5345 = vmatprep.subr.bf16.mxu0 0
      %5346 = vmatpush1.bf16.msra.mxu0 0
      %5347 = vmatprep.subr.bf16.mxu0 0
      %5348 = vmatpush1.bf16.msra.mxu0 0
      %5349 = vmatprep.subr.bf16.mxu0 0
      %5350 = vmatpush1.bf16.msra.mxu0 0
      %5351 = vmatprep.subr.bf16.mxu0 0
      %5352 = vmatpush1.bf16.msra.mxu0 0
      %5353 = vmatprep.subr.bf16.mxu0 0
      %5354 = vmatpush1.bf16.msra.mxu0 0
      %5355 = vmatprep.subr.bf16.mxu0 0
      %5356 = vmatpush1.bf16.msra.mxu0 0
      %5357 = vmatprep.subr.bf16.mxu0 0
      %5358 = vmatpush1.bf16.msra.mxu0 0
      %5359 = vmatprep.subr.bf16.mxu0 0
      %5360 = vmatpush1.bf16.msra.mxu0 0
      %5361 = vmatprep.subr.bf16.mxu0 0
      %5362 = vmatpush1.bf16.msra.mxu0 0
      %5363 = vmatprep.mubr.bf16.mxu0 0
      %5364 = vmatmul.mubr.bf16.gmra.mrb[0].mxu0 %v5196
      %v5365 = vpop.f32.mrb[0].mxu0
      %v5366 = vadd.f32 0.0, %v5365
      %v5367 = vpop.f32.mrb[0].mxu0
      %v5368 = vpop.f32.mrb[0].mxu0
      %v5369 = vadd.f32 0.0, %v5368
      %v5370 = vpop.f32.mrb[0].mxu0
      %5371 = vmatprep.mubr.bf16.mxu0 0
      %5372 = vmatmul.mubr.bf16.gmra.mrb[0].mxu0 %v5198
      %v5373 = vpop.f32.mrb[0].mxu0
      %v5374 = vadd.f32 0.0, %v5373
      %v5375 = vpop.f32.mrb[0].mxu0
      %v5376 = vpop.f32.mrb[0].mxu0
      %v5377 = vadd.f32 0.0, %v5376
      %v5378 = vpop.f32.mrb[0].mxu0
      %5379 = vmatprep.mubr.bf16.mxu0 0
      %5380 = vmatmul.mubr.bf16.gmra.mrb[0].mxu0 %v5200
      %v5381 = vpop.f32.mrb[0].mxu0
      %v5382 = vadd.f32 0.0, %v5381
      %v5383 = vpop.f32.mrb[0].mxu0
      %v5384 = vpop.f32.mrb[0].mxu0
      %v5385 = vadd.f32 0.0, %v5384
      %v5386 = vpop.f32.mrb[0].mxu0
      %5387 = vmatprep.mubr.bf16.mxu0 0
      %5388 = vmatmul.mubr.bf16.gmra.mrb[0].mxu0 %v5202
      %v5389 = vpop.f32.mrb[0].mxu0
      %v5390 = vadd.f32 0.0, %v5389
      %v5391 = vpop.f32.mrb[0].mxu0
      %v5392 = vpop.f32.mrb[0].mxu0
      %v5393 = vadd.f32 0.0, %v5392
      %v5394 = vpop.f32.mrb[0].mxu0
      %5395 = vmatprep.mubr.bf16.mxu0 0
      %5396 = vmatmul.mubr.bf16.gmra.mrb[0].mxu0 %v5204
      %v5397 = vpop.f32.mrb[0].mxu0
      %v5398 = vadd.f32 0.0, %v5397
      %v5399 = vpop.f32.mrb[0].mxu0
      %v5400 = vpop.f32.mrb[0].mxu0
      %v5401 = vadd.f32 0.0, %v5400
      %v5402 = vpop.f32.mrb[0].mxu0
      %5403 = vmatprep.mubr.bf16.mxu0 0
      %5404 = vmatmul.mubr.bf16.gmra.mrb[0].mxu0 %v5206
      %v5405 = vpop.f32.mrb[0].mxu0
      %v5406 = vadd.f32 0.0, %v5405
      %v5407 = vpop.f32.mrb[0].mxu0
      %v5408 = vpop.f32.mrb[0].mxu0
      %v5409 = vadd.f32 0.0, %v5408
      %v5410 = vpop.f32.mrb[0].mxu0
      %5411 = vmatprep.mubr.bf16.mxu0 0
      %5412 = vmatmul.mubr.bf16.gmra.mrb[0].mxu0 %v5208
      %v5413 = vpop.f32.mrb[0].mxu0
      %v5414 = vadd.f32 0.0, %v5413
      %v5415 = vpop.f32.mrb[0].mxu0
      %v5416 = vpop.f32.mrb[0].mxu0
      %v5417 = vadd.f32 0.0, %v5416
      %v5418 = vpop.f32.mrb[0].mxu0
      %5419 = vmatprep.mubr.bf16.mxu0 0
      %5420 = vmatmul.mubr.bf16.gmra.mrb[0].mxu0 %v5210
      %v5421 = vpop.f32.mrb[0].mxu0
      %v5422 = vadd.f32 0.0, %v5421
      %v5423 = vpop.f32.mrb[0].mxu0
      %v5424 = vpop.f32.mrb[0].mxu0
      %v5425 = vadd.f32 0.0, %v5424
      %v5426 = vpop.f32.mrb[0].mxu0
      %5427 = vmatprep.mubr.bf16.mxu0 0
      %5428 = vmatmul.mubr.bf16.gmra.mrb[0].mxu0 %v5212
      %v5429 = vpop.f32.mrb[0].mxu0
      %v5430 = vadd.f32 0.0, %v5429
      %v5431 = vpop.f32.mrb[0].mxu0
      %v5432 = vpop.f32.mrb[0].mxu0
      %v5433 = vadd.f32 0.0, %v5432
      %v5434 = vpop.f32.mrb[0].mxu0
      %5435 = vmatprep.mubr.bf16.mxu0 0
      %5436 = vmatmul.mubr.bf16.gmra.mrb[0].mxu0 %v5214
      %v5437 = vpop.f32.mrb[0].mxu0
      %v5438 = vadd.f32 0.0, %v5437
      %v5439 = vpop.f32.mrb[0].mxu0
      %v5440 = vpop.f32.mrb[0].mxu0
      %v5441 = vadd.f32 0.0, %v5440
      %v5442 = vpop.f32.mrb[0].mxu0
      %5443 = vmatprep.mubr.bf16.mxu0 0
      %5444 = vmatmul.mubr.bf16.gmra.mrb[0].mxu0 %v5216
      %v5445 = vpop.f32.mrb[0].mxu0
      %v5446 = vadd.f32 0.0, %v5445
      %v5447 = vpop.f32.mrb[0].mxu0
      %v5448 = vpop.f32.mrb[0].mxu0
      %v5449 = vadd.f32 0.0, %v5448
      %v5450 = vpop.f32.mrb[0].mxu0
      %5451 = vmatprep.mubr.bf16.mxu0 0
      %5452 = vmatmul.mubr.bf16.gmra.mrb[0].mxu0 %v5218
      %v5453 = vpop.f32.mrb[0].mxu0
      %v5454 = vadd.f32 0.0, %v5453
      %v5455 = vpop.f32.mrb[0].mxu0
      %v5456 = vpop.f32.mrb[0].mxu0
      %v5457 = vadd.f32 0.0, %v5456
      %v5458 = vpop.f32.mrb[0].mxu0
      %5459 = vmatprep.mubr.bf16.mxu0 0
      %5460 = vmatmul.mubr.bf16.gmra.mrb[0].mxu0 %v5220
      %v5461 = vpop.f32.mrb[0].mxu0
      %v5462 = vadd.f32 0.0, %v5461
      %v5463 = vpop.f32.mrb[0].mxu0
      %v5464 = vpop.f32.mrb[0].mxu0
      %v5465 = vadd.f32 0.0, %v5464
      %v5466 = vpop.f32.mrb[0].mxu0
      %5467 = vmatprep.mubr.bf16.mxu0 0
      %5468 = vmatmul.mubr.bf16.gmra.mrb[0].mxu0 %v5222
      %v5469 = vpop.f32.mrb[0].mxu0
      %v5470 = vadd.f32 0.0, %v5469
      %v5471 = vpop.f32.mrb[0].mxu0
      %v5472 = vpop.f32.mrb[0].mxu0
      %v5473 = vadd.f32 0.0, %v5472
      %v5474 = vpop.f32.mrb[0].mxu0
      %5475 = vmatprep.mubr.bf16.mxu0 0
      %5476 = vmatmul.mubr.bf16.gmra.mrb[0].mxu0 %v5224
      %v5477 = vpop.f32.mrb[0].mxu0
      %v5478 = vadd.f32 0.0, %v5477
      %v5479 = vpop.f32.mrb[0].mxu0
      %v5480 = vpop.f32.mrb[0].mxu0
      %v5481 = vadd.f32 0.0, %v5480
      %v5482 = vpop.f32.mrb[0].mxu0
      %5483 = vmatprep.mubr.bf16.mxu0 0
      %5484 = vmatmul.mubr.bf16.gmra.mrb[0].mxu0 %v5226
      %v5485 = vpop.f32.mrb[0].mxu0
      %v5486 = vadd.f32 0.0, %v5485
      %v5487 = vpop.f32.mrb[0].mxu0
      %v5488 = vpop.f32.mrb[0].mxu0
      %v5489 = vadd.f32 0.0, %v5488
      %v5490 = vpop.f32.mrb[0].mxu0
      %5491 = vmatprep.mubr.bf16.mxu0 0
      %5492 = vmatmul.mubr.bf16.gmra.mrb[0].mxu0 %v5228
      %v5493 = vpop.f32.mrb[0].mxu0
      %v5494 = vadd.f32 0.0, %v5493
      %v5495 = vpop.f32.mrb[0].mxu0
      %v5496 = vpop.f32.mrb[0].mxu0
      %v5497 = vadd.f32 0.0, %v5496
      %v5498 = vpop.f32.mrb[0].mxu0
      %5499 = vmatprep.mubr.bf16.mxu0 0
      %5500 = vmatmul.mubr.bf16.gmra.mrb[0].mxu0 %v5230
      %v5501 = vpop.f32.mrb[0].mxu0
      %v5502 = vadd.f32 0.0, %v5501
      %v5503 = vpop.f32.mrb[0].mxu0
      %v5504 = vpop.f32.mrb[0].mxu0
      %v5505 = vadd.f32 0.0, %v5504
      %v5506 = vpop.f32.mrb[0].mxu0
      %5507 = vmatprep.mubr.bf16.mxu0 0
      %5508 = vmatmul.mubr.bf16.gmra.mrb[0].mxu0 %v5232
      %v5509 = vpop.f32.mrb[0].mxu0
      %v5510 = vadd.f32 0.0, %v5509
      %v5511 = vpop.f32.mrb[0].mxu0
      %v5512 = vpop.f32.mrb[0].mxu0
      %v5513 = vadd.f32 0.0, %v5512
      %v5514 = vpop.f32.mrb[0].mxu0
      %5515 = vmatprep.mubr.bf16.mxu0 0
      %5516 = vmatmul.mubr.bf16.gmra.mrb[0].mxu0 %v5234
      %v5517 = vpop.f32.mrb[0].mxu0
      %v5518 = vadd.f32 0.0, %v5517
      %v5519 = vpop.f32.mrb[0].mxu0
      %v5520 = vpop.f32.mrb[0].mxu0
      %v5521 = vadd.f32 0.0, %v5520
      %v5522 = vpop.f32.mrb[0].mxu0
      %5523 = vmatprep.mubr.bf16.mxu0 0
      %5524 = vmatmul.mubr.bf16.gmra.mrb[0].mxu0 %v5236
      %v5525 = vpop.f32.mrb[0].mxu0
      %v5526 = vadd.f32 0.0, %v5525
      %v5527 = vpop.f32.mrb[0].mxu0
      %v5528 = vpop.f32.mrb[0].mxu0
      %v5529 = vadd.f32 0.0, %v5528
      %v5530 = vpop.f32.mrb[0].mxu0
      %5531 = vmatprep.mubr.bf16.mxu0 0
      %5532 = vmatmul.mubr.bf16.gmra.mrb[0].mxu0 %v5238
      %v5533 = vpop.f32.mrb[0].mxu0
      %v5534 = vadd.f32 0.0, %v5533
      %v5535 = vpop.f32.mrb[0].mxu0
      %v5536 = vpop.f32.mrb[0].mxu0
      %v5537 = vadd.f32 0.0, %v5536
      %v5538 = vpop.f32.mrb[0].mxu0
      %5539 = vmatprep.mubr.bf16.mxu0 0
      %5540 = vmatmul.mubr.bf16.gmra.mrb[0].mxu0 %v5240
      %v5541 = vpop.f32.mrb[0].mxu0
      %v5542 = vadd.f32 0.0, %v5541
      %v5543 = vpop.f32.mrb[0].mxu0
      %v5544 = vpop.f32.mrb[0].mxu0
      %v5545 = vadd.f32 0.0, %v5544
      %v5546 = vpop.f32.mrb[0].mxu0
      %5547 = vmatprep.mubr.bf16.mxu0 0
      %5548 = vmatmul.mubr.bf16.gmra.mrb[0].mxu0 %v5242
      %v5549 = vpop.f32.mrb[0].mxu0
      %v5550 = vadd.f32 0.0, %v5549
      %v5551 = vpop.f32.mrb[0].mxu0
      %v5552 = vpop.f32.mrb[0].mxu0
      %v5553 = vadd.f32 0.0, %v5552
      %v5554 = vpop.f32.mrb[0].mxu0
      %5555 = vmatprep.mubr.bf16.mxu0 0
      %5556 = vmatmul.mubr.bf16.gmra.mrb[0].mxu0 %v5244
      %v5557 = vpop.f32.mrb[0].mxu0
      %v5558 = vadd.f32 0.0, %v5557
      %v5559 = vpop.f32.mrb[0].mxu0
      %v5560 = vpop.f32.mrb[0].mxu0
      %v5561 = vadd.f32 0.0, %v5560
      %v5562 = vpop.f32.mrb[0].mxu0
      %5563 = vmatprep.mubr.bf16.mxu0 0
      %5564 = vmatmul.mubr.bf16.gmra.mrb[0].mxu0 %v5246
      %v5565 = vpop.f32.mrb[0].mxu0
      %v5566 = vadd.f32 0.0, %v5565
      %v5567 = vpop.f32.mrb[0].mxu0
      %v5568 = vpop.f32.mrb[0].mxu0
      %v5569 = vadd.f32 0.0, %v5568
      %v5570 = vpop.f32.mrb[0].mxu0
      %5571 = vmatprep.mubr.bf16.mxu0 0
      %5572 = vmatmul.mubr.bf16.gmra.mrb[0].mxu0 %v5248
      %v5573 = vpop.f32.mrb[0].mxu0
      %v5574 = vadd.f32 0.0, %v5573
      %v5575 = vpop.f32.mrb[0].mxu0
      %v5576 = vpop.f32.mrb[0].mxu0
      %v5577 = vadd.f32 0.0, %v5576
      %v5578 = vpop.f32.mrb[0].mxu0
      %5579 = vmatprep.mubr.bf16.mxu0 0
      %5580 = vmatmul.mubr.bf16.gmra.mrb[0].mxu0 %v5250
      %v5581 = vpop.f32.mrb[0].mxu0
      %v5582 = vadd.f32 0.0, %v5581
      %v5583 = vpop.f32.mrb[0].mxu0
      %v5584 = vpop.f32.mrb[0].mxu0
      %v5585 = vadd.f32 0.0, %v5584
      %v5586 = vpop.f32.mrb[0].mxu0
      %5587 = vmatprep.mubr.bf16.mxu0 0
      %5588 = vmatmul.mubr.bf16.gmra.mrb[0].mxu0 %v5252
      %v5589 = vpop.f32.mrb[0].mxu0
      %v5590 = vadd.f32 0.0, %v5589
      %v5591 = vpop.f32.mrb[0].mxu0
      %v5592 = vpop.f32.mrb[0].mxu0
      %v5593 = vadd.f32 0.0, %v5592
      %v5594 = vpop.f32.mrb[0].mxu0
      %5595 = vmatprep.mubr.bf16.mxu0 0
      %5596 = vmatmul.mubr.bf16.gmra.mrb[0].mxu0 %v5254
      %v5597 = vpop.f32.mrb[0].mxu0
      %v5598 = vadd.f32 0.0, %v5597
      %v5599 = vpop.f32.mrb[0].mxu0
      %v5600 = vpop.f32.mrb[0].mxu0
      %v5601 = vadd.f32 0.0, %v5600
      %v5602 = vpop.f32.mrb[0].mxu0
      %5603 = vmatprep.mubr.bf16.mxu0 0
      %5604 = vmatmul.mubr.bf16.gmra.mrb[0].mxu0 %v5256
      %v5605 = vpop.f32.mrb[0].mxu0
      %v5606 = vadd.f32 0.0, %v5605
      %v5607 = vpop.f32.mrb[0].mxu0
      %v5608 = vpop.f32.mrb[0].mxu0
      %v5609 = vadd.f32 0.0, %v5608
      %v5610 = vpop.f32.mrb[0].mxu0
      %5611 = vmatprep.mubr.bf16.mxu0 0
      %5612 = vmatmul.mubr.bf16.gmra.mrb[0].mxu0 %v5258
      %v5613 = vpop.f32.mrb[0].mxu0
      %v5614 = vadd.f32 0.0, %v5613
      %v5615 = vpop.f32.mrb[0].mxu0
      %v5616 = vpop.f32.mrb[0].mxu0
      %v5617 = vadd.f32 0.0, %v5616
      %v5618 = vpop.f32.mrb[0].mxu0
      %5619 = vmatprep.mubr.bf16.mxu0 0
      %5620 = vmatmul.mubr.bf16.gmra.mrb[0].mxu0 %v5260
      %v5621 = vpop.f32.mrb[0].mxu0
      %v5622 = vadd.f32 0.0, %v5621
      %v5623 = vpop.f32.mrb[0].mxu0
      %v5624 = vpop.f32.mrb[0].mxu0
      %v5625 = vadd.f32 0.0, %v5624
      %v5626 = vpop.f32.mrb[0].mxu0
      %5627 = vmatprep.mubr.bf16.mxu0 0
      %5628 = vmatmul.mubr.bf16.gmra.mrb[0].mxu0 %v5262
      %v5629 = vpop.f32.mrb[0].mxu0
      %v5630 = vadd.f32 0.0, %v5629
      %v5631 = vpop.f32.mrb[0].mxu0
      %v5632 = vpop.f32.mrb[0].mxu0
      %v5633 = vadd.f32 0.0, %v5632
      %v5634 = vpop.f32.mrb[0].mxu0
      %5635 = vmatprep.mubr.bf16.mxu0 0
      %5636 = vmatmul.mubr.bf16.gmra.mrb[0].mxu0 %v5264
      %v5637 = vpop.f32.mrb[0].mxu0
      %v5638 = vadd.f32 0.0, %v5637
      %v5639 = vpop.f32.mrb[0].mxu0
      %v5640 = vpop.f32.mrb[0].mxu0
      %v5641 = vadd.f32 0.0, %v5640
      %v5642 = vpop.f32.mrb[0].mxu0
      %5643 = vmatprep.mubr.bf16.mxu0 0
      %5644 = vmatmul.mubr.bf16.gmra.mrb[0].mxu0 %v5266
      %v5645 = vpop.f32.mrb[0].mxu0
      %v5646 = vadd.f32 0.0, %v5645
      %v5647 = vpop.f32.mrb[0].mxu0
      %v5648 = vpop.f32.mrb[0].mxu0
      %v5649 = vadd.f32 0.0, %v5648
      %v5650 = vpop.f32.mrb[0].mxu0
      %5651 = vmatprep.mubr.bf16.mxu0 0
      %5652 = vmatmul.mubr.bf16.gmra.mrb[0].mxu0 %v5268
      %v5653 = vpop.f32.mrb[0].mxu0
      %v5654 = vadd.f32 0.0, %v5653
      %v5655 = vpop.f32.mrb[0].mxu0
      %v5656 = vpop.f32.mrb[0].mxu0
      %v5657 = vadd.f32 0.0, %v5656
      %v5658 = vpop.f32.mrb[0].mxu0
      %5659 = vmatprep.mubr.bf16.mxu0 0
      %5660 = vmatmul.mubr.bf16.gmra.mrb[0].mxu0 %v5270
      %v5661 = vpop.f32.mrb[0].mxu0
      %v5662 = vadd.f32 0.0, %v5661
      %v5663 = vpop.f32.mrb[0].mxu0
      %v5664 = vpop.f32.mrb[0].mxu0
      %v5665 = vadd.f32 0.0, %v5664
      %v5666 = vpop.f32.mrb[0].mxu0
      %5667 = vmatprep.mubr.bf16.mxu0 0
      %5668 = vmatmul.mubr.bf16.gmra.mrb[0].mxu0 %v5272
      %v5669 = vpop.f32.mrb[0].mxu0
      %v5670 = vadd.f32 0.0, %v5669
      %v5671 = vpop.f32.mrb[0].mxu0
      %v5672 = vpop.f32.mrb[0].mxu0
      %v5673 = vadd.f32 0.0, %v5672
      %v5674 = vpop.f32.mrb[0].mxu0
      %5675 = vmatprep.mubr.bf16.mxu0 0
      %5676 = vmatmul.mubr.bf16.gmra.mrb[0].mxu0 %v5274
      %v5677 = vpop.f32.mrb[0].mxu0
      %v5678 = vadd.f32 0.0, %v5677
      %v5679 = vpop.f32.mrb[0].mxu0
      %v5680 = vpop.f32.mrb[0].mxu0
      %v5681 = vadd.f32 0.0, %v5680
      %v5682 = vpop.f32.mrb[0].mxu0
      %5683 = vmatprep.mubr.bf16.mxu0 0
      %5684 = vmatmul.mubr.bf16.gmra.mrb[0].mxu0 %v5276
      %v5685 = vpop.f32.mrb[0].mxu0
      %v5686 = vadd.f32 0.0, %v5685
      %v5687 = vpop.f32.mrb[0].mxu0
      %v5688 = vpop.f32.mrb[0].mxu0
      %v5689 = vadd.f32 0.0, %v5688
      %v5690 = vpop.f32.mrb[0].mxu0
      %5691 = vmatprep.mubr.bf16.mxu0 0
      %5692 = vmatmul.mubr.bf16.gmra.mrb[0].mxu0 %v5278
      %v5693 = vpop.f32.mrb[0].mxu0
      %v5694 = vadd.f32 0.0, %v5693
      %v5695 = vpop.f32.mrb[0].mxu0
      %v5696 = vpop.f32.mrb[0].mxu0
      %v5697 = vadd.f32 0.0, %v5696
      %v5698 = vpop.f32.mrb[0].mxu0
      %5699 = vmatprep.mubr.bf16.mxu0 0
      %5700 = vmatmul.mubr.bf16.gmra.mrb[0].mxu0 %v5280
      %v5701 = vpop.f32.mrb[0].mxu0
      %v5702 = vadd.f32 0.0, %v5701
      %v5703 = vpop.f32.mrb[0].mxu0
      %v5704 = vpop.f32.mrb[0].mxu0
      %v5705 = vadd.f32 0.0, %v5704
      %v5706 = vpop.f32.mrb[0].mxu0
      %5707 = vmatprep.mubr.bf16.mxu0 0
      %5708 = vmatmul.mubr.bf16.gmra.mrb[0].mxu0 %v5282
      %v5709 = vpop.f32.mrb[0].mxu0
      %v5710 = vadd.f32 0.0, %v5709
      %v5711 = vpop.f32.mrb[0].mxu0
      %v5712 = vpop.f32.mrb[0].mxu0
      %v5713 = vadd.f32 0.0, %v5712
      %v5714 = vpop.f32.mrb[0].mxu0
      %5715 = vmatprep.mubr.bf16.mxu0 0
      %5716 = vmatmul.mubr.bf16.gmra.mrb[0].mxu0 %v5284
      %v5717 = vpop.f32.mrb[0].mxu0
      %v5718 = vadd.f32 0.0, %v5717
      %v5719 = vpop.f32.mrb[0].mxu0
      %v5720 = vpop.f32.mrb[0].mxu0
      %v5721 = vadd.f32 0.0, %v5720
      %v5722 = vpop.f32.mrb[0].mxu0
      %5723 = vmatprep.mubr.bf16.mxu0 0
      %5724 = vmatmul.mubr.bf16.gmra.mrb[0].mxu0 %v5286
      %v5725 = vpop.f32.mrb[0].mxu0
      %v5726 = vadd.f32 0.0, %v5725
      %v5727 = vpop.f32.mrb[0].mxu0
      %v5728 = vpop.f32.mrb[0].mxu0
      %v5729 = vadd.f32 0.0, %v5728
      %v5730 = vpop.f32.mrb[0].mxu0
      %5731 = vmatprep.mubr.bf16.mxu0 0
      %5732 = vmatmul.mubr.bf16.gmra.mrb[0].mxu0 %v5288
      %v5733 = vpop.f32.mrb[0].mxu0
      %v5734 = vadd.f32 0.0, %v5733
      %v5735 = vpop.f32.mrb[0].mxu0
      %v5736 = vpop.f32.mrb[0].mxu0
      %v5737 = vadd.f32 0.0, %v5736
      %v5738 = vpop.f32.mrb[0].mxu0
      %5739 = vmatprep.mubr.bf16.mxu0 0
      %5740 = vmatmul.mubr.bf16.gmra.mrb[0].mxu0 %v5290
      %v5741 = vpop.f32.mrb[0].mxu0
      %v5742 = vadd.f32 0.0, %v5741
      %v5743 = vpop.f32.mrb[0].mxu0
      %v5744 = vpop.f32.mrb[0].mxu0
      %v5745 = vadd.f32 0.0, %v5744
      %v5746 = vpop.f32.mrb[0].mxu0
      %5747 = vmatprep.mubr.bf16.mxu0 0
      %5748 = vmatmul.mubr.bf16.gmra.mrb[0].mxu0 %v5292
      %v5749 = vpop.f32.mrb[0].mxu0
      %v5750 = vadd.f32 0.0, %v5749
      %v5751 = vpop.f32.mrb[0].mxu0
      %v5752 = vpop.f32.mrb[0].mxu0
      %v5753 = vadd.f32 0.0, %v5752
      %v5754 = vpop.f32.mrb[0].mxu0
      %5755 = vmatprep.mubr.bf16.mxu0 0
      %5756 = vmatmul.mubr.bf16.gmra.mrb[0].mxu0 %v5294
      %v5757 = vpop.f32.mrb[0].mxu0
      %v5758 = vadd.f32 0.0, %v5757
      %v5759 = vpop.f32.mrb[0].mxu0
      %v5760 = vpop.f32.mrb[0].mxu0
      %v5761 = vadd.f32 0.0, %v5760
      %v5762 = vpop.f32.mrb[0].mxu0
      %5763 = vmatprep.mubr.bf16.mxu0 0
      %5764 = vmatmul.mubr.bf16.gmra.mrb[0].mxu0 %v5296
      %v5765 = vpop.f32.mrb[0].mxu0
      %v5766 = vadd.f32 0.0, %v5765
      %v5767 = vpop.f32.mrb[0].mxu0
      %v5768 = vpop.f32.mrb[0].mxu0
      %v5769 = vadd.f32 0.0, %v5768
      %v5770 = vpop.f32.mrb[0].mxu0
      %5771 = vmatprep.mubr.bf16.mxu0 0
      %5772 = vmatmul.mubr.bf16.gmra.mrb[0].mxu0 %v5298
      %v5773 = vpop.f32.mrb[0].mxu0
      %v5774 = vadd.f32 0.0, %v5773
      %v5775 = vpop.f32.mrb[0].mxu0
      %v5776 = vpop.f32.mrb[0].mxu0
      %v5777 = vadd.f32 0.0, %v5776
      %v5778 = vpop.f32.mrb[0].mxu0
      %5779 = vmatprep.mubr.bf16.mxu0 0
      %5780 = vmatmul.mubr.bf16.gmra.mrb[0].mxu0 %v5300
      %v5781 = vpop.f32.mrb[0].mxu0
      %v5782 = vadd.f32 0.0, %v5781
      %v5783 = vpop.f32.mrb[0].mxu0
      %v5784 = vpop.f32.mrb[0].mxu0
      %v5785 = vadd.f32 0.0, %v5784
      %v5786 = vpop.f32.mrb[0].mxu0
      %5787 = vmatprep.mubr.bf16.mxu0 0
      %5788 = vmatmul.mubr.bf16.gmra.mrb[0].mxu0 %v5302
      %v5789 = vpop.f32.mrb[0].mxu0
      %v5790 = vadd.f32 0.0, %v5789
      %v5791 = vpop.f32.mrb[0].mxu0
      %v5792 = vpop.f32.mrb[0].mxu0
      %v5793 = vadd.f32 0.0, %v5792
      %v5794 = vpop.f32.mrb[0].mxu0
      %5795 = vmatprep.mubr.bf16.mxu0 0
      %5796 = vmatmul.mubr.bf16.gmra.mrb[0].mxu0 %v5304
      %v5797 = vpop.f32.mrb[0].mxu0
      %v5798 = vadd.f32 0.0, %v5797
      %v5799 = vpop.f32.mrb[0].mxu0
      %v5800 = vpop.f32.mrb[0].mxu0
      %v5801 = vadd.f32 0.0, %v5800
      %v5802 = vpop.f32.mrb[0].mxu0
      %5803 = vmatprep.mubr.bf16.mxu0 0
      %5804 = vmatmul.mubr.bf16.gmra.mrb[0].mxu0 %v5306
      %v5805 = vpop.f32.mrb[0].mxu0
      %v5806 = vadd.f32 0.0, %v5805
      %v5807 = vpop.f32.mrb[0].mxu0
      %v5808 = vpop.f32.mrb[0].mxu0
      %v5809 = vadd.f32 0.0, %v5808
      %v5810 = vpop.f32.mrb[0].mxu0
      %5811 = vmatprep.mubr.bf16.mxu0 0
      %5812 = vmatmul.mubr.bf16.gmra.mrb[0].mxu0 %v5308
      %v5813 = vpop.f32.mrb[0].mxu0
      %v5814 = vadd.f32 0.0, %v5813
      %v5815 = vpop.f32.mrb[0].mxu0
      %v5816 = vpop.f32.mrb[0].mxu0
      %v5817 = vadd.f32 0.0, %v5816
      %v5818 = vpop.f32.mrb[0].mxu0
      %5819 = vmatprep.mubr.bf16.mxu0 0
      %5820 = vmatmul.mubr.bf16.gmra.mrb[0].mxu0 %v5310
      %v5821 = vpop.f32.mrb[0].mxu0
      %v5822 = vadd.f32 0.0, %v5821
      %v5823 = vpop.f32.mrb[0].mxu0
      %v5824 = vpop.f32.mrb[0].mxu0
      %v5825 = vadd.f32 0.0, %v5824
      %v5826 = vpop.f32.mrb[0].mxu0
      %5827 = vmatprep.mubr.bf16.mxu0 0
      %5828 = vmatmul.mubr.bf16.gmra.mrb[0].mxu0 %v5312
      %v5829 = vpop.f32.mrb[0].mxu0
      %v5830 = vadd.f32 0.0, %v5829
      %v5831 = vpop.f32.mrb[0].mxu0
      %v5832 = vpop.f32.mrb[0].mxu0
      %v5833 = vadd.f32 0.0, %v5832
      %v5834 = vpop.f32.mrb[0].mxu0
      %5835 = vmatprep.mubr.bf16.mxu0 0
      %5836 = vmatmul.mubr.bf16.gmra.mrb[0].mxu0 %v5314
      %v5837 = vpop.f32.mrb[0].mxu0
      %v5838 = vadd.f32 0.0, %v5837
      %v5839 = vpop.f32.mrb[0].mxu0
      %v5840 = vpop.f32.mrb[0].mxu0
      %v5841 = vadd.f32 0.0, %v5840
      %v5842 = vpop.f32.mrb[0].mxu0
      %5843 = vmatprep.mubr.bf16.mxu0 0
      %5844 = vmatmul.mubr.bf16.gmra.mrb[0].mxu0 %v5316
      %v5845 = vpop.f32.mrb[0].mxu0
      %v5846 = vadd.f32 0.0, %v5845
      %v5847 = vpop.f32.mrb[0].mxu0
      %v5848 = vpop.f32.mrb[0].mxu0
      %v5849 = vadd.f32 0.0, %v5848
      %v5850 = vpop.f32.mrb[0].mxu0
      %5851 = vmatprep.mubr.bf16.mxu0 0
      %5852 = vmatmul.mubr.bf16.gmra.mrb[0].mxu0 %v5318
      %v5853 = vpop.f32.mrb[0].mxu0
      %v5854 = vadd.f32 0.0, %v5853
      %v5855 = vpop.f32.mrb[0].mxu0
      %v5856 = vpop.f32.mrb[0].mxu0
      %v5857 = vadd.f32 0.0, %v5856
      %v5858 = vpop.f32.mrb[0].mxu0
      %5859 = vmatprep.mubr.bf16.mxu0 0
      %5860 = vmatmul.mubr.bf16.gmra.mrb[0].mxu0 %v5320
      %v5861 = vpop.f32.mrb[0].mxu0
      %v5862 = vadd.f32 0.0, %v5861
      %v5863 = vpop.f32.mrb[0].mxu0
      %v5864 = vpop.f32.mrb[0].mxu0
      %v5865 = vadd.f32 0.0, %v5864
      %v5866 = vpop.f32.mrb[0].mxu0
      %5867 = vmatprep.mubr.bf16.mxu0 0
      %5868 = vmatmul.mubr.bf16.gmra.mrb[0].mxu0 %v5322
      %v5869 = vpop.f32.mrb[0].mxu0
      %v5870 = vadd.f32 0.0, %v5869
      %v5871 = vpop.f32.mrb[0].mxu0
      %v5872 = vpop.f32.mrb[0].mxu0
      %v5873 = vadd.f32 0.0, %v5872
      %v5874 = vpop.f32.mrb[0].mxu0
      %5875 = vdwg.mxu0
      %v5876 = vmax.f32 %v5366, %v5494
      %v5877 = vmax.f32 %v5369, %v5497
      %v5878 = vmax.f32 %v5374, %v5502
      %v5879 = vmax.f32 %v5377, %v5505
      %v5880 = vmax.f32 %v5382, %v5510
      %v5881 = vmax.f32 %v5385, %v5513
      %v5882 = vmax.f32 %v5390, %v5518
      %v5883 = vmax.f32 %v5393, %v5521
      %v5884 = vmax.f32 %v5398, %v5526
      %v5885 = vmax.f32 %v5401, %v5529
      %v5886 = vmax.f32 %v5406, %v5534
      %v5887 = vmax.f32 %v5409, %v5537
      %v5888 = vmax.f32 %v5414, %v5542
      %v5889 = vmax.f32 %v5417, %v5545
      %v5890 = vmax.f32 %v5422, %v5550
      %v5891 = vmax.f32 %v5425, %v5553
      %v5892 = vmax.f32 %v5430, %v5558
      %v5893 = vmax.f32 %v5433, %v5561
      %v5894 = vmax.f32 %v5438, %v5566
      %v5895 = vmax.f32 %v5441, %v5569
      %v5896 = vmax.f32 %v5446, %v5574
      %v5897 = vmax.f32 %v5449, %v5577
      %v5898 = vmax.f32 %v5454, %v5582
      %v5899 = vmax.f32 %v5457, %v5585
      %v5900 = vmax.f32 %v5462, %v5590
      %v5901 = vmax.f32 %v5465, %v5593
      %v5902 = vmax.f32 %v5470, %v5598
      %v5903 = vmax.f32 %v5473, %v5601
      %v5904 = vmax.f32 %v5478, %v5606
      %v5905 = vmax.f32 %v5481, %v5609
      %v5906 = vmax.f32 %v5486, %v5614
      %v5907 = vmax.f32 %v5489, %v5617
      %v5908 = vmax.f32 %v5622, %v5750
      %v5909 = vmax.f32 %v5625, %v5753
      %v5910 = vmax.f32 %v5630, %v5758
      %v5911 = vmax.f32 %v5633, %v5761
      %v5912 = vmax.f32 %v5638, %v5766
      %v5913 = vmax.f32 %v5641, %v5769
      %v5914 = vmax.f32 %v5646, %v5774
      %v5915 = vmax.f32 %v5649, %v5777
      %v5916 = vmax.f32 %v5654, %v5782
      %v5917 = vmax.f32 %v5657, %v5785
      %v5918 = vmax.f32 %v5662, %v5790
      %v5919 = vmax.f32 %v5665, %v5793
      %v5920 = vmax.f32 %v5670, %v5798
      %v5921 = vmax.f32 %v5673, %v5801
      %v5922 = vmax.f32 %v5678, %v5806
      %v5923 = vmax.f32 %v5681, %v5809
      %v5924 = vmax.f32 %v5686, %v5814
      %v5925 = vmax.f32 %v5689, %v5817
      %v5926 = vmax.f32 %v5694, %v5822
      %v5927 = vmax.f32 %v5697, %v5825
      %v5928 = vmax.f32 %v5702, %v5830
      %v5929 = vmax.f32 %v5705, %v5833
      %v5930 = vmax.f32 %v5710, %v5838
      %v5931 = vmax.f32 %v5713, %v5841
      %v5932 = vmax.f32 %v5718, %v5846
      %v5933 = vmax.f32 %v5721, %v5849
      %v5934 = vmax.f32 %v5726, %v5854
      %v5935 = vmax.f32 %v5729, %v5857
      %v5936 = vmax.f32 %v5734, %v5862
      %v5937 = vmax.f32 %v5737, %v5865
      %v5938 = vmax.f32 %v5742, %v5870
      %v5939 = vmax.f32 %v5745, %v5873
      %v5940 = vmax.f32 %v5876, %v5908
      %v5941 = vmax.f32 %v5877, %v5909
      %v5942 = vmax.f32 %v5878, %v5910
      %v5943 = vmax.f32 %v5879, %v5911
      %v5944 = vmax.f32 %v5880, %v5912
      %v5945 = vmax.f32 %v5881, %v5913
      %v5946 = vmax.f32 %v5882, %v5914
      %v5947 = vmax.f32 %v5883, %v5915
      %v5948 = vmax.f32 %v5884, %v5916
      %v5949 = vmax.f32 %v5885, %v5917
      %v5950 = vmax.f32 %v5886, %v5918
      %v5951 = vmax.f32 %v5887, %v5919
      %v5952 = vmax.f32 %v5888, %v5920
      %v5953 = vmax.f32 %v5889, %v5921
      %v5954 = vmax.f32 %v5890, %v5922
      %v5955 = vmax.f32 %v5891, %v5923
      %v5956 = vmax.f32 %v5892, %v5924
      %v5957 = vmax.f32 %v5893, %v5925
      %v5958 = vmax.f32 %v5894, %v5926
      %v5959 = vmax.f32 %v5895, %v5927
      %v5960 = vmax.f32 %v5896, %v5928
      %v5961 = vmax.f32 %v5897, %v5929
      %v5962 = vmax.f32 %v5898, %v5930
      %v5963 = vmax.f32 %v5899, %v5931
      %v5964 = vmax.f32 %v5900, %v5932
      %v5965 = vmax.f32 %v5901, %v5933
      %v5966 = vmax.f32 %v5902, %v5934
      %v5967 = vmax.f32 %v5903, %v5935
      %v5968 = vmax.f32 %v5904, %v5936
      %v5969 = vmax.f32 %v5905, %v5937
      %v5970 = vmax.f32 %v5906, %v5938
      %v5971 = vmax.f32 %v5907, %v5939
      %v5972 = vld [vmem:[%s2] sm:$0x1]
      %v5974 = vlaneseq
      %v5975 = vshrl.u32 %v5974, 7
      %v5976 = vsub.s32 0, %v5975
      %v5977 = vrot.slane %v5972, %v5976
      %v5979 = vadd.f32 %v5940, %v5977
      %v5980 = vadd.f32 %v5941, %v5977
      %v5981 = vadd.f32 %v5942, %v5977
      %v5982 = vadd.f32 %v5943, %v5977
      %v5983 = vadd.f32 %v5944, %v5977
      %v5984 = vadd.f32 %v5945, %v5977
      %v5985 = vadd.f32 %v5946, %v5977
      %v5986 = vadd.f32 %v5947, %v5977
      %v5987 = vadd.f32 %v5948, %v5977
      %v5988 = vadd.f32 %v5949, %v5977
      %v5989 = vadd.f32 %v5950, %v5977
      %v5990 = vadd.f32 %v5951, %v5977
      %v5991 = vadd.f32 %v5952, %v5977
      %v5992 = vadd.f32 %v5953, %v5977
      %v5993 = vadd.f32 %v5954, %v5977
      %v5994 = vadd.f32 %v5955, %v5977
      %v5995 = vadd.f32 %v5956, %v5977
      %v5996 = vadd.f32 %v5957, %v5977
      %v5997 = vadd.f32 %v5958, %v5977
      %v5998 = vadd.f32 %v5959, %v5977
      %v5999 = vadd.f32 %v5960, %v5977
      %v6000 = vadd.f32 %v5961, %v5977
      %v6001 = vadd.f32 %v5962, %v5977
      %v6002 = vadd.f32 %v5963, %v5977
      %v6003 = vadd.f32 %v5964, %v5977
      %v6004 = vadd.f32 %v5965, %v5977
      %v6005 = vadd.f32 %v5966, %v5977
      %v6006 = vadd.f32 %v5967, %v5977
      %v6007 = vadd.f32 %v5968, %v5977
      %v6008 = vadd.f32 %v5969, %v5977
      %v6009 = vadd.f32 %v5970, %v5977
      %v6010 = vadd.f32 %v5971, %v5977
      %v6011 = vmax.f32 %v5979, 0.0
      %v6012 = vmax.f32 %v5980, 0.0
      %v6013 = vmax.f32 %v5981, 0.0
      %v6014 = vmax.f32 %v5982, 0.0
      %v6015 = vmax.f32 %v5983, 0.0
      %v6016 = vmax.f32 %v5984, 0.0
      %v6017 = vmax.f32 %v5985, 0.0
      %v6018 = vmax.f32 %v5986, 0.0
      %v6019 = vmax.f32 %v5987, 0.0
      %v6020 = vmax.f32 %v5988, 0.0
      %v6021 = vmax.f32 %v5989, 0.0
      %v6022 = vmax.f32 %v5990, 0.0
      %v6023 = vmax.f32 %v5991, 0.0
      %v6024 = vmax.f32 %v5992, 0.0
      %v6025 = vmax.f32 %v5993, 0.0
      %v6026 = vmax.f32 %v5994, 0.0
      %v6027 = vmax.f32 %v5995, 0.0
      %v6028 = vmax.f32 %v5996, 0.0
      %v6029 = vmax.f32 %v5997, 0.0
      %v6030 = vmax.f32 %v5998, 0.0
      %v6031 = vmax.f32 %v5999, 0.0
      %v6032 = vmax.f32 %v6000, 0.0
      %v6033 = vmax.f32 %v6001, 0.0
      %v6034 = vmax.f32 %v6002, 0.0
      %v6035 = vmax.f32 %v6003, 0.0
      %v6036 = vmax.f32 %v6004, 0.0
      %v6037 = vmax.f32 %v6005, 0.0
      %v6038 = vmax.f32 %v6006, 0.0
      %v6039 = vmax.f32 %v6007, 0.0
      %v6040 = vmax.f32 %v6008, 0.0
      %v6041 = vmax.f32 %v6009, 0.0
      %v6042 = vmax.f32 %v6010, 0.0
      %v6043 = vpack.c.bf16 %v6012, %v6011
      %v6044 = vpack.c.bf16 %v6014, %v6013
      %v6045 = vpack.c.bf16 %v6016, %v6015
      %v6046 = vpack.c.bf16 %v6018, %v6017
      %v6047 = vpack.c.bf16 %v6020, %v6019
      %v6048 = vpack.c.bf16 %v6022, %v6021
      %v6049 = vpack.c.bf16 %v6024, %v6023
      %v6050 = vpack.c.bf16 %v6026, %v6025
      %v6051 = vpack.c.bf16 %v6028, %v6027
      %v6052 = vpack.c.bf16 %v6030, %v6029
      %v6053 = vpack.c.bf16 %v6032, %v6031
      %v6054 = vpack.c.bf16 %v6034, %v6033
      %v6055 = vpack.c.bf16 %v6036, %v6035
      %v6056 = vpack.c.bf16 %v6038, %v6037
      %v6057 = vpack.c.bf16 %v6040, %v6039
      %v6058 = vpack.c.bf16 %v6042, %v6041
      %v6075 = vunpack.c.l.b16 %v6043
      %v6076 = vunpack.c.h.b16 %v6043
      %v6077 = vunpack.c.l.b16 %v6044
      %v6078 = vunpack.c.h.b16 %v6044
      %v6079 = vunpack.c.l.b16 %v6045
      %v6080 = vunpack.c.h.b16 %v6045
      %v6081 = vunpack.c.l.b16 %v6046
      %v6082 = vunpack.c.h.b16 %v6046
      %v6083 = vunpack.c.l.b16 %v6047
      %v6084 = vunpack.c.h.b16 %v6047
      %v6085 = vunpack.c.l.b16 %v6048
      %v6086 = vunpack.c.h.b16 %v6048
      %v6087 = vunpack.c.l.b16 %v6049
      %v6088 = vunpack.c.h.b16 %v6049
      %v6089 = vunpack.c.l.b16 %v6050
      %v6090 = vunpack.c.h.b16 %v6050
      %v6091 = vunpack.c.l.b16 %v6051
      %v6092 = vunpack.c.h.b16 %v6051
      %v6093 = vunpack.c.l.b16 %v6052
      %v6094 = vunpack.c.h.b16 %v6052
      %v6095 = vunpack.c.l.b16 %v6053
      %v6096 = vunpack.c.h.b16 %v6053
      %v6097 = vunpack.c.l.b16 %v6054
      %v6098 = vunpack.c.h.b16 %v6054
      %v6099 = vunpack.c.l.b16 %v6055
      %v6100 = vunpack.c.h.b16 %v6055
      %v6101 = vunpack.c.l.b16 %v6056
      %v6102 = vunpack.c.h.b16 %v6056
      %v6103 = vunpack.c.l.b16 %v6057
      %v6104 = vunpack.c.h.b16 %v6057
      %v6105 = vunpack.c.l.b16 %v6058
      %v6106 = vunpack.c.h.b16 %v6058
      %v6107 = vpack.c.b16 %v6075, %v6075
      %v6108 = vpack.c.b16 %v6076, %v6076
      %v6109 = vpack.c.b16 %v6077, %v6077
      %v6110 = vpack.c.b16 %v6078, %v6078
      %v6111 = vpack.c.b16 %v6079, %v6079
      %v6112 = vpack.c.b16 %v6080, %v6080
      %v6113 = vpack.c.b16 %v6081, %v6081
      %v6114 = vpack.c.b16 %v6082, %v6082
      %v6115 = vpack.c.b16 %v6083, %v6083
      %v6116 = vpack.c.b16 %v6084, %v6084
      %v6117 = vpack.c.b16 %v6085, %v6085
      %v6118 = vpack.c.b16 %v6086, %v6086
      %v6119 = vpack.c.b16 %v6087, %v6087
      %v6120 = vpack.c.b16 %v6088, %v6088
      %v6121 = vpack.c.b16 %v6089, %v6089
      %v6122 = vpack.c.b16 %v6090, %v6090
      %v6123 = vpack.c.b16 %v6091, %v6091
      %v6124 = vpack.c.b16 %v6092, %v6092
      %v6125 = vpack.c.b16 %v6093, %v6093
      %v6126 = vpack.c.b16 %v6094, %v6094
      %v6127 = vpack.c.b16 %v6095, %v6095
      %v6128 = vpack.c.b16 %v6096, %v6096
      %v6129 = vpack.c.b16 %v6097, %v6097
      %v6130 = vpack.c.b16 %v6098, %v6098
      %v6131 = vpack.c.b16 %v6099, %v6099
      %v6132 = vpack.c.b16 %v6100, %v6100
      %v6133 = vpack.c.b16 %v6101, %v6101
      %v6134 = vpack.c.b16 %v6102, %v6102
      %v6135 = vpack.c.b16 %v6103, %v6103
      %v6136 = vpack.c.b16 %v6104, %v6104
      %v6137 = vpack.c.b16 %v6105, %v6105
      %v6138 = vpack.c.b16 %v6106, %v6106
      %6171 = vst [vmem:[%s170] sm:$0xf] %v6107
      %6172 = vst [vmem:[%s170 + $0x4] sm:$0xf] %v6108
      %6173 = vst [vmem:[%s170 + $0x8] sm:$0xf] %v6109
      %6174 = vst [vmem:[%s170 + $0xc] sm:$0xf] %v6110
      %6175 = vst [vmem:[%s170 + $0x10] sm:$0xf] %v6111
      %6176 = vst [vmem:[%s170 + $0x14] sm:$0xf] %v6112
      %6177 = vst [vmem:[%s170 + $0x18] sm:$0xf] %v6113
      %6178 = vst [vmem:[%s170 + $0x1c] sm:$0xf] %v6114
      %6179 = vst [vmem:[%s170 + $0x20] sm:$0xf] %v6115
      %6180 = vst [vmem:[%s170 + $0x24] sm:$0xf] %v6116
      %6181 = vst [vmem:[%s170 + $0x28] sm:$0xf] %v6117
      %6182 = vst [vmem:[%s170 + $0x2c] sm:$0xf] %v6118
      %6183 = vst [vmem:[%s170 + $0x30] sm:$0xf] %v6119
      %6184 = vst [vmem:[%s170 + $0x34] sm:$0xf] %v6120
      %6185 = vst [vmem:[%s170 + $0x38] sm:$0xf] %v6121
      %6186 = vst [vmem:[%s170 + $0x3c] sm:$0xf] %v6122
      %6187 = vst [vmem:[%s170 + $0x40] sm:$0xf] %v6123
      %6188 = vst [vmem:[%s170 + $0x44] sm:$0xf] %v6124
      %6189 = vst [vmem:[%s170 + $0x48] sm:$0xf] %v6125
      %6190 = vst [vmem:[%s170 + $0x4c] sm:$0xf] %v6126
      %6191 = vst [vmem:[%s170 + $0x50] sm:$0xf] %v6127
      %6192 = vst [vmem:[%s170 + $0x54] sm:$0xf] %v6128
      %6193 = vst [vmem:[%s170 + $0x58] sm:$0xf] %v6129
      %6194 = vst [vmem:[%s170 + $0x5c] sm:$0xf] %v6130
      %6195 = vst [vmem:[%s170 + $0x60] sm:$0xf] %v6131
      %6196 = vst [vmem:[%s170 + $0x64] sm:$0xf] %v6132
      %6197 = vst [vmem:[%s170 + $0x68] sm:$0xf] %v6133
      %6198 = vst [vmem:[%s170 + $0x6c] sm:$0xf] %v6134
      %6199 = vst [vmem:[%s170 + $0x70] sm:$0xf] %v6135
      %6200 = vst [vmem:[%s170 + $0x74] sm:$0xf] %v6136
      %6201 = vst [vmem:[%s170 + $0x78] sm:$0xf] %v6137
      %6202 = vst [vmem:[%s170 + $0x7c] sm:$0xf] %v6138
      %p6203 = scmp.lt.s32.totalorder %s14, 1
      %s6204 = scalar_select %p6203, %s14, 1
      %s6205 = smul.addr %s6204, 32
      %s6206 = smul.addr %s6205, 4
      %s6207 = scalar_lea.vmem %s3, %s6206
      // Predicated region
      $region33: #{road_sign_cnn_forward.3} parent=31 // pred_check
        %p6208 = pneg %p100
      $region34: #{road_sign_cnn_forward.3} parent=31 // pred_check_branch
        %6210 = sbr.rel (%p6208) target = $region36
      $region35: #{road_sign_cnn_forward.3} parent=31 // pred_region
        _
      $region36: #{road_sign_cnn_forward.3} parent=31 // pred_fallthru
        _
    $region32: #{road_sign_cnn_forward.3} parent=5 // pred_fallthru
      _
    %p6211 = scmp.le.s32.totalorder 2, %s9
    // Predicated region
    $region37: #{road_sign_cnn_forward.3} parent=5 // pred_check
      %p6212 = pneg %p6211
    $region38: #{road_sign_cnn_forward.3} parent=5 // pred_check_branch
      %6214 = sbr.rel (%p6212) target = $region40
    $region39: #{road_sign_cnn_forward.3} parent=5 // pred_region
      %s6215 = ssub.s32 %s9, 2
      // Predicated region
      $region41: #{road_sign_cnn_forward.3} parent=39 // pred_check
        %p6216 = pneg %p106
      $region42: #{road_sign_cnn_forward.3} parent=39 // pred_check_branch
        %6218 = sbr.rel (%p6216) target = $region44
      $region43: #{road_sign_cnn_forward.3} parent=39 // pred_region
        %p6219 = scmp.lt.s32.totalorder %s15, 1
        %s6220 = scalar_select %p6219, %s15, 1
        %s6221 = smul.addr %s6220, 32
        %s6222 = smul.addr %s6221, 4
        %s6223 = scalar_lea.vmem %s3, %s6222
      $region44: #{road_sign_cnn_forward.3} parent=39 // pred_fallthru
        _
    $region40: #{road_sign_cnn_forward.3} parent=5 // pred_fallthru
      _
  $region6: #{road_sign_cnn_forward.3} parent=0 // loop_footer
    %s13 = sadd.s32 1, %s9
  $region7: #{road_sign_cnn_forward.3} parent=0 // loop_footer_branch
    %8 = sbr.rel target = $region3
  $region8: #{road_sign_cnn_forward.3} parent=0 // loop_exit
    _

</llo_original>
